<compile_context>
chip_gen: v7x
topology: tpu7x:2x2x1
jax: 0.10.0
libtpu: 0.0.40
codegen_flags: <defaults>
</compile_context>

<pallas_src>
import math
from functools import partial

import jax
import jax.numpy as jnp
from jax.experimental import pallas as pl
from jax.experimental.pallas import tpu as pltpu


_VMEM_LIMIT = 48 * 1024 * 1024  # compromise: <= v7x 64 MiB physical, generous for v6e


# ----------------------------------------------------------------------------
# Tile-size helpers
# ----------------------------------------------------------------------------

def _pick_tr(R, num_p_pad, target_tokens=256):
    """Row-block size: divides R, tokens per block <= target, prefer >=2 grid steps."""
    divs = [d for d in range(1, R + 1) if R % d == 0]
    fit = [d for d in divs if d * num_p_pad <= target_tokens] or [1]
    multi = [d for d in fit if R // d >= 2]
    return max(multi) if multi else max(fit)


def _pick_tm(M, target=512):
    """Row tile for the head matmul: multiple of 8 dividing M, prefer >=2 steps."""
    cands = [t for t in range(8, min(M, target) + 1, 8) if M % t == 0]
    if not cands:
        return M
    multi = [t for t in cands if M // t >= 2]
    return max(multi) if multi else max(cands)


# ----------------------------------------------------------------------------
# Kernels
# ----------------------------------------------------------------------------

def _layernorm(x, g, b):
    mu = jnp.mean(x, axis=-1, keepdims=True)
    var = jnp.mean((x - mu) ** 2, axis=-1, keepdims=True)
    return (x - mu) * jax.lax.rsqrt(var + 1e-5) * g + b


def _encoder_fused_kernel(patch_ref, wemb_ref, pos_ref,
                          wq_ref, bq_ref, wk_ref, bk_ref, wv_ref, bv_ref,
                          wo_ref, bo_ref, g1_ref, be1_ref,
                          w1_ref, b1_ref, w2_ref, b2_ref, g2_ref, be2_ref,
                          gf_ref, bf_ref, o_ref,
                          *, n_layers, n_heads, num_p, num_p_pad, tr):
    """Embedding + all encoder layers + final LayerNorm for one block of TR rows."""
    TB = tr * num_p_pad
    D = wemb_ref.shape[1]
    dh = D // n_heads
    scale = 1.0 / math.sqrt(dh)       # FullAttention default: 1/sqrt(E)
    bf16 = jnp.bfloat16

    # Value embedding (bias-free Linear) + positional embedding, fused.
    x = jnp.dot(patch_ref[...].astype(bf16), wemb_ref[...],
                preferred_element_type=jnp.float32) + pos_ref[...]      # (TB, D) f32

    # Additive key-padding bias for the padded patch slots (built in-kernel,
    # hoisted out of the layer loop).  Shape (1, num_p_pad) broadcasts over the
    # key axis of the (TR, num_p_pad, num_p_pad) score tensor.
    if num_p_pad != num_p:
        col = jax.lax.broadcasted_iota(jnp.int32, (1, num_p_pad), 1)
        kbias = jnp.where(col < num_p, 0.0, -1e30).astype(jnp.float32)
    else:
        kbias = None

    for li in range(n_layers):                                  # static layer loop
        wq = wq_ref[li]; bq = bq_ref[li]
        wk = wk_ref[li]; bk = bk_ref[li]
        wv = wv_ref[li]; bv = bv_ref[li]
        wo = wo_ref[li]; bo = bo_ref[li]
        g1 = g1_ref[li]; be1 = be1_ref[li]
        w1 = w1_ref[li]; b1 = b1_ref[li]
        w2 = w2_ref[li]; b2 = b2_ref[li]
        g2 = g2_ref[li]; be2 = be2_ref[li]

        xb = x.astype(bf16)
        q = jnp.dot(xb, wq, preferred_element_type=jnp.float32) + bq    # (TB, D)
        k = jnp.dot(xb, wk, preferred_element_type=jnp.float32) + bk
        v = jnp.dot(xb, wv, preferred_element_type=jnp.float32) + bv

        # Tile-aligned split of the token axis: (TR*num_p_pad, D) -> (TR, num_p_pad, D)
        q3 = q.reshape(tr, num_p_pad, D)
        k3 = k.reshape(tr, num_p_pad, D)
        v3 = v.reshape(tr, num_p_pad, D)

        attn_acc = None
        for h in range(n_heads):                                # static head loop
            sl = slice(h * dh, (h + 1) * dh)
            qh = q3[:, :, sl].astype(bf16)
            kh = k3[:, :, sl].astype(bf16)
            vh = v3[:, :, sl].astype(bf16)
            # per-row batched attention — no cross-row waste, no (TB,TB) mask
            s = jnp.einsum('rpd,rqd->rpq', qh, kh,
                           preferred_element_type=jnp.float32) * scale
            if kbias is not None:
                s = s + kbias
            s = s - jnp.max(s, axis=-1, keepdims=True)
            p = jnp.exp(s)
            p = p * pl.reciprocal(jnp.sum(p, axis=-1, keepdims=True), approx=True)
            oh = jnp.einsum('rpq,rqd->rpd', p.astype(bf16), vh,
                            preferred_element_type=jnp.float32)         # (TR, P, dh)
            # fold the output projection per head (no concatenate of head slices)
            contrib = jnp.dot(oh.reshape(TB, dh).astype(bf16), wo[sl, :],
                              preferred_element_type=jnp.float32)       # (TB, D)
            attn_acc = contrib if attn_acc is None else attn_acc + contrib
        attn_out = attn_acc + bo

        # residual + norm1
        xn = _layernorm(x + attn_out, g1, be1)

        # FFN: Conv1d(k=1) -> relu -> Conv1d(k=1)
        y = jnp.dot(xn.astype(bf16), w1, preferred_element_type=jnp.float32) + b1
        y = jnp.maximum(y, 0.0)
        y = jnp.dot(y.astype(bf16), w2, preferred_element_type=jnp.float32) + b2

        # residual + norm2
        x = _layernorm(xn + y, g2, be2)

    # fused final encoder LayerNorm
    o_ref[...] = _layernorm(x, gf_ref[...], bf_ref[...])


def _head_kernel(x_ref, w_ref, b_ref, o_ref):
    o_ref[...] = (jnp.dot(x_ref[...].astype(jnp.bfloat16), w_ref[...],
                          preferred_element_type=jnp.float32) + b_ref[...])


# ----------------------------------------------------------------------------
# Pallas wrappers
# ----------------------------------------------------------------------------

_STACK_KEYS = ('wq', 'bq', 'wk', 'bk', 'wv', 'bv', 'wo', 'bo',
               'g1', 'be1', 'w1', 'b1', 'w2', 'b2', 'g2', 'be2')


def encoder_fused(patches2, params, cfg, num_p, num_p_pad, R, target_tokens=256):
    D = cfg['d_model']
    P = cfg['patch_len']
    TR = _pick_tr(R, num_p_pad, target_tokens)
    TB = TR * num_p_pad
    T = R * num_p_pad
    assert T % TB == 0
    pos_tiled = jnp.tile(params['pos_emb_pad'], (TR, 1))        # (TB, D) f32

    weights = [params['stacked'][k] for k in _STACK_KEYS]
    weights += [params['norm_g'], params['norm_b']]

    in_specs = [pl.BlockSpec((TB, P), lambda i: (i, 0)),
                pl.BlockSpec(params['w_emb'].shape, lambda i: (0, 0)),
                pl.BlockSpec((TB, D), lambda i: (0, 0))]
    in_specs += [pl.BlockSpec(w.shape, lambda i, nd=w.ndim: (0,) * nd)
                 for w in weights]

    kern = partial(_encoder_fused_kernel,
                   n_layers=cfg['e_layers'], n_heads=cfg['n_heads'],
                   num_p=num_p, num_p_pad=num_p_pad, tr=TR)

    return pl.pallas_call(
        kern,
        out_shape=jax.ShapeDtypeStruct((T, D), jnp.float32),
        grid=(T // TB,),
        in_specs=in_specs,
        out_specs=pl.BlockSpec((TB, D), lambda i: (i, 0)),
        compiler_params=pltpu.CompilerParams(
            dimension_semantics=("parallel",),
            vmem_limit_bytes=_VMEM_LIMIT),
    )(patches2, params['w_emb'], pos_tiled, *weights)


def head_dense(x, w, b, target_rows=512):
    M, K = x.shape
    N = w.shape[1]                                               # padded to %128 == 0
    TM = _pick_tm(M, target_rows)
    return pl.pallas_call(
        _head_kernel,
        out_shape=jax.ShapeDtypeStruct((M, N), jnp.float32),
        grid=(pl.cdiv(M, TM),),
        in_specs=[pl.BlockSpec((TM, K), lambda i: (i, 0)),
                  pl.BlockSpec((K, N), lambda i: (0, 0)),
                  pl.BlockSpec((1, N), lambda i: (0, 0))],
        out_specs=pl.BlockSpec((TM, N), lambda i: (i, 0)),
        compiler_params=pltpu.CompilerParams(
            dimension_semantics=("parallel",),
            vmem_limit_bytes=_VMEM_LIMIT),
    )(x, w, b)


# ----------------------------------------------------------------------------
# Parameter construction (deterministic, synthetic)
# ----------------------------------------------------------------------------

def positional_embedding(d_model, length):
    position = jnp.arange(length, dtype=jnp.float32)[:, None]
    div_term = jnp.exp(jnp.arange(0, d_model, 2, dtype=jnp.float32)
                       * (-math.log(10000.0) / d_model))
    pe = jnp.zeros((length, d_model), jnp.float32)
    pe = pe.at[:, 0::2].set(jnp.sin(position * div_term))
    pe = pe.at[:, 1::2].set(jnp.cos(position * div_term))
    return pe


def init_params(key, cfg):
    D, Dff, P = cfg['d_model'], cfg['d_ff'], cfg['patch_len']
    assert D % cfg['n_heads'] == 0, "d_model must be divisible by n_heads"
    num_p = (cfg['seq_len'] - P) // cfg['stride'] + 2
    num_p_pad = ((num_p + 7) // 8) * 8
    keys = iter(jax.random.split(key, 256))

    def lin(fan_in, fan_out, dtype=jnp.bfloat16):                # matmul weights: bf16
        lim = 1.0 / math.sqrt(fan_in)
        return jax.random.uniform(next(keys), (fan_in, fan_out), jnp.float32,
                                  -lim, lim).astype(dtype)

    def bias(fan_in, fan_out):                                   # biases stay f32
        lim = 1.0 / math.sqrt(fan_in)
        return jax.random.uniform(next(keys), (1, fan_out), jnp.float32, -lim, lim)

    pos = positional_embedding(D, num_p)
    pos_pad = jnp.pad(pos, ((0, num_p_pad - num_p), (0, 0)))

    params = {
        'w_emb': lin(P, D),                                      # value_embedding (no bias)
        'pos_emb_pad': pos_pad,                                  # fixed sinusoidal, padded
        'norm_g': jnp.ones((1, D), jnp.float32),                 # final encoder LayerNorm
        'norm_b': jnp.zeros((1, D), jnp.float32),
    }

    layers = []
    for _ in range(cfg['e_layers']):
        layers.append(dict(
            wq=lin(D, D), bq=bias(D, D), wk=lin(D, D), bk=bias(D, D),
            wv=lin(D, D), bv=bias(D, D), wo=lin(D, D), bo=bias(D, D),
            g1=jnp.ones((1, D), jnp.float32), be1=jnp.zeros((1, D), jnp.float32),
            w1=lin(D, Dff), b1=bias(D, Dff),
            w2=lin(Dff, D), b2=bias(Dff, D),
            g2=jnp.ones((1, D), jnp.float32), be2=jnp.zeros((1, D), jnp.float32)))
    params['stacked'] = {k: jnp.stack([lp[k] for lp in layers], axis=0)
                         for k in layers[0]}

    # FlattenHead: PyTorch flattens (D, num_p) i.e. row index d*num_p + p.
    # Permute once at init to the (num_p, D)-major order used by our activations,
    # zero-pad the rows that correspond to padded patch slots, and pad pred_len
    # up to a multiple of 128 for lane-dense output stores.
    pred = cfg['pred_len']
    pred_pad = ((pred + 127) // 128) * 128
    head_nf = D * num_p
    w_head = lin(head_nf, pred, dtype=jnp.float32)
    w_head = (w_head.reshape(D, num_p, pred).transpose(1, 0, 2)
              .reshape(num_p * D, pred))
    w_head = jnp.pad(w_head, ((0, (num_p_pad - num_p) * D), (0, pred_pad - pred)))
    params['w_head'] = w_head.astype(jnp.bfloat16)
    params['b_head'] = jnp.pad(bias(head_nf, pred), ((0, 0), (0, pred_pad - pred)))
    return params


# ----------------------------------------------------------------------------
# PatchTST forecast forward (task_name = 'long_term_forecast')
# ----------------------------------------------------------------------------

def patchtst_forward(x_enc, params, cfg, x_mark_enc=None, x_dec=None, x_mark_dec=None):
    B, L, C = x_enc.shape
    P, stride, D = cfg['patch_len'], cfg['stride'], cfg['d_model']
    num_p = (L - P) // stride + 2
    num_p_pad = ((num_p + 7) // 8) * 8
    R = B * C

    # instance normalization over the sequence dim (glue / small reduction)
    means = jnp.mean(x_enc, axis=1, keepdims=True)
    xc = x_enc - means
    stdev = jnp.sqrt(jnp.var(xc, axis=1, keepdims=True) + 1e-5)
    xc = xc / stdev

    # (B, L, C) -> (B, C, L), replication-pad end by `stride`, then patchify.
    x = jnp.transpose(xc, (0, 2, 1))
    x = jnp.concatenate([x, jnp.repeat(x[:, :, -1:], stride, axis=-1)], axis=-1)
    if stride == P and L % stride == 0:
        patches = x.reshape(B, C, num_p, P)            # non-overlapping: free reshape
    else:
        # TODO(synk): overlapping patches fall back to an XLA gather.
        idx = jnp.arange(num_p)[:, None] * stride + jnp.arange(P)[None, :]
        patches = x[:, :, idx]
    patches = patches.reshape(R, num_p, P)
    if num_p_pad != num_p:
        patches = jnp.pad(patches, ((0, 0), (0, num_p_pad - num_p), (0, 0)))
    patches = patches.reshape(R * num_p_pad, P)

    # fused: embedding + positional add + all encoder layers + final LayerNorm
    h = encoder_fused(patches, params, cfg, num_p, num_p_pad, R)

    # FlattenHead: row-major flatten matches the pre-permuted / zero-padded w_head.
    flat = h.reshape(R, num_p_pad * D)
    dec = head_dense(flat, params['w_head'], params['b_head'])[:, :cfg['pred_len']]
    dec = dec.reshape(B, C, cfg['pred_len'])
    dec = jnp.transpose(dec, (0, 2, 1))                # (B, pred_len, C)

    # de-normalize
    dec = dec * stdev[:, 0, :][:, None, :] + means[:, 0, :][:, None, :]
    return dec[:, -cfg['pred_len']:, :]


# ----------------------------------------------------------------------------
if __name__ == "__main__":
    cfg = dict(task_name='long_term_forecast',
               seq_len=32, pred_len=16, patch_len=8, stride=8,
               d_model=32, n_heads=4, d_ff=64, e_layers=2, enc_in=4)

    key = jax.random.PRNGKey(0)
    pkey, xkey = jax.random.split(key)
    params = init_params(pkey, cfg)

    B = 2
    x_enc = jax.random.normal(xkey, (B, cfg['seq_len'], cfg['enc_in']), jnp.float32)

    fwd = jax.jit(lambda x, p: patchtst_forward(x, p, cfg))
    out = fwd(x_enc, params)
    jax.block_until_ready(out)
    assert out.shape == (B, cfg['pred_len'], cfg['enc_in']), out.shape
    assert bool(jnp.all(jnp.isfinite(out)))
    print("KERNEL_OK")
</pallas_src>

<mosaic_0001>
module attributes {stable_mosaic.version = 11 : i64} {
  func.func @_encoder_fused_kernel(%arg0: i32, %arg1: memref<32x8xf32, #tpu.memory_space<vmem>>, %arg2: memref<8x32xbf16, #tpu.memory_space<vmem>>, %arg3: memref<32x32xf32, #tpu.memory_space<vmem>>, %arg4: memref<2x32x32xbf16, #tpu.memory_space<vmem>>, %arg5: memref<2x1x32xf32, #tpu.memory_space<vmem>>, %arg6: memref<2x32x32xbf16, #tpu.memory_space<vmem>>, %arg7: memref<2x1x32xf32, #tpu.memory_space<vmem>>, %arg8: memref<2x32x32xbf16, #tpu.memory_space<vmem>>, %arg9: memref<2x1x32xf32, #tpu.memory_space<vmem>>, %arg10: memref<2x32x32xbf16, #tpu.memory_space<vmem>>, %arg11: memref<2x1x32xf32, #tpu.memory_space<vmem>>, %arg12: memref<2x1x32xf32, #tpu.memory_space<vmem>>, %arg13: memref<2x1x32xf32, #tpu.memory_space<vmem>>, %arg14: memref<2x32x64xbf16, #tpu.memory_space<vmem>>, %arg15: memref<2x1x64xf32, #tpu.memory_space<vmem>>, %arg16: memref<2x64x32xbf16, #tpu.memory_space<vmem>>, %arg17: memref<2x1x32xf32, #tpu.memory_space<vmem>>, %arg18: memref<2x1x32xf32, #tpu.memory_space<vmem>>, %arg19: memref<2x1x32xf32, #tpu.memory_space<vmem>>, %arg20: memref<1x32xf32, #tpu.memory_space<vmem>>, %arg21: memref<1x32xf32, #tpu.memory_space<vmem>>, %arg22: memref<32x32xf32, #tpu.memory_space<vmem>>) attributes {dimension_semantics = [#tpu.dimension_semantics<parallel>], iteration_bounds = array<i64: 2>, scalar_prefetch = 0 : i64, scratch_operands = 0 : i64, tpu.core_type = #tpu.core_type<tc>, window_params = [{transform_indices = @transform_0, window_bounds = array<i64: 32, 8>}, {pipeline_mode = #tpu.pipeline_mode<synchronous>, transform_indices = @transform_1, window_bounds = array<i64: 8, 32>}, {pipeline_mode = #tpu.pipeline_mode<synchronous>, transform_indices = @transform_2, window_bounds = array<i64: 32, 32>}, {pipeline_mode = #tpu.pipeline_mode<synchronous>, transform_indices = @transform_3, window_bounds = array<i64: 2, 32, 32>}, {pipeline_mode = #tpu.pipeline_mode<synchronous>, transform_indices = @transform_4, window_bounds = array<i64: 2, 1, 32>}, {pipeline_mode = #tpu.pipeline_mode<synchronous>, transform_indices = @transform_5, window_bounds = array<i64: 2, 32, 32>}, {pipeline_mode = #tpu.pipeline_mode<synchronous>, transform_indices = @transform_6, window_bounds = array<i64: 2, 1, 32>}, {pipeline_mode = #tpu.pipeline_mode<synchronous>, transform_indices = @transform_7, window_bounds = array<i64: 2, 32, 32>}, {pipeline_mode = #tpu.pipeline_mode<synchronous>, transform_indices = @transform_8, window_bounds = array<i64: 2, 1, 32>}, {pipeline_mode = #tpu.pipeline_mode<synchronous>, transform_indices = @transform_9, window_bounds = array<i64: 2, 32, 32>}, {pipeline_mode = #tpu.pipeline_mode<synchronous>, transform_indices = @transform_10, window_bounds = array<i64: 2, 1, 32>}, {pipeline_mode = #tpu.pipeline_mode<synchronous>, transform_indices = @transform_11, window_bounds = array<i64: 2, 1, 32>}, {pipeline_mode = #tpu.pipeline_mode<synchronous>, transform_indices = @transform_12, window_bounds = array<i64: 2, 1, 32>}, {pipeline_mode = #tpu.pipeline_mode<synchronous>, transform_indices = @transform_13, window_bounds = array<i64: 2, 32, 64>}, {pipeline_mode = #tpu.pipeline_mode<synchronous>, transform_indices = @transform_14, window_bounds = array<i64: 2, 1, 64>}, {pipeline_mode = #tpu.pipeline_mode<synchronous>, transform_indices = @transform_15, window_bounds = array<i64: 2, 64, 32>}, {pipeline_mode = #tpu.pipeline_mode<synchronous>, transform_indices = @transform_16, window_bounds = array<i64: 2, 1, 32>}, {pipeline_mode = #tpu.pipeline_mode<synchronous>, transform_indices = @transform_17, window_bounds = array<i64: 2, 1, 32>}, {pipeline_mode = #tpu.pipeline_mode<synchronous>, transform_indices = @transform_18, window_bounds = array<i64: 2, 1, 32>}, {pipeline_mode = #tpu.pipeline_mode<synchronous>, transform_indices = @transform_19, window_bounds = array<i64: 1, 32>}, {pipeline_mode = #tpu.pipeline_mode<synchronous>, transform_indices = @transform_20, window_bounds = array<i64: 1, 32>}, {transform_indices = @transform_21, window_bounds = array<i64: 32, 32>}]} {
    %c0 = arith.constant 0 : index
    %c0_0 = arith.constant 0 : index
    %0 = vector.load %arg1[%c0, %c0_0] : memref<32x8xf32, #tpu.memory_space<vmem>>, vector<32x8xf32>
    %1 = arith.truncf %0 : vector<32x8xf32> to vector<32x8xbf16>
    %c0_1 = arith.constant 0 : index
    %c0_2 = arith.constant 0 : index
    %2 = vector.load %arg2[%c0_1, %c0_2] : memref<8x32xbf16, #tpu.memory_space<vmem>>, vector<8x32xbf16>
    %cst = arith.constant dense<0.000000e+00> : vector<32x32xf32>
    %3 = tpu.matmul %1, %2, %cst {dimension_numbers = #tpu.dot_dimension_numbers<[1], [0], [0], [1], [0, 0, 1, 1], [], []>} : vector<32x8xbf16>, vector<8x32xbf16>, vector<32x32xf32> -> vector<32x32xf32>
    %c0_3 = arith.constant 0 : index
    %c0_4 = arith.constant 0 : index
    %4 = vector.load %arg3[%c0_3, %c0_4] : memref<32x32xf32, #tpu.memory_space<vmem>>, vector<32x32xf32>
    %5 = arith.addf %3, %4 : vector<32x32xf32>
    %6 = tpu.iota {dimensions = array<i32: 1>} : vector<1x8xi32>
    %c5_i32 = arith.constant 5 : i32
    %7 = vector.broadcast %c5_i32 : i32 to vector<1x8xi32>
    %8 = arith.cmpi slt, %6, %7 : vector<1x8xi32>
    %cst_5 = arith.constant 0.000000e+00 : f32
    %cst_6 = arith.constant -1.000000e+30 : f32
    %9 = vector.broadcast %cst_5 : f32 to vector<1x8xf32>
    %10 = vector.broadcast %cst_6 : f32 to vector<1x8xf32>
    %11 = arith.select %8, %9, %10 : vector<1x8xi1>, vector<1x8xf32>
    %c0_7 = arith.constant 0 : index
    %c0_8 = arith.constant 0 : index
    %c0_9 = arith.constant 0 : index
    %12 = vector.load %arg4[%c0_7, %c0_8, %c0_9] : memref<2x32x32xbf16, #tpu.memory_space<vmem>>, vector<1x32x32xbf16>
    %13 = vector.shape_cast %12 : vector<1x32x32xbf16> to vector<32x32xbf16>
    %c0_10 = arith.constant 0 : index
    %c0_11 = arith.constant 0 : index
    %c0_12 = arith.constant 0 : index
    %14 = vector.load %arg5[%c0_10, %c0_11, %c0_12] : memref<2x1x32xf32, #tpu.memory_space<vmem>>, vector<1x1x32xf32>
    %15 = vector.shape_cast %14 : vector<1x1x32xf32> to vector<1x32xf32>
    %c0_13 = arith.constant 0 : index
    %c0_14 = arith.constant 0 : index
    %c0_15 = arith.constant 0 : index
    %16 = vector.load %arg6[%c0_13, %c0_14, %c0_15] : memref<2x32x32xbf16, #tpu.memory_space<vmem>>, vector<1x32x32xbf16>
    %17 = vector.shape_cast %16 : vector<1x32x32xbf16> to vector<32x32xbf16>
    %c0_16 = arith.constant 0 : index
    %c0_17 = arith.constant 0 : index
    %c0_18 = arith.constant 0 : index
    %18 = vector.load %arg7[%c0_16, %c0_17, %c0_18] : memref<2x1x32xf32, #tpu.memory_space<vmem>>, vector<1x1x32xf32>
    %19 = vector.shape_cast %18 : vector<1x1x32xf32> to vector<1x32xf32>
    %c0_19 = arith.constant 0 : index
    %c0_20 = arith.constant 0 : index
    %c0_21 = arith.constant 0 : index
    %20 = vector.load %arg8[%c0_19, %c0_20, %c0_21] : memref<2x32x32xbf16, #tpu.memory_space<vmem>>, vector<1x32x32xbf16>
    %21 = vector.shape_cast %20 : vector<1x32x32xbf16> to vector<32x32xbf16>
    %c0_22 = arith.constant 0 : index
    %c0_23 = arith.constant 0 : index
    %c0_24 = arith.constant 0 : index
    %22 = vector.load %arg9[%c0_22, %c0_23, %c0_24] : memref<2x1x32xf32, #tpu.memory_space<vmem>>, vector<1x1x32xf32>
    %23 = vector.shape_cast %22 : vector<1x1x32xf32> to vector<1x32xf32>
    %c0_25 = arith.constant 0 : index
    %c0_26 = arith.constant 0 : index
    %c0_27 = arith.constant 0 : index
    %24 = vector.load %arg10[%c0_25, %c0_26, %c0_27] : memref<2x32x32xbf16, #tpu.memory_space<vmem>>, vector<1x32x32xbf16>
    %25 = vector.shape_cast %24 : vector<1x32x32xbf16> to vector<32x32xbf16>
    %c0_28 = arith.constant 0 : index
    %c0_29 = arith.constant 0 : index
    %c0_30 = arith.constant 0 : index
    %26 = vector.load %arg11[%c0_28, %c0_29, %c0_30] : memref<2x1x32xf32, #tpu.memory_space<vmem>>, vector<1x1x32xf32>
    %27 = vector.shape_cast %26 : vector<1x1x32xf32> to vector<1x32xf32>
    %c0_31 = arith.constant 0 : index
    %c0_32 = arith.constant 0 : index
    %c0_33 = arith.constant 0 : index
    %28 = vector.load %arg12[%c0_31, %c0_32, %c0_33] : memref<2x1x32xf32, #tpu.memory_space<vmem>>, vector<1x1x32xf32>
    %29 = vector.shape_cast %28 : vector<1x1x32xf32> to vector<1x32xf32>
    %c0_34 = arith.constant 0 : index
    %c0_35 = arith.constant 0 : index
    %c0_36 = arith.constant 0 : index
    %30 = vector.load %arg13[%c0_34, %c0_35, %c0_36] : memref<2x1x32xf32, #tpu.memory_space<vmem>>, vector<1x1x32xf32>
    %31 = vector.shape_cast %30 : vector<1x1x32xf32> to vector<1x32xf32>
    %c0_37 = arith.constant 0 : index
    %c0_38 = arith.constant 0 : index
    %c0_39 = arith.constant 0 : index
    %32 = vector.load %arg14[%c0_37, %c0_38, %c0_39] : memref<2x32x64xbf16, #tpu.memory_space<vmem>>, vector<1x32x64xbf16>
    %33 = vector.shape_cast %32 : vector<1x32x64xbf16> to vector<32x64xbf16>
    %c0_40 = arith.constant 0 : index
    %c0_41 = arith.constant 0 : index
    %c0_42 = arith.constant 0 : index
    %34 = vector.load %arg15[%c0_40, %c0_41, %c0_42] : memref<2x1x64xf32, #tpu.memory_space<vmem>>, vector<1x1x64xf32>
    %35 = vector.shape_cast %34 : vector<1x1x64xf32> to vector<1x64xf32>
    %c0_43 = arith.constant 0 : index
    %c0_44 = arith.constant 0 : index
    %c0_45 = arith.constant 0 : index
    %36 = vector.load %arg16[%c0_43, %c0_44, %c0_45] : memref<2x64x32xbf16, #tpu.memory_space<vmem>>, vector<1x64x32xbf16>
    %37 = vector.shape_cast %36 : vector<1x64x32xbf16> to vector<64x32xbf16>
    %c0_46 = arith.constant 0 : index
    %c0_47 = arith.constant 0 : index
    %c0_48 = arith.constant 0 : index
    %38 = vector.load %arg17[%c0_46, %c0_47, %c0_48] : memref<2x1x32xf32, #tpu.memory_space<vmem>>, vector<1x1x32xf32>
    %39 = vector.shape_cast %38 : vector<1x1x32xf32> to vector<1x32xf32>
    %c0_49 = arith.constant 0 : index
    %c0_50 = arith.constant 0 : index
    %c0_51 = arith.constant 0 : index
    %40 = vector.load %arg18[%c0_49, %c0_50, %c0_51] : memref<2x1x32xf32, #tpu.memory_space<vmem>>, vector<1x1x32xf32>
    %41 = vector.shape_cast %40 : vector<1x1x32xf32> to vector<1x32xf32>
    %c0_52 = arith.constant 0 : index
    %c0_53 = arith.constant 0 : index
    %c0_54 = arith.constant 0 : index
    %42 = vector.load %arg19[%c0_52, %c0_53, %c0_54] : memref<2x1x32xf32, #tpu.memory_space<vmem>>, vector<1x1x32xf32>
    %43 = vector.shape_cast %42 : vector<1x1x32xf32> to vector<1x32xf32>
    %44 = arith.truncf %5 : vector<32x32xf32> to vector<32x32xbf16>
    %cst_55 = arith.constant dense<0.000000e+00> : vector<32x32xf32>
    %45 = tpu.matmul %44, %13, %cst_55 {dimension_numbers = #tpu.dot_dimension_numbers<[1], [0], [0], [1], [0, 0, 1, 1], [], []>} : vector<32x32xbf16>, vector<32x32xbf16>, vector<32x32xf32> -> vector<32x32xf32>
    %46 = vector.broadcast %15 : vector<1x32xf32> to vector<32x32xf32>
    %47 = arith.addf %45, %46 : vector<32x32xf32>
    %cst_56 = arith.constant dense<0.000000e+00> : vector<32x32xf32>
    %48 = tpu.matmul %44, %17, %cst_56 {dimension_numbers = #tpu.dot_dimension_numbers<[1], [0], [0], [1], [0, 0, 1, 1], [], []>} : vector<32x32xbf16>, vector<32x32xbf16>, vector<32x32xf32> -> vector<32x32xf32>
    %49 = vector.broadcast %19 : vector<1x32xf32> to vector<32x32xf32>
    %50 = arith.addf %48, %49 : vector<32x32xf32>
    %cst_57 = arith.constant dense<0.000000e+00> : vector<32x32xf32>
    %51 = tpu.matmul %44, %21, %cst_57 {dimension_numbers = #tpu.dot_dimension_numbers<[1], [0], [0], [1], [0, 0, 1, 1], [], []>} : vector<32x32xbf16>, vector<32x32xbf16>, vector<32x32xf32> -> vector<32x32xf32>
    %52 = vector.broadcast %23 : vector<1x32xf32> to vector<32x32xf32>
    %53 = arith.addf %51, %52 : vector<32x32xf32>
    %54 = vector.shape_cast %47 : vector<32x32xf32> to vector<4x8x32xf32>
    %55 = vector.shape_cast %50 : vector<32x32xf32> to vector<4x8x32xf32>
    %56 = vector.shape_cast %53 : vector<32x32xf32> to vector<4x8x32xf32>
    %57 = vector.extract_strided_slice %54 {offsets = [0, 0, 0], sizes = [4, 8, 8], strides = [1, 1, 1]} : vector<4x8x32xf32> to vector<4x8x8xf32>
    %58 = arith.truncf %57 : vector<4x8x8xf32> to vector<4x8x8xbf16>
    %59 = vector.extract_strided_slice %55 {offsets = [0, 0, 0], sizes = [4, 8, 8], strides = [1, 1, 1]} : vector<4x8x32xf32> to vector<4x8x8xf32>
    %60 = arith.truncf %59 : vector<4x8x8xf32> to vector<4x8x8xbf16>
    %61 = vector.extract_strided_slice %56 {offsets = [0, 0, 0], sizes = [4, 8, 8], strides = [1, 1, 1]} : vector<4x8x32xf32> to vector<4x8x8xf32>
    %62 = arith.truncf %61 : vector<4x8x8xf32> to vector<4x8x8xbf16>
    "tpu.trace_start"() <{level = 10 : i32, message = "rpd,rqd->rpq"}> : () -> ()
    %cst_58 = arith.constant dense<0.000000e+00> : vector<4x8x8xf32>
    %63 = tpu.matmul %58, %60, %cst_58 {dimension_numbers = #tpu.dot_dimension_numbers<[2], [2], [1], [1], [0, 0, 0, 1, 1, 1], [0], [0]>} : vector<4x8x8xbf16>, vector<4x8x8xbf16>, vector<4x8x8xf32> -> vector<4x8x8xf32>
    "tpu.trace_stop"() : () -> ()
    %cst_59 = arith.constant 0.353553385 : f32
    %64 = vector.broadcast %cst_59 : f32 to vector<4x8x8xf32>
    %65 = arith.mulf %63, %64 : vector<4x8x8xf32>
    %66 = vector.shape_cast %11 : vector<1x8xf32> to vector<1x1x8xf32>
    %67 = vector.broadcast %66 : vector<1x1x8xf32> to vector<4x8x8xf32>
    %68 = arith.addf %65, %67 : vector<4x8x8xf32>
    %cst_60 = arith.constant dense<0xFF800000> : vector<4x8xf32>
    %69 = vector.multi_reduction <maximumf>, %68, %cst_60 [2] : vector<4x8x8xf32> to vector<4x8xf32>
    %70 = vector.shape_cast %69 : vector<4x8xf32> to vector<4x8x1xf32>
    %71 = vector.broadcast %70 : vector<4x8x1xf32> to vector<4x8x8xf32>
    %72 = arith.subf %68, %71 : vector<4x8x8xf32>
    %73 = math.exp %72 : vector<4x8x8xf32>
    %cst_61 = arith.constant dense<0.000000e+00> : vector<4x8xf32>
    %74 = vector.multi_reduction <add>, %73, %cst_61 [2] : vector<4x8x8xf32> to vector<4x8xf32>
    %75 = vector.shape_cast %74 : vector<4x8xf32> to vector<4x8x1xf32>
    %76 = tpu.reciprocal %75 {approx = true} : vector<4x8x1xf32> -> vector<4x8x1xf32>
    %77 = vector.broadcast %76 : vector<4x8x1xf32> to vector<4x8x8xf32>
    %78 = arith.mulf %73, %77 : vector<4x8x8xf32>
    %79 = arith.truncf %78 : vector<4x8x8xf32> to vector<4x8x8xbf16>
    "tpu.trace_start"() <{level = 10 : i32, message = "rpq,rqd->rpd"}> : () -> ()
    %cst_62 = arith.constant dense<0.000000e+00> : vector<4x8x8xf32>
    %80 = tpu.matmul %79, %62, %cst_62 {dimension_numbers = #tpu.dot_dimension_numbers<[2], [1], [1], [2], [0, 0, 0, 1, 1, 2], [0], [0]>} : vector<4x8x8xbf16>, vector<4x8x8xbf16>, vector<4x8x8xf32> -> vector<4x8x8xf32>
    "tpu.trace_stop"() : () -> ()
    %81 = vector.shape_cast %80 : vector<4x8x8xf32> to vector<32x8xf32>
    %82 = arith.truncf %81 : vector<32x8xf32> to vector<32x8xbf16>
    %83 = vector.extract_strided_slice %25 {offsets = [0, 0], sizes = [8, 32], strides = [1, 1]} : vector<32x32xbf16> to vector<8x32xbf16>
    %cst_63 = arith.constant dense<0.000000e+00> : vector<32x32xf32>
    %84 = tpu.matmul %82, %83, %cst_63 {dimension_numbers = #tpu.dot_dimension_numbers<[1], [0], [0], [1], [0, 0, 1, 1], [], []>} : vector<32x8xbf16>, vector<8x32xbf16>, vector<32x32xf32> -> vector<32x32xf32>
    %85 = vector.extract_strided_slice %54 {offsets = [0, 0, 8], sizes = [4, 8, 8], strides = [1, 1, 1]} : vector<4x8x32xf32> to vector<4x8x8xf32>
    %86 = arith.truncf %85 : vector<4x8x8xf32> to vector<4x8x8xbf16>
    %87 = vector.extract_strided_slice %55 {offsets = [0, 0, 8], sizes = [4, 8, 8], strides = [1, 1, 1]} : vector<4x8x32xf32> to vector<4x8x8xf32>
    %88 = arith.truncf %87 : vector<4x8x8xf32> to vector<4x8x8xbf16>
    %89 = vector.extract_strided_slice %56 {offsets = [0, 0, 8], sizes = [4, 8, 8], strides = [1, 1, 1]} : vector<4x8x32xf32> to vector<4x8x8xf32>
    %90 = arith.truncf %89 : vector<4x8x8xf32> to vector<4x8x8xbf16>
    "tpu.trace_start"() <{level = 10 : i32, message = "rpd,rqd->rpq"}> : () -> ()
    %cst_64 = arith.constant dense<0.000000e+00> : vector<4x8x8xf32>
    %91 = tpu.matmul %86, %88, %cst_64 {dimension_numbers = #tpu.dot_dimension_numbers<[2], [2], [1], [1], [0, 0, 0, 1, 1, 1], [0], [0]>} : vector<4x8x8xbf16>, vector<4x8x8xbf16>, vector<4x8x8xf32> -> vector<4x8x8xf32>
    "tpu.trace_stop"() : () -> ()
    %cst_65 = arith.constant 0.353553385 : f32
    %92 = vector.broadcast %cst_65 : f32 to vector<4x8x8xf32>
    %93 = arith.mulf %91, %92 : vector<4x8x8xf32>
    %94 = vector.shape_cast %11 : vector<1x8xf32> to vector<1x1x8xf32>
    %95 = vector.broadcast %94 : vector<1x1x8xf32> to vector<4x8x8xf32>
    %96 = arith.addf %93, %95 : vector<4x8x8xf32>
    %cst_66 = arith.constant dense<0xFF800000> : vector<4x8xf32>
    %97 = vector.multi_reduction <maximumf>, %96, %cst_66 [2] : vector<4x8x8xf32> to vector<4x8xf32>
    %98 = vector.shape_cast %97 : vector<4x8xf32> to vector<4x8x1xf32>
    %99 = vector.broadcast %98 : vector<4x8x1xf32> to vector<4x8x8xf32>
    %100 = arith.subf %96, %99 : vector<4x8x8xf32>
    %101 = math.exp %100 : vector<4x8x8xf32>
    %cst_67 = arith.constant dense<0.000000e+00> : vector<4x8xf32>
    %102 = vector.multi_reduction <add>, %101, %cst_67 [2] : vector<4x8x8xf32> to vector<4x8xf32>
    %103 = vector.shape_cast %102 : vector<4x8xf32> to vector<4x8x1xf32>
    %104 = tpu.reciprocal %103 {approx = true} : vector<4x8x1xf32> -> vector<4x8x1xf32>
    %105 = vector.broadcast %104 : vector<4x8x1xf32> to vector<4x8x8xf32>
    %106 = arith.mulf %101, %105 : vector<4x8x8xf32>
    %107 = arith.truncf %106 : vector<4x8x8xf32> to vector<4x8x8xbf16>
    "tpu.trace_start"() <{level = 10 : i32, message = "rpq,rqd->rpd"}> : () -> ()
    %cst_68 = arith.constant dense<0.000000e+00> : vector<4x8x8xf32>
    %108 = tpu.matmul %107, %90, %cst_68 {dimension_numbers = #tpu.dot_dimension_numbers<[2], [1], [1], [2], [0, 0, 0, 1, 1, 2], [0], [0]>} : vector<4x8x8xbf16>, vector<4x8x8xbf16>, vector<4x8x8xf32> -> vector<4x8x8xf32>
    "tpu.trace_stop"() : () -> ()
    %109 = vector.shape_cast %108 : vector<4x8x8xf32> to vector<32x8xf32>
    %110 = arith.truncf %109 : vector<32x8xf32> to vector<32x8xbf16>
    %111 = vector.extract_strided_slice %25 {offsets = [8, 0], sizes = [8, 32], strides = [1, 1]} : vector<32x32xbf16> to vector<8x32xbf16>
    %cst_69 = arith.constant dense<0.000000e+00> : vector<32x32xf32>
    %112 = tpu.matmul %110, %111, %cst_69 {dimension_numbers = #tpu.dot_dimension_numbers<[1], [0], [0], [1], [0, 0, 1, 1], [], []>} : vector<32x8xbf16>, vector<8x32xbf16>, vector<32x32xf32> -> vector<32x32xf32>
    %113 = arith.addf %84, %112 : vector<32x32xf32>
    %114 = vector.extract_strided_slice %54 {offsets = [0, 0, 16], sizes = [4, 8, 8], strides = [1, 1, 1]} : vector<4x8x32xf32> to vector<4x8x8xf32>
    %115 = arith.truncf %114 : vector<4x8x8xf32> to vector<4x8x8xbf16>
    %116 = vector.extract_strided_slice %55 {offsets = [0, 0, 16], sizes = [4, 8, 8], strides = [1, 1, 1]} : vector<4x8x32xf32> to vector<4x8x8xf32>
    %117 = arith.truncf %116 : vector<4x8x8xf32> to vector<4x8x8xbf16>
    %118 = vector.extract_strided_slice %56 {offsets = [0, 0, 16], sizes = [4, 8, 8], strides = [1, 1, 1]} : vector<4x8x32xf32> to vector<4x8x8xf32>
    %119 = arith.truncf %118 : vector<4x8x8xf32> to vector<4x8x8xbf16>
    "tpu.trace_start"() <{level = 10 : i32, message = "rpd,rqd->rpq"}> : () -> ()
    %cst_70 = arith.constant dense<0.000000e+00> : vector<4x8x8xf32>
    %120 = tpu.matmul %115, %117, %cst_70 {dimension_numbers = #tpu.dot_dimension_numbers<[2], [2], [1], [1], [0, 0, 0, 1, 1, 1], [0], [0]>} : vector<4x8x8xbf16>, vector<4x8x8xbf16>, vector<4x8x8xf32> -> vector<4x8x8xf32>
    "tpu.trace_stop"() : () -> ()
    %cst_71 = arith.constant 0.353553385 : f32
    %121 = vector.broadcast %cst_71 : f32 to vector<4x8x8xf32>
    %122 = arith.mulf %120, %121 : vector<4x8x8xf32>
    %123 = vector.shape_cast %11 : vector<1x8xf32> to vector<1x1x8xf32>
    %124 = vector.broadcast %123 : vector<1x1x8xf32> to vector<4x8x8xf32>
    %125 = arith.addf %122, %124 : vector<4x8x8xf32>
    %cst_72 = arith.constant dense<0xFF800000> : vector<4x8xf32>
    %126 = vector.multi_reduction <maximumf>, %125, %cst_72 [2] : vector<4x8x8xf32> to vector<4x8xf32>
    %127 = vector.shape_cast %126 : vector<4x8xf32> to vector<4x8x1xf32>
    %128 = vector.broadcast %127 : vector<4x8x1xf32> to vector<4x8x8xf32>
    %129 = arith.subf %125, %128 : vector<4x8x8xf32>
    %130 = math.exp %129 : vector<4x8x8xf32>
    %cst_73 = arith.constant dense<0.000000e+00> : vector<4x8xf32>
    %131 = vector.multi_reduction <add>, %130, %cst_73 [2] : vector<4x8x8xf32> to vector<4x8xf32>
    %132 = vector.shape_cast %131 : vector<4x8xf32> to vector<4x8x1xf32>
    %133 = tpu.reciprocal %132 {approx = true} : vector<4x8x1xf32> -> vector<4x8x1xf32>
    %134 = vector.broadcast %133 : vector<4x8x1xf32> to vector<4x8x8xf32>
    %135 = arith.mulf %130, %134 : vector<4x8x8xf32>
    %136 = arith.truncf %135 : vector<4x8x8xf32> to vector<4x8x8xbf16>
    "tpu.trace_start"() <{level = 10 : i32, message = "rpq,rqd->rpd"}> : () -> ()
    %cst_74 = arith.constant dense<0.000000e+00> : vector<4x8x8xf32>
    %137 = tpu.matmul %136, %119, %cst_74 {dimension_numbers = #tpu.dot_dimension_numbers<[2], [1], [1], [2], [0, 0, 0, 1, 1, 2], [0], [0]>} : vector<4x8x8xbf16>, vector<4x8x8xbf16>, vector<4x8x8xf32> -> vector<4x8x8xf32>
    "tpu.trace_stop"() : () -> ()
    %138 = vector.shape_cast %137 : vector<4x8x8xf32> to vector<32x8xf32>
    %139 = arith.truncf %138 : vector<32x8xf32> to vector<32x8xbf16>
    %140 = vector.extract_strided_slice %25 {offsets = [16, 0], sizes = [8, 32], strides = [1, 1]} : vector<32x32xbf16> to vector<8x32xbf16>
    %cst_75 = arith.constant dense<0.000000e+00> : vector<32x32xf32>
    %141 = tpu.matmul %139, %140, %cst_75 {dimension_numbers = #tpu.dot_dimension_numbers<[1], [0], [0], [1], [0, 0, 1, 1], [], []>} : vector<32x8xbf16>, vector<8x32xbf16>, vector<32x32xf32> -> vector<32x32xf32>
    %142 = arith.addf %113, %141 : vector<32x32xf32>
    %143 = vector.extract_strided_slice %54 {offsets = [0, 0, 24], sizes = [4, 8, 8], strides = [1, 1, 1]} : vector<4x8x32xf32> to vector<4x8x8xf32>
    %144 = arith.truncf %143 : vector<4x8x8xf32> to vector<4x8x8xbf16>
    %145 = vector.extract_strided_slice %55 {offsets = [0, 0, 24], sizes = [4, 8, 8], strides = [1, 1, 1]} : vector<4x8x32xf32> to vector<4x8x8xf32>
    %146 = arith.truncf %145 : vector<4x8x8xf32> to vector<4x8x8xbf16>
    %147 = vector.extract_strided_slice %56 {offsets = [0, 0, 24], sizes = [4, 8, 8], strides = [1, 1, 1]} : vector<4x8x32xf32> to vector<4x8x8xf32>
    %148 = arith.truncf %147 : vector<4x8x8xf32> to vector<4x8x8xbf16>
    "tpu.trace_start"() <{level = 10 : i32, message = "rpd,rqd->rpq"}> : () -> ()
    %cst_76 = arith.constant dense<0.000000e+00> : vector<4x8x8xf32>
    %149 = tpu.matmul %144, %146, %cst_76 {dimension_numbers = #tpu.dot_dimension_numbers<[2], [2], [1], [1], [0, 0, 0, 1, 1, 1], [0], [0]>} : vector<4x8x8xbf16>, vector<4x8x8xbf16>, vector<4x8x8xf32> -> vector<4x8x8xf32>
    "tpu.trace_stop"() : () -> ()
    %cst_77 = arith.constant 0.353553385 : f32
    %150 = vector.broadcast %cst_77 : f32 to vector<4x8x8xf32>
    %151 = arith.mulf %149, %150 : vector<4x8x8xf32>
    %152 = vector.shape_cast %11 : vector<1x8xf32> to vector<1x1x8xf32>
    %153 = vector.broadcast %152 : vector<1x1x8xf32> to vector<4x8x8xf32>
    %154 = arith.addf %151, %153 : vector<4x8x8xf32>
    %cst_78 = arith.constant dense<0xFF800000> : vector<4x8xf32>
    %155 = vector.multi_reduction <maximumf>, %154, %cst_78 [2] : vector<4x8x8xf32> to vector<4x8xf32>
    %156 = vector.shape_cast %155 : vector<4x8xf32> to vector<4x8x1xf32>
    %157 = vector.broadcast %156 : vector<4x8x1xf32> to vector<4x8x8xf32>
    %158 = arith.subf %154, %157 : vector<4x8x8xf32>
    %159 = math.exp %158 : vector<4x8x8xf32>
    %cst_79 = arith.constant dense<0.000000e+00> : vector<4x8xf32>
    %160 = vector.multi_reduction <add>, %159, %cst_79 [2] : vector<4x8x8xf32> to vector<4x8xf32>
    %161 = vector.shape_cast %160 : vector<4x8xf32> to vector<4x8x1xf32>
    %162 = tpu.reciprocal %161 {approx = true} : vector<4x8x1xf32> -> vector<4x8x1xf32>
    %163 = vector.broadcast %162 : vector<4x8x1xf32> to vector<4x8x8xf32>
    %164 = arith.mulf %159, %163 : vector<4x8x8xf32>
    %165 = arith.truncf %164 : vector<4x8x8xf32> to vector<4x8x8xbf16>
    "tpu.trace_start"() <{level = 10 : i32, message = "rpq,rqd->rpd"}> : () -> ()
    %cst_80 = arith.constant dense<0.000000e+00> : vector<4x8x8xf32>
    %166 = tpu.matmul %165, %148, %cst_80 {dimension_numbers = #tpu.dot_dimension_numbers<[2], [1], [1], [2], [0, 0, 0, 1, 1, 2], [0], [0]>} : vector<4x8x8xbf16>, vector<4x8x8xbf16>, vector<4x8x8xf32> -> vector<4x8x8xf32>
    "tpu.trace_stop"() : () -> ()
    %167 = vector.shape_cast %166 : vector<4x8x8xf32> to vector<32x8xf32>
    %168 = arith.truncf %167 : vector<32x8xf32> to vector<32x8xbf16>
    %169 = vector.extract_strided_slice %25 {offsets = [24, 0], sizes = [8, 32], strides = [1, 1]} : vector<32x32xbf16> to vector<8x32xbf16>
    %cst_81 = arith.constant dense<0.000000e+00> : vector<32x32xf32>
    %170 = tpu.matmul %168, %169, %cst_81 {dimension_numbers = #tpu.dot_dimension_numbers<[1], [0], [0], [1], [0, 0, 1, 1], [], []>} : vector<32x8xbf16>, vector<8x32xbf16>, vector<32x32xf32> -> vector<32x32xf32>
    %171 = arith.addf %142, %170 : vector<32x32xf32>
    %172 = vector.broadcast %27 : vector<1x32xf32> to vector<32x32xf32>
    %173 = arith.addf %171, %172 : vector<32x32xf32>
    %174 = arith.addf %5, %173 : vector<32x32xf32>
    %cst_82 = arith.constant dense<0.000000e+00> : vector<32xf32>
    %175 = vector.multi_reduction <add>, %174, %cst_82 [1] : vector<32x32xf32> to vector<32xf32>
    %176 = vector.shape_cast %175 : vector<32xf32> to vector<32x1xf32>
    %cst_83 = arith.constant 3.200000e+01 : f32
    %177 = vector.broadcast %cst_83 : f32 to vector<32x1xf32>
    %178 = arith.divf %176, %177 : vector<32x1xf32>
    %179 = vector.broadcast %178 : vector<32x1xf32> to vector<32x32xf32>
    %180 = arith.subf %174, %179 : vector<32x32xf32>
    %181 = arith.mulf %180, %180 : vector<32x32xf32>
    %cst_84 = arith.constant dense<0.000000e+00> : vector<32xf32>
    %182 = vector.multi_reduction <add>, %181, %cst_84 [1] : vector<32x32xf32> to vector<32xf32>
    %183 = vector.shape_cast %182 : vector<32xf32> to vector<32x1xf32>
    %cst_85 = arith.constant 3.200000e+01 : f32
    %184 = vector.broadcast %cst_85 : f32 to vector<32x1xf32>
    %185 = arith.divf %183, %184 : vector<32x1xf32>
    %186 = vector.broadcast %178 : vector<32x1xf32> to vector<32x32xf32>
    %187 = arith.subf %174, %186 : vector<32x32xf32>
    %cst_86 = arith.constant 9.99999974E-6 : f32
    %188 = vector.broadcast %cst_86 : f32 to vector<32x1xf32>
    %189 = arith.addf %185, %188 : vector<32x1xf32>
    %190 = math.rsqrt %189 : vector<32x1xf32>
    %191 = vector.broadcast %190 : vector<32x1xf32> to vector<32x32xf32>
    %192 = arith.mulf %187, %191 : vector<32x32xf32>
    %193 = vector.broadcast %29 : vector<1x32xf32> to vector<32x32xf32>
    %194 = arith.mulf %192, %193 : vector<32x32xf32>
    %195 = vector.broadcast %31 : vector<1x32xf32> to vector<32x32xf32>
    %196 = arith.addf %194, %195 : vector<32x32xf32>
    %197 = arith.truncf %196 : vector<32x32xf32> to vector<32x32xbf16>
    %cst_87 = arith.constant dense<0.000000e+00> : vector<32x64xf32>
    %198 = tpu.matmul %197, %33, %cst_87 {dimension_numbers = #tpu.dot_dimension_numbers<[1], [0], [0], [1], [0, 0, 1, 1], [], []>} : vector<32x32xbf16>, vector<32x64xbf16>, vector<32x64xf32> -> vector<32x64xf32>
    %199 = vector.broadcast %35 : vector<1x64xf32> to vector<32x64xf32>
    %200 = arith.addf %198, %199 : vector<32x64xf32>
    %cst_88 = arith.constant 0.000000e+00 : f32
    %201 = vector.broadcast %cst_88 : f32 to vector<32x64xf32>
    %202 = arith.maximumf %200, %201 : vector<32x64xf32>
    %203 = arith.truncf %202 : vector<32x64xf32> to vector<32x64xbf16>
    %cst_89 = arith.constant dense<0.000000e+00> : vector<32x32xf32>
    %204 = tpu.matmul %203, %37, %cst_89 {dimension_numbers = #tpu.dot_dimension_numbers<[1], [0], [0], [1], [0, 0, 1, 1], [], []>} : vector<32x64xbf16>, vector<64x32xbf16>, vector<32x32xf32> -> vector<32x32xf32>
    %205 = vector.broadcast %39 : vector<1x32xf32> to vector<32x32xf32>
    %206 = arith.addf %204, %205 : vector<32x32xf32>
    %207 = arith.addf %196, %206 : vector<32x32xf32>
    %cst_90 = arith.constant dense<0.000000e+00> : vector<32xf32>
    %208 = vector.multi_reduction <add>, %207, %cst_90 [1] : vector<32x32xf32> to vector<32xf32>
    %209 = vector.shape_cast %208 : vector<32xf32> to vector<32x1xf32>
    %cst_91 = arith.constant 3.200000e+01 : f32
    %210 = vector.broadcast %cst_91 : f32 to vector<32x1xf32>
    %211 = arith.divf %209, %210 : vector<32x1xf32>
    %212 = vector.broadcast %211 : vector<32x1xf32> to vector<32x32xf32>
    %213 = arith.subf %207, %212 : vector<32x32xf32>
    %214 = arith.mulf %213, %213 : vector<32x32xf32>
    %cst_92 = arith.constant dense<0.000000e+00> : vector<32xf32>
    %215 = vector.multi_reduction <add>, %214, %cst_92 [1] : vector<32x32xf32> to vector<32xf32>
    %216 = vector.shape_cast %215 : vector<32xf32> to vector<32x1xf32>
    %cst_93 = arith.constant 3.200000e+01 : f32
    %217 = vector.broadcast %cst_93 : f32 to vector<32x1xf32>
    %218 = arith.divf %216, %217 : vector<32x1xf32>
    %219 = vector.broadcast %211 : vector<32x1xf32> to vector<32x32xf32>
    %220 = arith.subf %207, %219 : vector<32x32xf32>
    %cst_94 = arith.constant 9.99999974E-6 : f32
    %221 = vector.broadcast %cst_94 : f32 to vector<32x1xf32>
    %222 = arith.addf %218, %221 : vector<32x1xf32>
    %223 = math.rsqrt %222 : vector<32x1xf32>
    %224 = vector.broadcast %223 : vector<32x1xf32> to vector<32x32xf32>
    %225 = arith.mulf %220, %224 : vector<32x32xf32>
    %226 = vector.broadcast %41 : vector<1x32xf32> to vector<32x32xf32>
    %227 = arith.mulf %225, %226 : vector<32x32xf32>
    %228 = vector.broadcast %43 : vector<1x32xf32> to vector<32x32xf32>
    %229 = arith.addf %227, %228 : vector<32x32xf32>
    %c1 = arith.constant 1 : index
    %c0_95 = arith.constant 0 : index
    %c0_96 = arith.constant 0 : index
    %230 = vector.load %arg4[%c1, %c0_95, %c0_96] : memref<2x32x32xbf16, #tpu.memory_space<vmem>>, vector<1x32x32xbf16>
    %231 = vector.shape_cast %230 : vector<1x32x32xbf16> to vector<32x32xbf16>
    %c1_97 = arith.constant 1 : index
    %c0_98 = arith.constant 0 : index
    %c0_99 = arith.constant 0 : index
    %232 = vector.load %arg5[%c1_97, %c0_98, %c0_99] : memref<2x1x32xf32, #tpu.memory_space<vmem>>, vector<1x1x32xf32>
    %233 = vector.shape_cast %232 : vector<1x1x32xf32> to vector<1x32xf32>
    %c1_100 = arith.constant 1 : index
    %c0_101 = arith.constant 0 : index
    %c0_102 = arith.constant 0 : index
    %234 = vector.load %arg6[%c1_100, %c0_101, %c0_102] : memref<2x32x32xbf16, #tpu.memory_space<vmem>>, vector<1x32x32xbf16>
    %235 = vector.shape_cast %234 : vector<1x32x32xbf16> to vector<32x32xbf16>
    %c1_103 = arith.constant 1 : index
    %c0_104 = arith.constant 0 : index
    %c0_105 = arith.constant 0 : index
    %236 = vector.load %arg7[%c1_103, %c0_104, %c0_105] : memref<2x1x32xf32, #tpu.memory_space<vmem>>, vector<1x1x32xf32>
    %237 = vector.shape_cast %236 : vector<1x1x32xf32> to vector<1x32xf32>
    %c1_106 = arith.constant 1 : index
    %c0_107 = arith.constant 0 : index
    %c0_108 = arith.constant 0 : index
    %238 = vector.load %arg8[%c1_106, %c0_107, %c0_108] : memref<2x32x32xbf16, #tpu.memory_space<vmem>>, vector<1x32x32xbf16>
    %239 = vector.shape_cast %238 : vector<1x32x32xbf16> to vector<32x32xbf16>
    %c1_109 = arith.constant 1 : index
    %c0_110 = arith.constant 0 : index
    %c0_111 = arith.constant 0 : index
    %240 = vector.load %arg9[%c1_109, %c0_110, %c0_111] : memref<2x1x32xf32, #tpu.memory_space<vmem>>, vector<1x1x32xf32>
    %241 = vector.shape_cast %240 : vector<1x1x32xf32> to vector<1x32xf32>
    %c1_112 = arith.constant 1 : index
    %c0_113 = arith.constant 0 : index
    %c0_114 = arith.constant 0 : index
    %242 = vector.load %arg10[%c1_112, %c0_113, %c0_114] : memref<2x32x32xbf16, #tpu.memory_space<vmem>>, vector<1x32x32xbf16>
    %243 = vector.shape_cast %242 : vector<1x32x32xbf16> to vector<32x32xbf16>
    %c1_115 = arith.constant 1 : index
    %c0_116 = arith.constant 0 : index
    %c0_117 = arith.constant 0 : index
    %244 = vector.load %arg11[%c1_115, %c0_116, %c0_117] : memref<2x1x32xf32, #tpu.memory_space<vmem>>, vector<1x1x32xf32>
    %245 = vector.shape_cast %244 : vector<1x1x32xf32> to vector<1x32xf32>
    %c1_118 = arith.constant 1 : index
    %c0_119 = arith.constant 0 : index
    %c0_120 = arith.constant 0 : index
    %246 = vector.load %arg12[%c1_118, %c0_119, %c0_120] : memref<2x1x32xf32, #tpu.memory_space<vmem>>, vector<1x1x32xf32>
    %247 = vector.shape_cast %246 : vector<1x1x32xf32> to vector<1x32xf32>
    %c1_121 = arith.constant 1 : index
    %c0_122 = arith.constant 0 : index
    %c0_123 = arith.constant 0 : index
    %248 = vector.load %arg13[%c1_121, %c0_122, %c0_123] : memref<2x1x32xf32, #tpu.memory_space<vmem>>, vector<1x1x32xf32>
    %249 = vector.shape_cast %248 : vector<1x1x32xf32> to vector<1x32xf32>
    %c1_124 = arith.constant 1 : index
    %c0_125 = arith.constant 0 : index
    %c0_126 = arith.constant 0 : index
    %250 = vector.load %arg14[%c1_124, %c0_125, %c0_126] : memref<2x32x64xbf16, #tpu.memory_space<vmem>>, vector<1x32x64xbf16>
    %251 = vector.shape_cast %250 : vector<1x32x64xbf16> to vector<32x64xbf16>
    %c1_127 = arith.constant 1 : index
    %c0_128 = arith.constant 0 : index
    %c0_129 = arith.constant 0 : index
    %252 = vector.load %arg15[%c1_127, %c0_128, %c0_129] : memref<2x1x64xf32, #tpu.memory_space<vmem>>, vector<1x1x64xf32>
    %253 = vector.shape_cast %252 : vector<1x1x64xf32> to vector<1x64xf32>
    %c1_130 = arith.constant 1 : index
    %c0_131 = arith.constant 0 : index
    %c0_132 = arith.constant 0 : index
    %254 = vector.load %arg16[%c1_130, %c0_131, %c0_132] : memref<2x64x32xbf16, #tpu.memory_space<vmem>>, vector<1x64x32xbf16>
    %255 = vector.shape_cast %254 : vector<1x64x32xbf16> to vector<64x32xbf16>
    %c1_133 = arith.constant 1 : index
    %c0_134 = arith.constant 0 : index
    %c0_135 = arith.constant 0 : index
    %256 = vector.load %arg17[%c1_133, %c0_134, %c0_135] : memref<2x1x32xf32, #tpu.memory_space<vmem>>, vector<1x1x32xf32>
    %257 = vector.shape_cast %256 : vector<1x1x32xf32> to vector<1x32xf32>
    %c1_136 = arith.constant 1 : index
    %c0_137 = arith.constant 0 : index
    %c0_138 = arith.constant 0 : index
    %258 = vector.load %arg18[%c1_136, %c0_137, %c0_138] : memref<2x1x32xf32, #tpu.memory_space<vmem>>, vector<1x1x32xf32>
    %259 = vector.shape_cast %258 : vector<1x1x32xf32> to vector<1x32xf32>
    %c1_139 = arith.constant 1 : index
    %c0_140 = arith.constant 0 : index
    %c0_141 = arith.constant 0 : index
    %260 = vector.load %arg19[%c1_139, %c0_140, %c0_141] : memref<2x1x32xf32, #tpu.memory_space<vmem>>, vector<1x1x32xf32>
    %261 = vector.shape_cast %260 : vector<1x1x32xf32> to vector<1x32xf32>
    %262 = arith.truncf %229 : vector<32x32xf32> to vector<32x32xbf16>
    %cst_142 = arith.constant dense<0.000000e+00> : vector<32x32xf32>
    %263 = tpu.matmul %262, %231, %cst_142 {dimension_numbers = #tpu.dot_dimension_numbers<[1], [0], [0], [1], [0, 0, 1, 1], [], []>} : vector<32x32xbf16>, vector<32x32xbf16>, vector<32x32xf32> -> vector<32x32xf32>
    %264 = vector.broadcast %233 : vector<1x32xf32> to vector<32x32xf32>
    %265 = arith.addf %263, %264 : vector<32x32xf32>
    %cst_143 = arith.constant dense<0.000000e+00> : vector<32x32xf32>
    %266 = tpu.matmul %262, %235, %cst_143 {dimension_numbers = #tpu.dot_dimension_numbers<[1], [0], [0], [1], [0, 0, 1, 1], [], []>} : vector<32x32xbf16>, vector<32x32xbf16>, vector<32x32xf32> -> vector<32x32xf32>
    %267 = vector.broadcast %237 : vector<1x32xf32> to vector<32x32xf32>
    %268 = arith.addf %266, %267 : vector<32x32xf32>
    %cst_144 = arith.constant dense<0.000000e+00> : vector<32x32xf32>
    %269 = tpu.matmul %262, %239, %cst_144 {dimension_numbers = #tpu.dot_dimension_numbers<[1], [0], [0], [1], [0, 0, 1, 1], [], []>} : vector<32x32xbf16>, vector<32x32xbf16>, vector<32x32xf32> -> vector<32x32xf32>
    %270 = vector.broadcast %241 : vector<1x32xf32> to vector<32x32xf32>
    %271 = arith.addf %269, %270 : vector<32x32xf32>
    %272 = vector.shape_cast %265 : vector<32x32xf32> to vector<4x8x32xf32>
    %273 = vector.shape_cast %268 : vector<32x32xf32> to vector<4x8x32xf32>
    %274 = vector.shape_cast %271 : vector<32x32xf32> to vector<4x8x32xf32>
    %275 = vector.extract_strided_slice %272 {offsets = [0, 0, 0], sizes = [4, 8, 8], strides = [1, 1, 1]} : vector<4x8x32xf32> to vector<4x8x8xf32>
    %276 = arith.truncf %275 : vector<4x8x8xf32> to vector<4x8x8xbf16>
    %277 = vector.extract_strided_slice %273 {offsets = [0, 0, 0], sizes = [4, 8, 8], strides = [1, 1, 1]} : vector<4x8x32xf32> to vector<4x8x8xf32>
    %278 = arith.truncf %277 : vector<4x8x8xf32> to vector<4x8x8xbf16>
    %279 = vector.extract_strided_slice %274 {offsets = [0, 0, 0], sizes = [4, 8, 8], strides = [1, 1, 1]} : vector<4x8x32xf32> to vector<4x8x8xf32>
    %280 = arith.truncf %279 : vector<4x8x8xf32> to vector<4x8x8xbf16>
    "tpu.trace_start"() <{level = 10 : i32, message = "rpd,rqd->rpq"}> : () -> ()
    %cst_145 = arith.constant dense<0.000000e+00> : vector<4x8x8xf32>
    %281 = tpu.matmul %276, %278, %cst_145 {dimension_numbers = #tpu.dot_dimension_numbers<[2], [2], [1], [1], [0, 0, 0, 1, 1, 1], [0], [0]>} : vector<4x8x8xbf16>, vector<4x8x8xbf16>, vector<4x8x8xf32> -> vector<4x8x8xf32>
    "tpu.trace_stop"() : () -> ()
    %cst_146 = arith.constant 0.353553385 : f32
    %282 = vector.broadcast %cst_146 : f32 to vector<4x8x8xf32>
    %283 = arith.mulf %281, %282 : vector<4x8x8xf32>
    %284 = vector.shape_cast %11 : vector<1x8xf32> to vector<1x1x8xf32>
    %285 = vector.broadcast %284 : vector<1x1x8xf32> to vector<4x8x8xf32>
    %286 = arith.addf %283, %285 : vector<4x8x8xf32>
    %cst_147 = arith.constant dense<0xFF800000> : vector<4x8xf32>
    %287 = vector.multi_reduction <maximumf>, %286, %cst_147 [2] : vector<4x8x8xf32> to vector<4x8xf32>
    %288 = vector.shape_cast %287 : vector<4x8xf32> to vector<4x8x1xf32>
    %289 = vector.broadcast %288 : vector<4x8x1xf32> to vector<4x8x8xf32>
    %290 = arith.subf %286, %289 : vector<4x8x8xf32>
    %291 = math.exp %290 : vector<4x8x8xf32>
    %cst_148 = arith.constant dense<0.000000e+00> : vector<4x8xf32>
    %292 = vector.multi_reduction <add>, %291, %cst_148 [2] : vector<4x8x8xf32> to vector<4x8xf32>
    %293 = vector.shape_cast %292 : vector<4x8xf32> to vector<4x8x1xf32>
    %294 = tpu.reciprocal %293 {approx = true} : vector<4x8x1xf32> -> vector<4x8x1xf32>
    %295 = vector.broadcast %294 : vector<4x8x1xf32> to vector<4x8x8xf32>
    %296 = arith.mulf %291, %295 : vector<4x8x8xf32>
    %297 = arith.truncf %296 : vector<4x8x8xf32> to vector<4x8x8xbf16>
    "tpu.trace_start"() <{level = 10 : i32, message = "rpq,rqd->rpd"}> : () -> ()
    %cst_149 = arith.constant dense<0.000000e+00> : vector<4x8x8xf32>
    %298 = tpu.matmul %297, %280, %cst_149 {dimension_numbers = #tpu.dot_dimension_numbers<[2], [1], [1], [2], [0, 0, 0, 1, 1, 2], [0], [0]>} : vector<4x8x8xbf16>, vector<4x8x8xbf16>, vector<4x8x8xf32> -> vector<4x8x8xf32>
    "tpu.trace_stop"() : () -> ()
    %299 = vector.shape_cast %298 : vector<4x8x8xf32> to vector<32x8xf32>
    %300 = arith.truncf %299 : vector<32x8xf32> to vector<32x8xbf16>
    %301 = vector.extract_strided_slice %243 {offsets = [0, 0], sizes = [8, 32], strides = [1, 1]} : vector<32x32xbf16> to vector<8x32xbf16>
    %cst_150 = arith.constant dense<0.000000e+00> : vector<32x32xf32>
    %302 = tpu.matmul %300, %301, %cst_150 {dimension_numbers = #tpu.dot_dimension_numbers<[1], [0], [0], [1], [0, 0, 1, 1], [], []>} : vector<32x8xbf16>, vector<8x32xbf16>, vector<32x32xf32> -> vector<32x32xf32>
    %303 = vector.extract_strided_slice %272 {offsets = [0, 0, 8], sizes = [4, 8, 8], strides = [1, 1, 1]} : vector<4x8x32xf32> to vector<4x8x8xf32>
    %304 = arith.truncf %303 : vector<4x8x8xf32> to vector<4x8x8xbf16>
    %305 = vector.extract_strided_slice %273 {offsets = [0, 0, 8], sizes = [4, 8, 8], strides = [1, 1, 1]} : vector<4x8x32xf32> to vector<4x8x8xf32>
    %306 = arith.truncf %305 : vector<4x8x8xf32> to vector<4x8x8xbf16>
    %307 = vector.extract_strided_slice %274 {offsets = [0, 0, 8], sizes = [4, 8, 8], strides = [1, 1, 1]} : vector<4x8x32xf32> to vector<4x8x8xf32>
    %308 = arith.truncf %307 : vector<4x8x8xf32> to vector<4x8x8xbf16>
    "tpu.trace_start"() <{level = 10 : i32, message = "rpd,rqd->rpq"}> : () -> ()
    %cst_151 = arith.constant dense<0.000000e+00> : vector<4x8x8xf32>
    %309 = tpu.matmul %304, %306, %cst_151 {dimension_numbers = #tpu.dot_dimension_numbers<[2], [2], [1], [1], [0, 0, 0, 1, 1, 1], [0], [0]>} : vector<4x8x8xbf16>, vector<4x8x8xbf16>, vector<4x8x8xf32> -> vector<4x8x8xf32>
    "tpu.trace_stop"() : () -> ()
    %cst_152 = arith.constant 0.353553385 : f32
    %310 = vector.broadcast %cst_152 : f32 to vector<4x8x8xf32>
    %311 = arith.mulf %309, %310 : vector<4x8x8xf32>
    %312 = vector.shape_cast %11 : vector<1x8xf32> to vector<1x1x8xf32>
    %313 = vector.broadcast %312 : vector<1x1x8xf32> to vector<4x8x8xf32>
    %314 = arith.addf %311, %313 : vector<4x8x8xf32>
    %cst_153 = arith.constant dense<0xFF800000> : vector<4x8xf32>
    %315 = vector.multi_reduction <maximumf>, %314, %cst_153 [2] : vector<4x8x8xf32> to vector<4x8xf32>
    %316 = vector.shape_cast %315 : vector<4x8xf32> to vector<4x8x1xf32>
    %317 = vector.broadcast %316 : vector<4x8x1xf32> to vector<4x8x8xf32>
    %318 = arith.subf %314, %317 : vector<4x8x8xf32>
    %319 = math.exp %318 : vector<4x8x8xf32>
    %cst_154 = arith.constant dense<0.000000e+00> : vector<4x8xf32>
    %320 = vector.multi_reduction <add>, %319, %cst_154 [2] : vector<4x8x8xf32> to vector<4x8xf32>
    %321 = vector.shape_cast %320 : vector<4x8xf32> to vector<4x8x1xf32>
    %322 = tpu.reciprocal %321 {approx = true} : vector<4x8x1xf32> -> vector<4x8x1xf32>
    %323 = vector.broadcast %322 : vector<4x8x1xf32> to vector<4x8x8xf32>
    %324 = arith.mulf %319, %323 : vector<4x8x8xf32>
    %325 = arith.truncf %324 : vector<4x8x8xf32> to vector<4x8x8xbf16>
    "tpu.trace_start"() <{level = 10 : i32, message = "rpq,rqd->rpd"}> : () -> ()
    %cst_155 = arith.constant dense<0.000000e+00> : vector<4x8x8xf32>
    %326 = tpu.matmul %325, %308, %cst_155 {dimension_numbers = #tpu.dot_dimension_numbers<[2], [1], [1], [2], [0, 0, 0, 1, 1, 2], [0], [0]>} : vector<4x8x8xbf16>, vector<4x8x8xbf16>, vector<4x8x8xf32> -> vector<4x8x8xf32>
    "tpu.trace_stop"() : () -> ()
    %327 = vector.shape_cast %326 : vector<4x8x8xf32> to vector<32x8xf32>
    %328 = arith.truncf %327 : vector<32x8xf32> to vector<32x8xbf16>
    %329 = vector.extract_strided_slice %243 {offsets = [8, 0], sizes = [8, 32], strides = [1, 1]} : vector<32x32xbf16> to vector<8x32xbf16>
    %cst_156 = arith.constant dense<0.000000e+00> : vector<32x32xf32>
    %330 = tpu.matmul %328, %329, %cst_156 {dimension_numbers = #tpu.dot_dimension_numbers<[1], [0], [0], [1], [0, 0, 1, 1], [], []>} : vector<32x8xbf16>, vector<8x32xbf16>, vector<32x32xf32> -> vector<32x32xf32>
    %331 = arith.addf %302, %330 : vector<32x32xf32>
    %332 = vector.extract_strided_slice %272 {offsets = [0, 0, 16], sizes = [4, 8, 8], strides = [1, 1, 1]} : vector<4x8x32xf32> to vector<4x8x8xf32>
    %333 = arith.truncf %332 : vector<4x8x8xf32> to vector<4x8x8xbf16>
    %334 = vector.extract_strided_slice %273 {offsets = [0, 0, 16], sizes = [4, 8, 8], strides = [1, 1, 1]} : vector<4x8x32xf32> to vector<4x8x8xf32>
    %335 = arith.truncf %334 : vector<4x8x8xf32> to vector<4x8x8xbf16>
    %336 = vector.extract_strided_slice %274 {offsets = [0, 0, 16], sizes = [4, 8, 8], strides = [1, 1, 1]} : vector<4x8x32xf32> to vector<4x8x8xf32>
    %337 = arith.truncf %336 : vector<4x8x8xf32> to vector<4x8x8xbf16>
    "tpu.trace_start"() <{level = 10 : i32, message = "rpd,rqd->rpq"}> : () -> ()
    %cst_157 = arith.constant dense<0.000000e+00> : vector<4x8x8xf32>
    %338 = tpu.matmul %333, %335, %cst_157 {dimension_numbers = #tpu.dot_dimension_numbers<[2], [2], [1], [1], [0, 0, 0, 1, 1, 1], [0], [0]>} : vector<4x8x8xbf16>, vector<4x8x8xbf16>, vector<4x8x8xf32> -> vector<4x8x8xf32>
    "tpu.trace_stop"() : () -> ()
    %cst_158 = arith.constant 0.353553385 : f32
    %339 = vector.broadcast %cst_158 : f32 to vector<4x8x8xf32>
    %340 = arith.mulf %338, %339 : vector<4x8x8xf32>
    %341 = vector.shape_cast %11 : vector<1x8xf32> to vector<1x1x8xf32>
    %342 = vector.broadcast %341 : vector<1x1x8xf32> to vector<4x8x8xf32>
    %343 = arith.addf %340, %342 : vector<4x8x8xf32>
    %cst_159 = arith.constant dense<0xFF800000> : vector<4x8xf32>
    %344 = vector.multi_reduction <maximumf>, %343, %cst_159 [2] : vector<4x8x8xf32> to vector<4x8xf32>
    %345 = vector.shape_cast %344 : vector<4x8xf32> to vector<4x8x1xf32>
    %346 = vector.broadcast %345 : vector<4x8x1xf32> to vector<4x8x8xf32>
    %347 = arith.subf %343, %346 : vector<4x8x8xf32>
    %348 = math.exp %347 : vector<4x8x8xf32>
    %cst_160 = arith.constant dense<0.000000e+00> : vector<4x8xf32>
    %349 = vector.multi_reduction <add>, %348, %cst_160 [2] : vector<4x8x8xf32> to vector<4x8xf32>
    %350 = vector.shape_cast %349 : vector<4x8xf32> to vector<4x8x1xf32>
    %351 = tpu.reciprocal %350 {approx = true} : vector<4x8x1xf32> -> vector<4x8x1xf32>
    %352 = vector.broadcast %351 : vector<4x8x1xf32> to vector<4x8x8xf32>
    %353 = arith.mulf %348, %352 : vector<4x8x8xf32>
    %354 = arith.truncf %353 : vector<4x8x8xf32> to vector<4x8x8xbf16>
    "tpu.trace_start"() <{level = 10 : i32, message = "rpq,rqd->rpd"}> : () -> ()
    %cst_161 = arith.constant dense<0.000000e+00> : vector<4x8x8xf32>
    %355 = tpu.matmul %354, %337, %cst_161 {dimension_numbers = #tpu.dot_dimension_numbers<[2], [1], [1], [2], [0, 0, 0, 1, 1, 2], [0], [0]>} : vector<4x8x8xbf16>, vector<4x8x8xbf16>, vector<4x8x8xf32> -> vector<4x8x8xf32>
    "tpu.trace_stop"() : () -> ()
    %356 = vector.shape_cast %355 : vector<4x8x8xf32> to vector<32x8xf32>
    %357 = arith.truncf %356 : vector<32x8xf32> to vector<32x8xbf16>
    %358 = vector.extract_strided_slice %243 {offsets = [16, 0], sizes = [8, 32], strides = [1, 1]} : vector<32x32xbf16> to vector<8x32xbf16>
    %cst_162 = arith.constant dense<0.000000e+00> : vector<32x32xf32>
    %359 = tpu.matmul %357, %358, %cst_162 {dimension_numbers = #tpu.dot_dimension_numbers<[1], [0], [0], [1], [0, 0, 1, 1], [], []>} : vector<32x8xbf16>, vector<8x32xbf16>, vector<32x32xf32> -> vector<32x32xf32>
    %360 = arith.addf %331, %359 : vector<32x32xf32>
    %361 = vector.extract_strided_slice %272 {offsets = [0, 0, 24], sizes = [4, 8, 8], strides = [1, 1, 1]} : vector<4x8x32xf32> to vector<4x8x8xf32>
    %362 = arith.truncf %361 : vector<4x8x8xf32> to vector<4x8x8xbf16>
    %363 = vector.extract_strided_slice %273 {offsets = [0, 0, 24], sizes = [4, 8, 8], strides = [1, 1, 1]} : vector<4x8x32xf32> to vector<4x8x8xf32>
    %364 = arith.truncf %363 : vector<4x8x8xf32> to vector<4x8x8xbf16>
    %365 = vector.extract_strided_slice %274 {offsets = [0, 0, 24], sizes = [4, 8, 8], strides = [1, 1, 1]} : vector<4x8x32xf32> to vector<4x8x8xf32>
    %366 = arith.truncf %365 : vector<4x8x8xf32> to vector<4x8x8xbf16>
    "tpu.trace_start"() <{level = 10 : i32, message = "rpd,rqd->rpq"}> : () -> ()
    %cst_163 = arith.constant dense<0.000000e+00> : vector<4x8x8xf32>
    %367 = tpu.matmul %362, %364, %cst_163 {dimension_numbers = #tpu.dot_dimension_numbers<[2], [2], [1], [1], [0, 0, 0, 1, 1, 1], [0], [0]>} : vector<4x8x8xbf16>, vector<4x8x8xbf16>, vector<4x8x8xf32> -> vector<4x8x8xf32>
    "tpu.trace_stop"() : () -> ()
    %cst_164 = arith.constant 0.353553385 : f32
    %368 = vector.broadcast %cst_164 : f32 to vector<4x8x8xf32>
    %369 = arith.mulf %367, %368 : vector<4x8x8xf32>
    %370 = vector.shape_cast %11 : vector<1x8xf32> to vector<1x1x8xf32>
    %371 = vector.broadcast %370 : vector<1x1x8xf32> to vector<4x8x8xf32>
    %372 = arith.addf %369, %371 : vector<4x8x8xf32>
    %cst_165 = arith.constant dense<0xFF800000> : vector<4x8xf32>
    %373 = vector.multi_reduction <maximumf>, %372, %cst_165 [2] : vector<4x8x8xf32> to vector<4x8xf32>
    %374 = vector.shape_cast %373 : vector<4x8xf32> to vector<4x8x1xf32>
    %375 = vector.broadcast %374 : vector<4x8x1xf32> to vector<4x8x8xf32>
    %376 = arith.subf %372, %375 : vector<4x8x8xf32>
    %377 = math.exp %376 : vector<4x8x8xf32>
    %cst_166 = arith.constant dense<0.000000e+00> : vector<4x8xf32>
    %378 = vector.multi_reduction <add>, %377, %cst_166 [2] : vector<4x8x8xf32> to vector<4x8xf32>
    %379 = vector.shape_cast %378 : vector<4x8xf32> to vector<4x8x1xf32>
    %380 = tpu.reciprocal %379 {approx = true} : vector<4x8x1xf32> -> vector<4x8x1xf32>
    %381 = vector.broadcast %380 : vector<4x8x1xf32> to vector<4x8x8xf32>
    %382 = arith.mulf %377, %381 : vector<4x8x8xf32>
    %383 = arith.truncf %382 : vector<4x8x8xf32> to vector<4x8x8xbf16>
    "tpu.trace_start"() <{level = 10 : i32, message = "rpq,rqd->rpd"}> : () -> ()
    %cst_167 = arith.constant dense<0.000000e+00> : vector<4x8x8xf32>
    %384 = tpu.matmul %383, %366, %cst_167 {dimension_numbers = #tpu.dot_dimension_numbers<[2], [1], [1], [2], [0, 0, 0, 1, 1, 2], [0], [0]>} : vector<4x8x8xbf16>, vector<4x8x8xbf16>, vector<4x8x8xf32> -> vector<4x8x8xf32>
    "tpu.trace_stop"() : () -> ()
    %385 = vector.shape_cast %384 : vector<4x8x8xf32> to vector<32x8xf32>
    %386 = arith.truncf %385 : vector<32x8xf32> to vector<32x8xbf16>
    %387 = vector.extract_strided_slice %243 {offsets = [24, 0], sizes = [8, 32], strides = [1, 1]} : vector<32x32xbf16> to vector<8x32xbf16>
    %cst_168 = arith.constant dense<0.000000e+00> : vector<32x32xf32>
    %388 = tpu.matmul %386, %387, %cst_168 {dimension_numbers = #tpu.dot_dimension_numbers<[1], [0], [0], [1], [0, 0, 1, 1], [], []>} : vector<32x8xbf16>, vector<8x32xbf16>, vector<32x32xf32> -> vector<32x32xf32>
    %389 = arith.addf %360, %388 : vector<32x32xf32>
    %390 = vector.broadcast %245 : vector<1x32xf32> to vector<32x32xf32>
    %391 = arith.addf %389, %390 : vector<32x32xf32>
    %392 = arith.addf %229, %391 : vector<32x32xf32>
    %cst_169 = arith.constant dense<0.000000e+00> : vector<32xf32>
    %393 = vector.multi_reduction <add>, %392, %cst_169 [1] : vector<32x32xf32> to vector<32xf32>
    %394 = vector.shape_cast %393 : vector<32xf32> to vector<32x1xf32>
    %cst_170 = arith.constant 3.200000e+01 : f32
    %395 = vector.broadcast %cst_170 : f32 to vector<32x1xf32>
    %396 = arith.divf %394, %395 : vector<32x1xf32>
    %397 = vector.broadcast %396 : vector<32x1xf32> to vector<32x32xf32>
    %398 = arith.subf %392, %397 : vector<32x32xf32>
    %399 = arith.mulf %398, %398 : vector<32x32xf32>
    %cst_171 = arith.constant dense<0.000000e+00> : vector<32xf32>
    %400 = vector.multi_reduction <add>, %399, %cst_171 [1] : vector<32x32xf32> to vector<32xf32>
    %401 = vector.shape_cast %400 : vector<32xf32> to vector<32x1xf32>
    %cst_172 = arith.constant 3.200000e+01 : f32
    %402 = vector.broadcast %cst_172 : f32 to vector<32x1xf32>
    %403 = arith.divf %401, %402 : vector<32x1xf32>
    %404 = vector.broadcast %396 : vector<32x1xf32> to vector<32x32xf32>
    %405 = arith.subf %392, %404 : vector<32x32xf32>
    %cst_173 = arith.constant 9.99999974E-6 : f32
    %406 = vector.broadcast %cst_173 : f32 to vector<32x1xf32>
    %407 = arith.addf %403, %406 : vector<32x1xf32>
    %408 = math.rsqrt %407 : vector<32x1xf32>
    %409 = vector.broadcast %408 : vector<32x1xf32> to vector<32x32xf32>
    %410 = arith.mulf %405, %409 : vector<32x32xf32>
    %411 = vector.broadcast %247 : vector<1x32xf32> to vector<32x32xf32>
    %412 = arith.mulf %410, %411 : vector<32x32xf32>
    %413 = vector.broadcast %249 : vector<1x32xf32> to vector<32x32xf32>
    %414 = arith.addf %412, %413 : vector<32x32xf32>
    %415 = arith.truncf %414 : vector<32x32xf32> to vector<32x32xbf16>
    %cst_174 = arith.constant dense<0.000000e+00> : vector<32x64xf32>
    %416 = tpu.matmul %415, %251, %cst_174 {dimension_numbers = #tpu.dot_dimension_numbers<[1], [0], [0], [1], [0, 0, 1, 1], [], []>} : vector<32x32xbf16>, vector<32x64xbf16>, vector<32x64xf32> -> vector<32x64xf32>
    %417 = vector.broadcast %253 : vector<1x64xf32> to vector<32x64xf32>
    %418 = arith.addf %416, %417 : vector<32x64xf32>
    %cst_175 = arith.constant 0.000000e+00 : f32
    %419 = vector.broadcast %cst_175 : f32 to vector<32x64xf32>
    %420 = arith.maximumf %418, %419 : vector<32x64xf32>
    %421 = arith.truncf %420 : vector<32x64xf32> to vector<32x64xbf16>
    %cst_176 = arith.constant dense<0.000000e+00> : vector<32x32xf32>
    %422 = tpu.matmul %421, %255, %cst_176 {dimension_numbers = #tpu.dot_dimension_numbers<[1], [0], [0], [1], [0, 0, 1, 1], [], []>} : vector<32x64xbf16>, vector<64x32xbf16>, vector<32x32xf32> -> vector<32x32xf32>
    %423 = vector.broadcast %257 : vector<1x32xf32> to vector<32x32xf32>
    %424 = arith.addf %422, %423 : vector<32x32xf32>
    %425 = arith.addf %414, %424 : vector<32x32xf32>
    %cst_177 = arith.constant dense<0.000000e+00> : vector<32xf32>
    %426 = vector.multi_reduction <add>, %425, %cst_177 [1] : vector<32x32xf32> to vector<32xf32>
    %427 = vector.shape_cast %426 : vector<32xf32> to vector<32x1xf32>
    %cst_178 = arith.constant 3.200000e+01 : f32
    %428 = vector.broadcast %cst_178 : f32 to vector<32x1xf32>
    %429 = arith.divf %427, %428 : vector<32x1xf32>
    %430 = vector.broadcast %429 : vector<32x1xf32> to vector<32x32xf32>
    %431 = arith.subf %425, %430 : vector<32x32xf32>
    %432 = arith.mulf %431, %431 : vector<32x32xf32>
    %cst_179 = arith.constant dense<0.000000e+00> : vector<32xf32>
    %433 = vector.multi_reduction <add>, %432, %cst_179 [1] : vector<32x32xf32> to vector<32xf32>
    %434 = vector.shape_cast %433 : vector<32xf32> to vector<32x1xf32>
    %cst_180 = arith.constant 3.200000e+01 : f32
    %435 = vector.broadcast %cst_180 : f32 to vector<32x1xf32>
    %436 = arith.divf %434, %435 : vector<32x1xf32>
    %437 = vector.broadcast %429 : vector<32x1xf32> to vector<32x32xf32>
    %438 = arith.subf %425, %437 : vector<32x32xf32>
    %cst_181 = arith.constant 9.99999974E-6 : f32
    %439 = vector.broadcast %cst_181 : f32 to vector<32x1xf32>
    %440 = arith.addf %436, %439 : vector<32x1xf32>
    %441 = math.rsqrt %440 : vector<32x1xf32>
    %442 = vector.broadcast %441 : vector<32x1xf32> to vector<32x32xf32>
    %443 = arith.mulf %438, %442 : vector<32x32xf32>
    %444 = vector.broadcast %259 : vector<1x32xf32> to vector<32x32xf32>
    %445 = arith.mulf %443, %444 : vector<32x32xf32>
    %446 = vector.broadcast %261 : vector<1x32xf32> to vector<32x32xf32>
    %447 = arith.addf %445, %446 : vector<32x32xf32>
    %c0_182 = arith.constant 0 : index
    %c0_183 = arith.constant 0 : index
    %448 = vector.load %arg20[%c0_182, %c0_183] : memref<1x32xf32, #tpu.memory_space<vmem>>, vector<1x32xf32>
    %c0_184 = arith.constant 0 : index
    %c0_185 = arith.constant 0 : index
    %449 = vector.load %arg21[%c0_184, %c0_185] : memref<1x32xf32, #tpu.memory_space<vmem>>, vector<1x32xf32>
    %cst_186 = arith.constant dense<0.000000e+00> : vector<32xf32>
    %450 = vector.multi_reduction <add>, %447, %cst_186 [1] : vector<32x32xf32> to vector<32xf32>
    %451 = vector.shape_cast %450 : vector<32xf32> to vector<32x1xf32>
    %cst_187 = arith.constant 3.200000e+01 : f32
    %452 = vector.broadcast %cst_187 : f32 to vector<32x1xf32>
    %453 = arith.divf %451, %452 : vector<32x1xf32>
    %454 = vector.broadcast %453 : vector<32x1xf32> to vector<32x32xf32>
    %455 = arith.subf %447, %454 : vector<32x32xf32>
    %456 = arith.mulf %455, %455 : vector<32x32xf32>
    %cst_188 = arith.constant dense<0.000000e+00> : vector<32xf32>
    %457 = vector.multi_reduction <add>, %456, %cst_188 [1] : vector<32x32xf32> to vector<32xf32>
    %458 = vector.shape_cast %457 : vector<32xf32> to vector<32x1xf32>
    %cst_189 = arith.constant 3.200000e+01 : f32
    %459 = vector.broadcast %cst_189 : f32 to vector<32x1xf32>
    %460 = arith.divf %458, %459 : vector<32x1xf32>
    %461 = vector.broadcast %453 : vector<32x1xf32> to vector<32x32xf32>
    %462 = arith.subf %447, %461 : vector<32x32xf32>
    %cst_190 = arith.constant 9.99999974E-6 : f32
    %463 = vector.broadcast %cst_190 : f32 to vector<32x1xf32>
    %464 = arith.addf %460, %463 : vector<32x1xf32>
    %465 = math.rsqrt %464 : vector<32x1xf32>
    %466 = vector.broadcast %465 : vector<32x1xf32> to vector<32x32xf32>
    %467 = arith.mulf %462, %466 : vector<32x32xf32>
    %468 = vector.broadcast %448 : vector<1x32xf32> to vector<32x32xf32>
    %469 = arith.mulf %467, %468 : vector<32x32xf32>
    %470 = vector.broadcast %449 : vector<1x32xf32> to vector<32x32xf32>
    %471 = arith.addf %469, %470 : vector<32x32xf32>
    %c0_191 = arith.constant 0 : index
    %c0_192 = arith.constant 0 : index
    %472 = vector.load %arg22[%c0_191, %c0_192] : memref<32x32xf32, #tpu.memory_space<vmem>>, vector<32x32xf32>
    tpu.vector_store %arg22[%c0_191, %c0_192], %471 {strides = array<i32>} : memref<32x32xf32, #tpu.memory_space<vmem>>, vector<32x32xf32>,
    return
  }
  func.func @transform_0(%arg0: i32) -> (i32, i32) {
    %c0_i32 = arith.constant 0 : i32
    %c0_i32_0 = arith.constant 0 : i32
    return %arg0, %c0_i32 : i32, i32
  }
  func.func @transform_1(%arg0: i32) -> (i32, i32) {
    %c0_i32 = arith.constant 0 : i32
    %c0_i32_0 = arith.constant 0 : i32
    %c0_i32_1 = arith.constant 0 : i32
    return %c0_i32, %c0_i32_0 : i32, i32
  }
  func.func @transform_2(%arg0: i32) -> (i32, i32) {
    %c0_i32 = arith.constant 0 : i32
    %c0_i32_0 = arith.constant 0 : i32
    %c0_i32_1 = arith.constant 0 : i32
    return %c0_i32, %c0_i32_0 : i32, i32
  }
  func.func @transform_3(%arg0: i32) -> (i32, i32, i32) {
    %c0_i32 = arith.constant 0 : i32
    %c0_i32_0 = arith.constant 0 : i32
    %c0_i32_1 = arith.constant 0 : i32
    %c0_i32_2 = arith.constant 0 : i32
    return %c0_i32, %c0_i32_0, %c0_i32_1 : i32, i32, i32
  }
  func.func @transform_4(%arg0: i32) -> (i32, i32, i32) {
    %c0_i32 = arith.constant 0 : i32
    %c0_i32_0 = arith.constant 0 : i32
    %c0_i32_1 = arith.constant 0 : i32
    %c0_i32_2 = arith.constant 0 : i32
    return %c0_i32, %c0_i32_0, %c0_i32_1 : i32, i32, i32
  }
  func.func @transform_5(%arg0: i32) -> (i32, i32, i32) {
    %c0_i32 = arith.constant 0 : i32
    %c0_i32_0 = arith.constant 0 : i32
    %c0_i32_1 = arith.constant 0 : i32
    %c0_i32_2 = arith.constant 0 : i32
    return %c0_i32, %c0_i32_0, %c0_i32_1 : i32, i32, i32
  }
  func.func @transform_6(%arg0: i32) -> (i32, i32, i32) {
    %c0_i32 = arith.constant 0 : i32
    %c0_i32_0 = arith.constant 0 : i32
    %c0_i32_1 = arith.constant 0 : i32
    %c0_i32_2 = arith.constant 0 : i32
    return %c0_i32, %c0_i32_0, %c0_i32_1 : i32, i32, i32
  }
  func.func @transform_7(%arg0: i32) -> (i32, i32, i32) {
    %c0_i32 = arith.constant 0 : i32
    %c0_i32_0 = arith.constant 0 : i32
    %c0_i32_1 = arith.constant 0 : i32
    %c0_i32_2 = arith.constant 0 : i32
    return %c0_i32, %c0_i32_0, %c0_i32_1 : i32, i32, i32
  }
  func.func @transform_8(%arg0: i32) -> (i32, i32, i32) {
    %c0_i32 = arith.constant 0 : i32
    %c0_i32_0 = arith.constant 0 : i32
    %c0_i32_1 = arith.constant 0 : i32
    %c0_i32_2 = arith.constant 0 : i32
    return %c0_i32, %c0_i32_0, %c0_i32_1 : i32, i32, i32
  }
  func.func @transform_9(%arg0: i32) -> (i32, i32, i32) {
    %c0_i32 = arith.constant 0 : i32
    %c0_i32_0 = arith.constant 0 : i32
    %c0_i32_1 = arith.constant 0 : i32
    %c0_i32_2 = arith.constant 0 : i32
    return %c0_i32, %c0_i32_0, %c0_i32_1 : i32, i32, i32
  }
  func.func @transform_10(%arg0: i32) -> (i32, i32, i32) {
    %c0_i32 = arith.constant 0 : i32
    %c0_i32_0 = arith.constant 0 : i32
    %c0_i32_1 = arith.constant 0 : i32
    %c0_i32_2 = arith.constant 0 : i32
    return %c0_i32, %c0_i32_0, %c0_i32_1 : i32, i32, i32
  }
  func.func @transform_11(%arg0: i32) -> (i32, i32, i32) {
    %c0_i32 = arith.constant 0 : i32
    %c0_i32_0 = arith.constant 0 : i32
    %c0_i32_1 = arith.constant 0 : i32
    %c0_i32_2 = arith.constant 0 : i32
    return %c0_i32, %c0_i32_0, %c0_i32_1 : i32, i32, i32
  }
  func.func @transform_12(%arg0: i32) -> (i32, i32, i32) {
    %c0_i32 = arith.constant 0 : i32
    %c0_i32_0 = arith.constant 0 : i32
    %c0_i32_1 = arith.constant 0 : i32
    %c0_i32_2 = arith.constant 0 : i32
    return %c0_i32, %c0_i32_0, %c0_i32_1 : i32, i32, i32
  }
  func.func @transform_13(%arg0: i32) -> (i32, i32, i32) {
    %c0_i32 = arith.constant 0 : i32
    %c0_i32_0 = arith.constant 0 : i32
    %c0_i32_1 = arith.constant 0 : i32
    %c0_i32_2 = arith.constant 0 : i32
    return %c0_i32, %c0_i32_0, %c0_i32_1 : i32, i32, i32
  }
  func.func @transform_14(%arg0: i32) -> (i32, i32, i32) {
    %c0_i32 = arith.constant 0 : i32
    %c0_i32_0 = arith.constant 0 : i32
    %c0_i32_1 = arith.constant 0 : i32
    %c0_i32_2 = arith.constant 0 : i32
    return %c0_i32, %c0_i32_0, %c0_i32_1 : i32, i32, i32
  }
  func.func @transform_15(%arg0: i32) -> (i32, i32, i32) {
    %c0_i32 = arith.constant 0 : i32
    %c0_i32_0 = arith.constant 0 : i32
    %c0_i32_1 = arith.constant 0 : i32
    %c0_i32_2 = arith.constant 0 : i32
    return %c0_i32, %c0_i32_0, %c0_i32_1 : i32, i32, i32
  }
  func.func @transform_16(%arg0: i32) -> (i32, i32, i32) {
    %c0_i32 = arith.constant 0 : i32
    %c0_i32_0 = arith.constant 0 : i32
    %c0_i32_1 = arith.constant 0 : i32
    %c0_i32_2 = arith.constant 0 : i32
    return %c0_i32, %c0_i32_0, %c0_i32_1 : i32, i32, i32
  }
  func.func @transform_17(%arg0: i32) -> (i32, i32, i32) {
    %c0_i32 = arith.constant 0 : i32
    %c0_i32_0 = arith.constant 0 : i32
    %c0_i32_1 = arith.constant 0 : i32
    %c0_i32_2 = arith.constant 0 : i32
    return %c0_i32, %c0_i32_0, %c0_i32_1 : i32, i32, i32
  }
  func.func @transform_18(%arg0: i32) -> (i32, i32, i32) {
    %c0_i32 = arith.constant 0 : i32
    %c0_i32_0 = arith.constant 0 : i32
    %c0_i32_1 = arith.constant 0 : i32
    %c0_i32_2 = arith.constant 0 : i32
    return %c0_i32, %c0_i32_0, %c0_i32_1 : i32, i32, i32
  }
  func.func @transform_19(%arg0: i32) -> (i32, i32) {
    %c0_i32 = arith.constant 0 : i32
    %c0_i32_0 = arith.constant 0 : i32
    %c0_i32_1 = arith.constant 0 : i32
    return %c0_i32, %c0_i32_0 : i32, i32
  }
  func.func @transform_20(%arg0: i32) -> (i32, i32) {
    %c0_i32 = arith.constant 0 : i32
    %c0_i32_0 = arith.constant 0 : i32
    %c0_i32_1 = arith.constant 0 : i32
    return %c0_i32, %c0_i32_0 : i32, i32
  }
  func.func @transform_21(%arg0: i32) -> (i32, i32) {
    %c0_i32 = arith.constant 0 : i32
    %c0_i32_0 = arith.constant 0 : i32
    return %arg0, %c0_i32 : i32, i32
  }
}

module attributes {stable_mosaic.version = 11 : i64} {
  func.func @_head_kernel(%arg0: i32, %arg1: memref<8x256xf32, #tpu.memory_space<vmem>>, %arg2: memref<256x128xbf16, #tpu.memory_space<vmem>>, %arg3: memref<1x128xf32, #tpu.memory_space<vmem>>, %arg4: memref<8x128xf32, #tpu.memory_space<vmem>>) attributes {dimension_semantics = [#tpu.dimension_semantics<parallel>], iteration_bounds = array<i64: 1>, scalar_prefetch = 0 : i64, scratch_operands = 0 : i64, tpu.core_type = #tpu.core_type<tc>, window_params = [{transform_indices = @transform_0, window_bounds = array<i64: 8, 256>}, {pipeline_mode = #tpu.pipeline_mode<synchronous>, transform_indices = @transform_1, window_bounds = array<i64: 256, 128>}, {pipeline_mode = #tpu.pipeline_mode<synchronous>, transform_indices = @transform_2, window_bounds = array<i64: 1, 128>}, {transform_indices = @transform_3, window_bounds = array<i64: 8, 128>}]} {
    %c0 = arith.constant 0 : index
    %c0_0 = arith.constant 0 : index
    %0 = vector.load %arg1[%c0, %c0_0] : memref<8x256xf32, #tpu.memory_space<vmem>>, vector<8x256xf32>
    %1 = arith.truncf %0 : vector<8x256xf32> to vector<8x256xbf16>
    %c0_1 = arith.constant 0 : index
    %c0_2 = arith.constant 0 : index
    %2 = vector.load %arg2[%c0_1, %c0_2] : memref<256x128xbf16, #tpu.memory_space<vmem>>, vector<256x128xbf16>
    %cst = arith.constant dense<0.000000e+00> : vector<8x128xf32>
    %3 = tpu.matmul %1, %2, %cst {dimension_numbers = #tpu.dot_dimension_numbers<[1], [0], [0], [1], [0, 0, 1, 1], [], []>} : vector<8x256xbf16>, vector<256x128xbf16>, vector<8x128xf32> -> vector<8x128xf32>
    %c0_3 = arith.constant 0 : index
    %c0_4 = arith.constant 0 : index
    %4 = vector.load %arg3[%c0_3, %c0_4] : memref<1x128xf32, #tpu.memory_space<vmem>>, vector<1x128xf32>
    %5 = vector.broadcast %4 : vector<1x128xf32> to vector<8x128xf32>
    %6 = arith.addf %3, %5 : vector<8x128xf32>
    %c0_5 = arith.constant 0 : index
    %c0_6 = arith.constant 0 : index
    %7 = vector.load %arg4[%c0_5, %c0_6] : memref<8x128xf32, #tpu.memory_space<vmem>>, vector<8x128xf32>
    tpu.vector_store %arg4[%c0_5, %c0_6], %6 {strides = array<i32>} : memref<8x128xf32, #tpu.memory_space<vmem>>, vector<8x128xf32>,
    return
  }
  func.func @transform_0(%arg0: i32) -> (i32, i32) {
    %c0_i32 = arith.constant 0 : i32
    %c0_i32_0 = arith.constant 0 : i32
    return %arg0, %c0_i32 : i32, i32
  }
  func.func @transform_1(%arg0: i32) -> (i32, i32) {
    %c0_i32 = arith.constant 0 : i32
    %c0_i32_0 = arith.constant 0 : i32
    %c0_i32_1 = arith.constant 0 : i32
    return %c0_i32, %c0_i32_0 : i32, i32
  }
  func.func @transform_2(%arg0: i32) -> (i32, i32) {
    %c0_i32 = arith.constant 0 : i32
    %c0_i32_0 = arith.constant 0 : i32
    %c0_i32_1 = arith.constant 0 : i32
    return %c0_i32, %c0_i32_0 : i32, i32
  }
  func.func @transform_3(%arg0: i32) -> (i32, i32) {
    %c0_i32 = arith.constant 0 : i32
    %c0_i32_0 = arith.constant 0 : i32
    return %arg0, %c0_i32 : i32, i32
  }
}

</mosaic_0001>

<llo_original>
// kernel: _lambda_.3
$region0: #{_lambda_.3}
  #allocation0 [shape = 'u32[]', space=smem, size = 0x4, offset = 0x4, fixed_abs, tag = 'smem constant byte address 0x4 - core index']
  #allocation1 [shape = 'u32[144,128]{1,0:T(1,128)}', space=vmem, size = 0x12000, scoped, tag = 'internal scratch']
  %s0 = inlined_call_operand.vmem [shape: f32[8,256], index: 0, kind: input, shape index: {}]
  %s1 = inlined_call_operand.vmem [shape: bf16[256,128], index: 1, kind: input, shape index: {}]
  %s2 = inlined_call_operand.vmem [shape: f32[1,128], index: 2, kind: input, shape index: {}]
  %s3 = inlined_call_operand.vmem [shape: f32[8,128], index: 3, kind: output, shape index: {}]
  %s4 = sld [smem:[#allocation0]]
  $region22: #{_lambda_.3} parent=0
    _
  %s6 = ssub.s32 1, %s4
  %s7 = scalar_select 0, %s6, %s4
  // Predicated region
  $region2: #{_lambda_.3} parent=0 // pred_check
    _
  $region3: #{_lambda_.3} parent=0 // pred_check_branch
    %9 = sbr.rel (0) target = $region5
  $region4: #{_lambda_.3} parent=0 // pred_region
    _
  $region5: #{_lambda_.3} parent=0 // pred_fallthru
    _
  // Predicated region
  $region6: #{_lambda_.3} parent=0 // pred_check
    _
  $region7: #{_lambda_.3} parent=0 // pred_check_branch
    %11 = sbr.rel (0) target = $region9
  $region8: #{_lambda_.3} parent=0 // pred_region
    _
  $region9: #{_lambda_.3} parent=0 // pred_fallthru
    _
  // Predicated region
  $region10: #{_lambda_.3} parent=0 // pred_check
    _
  $region11: #{_lambda_.3} parent=0 // pred_check_branch
    %13 = sbr.rel (0) target = $region13
  $region12: #{_lambda_.3} parent=0 // pred_region
    _
  $region13: #{_lambda_.3} parent=0 // pred_fallthru
    _
  %v15 = vld [vmem:[%s0] sm:$0xff]
  %v16 = vld [vmem:[%s0 + $0x8] sm:$0xff]
  %v17 = vpack.c.bf16 %v15, %v15
  %v18 = vpack.c.bf16 %v16, %v16
  %v19 = vld [vmem:[%s1] sm:$0xf]
  %v20 = vld [vmem:[%s1 + $0x4] sm:$0xf]
  %v21 = vld [vmem:[%s1 + $0x8] sm:$0xf]
  %v22 = vld [vmem:[%s1 + $0xc] sm:$0xf]
  %v23 = vld [vmem:[%s1 + $0x10] sm:$0xf]
  %v24 = vld [vmem:[%s1 + $0x14] sm:$0xf]
  %v25 = vld [vmem:[%s1 + $0x18] sm:$0xf]
  %v26 = vld [vmem:[%s1 + $0x1c] sm:$0xf]
  %v27 = vld [vmem:[%s1 + $0x20] sm:$0xf]
  %v28 = vld [vmem:[%s1 + $0x24] sm:$0xf]
  %v29 = vld [vmem:[%s1 + $0x28] sm:$0xf]
  %v30 = vld [vmem:[%s1 + $0x2c] sm:$0xf]
  %v31 = vld [vmem:[%s1 + $0x30] sm:$0xf]
  %v32 = vld [vmem:[%s1 + $0x34] sm:$0xf]
  %v33 = vld [vmem:[%s1 + $0x38] sm:$0xf]
  %v34 = vld [vmem:[%s1 + $0x3c] sm:$0xf]
  %v35 = vld [vmem:[%s1 + $0x40] sm:$0xf]
  %v36 = vld [vmem:[%s1 + $0x44] sm:$0xf]
  %v37 = vld [vmem:[%s1 + $0x48] sm:$0xf]
  %v38 = vld [vmem:[%s1 + $0x4c] sm:$0xf]
  %v39 = vld [vmem:[%s1 + $0x50] sm:$0xf]
  %v40 = vld [vmem:[%s1 + $0x54] sm:$0xf]
  %v41 = vld [vmem:[%s1 + $0x58] sm:$0xf]
  %v42 = vld [vmem:[%s1 + $0x5c] sm:$0xf]
  %v43 = vld [vmem:[%s1 + $0x60] sm:$0xf]
  %v44 = vld [vmem:[%s1 + $0x64] sm:$0xf]
  %v45 = vld [vmem:[%s1 + $0x68] sm:$0xf]
  %v46 = vld [vmem:[%s1 + $0x6c] sm:$0xf]
  %v47 = vld [vmem:[%s1 + $0x70] sm:$0xf]
  %v48 = vld [vmem:[%s1 + $0x74] sm:$0xf]
  %v49 = vld [vmem:[%s1 + $0x78] sm:$0xf]
  %v50 = vld [vmem:[%s1 + $0x7c] sm:$0xf]
  %v51 = vld [vmem:[%s2] sm:$0x1]
  %v53 = vlaneseq
  %v54 = vshrl.u32 %v53, 7
  %v55 = vsub.s32 0, %v54
  %v56 = vrot.slane %v51, %v55
  %v90 = vunpack.c.l.b16 %v19
  %v91 = vunpack.c.l.b16 %v20
  %v92 = vunpack.c.l.b16 %v21
  %v93 = vunpack.c.l.b16 %v22
  %v94 = vunpack.c.l.b16 %v23
  %v95 = vunpack.c.l.b16 %v24
  %v96 = vunpack.c.l.b16 %v25
  %v97 = vunpack.c.l.b16 %v26
  %v98 = vunpack.c.l.b16 %v27
  %v99 = vunpack.c.l.b16 %v28
  %v100 = vunpack.c.l.b16 %v29
  %v101 = vunpack.c.l.b16 %v30
  %v102 = vunpack.c.l.b16 %v31
  %v103 = vunpack.c.l.b16 %v32
  %v104 = vunpack.c.l.b16 %v33
  %v105 = vunpack.c.l.b16 %v34
  %v106 = vunpack.c.l.b16 %v35
  %v107 = vunpack.c.l.b16 %v36
  %v108 = vunpack.c.l.b16 %v37
  %v109 = vunpack.c.l.b16 %v38
  %v110 = vunpack.c.l.b16 %v39
  %v111 = vunpack.c.l.b16 %v40
  %v112 = vunpack.c.l.b16 %v41
  %v113 = vunpack.c.l.b16 %v42
  %v114 = vunpack.c.l.b16 %v43
  %v115 = vunpack.c.l.b16 %v44
  %v116 = vunpack.c.l.b16 %v45
  %v117 = vunpack.c.l.b16 %v46
  %v118 = vunpack.c.l.b16 %v47
  %v119 = vunpack.c.l.b16 %v48
  %v120 = vunpack.c.l.b16 %v49
  %v121 = vunpack.c.l.b16 %v50
  %v122 = vpack.c.b16 %v91, %v90
  %v123 = vpack.c.b16 %v93, %v92
  %v124 = vpack.c.b16 %v95, %v94
  %v125 = vpack.c.b16 %v97, %v96
  %v126 = vpack.c.b16 %v99, %v98
  %v127 = vpack.c.b16 %v101, %v100
  %v128 = vpack.c.b16 %v103, %v102
  %v129 = vpack.c.b16 %v105, %v104
  %v130 = vpack.c.b16 %v107, %v106
  %v131 = vpack.c.b16 %v109, %v108
  %v132 = vpack.c.b16 %v111, %v110
  %v133 = vpack.c.b16 %v113, %v112
  %v134 = vpack.c.b16 %v115, %v114
  %v135 = vpack.c.b16 %v117, %v116
  %v136 = vpack.c.b16 %v119, %v118
  %v137 = vpack.c.b16 %v121, %v120
  %154 = vmatprep.subr.bf16.mxu0 0
  %155 = vmatpush1.bf16.msra.mxu0 %v122
  %156 = vmatprep.subr.bf16.mxu0 0
  %157 = vmatpush1.bf16.msra.mxu0 %v123
  %158 = vmatprep.subr.bf16.mxu0 0
  %159 = vmatpush1.bf16.msra.mxu0 %v124
  %160 = vmatprep.subr.bf16.mxu0 0
  %161 = vmatpush1.bf16.msra.mxu0 %v125
  %162 = vmatprep.subr.bf16.mxu0 0
  %163 = vmatpush1.bf16.msra.mxu0 %v126
  %164 = vmatprep.subr.bf16.mxu0 0
  %165 = vmatpush1.bf16.msra.mxu0 %v127
  %166 = vmatprep.subr.bf16.mxu0 0
  %167 = vmatpush1.bf16.msra.mxu0 %v128
  %168 = vmatprep.subr.bf16.mxu0 0
  %169 = vmatpush1.bf16.msra.mxu0 %v129
  %170 = vmatprep.subr.bf16.mxu0 0
  %171 = vmatpush1.bf16.msra.mxu0 %v130
  %172 = vmatprep.subr.bf16.mxu0 0
  %173 = vmatpush1.bf16.msra.mxu0 %v131
  %174 = vmatprep.subr.bf16.mxu0 0
  %175 = vmatpush1.bf16.msra.mxu0 %v132
  %176 = vmatprep.subr.bf16.mxu0 0
  %177 = vmatpush1.bf16.msra.mxu0 %v133
  %178 = vmatprep.subr.bf16.mxu0 0
  %179 = vmatpush1.bf16.msra.mxu0 %v134
  %180 = vmatprep.subr.bf16.mxu0 0
  %181 = vmatpush1.bf16.msra.mxu0 %v135
  %182 = vmatprep.subr.bf16.mxu0 0
  %183 = vmatpush1.bf16.msra.mxu0 %v136
  %184 = vmatprep.subr.bf16.mxu0 0
  %185 = vmatpush1.bf16.msra.mxu0 %v137
  %186 = vmatprep.mubr.bf16.mxu0 %v18
  %187 = vmatmul.mubr.bf16.gmra.mrb[0].mxu0 %v17
  %v188 = vpop.f32.mrb[0].mxu0
  %v189 = vadd.f32 %v56, %v188
  %v190 = vpop.f32.mrb[0].mxu0
  %v191 = vpop.f32.mrb[0].mxu0
  %v192 = vpop.f32.mrb[0].mxu0
  %193 = vdwg.mxu0
  %194 = vst [vmem:[%s3] sm:$0xff] %v189
  // Predicated region
  $region14: #{_lambda_.3} parent=0 // pred_check
    _
  $region15: #{_lambda_.3} parent=0 // pred_check_branch
    %196 = sbr.rel (0) target = $region17
  $region16: #{_lambda_.3} parent=0 // pred_region
    _
  $region17: #{_lambda_.3} parent=0 // pred_fallthru
    _
  // Predicated region
  $region18: #{_lambda_.3} parent=0 // pred_check
    _
  $region19: #{_lambda_.3} parent=0 // pred_check_branch
    %198 = sbr.rel (0) target = $region21
  $region20: #{_lambda_.3} parent=0 // pred_region
    _
  $region21: #{_lambda_.3} parent=0 // pred_fallthru
    _

// kernel: _lambda_.2
$region0: #{_lambda_.2}
  #allocation0 [shape = 'u32[]', space=smem, size = 0x4, offset = 0x4, fixed_abs, tag = 'smem constant byte address 0x4 - core index']
  #allocation1 [shape = 'u32[144,128]{1,0:T(1,128)}', space=vmem, size = 0x12000, scoped, tag = 'internal scratch']
  %s0 = inlined_call_operand.vmem [shape: f32[64,8], index: 0, kind: input, shape index: {}]
  %s1 = inlined_call_operand.vmem [shape: bf16[8,32], index: 1, kind: input, shape index: {}]
  %s2 = inlined_call_operand.vmem [shape: f32[32,32], index: 2, kind: input, shape index: {}]
  %s3 = inlined_call_operand.vmem [shape: bf16[2,32,32], index: 3, kind: input, shape index: {}]
  %s4 = inlined_call_operand.vmem [shape: f32[2,1,32], index: 4, kind: input, shape index: {}]
  %s5 = inlined_call_operand.vmem [shape: bf16[2,32,32], index: 5, kind: input, shape index: {}]
  %s6 = inlined_call_operand.vmem [shape: f32[2,1,32], index: 6, kind: input, shape index: {}]
  %s7 = inlined_call_operand.vmem [shape: bf16[2,32,32], index: 7, kind: input, shape index: {}]
  %s8 = inlined_call_operand.vmem [shape: f32[2,1,32], index: 8, kind: input, shape index: {}]
  %s9 = inlined_call_operand.vmem [shape: bf16[2,32,32], index: 9, kind: input, shape index: {}]
  %s10 = inlined_call_operand.vmem [shape: f32[2,1,32], index: 10, kind: input, shape index: {}]
  %s11 = inlined_call_operand.vmem [shape: f32[2,1,32], index: 11, kind: input, shape index: {}]
  %s12 = inlined_call_operand.vmem [shape: f32[2,1,32], index: 12, kind: input, shape index: {}]
  %s13 = inlined_call_operand.vmem [shape: bf16[2,32,64], index: 13, kind: input, shape index: {}]
  %s14 = inlined_call_operand.vmem [shape: f32[2,1,64], index: 14, kind: input, shape index: {}]
  %s15 = inlined_call_operand.vmem [shape: bf16[2,64,32], index: 15, kind: input, shape index: {}]
  %s16 = inlined_call_operand.vmem [shape: f32[2,1,32], index: 16, kind: input, shape index: {}]
  %s17 = inlined_call_operand.vmem [shape: f32[2,1,32], index: 17, kind: input, shape index: {}]
  %s18 = inlined_call_operand.vmem [shape: f32[2,1,32], index: 18, kind: input, shape index: {}]
  %s19 = inlined_call_operand.vmem [shape: f32[1,32], index: 19, kind: input, shape index: {}]
  %s20 = inlined_call_operand.vmem [shape: f32[1,32], index: 20, kind: input, shape index: {}]
  %s21 = inlined_call_operand.vmem [shape: f32[64,32], index: 21, kind: output, shape index: {}]
  %s22 = sld [smem:[#allocation0]]
  $region117: #{_lambda_.2} parent=0
    _
  %s24 = ssub.s32 1, %s22
  %s25 = scalar_select 0, %s24, %s22
  loop: start=0, step=1, limit=4
  $region2: #{_lambda_.2} parent=0 // loop_pre_header
    _
  $region3: #{_lambda_.2} parent=0 // loop_header
    %s27 = sphi 0, %s31
    %p28 = scmp.ge.s32.totalorder %s27, 4
    %s37 = sphi 0, %s39
    %s40 = sphi 0, %s37
    %s41 = sphi 0, %s40
    %s57 = sphi 0, %s41
    %s61 = sphi 0, %s61
    %s63 = sphi 0, %s61
    %s64 = sphi 0, %s63
    %s78 = sphi 0, %s64
    %s82 = sphi 0, %s82
    %s84 = sphi 0, %s82
    %s85 = sphi 0, %s84
    %s99 = sphi 0, %s85
    %s103 = sphi 0, %s103
    %s105 = sphi 0, %s103
    %s106 = sphi 0, %s105
    %s120 = sphi 0, %s106
    %s124 = sphi 0, %s124
    %s126 = sphi 0, %s124
    %s127 = sphi 0, %s126
    %s141 = sphi 0, %s127
    %s145 = sphi 0, %s145
    %s147 = sphi 0, %s145
    %s148 = sphi 0, %s147
    %s162 = sphi 0, %s148
    %s166 = sphi 0, %s166
    %s168 = sphi 0, %s166
    %s169 = sphi 0, %s168
    %s183 = sphi 0, %s169
    %s187 = sphi 0, %s187
    %s189 = sphi 0, %s187
    %s190 = sphi 0, %s189
    %s204 = sphi 0, %s190
    %s208 = sphi 0, %s208
    %s210 = sphi 0, %s208
    %s211 = sphi 0, %s210
    %s225 = sphi 0, %s211
    %s229 = sphi 0, %s229
    %s231 = sphi 0, %s229
    %s232 = sphi 0, %s231
    %s246 = sphi 0, %s232
    %s250 = sphi 0, %s250
    %s252 = sphi 0, %s250
    %s253 = sphi 0, %s252
    %s267 = sphi 0, %s253
    %s271 = sphi 0, %s271
    %s273 = sphi 0, %s271
    %s274 = sphi 0, %s273
    %s288 = sphi 0, %s274
    %s292 = sphi 0, %s292
    %s294 = sphi 0, %s292
    %s295 = sphi 0, %s294
    %s309 = sphi 0, %s295
    %s313 = sphi 0, %s313
    %s315 = sphi 0, %s313
    %s316 = sphi 0, %s315
    %s330 = sphi 0, %s316
    %s334 = sphi 0, %s334
    %s336 = sphi 0, %s334
    %s337 = sphi 0, %s336
    %s351 = sphi 0, %s337
    %s355 = sphi 0, %s355
    %s357 = sphi 0, %s355
    %s358 = sphi 0, %s357
    %s372 = sphi 0, %s358
    %s376 = sphi 0, %s376
    %s378 = sphi 0, %s376
    %s379 = sphi 0, %s378
    %s393 = sphi 0, %s379
    %s397 = sphi 0, %s397
    %s399 = sphi 0, %s397
    %s400 = sphi 0, %s399
    %s414 = sphi 0, %s400
    %s418 = sphi 0, %s418
    %s420 = sphi 0, %s418
    %s421 = sphi 0, %s420
    %s435 = sphi 0, %s421
    %s439 = sphi 0, %s439
    %s441 = sphi 0, %s439
    %s442 = sphi 0, %s441
    %s456 = sphi 0, %s442
    %s460 = sphi 0, %s460
    %s462 = sphi 0, %s460
    %s463 = sphi 0, %s462
    %s477 = sphi 0, %s463
    %s483 = sphi 0, %s485
    %s486 = sphi 0, %s483
    %s487 = sphi 0, %s486
    %s503 = sphi 0, %s487
  $region4: #{_lambda_.2} parent=0 // loop_header_branch
    %30 = sbr.rel (%p28) target = $region8
  $region5: #{_lambda_.2} parent=0 // loop_body
    %s32 = ssub.s32 %s27, 1
    %s33 = ssub.s32 %s27, 2
    %s34 = sadd.s32 %s27, 1
    %s35 = ssub.s32 %s27, %s34
    %p36 = scmp.eq.s32.totalorder %s35, 0
    %s38 = sadd.s32 %s37, 1
    %s39 = scalar_select %p36, %s37, %s38
    %p42 = pneg %p36
    %p43 = scmp.eq.s32.totalorder %s27, 1
    %p44 = por %p42, %p43
    %p45 = scmp.ne.s32.totalorder %s37, %s40
    %p46 = scmp.eq.s32.totalorder %s27, 0
    %p47 = por %p45, %p46
    %p48 = scmp.ne.s32.totalorder %s37, %s40
    %p49 = scmp.eq.s32.totalorder %s32, 1
    %p50 = por %p48, %p49
    %p51 = scmp.ne.s32.totalorder %s40, %s41
    %p52 = scmp.eq.s32.totalorder %s32, 0
    %p53 = por %p51, %p52
    %p54 = scmp.ne.s32.totalorder %s40, %s41
    %p55 = scmp.eq.s32.totalorder %s33, 1
    %p56 = por %p54, %p55
    %p58 = scmp.ne.s32.totalorder %s41, %s57
    %p59 = scmp.eq.s32.totalorder %s33, 0
    %p60 = por %p58, %p59
    %s62 = sadd.s32 %s61, 1
    %p65 = scmp.eq.s32.totalorder %s27, 1
    %p66 = scmp.ne.s32.totalorder %s61, %s63
    %p67 = scmp.eq.s32.totalorder %s27, 0
    %p68 = por %p66, %p67
    %p69 = scmp.ne.s32.totalorder %s61, %s63
    %p70 = scmp.eq.s32.totalorder %s32, 1
    %p71 = por %p69, %p70
    %p72 = scmp.ne.s32.totalorder %s63, %s64
    %p73 = scmp.eq.s32.totalorder %s32, 0
    %p74 = por %p72, %p73
    %p75 = scmp.ne.s32.totalorder %s63, %s64
    %p76 = scmp.eq.s32.totalorder %s33, 1
    %p77 = por %p75, %p76
    %p79 = scmp.ne.s32.totalorder %s64, %s78
    %p80 = scmp.eq.s32.totalorder %s33, 0
    %p81 = por %p79, %p80
    %s83 = sadd.s32 %s82, 1
    %p86 = scmp.eq.s32.totalorder %s27, 1
    %p87 = scmp.ne.s32.totalorder %s82, %s84
    %p88 = scmp.eq.s32.totalorder %s27, 0
    %p89 = por %p87, %p88
    %p90 = scmp.ne.s32.totalorder %s82, %s84
    %p91 = scmp.eq.s32.totalorder %s32, 1
    %p92 = por %p90, %p91
    %p93 = scmp.ne.s32.totalorder %s84, %s85
    %p94 = scmp.eq.s32.totalorder %s32, 0
    %p95 = por %p93, %p94
    %p96 = scmp.ne.s32.totalorder %s84, %s85
    %p97 = scmp.eq.s32.totalorder %s33, 1
    %p98 = por %p96, %p97
    %p100 = scmp.ne.s32.totalorder %s85, %s99
    %p101 = scmp.eq.s32.totalorder %s33, 0
    %p102 = por %p100, %p101
    %s104 = sadd.s32 %s103, 1
    %p107 = scmp.eq.s32.totalorder %s27, 1
    %p108 = scmp.ne.s32.totalorder %s103, %s105
    %p109 = scmp.eq.s32.totalorder %s27, 0
    %p110 = por %p108, %p109
    %p111 = scmp.ne.s32.totalorder %s103, %s105
    %p112 = scmp.eq.s32.totalorder %s32, 1
    %p113 = por %p111, %p112
    %p114 = scmp.ne.s32.totalorder %s105, %s106
    %p115 = scmp.eq.s32.totalorder %s32, 0
    %p116 = por %p114, %p115
    %p117 = scmp.ne.s32.totalorder %s105, %s106
    %p118 = scmp.eq.s32.totalorder %s33, 1
    %p119 = por %p117, %p118
    %p121 = scmp.ne.s32.totalorder %s106, %s120
    %p122 = scmp.eq.s32.totalorder %s33, 0
    %p123 = por %p121, %p122
    %s125 = sadd.s32 %s124, 1
    %p128 = scmp.eq.s32.totalorder %s27, 1
    %p129 = scmp.ne.s32.totalorder %s124, %s126
    %p130 = scmp.eq.s32.totalorder %s27, 0
    %p131 = por %p129, %p130
    %p132 = scmp.ne.s32.totalorder %s124, %s126
    %p133 = scmp.eq.s32.totalorder %s32, 1
    %p134 = por %p132, %p133
    %p135 = scmp.ne.s32.totalorder %s126, %s127
    %p136 = scmp.eq.s32.totalorder %s32, 0
    %p137 = por %p135, %p136
    %p138 = scmp.ne.s32.totalorder %s126, %s127
    %p139 = scmp.eq.s32.totalorder %s33, 1
    %p140 = por %p138, %p139
    %p142 = scmp.ne.s32.totalorder %s127, %s141
    %p143 = scmp.eq.s32.totalorder %s33, 0
    %p144 = por %p142, %p143
    %s146 = sadd.s32 %s145, 1
    %p149 = scmp.eq.s32.totalorder %s27, 1
    %p150 = scmp.ne.s32.totalorder %s145, %s147
    %p151 = scmp.eq.s32.totalorder %s27, 0
    %p152 = por %p150, %p151
    %p153 = scmp.ne.s32.totalorder %s145, %s147
    %p154 = scmp.eq.s32.totalorder %s32, 1
    %p155 = por %p153, %p154
    %p156 = scmp.ne.s32.totalorder %s147, %s148
    %p157 = scmp.eq.s32.totalorder %s32, 0
    %p158 = por %p156, %p157
    %p159 = scmp.ne.s32.totalorder %s147, %s148
    %p160 = scmp.eq.s32.totalorder %s33, 1
    %p161 = por %p159, %p160
    %p163 = scmp.ne.s32.totalorder %s148, %s162
    %p164 = scmp.eq.s32.totalorder %s33, 0
    %p165 = por %p163, %p164
    %s167 = sadd.s32 %s166, 1
    %p170 = scmp.eq.s32.totalorder %s27, 1
    %p171 = scmp.ne.s32.totalorder %s166, %s168
    %p172 = scmp.eq.s32.totalorder %s27, 0
    %p173 = por %p171, %p172
    %p174 = scmp.ne.s32.totalorder %s166, %s168
    %p175 = scmp.eq.s32.totalorder %s32, 1
    %p176 = por %p174, %p175
    %p177 = scmp.ne.s32.totalorder %s168, %s169
    %p178 = scmp.eq.s32.totalorder %s32, 0
    %p179 = por %p177, %p178
    %p180 = scmp.ne.s32.totalorder %s168, %s169
    %p181 = scmp.eq.s32.totalorder %s33, 1
    %p182 = por %p180, %p181
    %p184 = scmp.ne.s32.totalorder %s169, %s183
    %p185 = scmp.eq.s32.totalorder %s33, 0
    %p186 = por %p184, %p185
    %s188 = sadd.s32 %s187, 1
    %p191 = scmp.eq.s32.totalorder %s27, 1
    %p192 = scmp.ne.s32.totalorder %s187, %s189
    %p193 = scmp.eq.s32.totalorder %s27, 0
    %p194 = por %p192, %p193
    %p195 = scmp.ne.s32.totalorder %s187, %s189
    %p196 = scmp.eq.s32.totalorder %s32, 1
    %p197 = por %p195, %p196
    %p198 = scmp.ne.s32.totalorder %s189, %s190
    %p199 = scmp.eq.s32.totalorder %s32, 0
    %p200 = por %p198, %p199
    %p201 = scmp.ne.s32.totalorder %s189, %s190
    %p202 = scmp.eq.s32.totalorder %s33, 1
    %p203 = por %p201, %p202
    %p205 = scmp.ne.s32.totalorder %s190, %s204
    %p206 = scmp.eq.s32.totalorder %s33, 0
    %p207 = por %p205, %p206
    %s209 = sadd.s32 %s208, 1
    %p212 = scmp.eq.s32.totalorder %s27, 1
    %p213 = scmp.ne.s32.totalorder %s208, %s210
    %p214 = scmp.eq.s32.totalorder %s27, 0
    %p215 = por %p213, %p214
    %p216 = scmp.ne.s32.totalorder %s208, %s210
    %p217 = scmp.eq.s32.totalorder %s32, 1
    %p218 = por %p216, %p217
    %p219 = scmp.ne.s32.totalorder %s210, %s211
    %p220 = scmp.eq.s32.totalorder %s32, 0
    %p221 = por %p219, %p220
    %p222 = scmp.ne.s32.totalorder %s210, %s211
    %p223 = scmp.eq.s32.totalorder %s33, 1
    %p224 = por %p222, %p223
    %p226 = scmp.ne.s32.totalorder %s211, %s225
    %p227 = scmp.eq.s32.totalorder %s33, 0
    %p228 = por %p226, %p227
    %s230 = sadd.s32 %s229, 1
    %p233 = scmp.eq.s32.totalorder %s27, 1
    %p234 = scmp.ne.s32.totalorder %s229, %s231
    %p235 = scmp.eq.s32.totalorder %s27, 0
    %p236 = por %p234, %p235
    %p237 = scmp.ne.s32.totalorder %s229, %s231
    %p238 = scmp.eq.s32.totalorder %s32, 1
    %p239 = por %p237, %p238
    %p240 = scmp.ne.s32.totalorder %s231, %s232
    %p241 = scmp.eq.s32.totalorder %s32, 0
    %p242 = por %p240, %p241
    %p243 = scmp.ne.s32.totalorder %s231, %s232
    %p244 = scmp.eq.s32.totalorder %s33, 1
    %p245 = por %p243, %p244
    %p247 = scmp.ne.s32.totalorder %s232, %s246
    %p248 = scmp.eq.s32.totalorder %s33, 0
    %p249 = por %p247, %p248
    %s251 = sadd.s32 %s250, 1
    %p254 = scmp.eq.s32.totalorder %s27, 1
    %p255 = scmp.ne.s32.totalorder %s250, %s252
    %p256 = scmp.eq.s32.totalorder %s27, 0
    %p257 = por %p255, %p256
    %p258 = scmp.ne.s32.totalorder %s250, %s252
    %p259 = scmp.eq.s32.totalorder %s32, 1
    %p260 = por %p258, %p259
    %p261 = scmp.ne.s32.totalorder %s252, %s253
    %p262 = scmp.eq.s32.totalorder %s32, 0
    %p263 = por %p261, %p262
    %p264 = scmp.ne.s32.totalorder %s252, %s253
    %p265 = scmp.eq.s32.totalorder %s33, 1
    %p266 = por %p264, %p265
    %p268 = scmp.ne.s32.totalorder %s253, %s267
    %p269 = scmp.eq.s32.totalorder %s33, 0
    %p270 = por %p268, %p269
    %s272 = sadd.s32 %s271, 1
    %p275 = scmp.eq.s32.totalorder %s27, 1
    %p276 = scmp.ne.s32.totalorder %s271, %s273
    %p277 = scmp.eq.s32.totalorder %s27, 0
    %p278 = por %p276, %p277
    %p279 = scmp.ne.s32.totalorder %s271, %s273
    %p280 = scmp.eq.s32.totalorder %s32, 1
    %p281 = por %p279, %p280
    %p282 = scmp.ne.s32.totalorder %s273, %s274
    %p283 = scmp.eq.s32.totalorder %s32, 0
    %p284 = por %p282, %p283
    %p285 = scmp.ne.s32.totalorder %s273, %s274
    %p286 = scmp.eq.s32.totalorder %s33, 1
    %p287 = por %p285, %p286
    %p289 = scmp.ne.s32.totalorder %s274, %s288
    %p290 = scmp.eq.s32.totalorder %s33, 0
    %p291 = por %p289, %p290
    %s293 = sadd.s32 %s292, 1
    %p296 = scmp.eq.s32.totalorder %s27, 1
    %p297 = scmp.ne.s32.totalorder %s292, %s294
    %p298 = scmp.eq.s32.totalorder %s27, 0
    %p299 = por %p297, %p298
    %p300 = scmp.ne.s32.totalorder %s292, %s294
    %p301 = scmp.eq.s32.totalorder %s32, 1
    %p302 = por %p300, %p301
    %p303 = scmp.ne.s32.totalorder %s294, %s295
    %p304 = scmp.eq.s32.totalorder %s32, 0
    %p305 = por %p303, %p304
    %p306 = scmp.ne.s32.totalorder %s294, %s295
    %p307 = scmp.eq.s32.totalorder %s33, 1
    %p308 = por %p306, %p307
    %p310 = scmp.ne.s32.totalorder %s295, %s309
    %p311 = scmp.eq.s32.totalorder %s33, 0
    %p312 = por %p310, %p311
    %s314 = sadd.s32 %s313, 1
    %p317 = scmp.eq.s32.totalorder %s27, 1
    %p318 = scmp.ne.s32.totalorder %s313, %s315
    %p319 = scmp.eq.s32.totalorder %s27, 0
    %p320 = por %p318, %p319
    %p321 = scmp.ne.s32.totalorder %s313, %s315
    %p322 = scmp.eq.s32.totalorder %s32, 1
    %p323 = por %p321, %p322
    %p324 = scmp.ne.s32.totalorder %s315, %s316
    %p325 = scmp.eq.s32.totalorder %s32, 0
    %p326 = por %p324, %p325
    %p327 = scmp.ne.s32.totalorder %s315, %s316
    %p328 = scmp.eq.s32.totalorder %s33, 1
    %p329 = por %p327, %p328
    %p331 = scmp.ne.s32.totalorder %s316, %s330
    %p332 = scmp.eq.s32.totalorder %s33, 0
    %p333 = por %p331, %p332
    %s335 = sadd.s32 %s334, 1
    %p338 = scmp.eq.s32.totalorder %s27, 1
    %p339 = scmp.ne.s32.totalorder %s334, %s336
    %p340 = scmp.eq.s32.totalorder %s27, 0
    %p341 = por %p339, %p340
    %p342 = scmp.ne.s32.totalorder %s334, %s336
    %p343 = scmp.eq.s32.totalorder %s32, 1
    %p344 = por %p342, %p343
    %p345 = scmp.ne.s32.totalorder %s336, %s337
    %p346 = scmp.eq.s32.totalorder %s32, 0
    %p347 = por %p345, %p346
    %p348 = scmp.ne.s32.totalorder %s336, %s337
    %p349 = scmp.eq.s32.totalorder %s33, 1
    %p350 = por %p348, %p349
    %p352 = scmp.ne.s32.totalorder %s337, %s351
    %p353 = scmp.eq.s32.totalorder %s33, 0
    %p354 = por %p352, %p353
    %s356 = sadd.s32 %s355, 1
    %p359 = scmp.eq.s32.totalorder %s27, 1
    %p360 = scmp.ne.s32.totalorder %s355, %s357
    %p361 = scmp.eq.s32.totalorder %s27, 0
    %p362 = por %p360, %p361
    %p363 = scmp.ne.s32.totalorder %s355, %s357
    %p364 = scmp.eq.s32.totalorder %s32, 1
    %p365 = por %p363, %p364
    %p366 = scmp.ne.s32.totalorder %s357, %s358
    %p367 = scmp.eq.s32.totalorder %s32, 0
    %p368 = por %p366, %p367
    %p369 = scmp.ne.s32.totalorder %s357, %s358
    %p370 = scmp.eq.s32.totalorder %s33, 1
    %p371 = por %p369, %p370
    %p373 = scmp.ne.s32.totalorder %s358, %s372
    %p374 = scmp.eq.s32.totalorder %s33, 0
    %p375 = por %p373, %p374
    %s377 = sadd.s32 %s376, 1
    %p380 = scmp.eq.s32.totalorder %s27, 1
    %p381 = scmp.ne.s32.totalorder %s376, %s378
    %p382 = scmp.eq.s32.totalorder %s27, 0
    %p383 = por %p381, %p382
    %p384 = scmp.ne.s32.totalorder %s376, %s378
    %p385 = scmp.eq.s32.totalorder %s32, 1
    %p386 = por %p384, %p385
    %p387 = scmp.ne.s32.totalorder %s378, %s379
    %p388 = scmp.eq.s32.totalorder %s32, 0
    %p389 = por %p387, %p388
    %p390 = scmp.ne.s32.totalorder %s378, %s379
    %p391 = scmp.eq.s32.totalorder %s33, 1
    %p392 = por %p390, %p391
    %p394 = scmp.ne.s32.totalorder %s379, %s393
    %p395 = scmp.eq.s32.totalorder %s33, 0
    %p396 = por %p394, %p395
    %s398 = sadd.s32 %s397, 1
    %p401 = scmp.eq.s32.totalorder %s27, 1
    %p402 = scmp.ne.s32.totalorder %s397, %s399
    %p403 = scmp.eq.s32.totalorder %s27, 0
    %p404 = por %p402, %p403
    %p405 = scmp.ne.s32.totalorder %s397, %s399
    %p406 = scmp.eq.s32.totalorder %s32, 1
    %p407 = por %p405, %p406
    %p408 = scmp.ne.s32.totalorder %s399, %s400
    %p409 = scmp.eq.s32.totalorder %s32, 0
    %p410 = por %p408, %p409
    %p411 = scmp.ne.s32.totalorder %s399, %s400
    %p412 = scmp.eq.s32.totalorder %s33, 1
    %p413 = por %p411, %p412
    %p415 = scmp.ne.s32.totalorder %s400, %s414
    %p416 = scmp.eq.s32.totalorder %s33, 0
    %p417 = por %p415, %p416
    %s419 = sadd.s32 %s418, 1
    %p422 = scmp.eq.s32.totalorder %s27, 1
    %p423 = scmp.ne.s32.totalorder %s418, %s420
    %p424 = scmp.eq.s32.totalorder %s27, 0
    %p425 = por %p423, %p424
    %p426 = scmp.ne.s32.totalorder %s418, %s420
    %p427 = scmp.eq.s32.totalorder %s32, 1
    %p428 = por %p426, %p427
    %p429 = scmp.ne.s32.totalorder %s420, %s421
    %p430 = scmp.eq.s32.totalorder %s32, 0
    %p431 = por %p429, %p430
    %p432 = scmp.ne.s32.totalorder %s420, %s421
    %p433 = scmp.eq.s32.totalorder %s33, 1
    %p434 = por %p432, %p433
    %p436 = scmp.ne.s32.totalorder %s421, %s435
    %p437 = scmp.eq.s32.totalorder %s33, 0
    %p438 = por %p436, %p437
    %s440 = sadd.s32 %s439, 1
    %p443 = scmp.eq.s32.totalorder %s27, 1
    %p444 = scmp.ne.s32.totalorder %s439, %s441
    %p445 = scmp.eq.s32.totalorder %s27, 0
    %p446 = por %p444, %p445
    %p447 = scmp.ne.s32.totalorder %s439, %s441
    %p448 = scmp.eq.s32.totalorder %s32, 1
    %p449 = por %p447, %p448
    %p450 = scmp.ne.s32.totalorder %s441, %s442
    %p451 = scmp.eq.s32.totalorder %s32, 0
    %p452 = por %p450, %p451
    %p453 = scmp.ne.s32.totalorder %s441, %s442
    %p454 = scmp.eq.s32.totalorder %s33, 1
    %p455 = por %p453, %p454
    %p457 = scmp.ne.s32.totalorder %s442, %s456
    %p458 = scmp.eq.s32.totalorder %s33, 0
    %p459 = por %p457, %p458
    %s461 = sadd.s32 %s460, 1
    %p464 = scmp.eq.s32.totalorder %s27, 1
    %p465 = scmp.ne.s32.totalorder %s460, %s462
    %p466 = scmp.eq.s32.totalorder %s27, 0
    %p467 = por %p465, %p466
    %p468 = scmp.ne.s32.totalorder %s460, %s462
    %p469 = scmp.eq.s32.totalorder %s32, 1
    %p470 = por %p468, %p469
    %p471 = scmp.ne.s32.totalorder %s462, %s463
    %p472 = scmp.eq.s32.totalorder %s32, 0
    %p473 = por %p471, %p472
    %p474 = scmp.ne.s32.totalorder %s462, %s463
    %p475 = scmp.eq.s32.totalorder %s33, 1
    %p476 = por %p474, %p475
    %p478 = scmp.ne.s32.totalorder %s463, %s477
    %p479 = scmp.eq.s32.totalorder %s33, 0
    %p480 = por %p478, %p479
    %s481 = ssub.s32 %s27, %s34
    %p482 = scmp.eq.s32.totalorder %s481, 0
    %s484 = sadd.s32 %s483, 1
    %s485 = scalar_select %p482, %s483, %s484
    %p488 = pneg %p482
    %p489 = scmp.eq.s32.totalorder %s27, 1
    %p490 = por %p488, %p489
    %p491 = scmp.ne.s32.totalorder %s483, %s486
    %p492 = scmp.eq.s32.totalorder %s27, 0
    %p493 = por %p491, %p492
    %p494 = scmp.ne.s32.totalorder %s483, %s486
    %p495 = scmp.eq.s32.totalorder %s32, 1
    %p496 = por %p494, %p495
    %p497 = scmp.ne.s32.totalorder %s486, %s487
    %p498 = scmp.eq.s32.totalorder %s32, 0
    %p499 = por %p497, %p498
    %p500 = scmp.ne.s32.totalorder %s486, %s487
    %p501 = scmp.eq.s32.totalorder %s33, 1
    %p502 = por %p500, %p501
    %p504 = scmp.ne.s32.totalorder %s487, %s503
    %p505 = scmp.eq.s32.totalorder %s33, 0
    %p506 = por %p504, %p505
    %p507 = scmp.le.s32.totalorder 1, %s27
    %p508 = scmp.lt.s32.totalorder %s27, 3
    %p509 = pnand %p507, %p508
    %p510 = pneg %p509
    // Predicated region
    $region9: #{_lambda_.2} parent=5 // pred_check
      _
    $region10: #{_lambda_.2} parent=5 // pred_check_branch
      %512 = sbr.rel (%p509) target = $region12
    $region11: #{_lambda_.2} parent=5 // pred_region
      %s513 = ssub.s32 %s27, 1
      // Predicated region
      $region13: #{_lambda_.2} parent=11 // pred_check
        %p514 = pneg %p74
      $region14: #{_lambda_.2} parent=11 // pred_check_branch
        %516 = sbr.rel (%p514) target = $region16
      $region15: #{_lambda_.2} parent=11 // pred_region
        _
      $region16: #{_lambda_.2} parent=11 // pred_fallthru
        _
      // Predicated region
      $region17: #{_lambda_.2} parent=11 // pred_check
        %p517 = pneg %p95
      $region18: #{_lambda_.2} parent=11 // pred_check_branch
        %519 = sbr.rel (%p517) target = $region20
      $region19: #{_lambda_.2} parent=11 // pred_region
        _
      $region20: #{_lambda_.2} parent=11 // pred_fallthru
        _
      // Predicated region
      $region21: #{_lambda_.2} parent=11 // pred_check
        %p520 = pneg %p116
      $region22: #{_lambda_.2} parent=11 // pred_check_branch
        %522 = sbr.rel (%p520) target = $region24
      $region23: #{_lambda_.2} parent=11 // pred_region
        _
      $region24: #{_lambda_.2} parent=11 // pred_fallthru
        _
      // Predicated region
      $region25: #{_lambda_.2} parent=11 // pred_check
        %p523 = pneg %p137
      $region26: #{_lambda_.2} parent=11 // pred_check_branch
        %525 = sbr.rel (%p523) target = $region28
      $region27: #{_lambda_.2} parent=11 // pred_region
        _
      $region28: #{_lambda_.2} parent=11 // pred_fallthru
        _
      // Predicated region
      $region29: #{_lambda_.2} parent=11 // pred_check
        %p526 = pneg %p158
      $region30: #{_lambda_.2} parent=11 // pred_check_branch
        %528 = sbr.rel (%p526) target = $region32
      $region31: #{_lambda_.2} parent=11 // pred_region
        _
      $region32: #{_lambda_.2} parent=11 // pred_fallthru
        _
      // Predicated region
      $region33: #{_lambda_.2} parent=11 // pred_check
        %p529 = pneg %p179
      $region34: #{_lambda_.2} parent=11 // pred_check_branch
        %531 = sbr.rel (%p529) target = $region36
      $region35: #{_lambda_.2} parent=11 // pred_region
        _
      $region36: #{_lambda_.2} parent=11 // pred_fallthru
        _
      // Predicated region
      $region37: #{_lambda_.2} parent=11 // pred_check
        %p532 = pneg %p200
      $region38: #{_lambda_.2} parent=11 // pred_check_branch
        %534 = sbr.rel (%p532) target = $region40
      $region39: #{_lambda_.2} parent=11 // pred_region
        _
      $region40: #{_lambda_.2} parent=11 // pred_fallthru
        _
      // Predicated region
      $region41: #{_lambda_.2} parent=11 // pred_check
        %p535 = pneg %p221
      $region42: #{_lambda_.2} parent=11 // pred_check_branch
        %537 = sbr.rel (%p535) target = $region44
      $region43: #{_lambda_.2} parent=11 // pred_region
        _
      $region44: #{_lambda_.2} parent=11 // pred_fallthru
        _
      // Predicated region
      $region45: #{_lambda_.2} parent=11 // pred_check
        %p538 = pneg %p242
      $region46: #{_lambda_.2} parent=11 // pred_check_branch
        %540 = sbr.rel (%p538) target = $region48
      $region47: #{_lambda_.2} parent=11 // pred_region
        _
      $region48: #{_lambda_.2} parent=11 // pred_fallthru
        _
      // Predicated region
      $region49: #{_lambda_.2} parent=11 // pred_check
        %p541 = pneg %p263
      $region50: #{_lambda_.2} parent=11 // pred_check_branch
        %543 = sbr.rel (%p541) target = $region52
      $region51: #{_lambda_.2} parent=11 // pred_region
        _
      $region52: #{_lambda_.2} parent=11 // pred_fallthru
        _
      // Predicated region
      $region53: #{_lambda_.2} parent=11 // pred_check
        %p544 = pneg %p284
      $region54: #{_lambda_.2} parent=11 // pred_check_branch
        %546 = sbr.rel (%p544) target = $region56
      $region55: #{_lambda_.2} parent=11 // pred_region
        _
      $region56: #{_lambda_.2} parent=11 // pred_fallthru
        _
      // Predicated region
      $region57: #{_lambda_.2} parent=11 // pred_check
        %p547 = pneg %p305
      $region58: #{_lambda_.2} parent=11 // pred_check_branch
        %549 = sbr.rel (%p547) target = $region60
      $region59: #{_lambda_.2} parent=11 // pred_region
        _
      $region60: #{_lambda_.2} parent=11 // pred_fallthru
        _
      // Predicated region
      $region61: #{_lambda_.2} parent=11 // pred_check
        %p550 = pneg %p326
      $region62: #{_lambda_.2} parent=11 // pred_check_branch
        %552 = sbr.rel (%p550) target = $region64
      $region63: #{_lambda_.2} parent=11 // pred_region
        _
      $region64: #{_lambda_.2} parent=11 // pred_fallthru
        _
      // Predicated region
      $region65: #{_lambda_.2} parent=11 // pred_check
        %p553 = pneg %p347
      $region66: #{_lambda_.2} parent=11 // pred_check_branch
        %555 = sbr.rel (%p553) target = $region68
      $region67: #{_lambda_.2} parent=11 // pred_region
        _
      $region68: #{_lambda_.2} parent=11 // pred_fallthru
        _
      // Predicated region
      $region69: #{_lambda_.2} parent=11 // pred_check
        %p556 = pneg %p368
      $region70: #{_lambda_.2} parent=11 // pred_check_branch
        %558 = sbr.rel (%p556) target = $region72
      $region71: #{_lambda_.2} parent=11 // pred_region
        _
      $region72: #{_lambda_.2} parent=11 // pred_fallthru
        _
      // Predicated region
      $region73: #{_lambda_.2} parent=11 // pred_check
        %p559 = pneg %p389
      $region74: #{_lambda_.2} parent=11 // pred_check_branch
        %561 = sbr.rel (%p559) target = $region76
      $region75: #{_lambda_.2} parent=11 // pred_region
        _
      $region76: #{_lambda_.2} parent=11 // pred_fallthru
        _
      // Predicated region
      $region77: #{_lambda_.2} parent=11 // pred_check
        %p562 = pneg %p410
      $region78: #{_lambda_.2} parent=11 // pred_check_branch
        %564 = sbr.rel (%p562) target = $region80
      $region79: #{_lambda_.2} parent=11 // pred_region
        _
      $region80: #{_lambda_.2} parent=11 // pred_fallthru
        _
      // Predicated region
      $region81: #{_lambda_.2} parent=11 // pred_check
        %p565 = pneg %p431
      $region82: #{_lambda_.2} parent=11 // pred_check_branch
        %567 = sbr.rel (%p565) target = $region84
      $region83: #{_lambda_.2} parent=11 // pred_region
        _
      $region84: #{_lambda_.2} parent=11 // pred_fallthru
        _
      // Predicated region
      $region85: #{_lambda_.2} parent=11 // pred_check
        %p568 = pneg %p452
      $region86: #{_lambda_.2} parent=11 // pred_check_branch
        %570 = sbr.rel (%p568) target = $region88
      $region87: #{_lambda_.2} parent=11 // pred_region
        _
      $region88: #{_lambda_.2} parent=11 // pred_fallthru
        _
      // Predicated region
      $region89: #{_lambda_.2} parent=11 // pred_check
        %p571 = pneg %p473
      $region90: #{_lambda_.2} parent=11 // pred_check_branch
        %573 = sbr.rel (%p571) target = $region92
      $region91: #{_lambda_.2} parent=11 // pred_region
        _
      $region92: #{_lambda_.2} parent=11 // pred_fallthru
        _
    $region12: #{_lambda_.2} parent=5 // pred_fallthru
      _
    %p574 = scmp.lt.s32.totalorder %s27, 2
    // Predicated region
    $region93: #{_lambda_.2} parent=5 // pred_check
      %p575 = pneg %p574
    $region94: #{_lambda_.2} parent=5 // pred_check_branch
      %577 = sbr.rel (%p575) target = $region96
    $region95: #{_lambda_.2} parent=5 // pred_region
      // Predicated region
      $region97: #{_lambda_.2} parent=95 // pred_check
        %p578 = pneg %p47
      $region98: #{_lambda_.2} parent=95 // pred_check_branch
        %580 = sbr.rel (%p578) target = $region100
      $region99: #{_lambda_.2} parent=95 // pred_region
        %s581 = smul.u32 4, %s27
        %p582 = scmp.lt.s32.totalorder %s581, 7
        %s583 = scalar_select %p582, %s581, 7
        %s584 = smul.addr %s583, 8
        %s585 = scalar_lea.vmem %s0, %s584
        %s586 = smul.u32 4, %s27
      $region100: #{_lambda_.2} parent=95 // pred_fallthru
        _
    $region96: #{_lambda_.2} parent=5 // pred_fallthru
      _
    %p587 = scmp.le.s32.totalorder 1, %s27
    %p588 = scmp.lt.s32.totalorder %s27, 3
    %p589 = pnand %p587, %p588
    %p590 = pneg %p589
    // Predicated region
    $region101: #{_lambda_.2} parent=5 // pred_check
      _
    $region102: #{_lambda_.2} parent=5 // pred_check_branch
      %592 = sbr.rel (%p589) target = $region104
    $region103: #{_lambda_.2} parent=5 // pred_region
      %s593 = ssub.s32 %s27, 1
      %s594 = smul.u32 4, %s32
      %p595 = scmp.lt.s32.totalorder %s594, 7
      %s596 = scalar_select %p595, %s594, 7
      %s597 = smul.addr %s596, 8
      %s598 = scalar_lea.vmem %s0, %s597
      %p599 = pneg %p53
      %p600 = pneg %p50
      %p601 = pneg %p74
      %p602 = pneg %p71
      %p603 = pneg %p95
      %p604 = pneg %p92
      %p605 = pneg %p116
      %p606 = pneg %p113
      %p607 = pneg %p137
      %p608 = pneg %p134
      %p609 = pneg %p158
      %p610 = pneg %p155
      %p611 = pneg %p179
      %p612 = pneg %p176
      %p613 = pneg %p200
      %p614 = pneg %p197
      %p615 = pneg %p221
      %p616 = pneg %p218
      %p617 = pneg %p242
      %p618 = pneg %p239
      %p619 = pneg %p263
      %p620 = pneg %p260
      %p621 = pneg %p284
      %p622 = pneg %p281
      %p623 = pneg %p305
      %p624 = pneg %p302
      %p625 = pneg %p326
      %p626 = pneg %p323
      %p627 = pneg %p347
      %p628 = pneg %p344
      %p629 = pneg %p368
      %p630 = pneg %p365
      %p631 = pneg %p389
      %p632 = pneg %p386
      %p633 = pneg %p410
      %p634 = pneg %p407
      %p635 = pneg %p431
      %p636 = pneg %p428
      %p637 = pneg %p452
      %p638 = pneg %p449
      %p639 = pneg %p473
      %p640 = pneg %p470
      %p641 = pneg %p499
      %p642 = pneg %p496
      %s643 = smul.u32 4, %s32
      %p644 = scmp.lt.s32.totalorder %s643, 7
      %s645 = scalar_select %p644, %s643, 7
      %s646 = smul.addr %s645, 8
      %s647 = scalar_lea.vmem %s21, %s646
      %s648 = smul.u32 4, %s32
      %p649 = scmp.lt.s32.totalorder %s648, 7
      %s650 = scalar_select %p649, %s648, 7
      %s651 = smul.addr %s650, 8
      %s652 = scalar_lea.vmem %s0, %s651
      %s653 = smul.u32 4, %s32
      %s654 = smul.u32 4, %s32
      %p655 = scmp.lt.s32.totalorder %s654, 7
      %s656 = scalar_select %p655, %s654, 7
      %s657 = smul.addr %s656, 8
      %s658 = scalar_lea.vmem %s21, %s657
      %s659 = smul.u32 4, %s32
      %v661 = vld [vmem:[%s652] sm:$0xff]
      %v662 = vld [vmem:[%s652 + $0x8] sm:$0xff]
      %v663 = vld [vmem:[%s652 + $0x10] sm:$0xff]
      %v664 = vld [vmem:[%s652 + $0x18] sm:$0xff]
      %v665 = vpack.c.bf16 %v662, %v661
      %v666 = vpack.c.bf16 %v664, %v663
      %v667 = vld [vmem:[%s1] sm:$0xf]
      %v668 = vld [vmem:[%s2] sm:$0xff]
      %v669 = vld [vmem:[%s2 + $0x8] sm:$0xff]
      %v670 = vld [vmem:[%s2 + $0x10] sm:$0xff]
      %v671 = vld [vmem:[%s2 + $0x18] sm:$0xff]
      %vm672 = vcmask 64512
      %v674 = vsel %vm672, %v665, 0
      %v677 = vsel %vm672, %v666, 0
      %vm679 = vcmask 1043456
      %v681 = vsel %vm679, %v667, 0
      %683 = vmatprep.subr.bf16.mxu0 0
      %684 = vmatpush1.bf16.msra.mxu0 %v681
      %685 = vmatprep.subr.bf16.mxu0 0
      %686 = vmatpush1.bf16.msra.mxu0 0
      %687 = vmatprep.subr.bf16.mxu0 0
      %688 = vmatpush1.bf16.msra.mxu0 0
      %689 = vmatprep.subr.bf16.mxu0 0
      %690 = vmatpush1.bf16.msra.mxu0 0
      %691 = vmatprep.subr.bf16.mxu0 0
      %692 = vmatpush1.bf16.msra.mxu0 0
      %693 = vmatprep.subr.bf16.mxu0 0
      %694 = vmatpush1.bf16.msra.mxu0 0
      %695 = vmatprep.subr.bf16.mxu0 0
      %696 = vmatpush1.bf16.msra.mxu0 0
      %697 = vmatprep.subr.bf16.mxu0 0
      %698 = vmatpush1.bf16.msra.mxu0 0
      %699 = vmatprep.subr.bf16.mxu0 0
      %700 = vmatpush1.bf16.msra.mxu0 0
      %701 = vmatprep.subr.bf16.mxu0 0
      %702 = vmatpush1.bf16.msra.mxu0 0
      %703 = vmatprep.subr.bf16.mxu0 0
      %704 = vmatpush1.bf16.msra.mxu0 0
      %705 = vmatprep.subr.bf16.mxu0 0
      %706 = vmatpush1.bf16.msra.mxu0 0
      %707 = vmatprep.subr.bf16.mxu0 0
      %708 = vmatpush1.bf16.msra.mxu0 0
      %709 = vmatprep.subr.bf16.mxu0 0
      %710 = vmatpush1.bf16.msra.mxu0 0
      %711 = vmatprep.subr.bf16.mxu0 0
      %712 = vmatpush1.bf16.msra.mxu0 0
      %713 = vmatprep.subr.bf16.mxu0 0
      %714 = vmatpush1.bf16.msra.mxu0 0
      %715 = vmatprep.mubr.bf16.mxu0 0
      %716 = vmatmul.mubr.bf16.gmra.mrb[0].mxu0 %v674
      %v717 = vpop.f32.mrb[0].mxu0
      %v718 = vadd.f32 %v668, %v717
      %v719 = vpop.f32.mrb[0].mxu0
      %v720 = vpop.f32.mrb[0].mxu0
      %v721 = vadd.f32 %v669, %v720
      %v722 = vpop.f32.mrb[0].mxu0
      %723 = vmatprep.mubr.bf16.mxu0 0
      %724 = vmatmul.mubr.bf16.gmra.mrb[0].mxu0 %v677
      %v725 = vpop.f32.mrb[0].mxu0
      %v726 = vadd.f32 %v670, %v725
      %v727 = vpop.f32.mrb[0].mxu0
      %v728 = vpop.f32.mrb[0].mxu0
      %v729 = vadd.f32 %v671, %v728
      %v730 = vpop.f32.mrb[0].mxu0
      %731 = vdwg.mxu0
      %v732 = vlaneseq
      %v733 = vand.u32 %v732, 127
      %vm734 = vcmp.lt.s32.totalorder %v733, 5
      %v735 = vsel %vm734, 0.0, -1e+30
      %v736 = vld [vmem:[%s3] sm:$0xf]
      %v737 = vld [vmem:[%s3 + $0x4] sm:$0xf]
      %v738 = vld [vmem:[%s3 + $0x8] sm:$0xf]
      %v739 = vld [vmem:[%s3 + $0xc] sm:$0xf]
      %v740 = vld [vmem:[%s4] sm:$0x1]
      %v741 = vld [vmem:[%s5] sm:$0xf]
      %v742 = vld [vmem:[%s5 + $0x4] sm:$0xf]
      %v743 = vld [vmem:[%s5 + $0x8] sm:$0xf]
      %v744 = vld [vmem:[%s5 + $0xc] sm:$0xf]
      %v745 = vld [vmem:[%s6] sm:$0x1]
      %v746 = vld [vmem:[%s7] sm:$0xf]
      %v747 = vld [vmem:[%s7 + $0x4] sm:$0xf]
      %v748 = vld [vmem:[%s7 + $0x8] sm:$0xf]
      %v749 = vld [vmem:[%s7 + $0xc] sm:$0xf]
      %v750 = vld [vmem:[%s8] sm:$0x1]
      %v751 = vld [vmem:[%s9] sm:$0xf]
      %v752 = vld [vmem:[%s9 + $0x4] sm:$0xf]
      %v753 = vld [vmem:[%s9 + $0x8] sm:$0xf]
      %v754 = vld [vmem:[%s9 + $0xc] sm:$0xf]
      %v755 = vld [vmem:[%s10] sm:$0x1]
      %v756 = vld [vmem:[%s11] sm:$0x1]
      %v757 = vld [vmem:[%s12] sm:$0x1]
      %v758 = vld [vmem:[%s13] sm:$0xf]
      %v759 = vld [vmem:[%s13 + $0x4] sm:$0xf]
      %v760 = vld [vmem:[%s13 + $0x8] sm:$0xf]
      %v761 = vld [vmem:[%s13 + $0xc] sm:$0xf]
      %v762 = vld [vmem:[%s14] sm:$0x1]
      %v763 = vld [vmem:[%s15] sm:$0xf]
      %v764 = vld [vmem:[%s15 + $0x4] sm:$0xf]
      %v765 = vld [vmem:[%s15 + $0x8] sm:$0xf]
      %v766 = vld [vmem:[%s15 + $0xc] sm:$0xf]
      %v767 = vld [vmem:[%s15 + $0x10] sm:$0xf]
      %v768 = vld [vmem:[%s15 + $0x14] sm:$0xf]
      %v769 = vld [vmem:[%s15 + $0x18] sm:$0xf]
      %v770 = vld [vmem:[%s15 + $0x1c] sm:$0xf]
      %v771 = vld [vmem:[%s16] sm:$0x1]
      %v772 = vld [vmem:[%s17] sm:$0x1]
      %v773 = vld [vmem:[%s18] sm:$0x1]
      %v774 = vpack.c.bf16 %v721, %v718
      %v775 = vpack.c.bf16 %v729, %v726
      %v777 = vlaneseq
      %v778 = vshrl.u32 %v777, 7
      %v779 = vsub.s32 0, %v778
      %v780 = vrot.slane %v740, %v779
      %v786 = vunpack.c.l.b16 %v736
      %v787 = vunpack.c.l.b16 %v737
      %v788 = vunpack.c.l.b16 %v738
      %v789 = vunpack.c.l.b16 %v739
      %v790 = vpack.c.b16 %v787, %v786
      %v791 = vpack.c.b16 %v789, %v788
      %vm794 = vcmask 261120
      %v796 = vsel %vm794, %v774, 0
      %v799 = vsel %vm794, %v775, 0
      %801 = vmatprep.subr.bf16.mxu0 0
      %802 = vmatpush1.bf16.msra.mxu0 %v790
      %803 = vmatprep.subr.bf16.mxu0 0
      %804 = vmatpush1.bf16.msra.mxu0 %v791
      %805 = vmatprep.subr.bf16.mxu0 0
      %806 = vmatpush1.bf16.msra.mxu0 0
      %807 = vmatprep.subr.bf16.mxu0 0
      %808 = vmatpush1.bf16.msra.mxu0 0
      %809 = vmatprep.subr.bf16.mxu0 0
      %810 = vmatpush1.bf16.msra.mxu0 0
      %811 = vmatprep.subr.bf16.mxu0 0
      %812 = vmatpush1.bf16.msra.mxu0 0
      %813 = vmatprep.subr.bf16.mxu0 0
      %814 = vmatpush1.bf16.msra.mxu0 0
      %815 = vmatprep.subr.bf16.mxu0 0
      %816 = vmatpush1.bf16.msra.mxu0 0
      %817 = vmatprep.subr.bf16.mxu0 0
      %818 = vmatpush1.bf16.msra.mxu0 0
      %819 = vmatprep.subr.bf16.mxu0 0
      %820 = vmatpush1.bf16.msra.mxu0 0
      %821 = vmatprep.subr.bf16.mxu0 0
      %822 = vmatpush1.bf16.msra.mxu0 0
      %823 = vmatprep.subr.bf16.mxu0 0
      %824 = vmatpush1.bf16.msra.mxu0 0
      %825 = vmatprep.subr.bf16.mxu0 0
      %826 = vmatpush1.bf16.msra.mxu0 0
      %827 = vmatprep.subr.bf16.mxu0 0
      %828 = vmatpush1.bf16.msra.mxu0 0
      %829 = vmatprep.subr.bf16.mxu0 0
      %830 = vmatpush1.bf16.msra.mxu0 0
      %831 = vmatprep.subr.bf16.mxu0 0
      %832 = vmatpush1.bf16.msra.mxu0 0
      %833 = vmatprep.mubr.bf16.mxu0 0
      %834 = vmatmul.mubr.bf16.gmra.mrb[0].mxu0 %v796
      %v835 = vpop.f32.mrb[0].mxu0
      %v836 = vadd.f32 %v780, %v835
      %v837 = vpop.f32.mrb[0].mxu0
      %v838 = vpop.f32.mrb[0].mxu0
      %v839 = vadd.f32 %v780, %v838
      %v840 = vpop.f32.mrb[0].mxu0
      %841 = vmatprep.mubr.bf16.mxu0 0
      %842 = vmatmul.mubr.bf16.gmra.mrb[0].mxu0 %v799
      %v843 = vpop.f32.mrb[0].mxu0
      %v844 = vadd.f32 %v780, %v843
      %v845 = vpop.f32.mrb[0].mxu0
      %v846 = vpop.f32.mrb[0].mxu0
      %v847 = vadd.f32 %v780, %v846
      %v848 = vpop.f32.mrb[0].mxu0
      %849 = vdwg.mxu0
      %v851 = vlaneseq
      %v852 = vshrl.u32 %v851, 7
      %v853 = vsub.s32 0, %v852
      %v854 = vrot.slane %v745, %v853
      %v860 = vunpack.c.l.b16 %v741
      %v861 = vunpack.c.l.b16 %v742
      %v862 = vunpack.c.l.b16 %v743
      %v863 = vunpack.c.l.b16 %v744
      %v864 = vpack.c.b16 %v861, %v860
      %v865 = vpack.c.b16 %v863, %v862
      %868 = vmatprep.subr.bf16.mxu0 0
      %869 = vmatpush1.bf16.msra.mxu0 %v864
      %870 = vmatprep.subr.bf16.mxu0 0
      %871 = vmatpush1.bf16.msra.mxu0 %v865
      %872 = vmatprep.subr.bf16.mxu0 0
      %873 = vmatpush1.bf16.msra.mxu0 0
      %874 = vmatprep.subr.bf16.mxu0 0
      %875 = vmatpush1.bf16.msra.mxu0 0
      %876 = vmatprep.subr.bf16.mxu0 0
      %877 = vmatpush1.bf16.msra.mxu0 0
      %878 = vmatprep.subr.bf16.mxu0 0
      %879 = vmatpush1.bf16.msra.mxu0 0
      %880 = vmatprep.subr.bf16.mxu0 0
      %881 = vmatpush1.bf16.msra.mxu0 0
      %882 = vmatprep.subr.bf16.mxu0 0
      %883 = vmatpush1.bf16.msra.mxu0 0
      %884 = vmatprep.subr.bf16.mxu0 0
      %885 = vmatpush1.bf16.msra.mxu0 0
      %886 = vmatprep.subr.bf16.mxu0 0
      %887 = vmatpush1.bf16.msra.mxu0 0
      %888 = vmatprep.subr.bf16.mxu0 0
      %889 = vmatpush1.bf16.msra.mxu0 0
      %890 = vmatprep.subr.bf16.mxu0 0
      %891 = vmatpush1.bf16.msra.mxu0 0
      %892 = vmatprep.subr.bf16.mxu0 0
      %893 = vmatpush1.bf16.msra.mxu0 0
      %894 = vmatprep.subr.bf16.mxu0 0
      %895 = vmatpush1.bf16.msra.mxu0 0
      %896 = vmatprep.subr.bf16.mxu0 0
      %897 = vmatpush1.bf16.msra.mxu0 0
      %898 = vmatprep.subr.bf16.mxu0 0
      %899 = vmatpush1.bf16.msra.mxu0 0
      %900 = vmatprep.mubr.bf16.mxu0 0
      %901 = vmatmul.mubr.bf16.gmra.mrb[0].mxu0 %v796
      %v902 = vpop.f32.mrb[0].mxu0
      %v903 = vadd.f32 %v854, %v902
      %v904 = vpop.f32.mrb[0].mxu0
      %v905 = vpop.f32.mrb[0].mxu0
      %v906 = vadd.f32 %v854, %v905
      %v907 = vpop.f32.mrb[0].mxu0
      %908 = vmatprep.mubr.bf16.mxu0 0
      %909 = vmatmul.mubr.bf16.gmra.mrb[0].mxu0 %v799
      %v910 = vpop.f32.mrb[0].mxu0
      %v911 = vadd.f32 %v854, %v910
      %v912 = vpop.f32.mrb[0].mxu0
      %v913 = vpop.f32.mrb[0].mxu0
      %v914 = vadd.f32 %v854, %v913
      %v915 = vpop.f32.mrb[0].mxu0
      %916 = vdwg.mxu0
      %v918 = vlaneseq
      %v919 = vshrl.u32 %v918, 7
      %v920 = vsub.s32 0, %v919
      %v921 = vrot.slane %v750, %v920
      %v927 = vunpack.c.l.b16 %v746
      %v928 = vunpack.c.l.b16 %v747
      %v929 = vunpack.c.l.b16 %v748
      %v930 = vunpack.c.l.b16 %v749
      %v931 = vpack.c.b16 %v928, %v927
      %v932 = vpack.c.b16 %v930, %v929
      %935 = vmatprep.subr.bf16.mxu0 0
      %936 = vmatpush1.bf16.msra.mxu0 %v931
      %937 = vmatprep.subr.bf16.mxu0 0
      %938 = vmatpush1.bf16.msra.mxu0 %v932
      %939 = vmatprep.subr.bf16.mxu0 0
      %940 = vmatpush1.bf16.msra.mxu0 0
      %941 = vmatprep.subr.bf16.mxu0 0
      %942 = vmatpush1.bf16.msra.mxu0 0
      %943 = vmatprep.subr.bf16.mxu0 0
      %944 = vmatpush1.bf16.msra.mxu0 0
      %945 = vmatprep.subr.bf16.mxu0 0
      %946 = vmatpush1.bf16.msra.mxu0 0
      %947 = vmatprep.subr.bf16.mxu0 0
      %948 = vmatpush1.bf16.msra.mxu0 0
      %949 = vmatprep.subr.bf16.mxu0 0
      %950 = vmatpush1.bf16.msra.mxu0 0
      %951 = vmatprep.subr.bf16.mxu0 0
      %952 = vmatpush1.bf16.msra.mxu0 0
      %953 = vmatprep.subr.bf16.mxu0 0
      %954 = vmatpush1.bf16.msra.mxu0 0
      %955 = vmatprep.subr.bf16.mxu0 0
      %956 = vmatpush1.bf16.msra.mxu0 0
      %957 = vmatprep.subr.bf16.mxu0 0
      %958 = vmatpush1.bf16.msra.mxu0 0
      %959 = vmatprep.subr.bf16.mxu0 0
      %960 = vmatpush1.bf16.msra.mxu0 0
      %961 = vmatprep.subr.bf16.mxu0 0
      %962 = vmatpush1.bf16.msra.mxu0 0
      %963 = vmatprep.subr.bf16.mxu0 0
      %964 = vmatpush1.bf16.msra.mxu0 0
      %965 = vmatprep.subr.bf16.mxu0 0
      %966 = vmatpush1.bf16.msra.mxu0 0
      %967 = vmatprep.mubr.bf16.mxu0 0
      %968 = vmatmul.mubr.bf16.gmra.mrb[0].mxu0 %v796
      %v969 = vpop.f32.mrb[0].mxu0
      %v970 = vadd.f32 %v921, %v969
      %v971 = vpop.f32.mrb[0].mxu0
      %v972 = vpop.f32.mrb[0].mxu0
      %v973 = vadd.f32 %v921, %v972
      %v974 = vpop.f32.mrb[0].mxu0
      %975 = vmatprep.mubr.bf16.mxu0 0
      %976 = vmatmul.mubr.bf16.gmra.mrb[0].mxu0 %v799
      %v977 = vpop.f32.mrb[0].mxu0
      %v978 = vadd.f32 %v921, %v977
      %v979 = vpop.f32.mrb[0].mxu0
      %v980 = vpop.f32.mrb[0].mxu0
      %v981 = vadd.f32 %v921, %v980
      %v982 = vpop.f32.mrb[0].mxu0
      %983 = vdwg.mxu0
      %v984 = vpack.c.bf16 %v836, %v836
      %v985 = vpack.c.bf16 %v839, %v839
      %v986 = vpack.c.bf16 %v844, %v844
      %v987 = vpack.c.bf16 %v847, %v847
      %v988 = vpack.c.bf16 %v903, %v903
      %v989 = vpack.c.bf16 %v906, %v906
      %v990 = vpack.c.bf16 %v911, %v911
      %v991 = vpack.c.bf16 %v914, %v914
      %v992 = vpack.c.bf16 %v970, %v970
      %v993 = vpack.c.bf16 %v973, %v973
      %v994 = vpack.c.bf16 %v978, %v978
      %v995 = vpack.c.bf16 %v981, %v981
      %v997 = vsel %vm672, %v984, 0
      %v1000 = vsel %vm672, %v988, 0
      %1002 = vmatprep.subr.bf16.mxu0 0
      %1003 = vmatpush1.bf16.xpose.msra.mxu0 %v1000
      %1004 = vmatprep.subr.bf16.mxu0 0
      %1005 = vmatpush1.bf16.xpose.msra.mxu0 0
      %1006 = vmatprep.subr.bf16.mxu0 0
      %1007 = vmatpush1.bf16.xpose.msra.mxu0 0
      %1008 = vmatprep.subr.bf16.mxu0 0
      %1009 = vmatpush1.bf16.xpose.msra.mxu0 0
      %1010 = vmatprep.subr.bf16.mxu0 0
      %1011 = vmatpush1.bf16.xpose.msra.mxu0 0
      %1012 = vmatprep.subr.bf16.mxu0 0
      %1013 = vmatpush1.bf16.xpose.msra.mxu0 0
      %1014 = vmatprep.subr.bf16.mxu0 0
      %1015 = vmatpush1.bf16.xpose.msra.mxu0 0
      %1016 = vmatprep.subr.bf16.mxu0 0
      %1017 = vmatpush1.bf16.xpose.msra.mxu0 0
      %1018 = vmatprep.subr.bf16.mxu0 0
      %1019 = vmatpush1.bf16.xpose.msra.mxu0 0
      %1020 = vmatprep.subr.bf16.mxu0 0
      %1021 = vmatpush1.bf16.xpose.msra.mxu0 0
      %1022 = vmatprep.subr.bf16.mxu0 0
      %1023 = vmatpush1.bf16.xpose.msra.mxu0 0
      %1024 = vmatprep.subr.bf16.mxu0 0
      %1025 = vmatpush1.bf16.xpose.msra.mxu0 0
      %1026 = vmatprep.subr.bf16.mxu0 0
      %1027 = vmatpush1.bf16.xpose.msra.mxu0 0
      %1028 = vmatprep.subr.bf16.mxu0 0
      %1029 = vmatpush1.bf16.xpose.msra.mxu0 0
      %1030 = vmatprep.subr.bf16.mxu0 0
      %1031 = vmatpush1.bf16.xpose.msra.mxu0 0
      %1032 = vmatprep.subr.bf16.mxu0 0
      %1033 = vmatpush1.bf16.xpose.msra.mxu0 0
      %1034 = vmatprep.mubr.bf16.mxu0 0
      %1035 = vmatmul.mubr.bf16.gmra.mrb[0].mxu0 %v997
      %v1036 = vpop.f32.mrb[0].mxu0
      %v1037 = vadd.f32 0.0, %v1036
      %v1038 = vpop.f32.mrb[0].mxu0
      %v1039 = vpop.f32.mrb[0].mxu0
      %v1040 = vpop.f32.mrb[0].mxu0
      %1041 = vdwg.mxu0
      %v1043 = vsel %vm672, %v985, 0
      %v1046 = vsel %vm672, %v989, 0
      %1048 = vmatprep.subr.bf16.mxu0 0
      %1049 = vmatpush1.bf16.xpose.msra.mxu0 %v1046
      %1050 = vmatprep.subr.bf16.mxu0 0
      %1051 = vmatpush1.bf16.xpose.msra.mxu0 0
      %1052 = vmatprep.subr.bf16.mxu0 0
      %1053 = vmatpush1.bf16.xpose.msra.mxu0 0
      %1054 = vmatprep.subr.bf16.mxu0 0
      %1055 = vmatpush1.bf16.xpose.msra.mxu0 0
      %1056 = vmatprep.subr.bf16.mxu0 0
      %1057 = vmatpush1.bf16.xpose.msra.mxu0 0
      %1058 = vmatprep.subr.bf16.mxu0 0
      %1059 = vmatpush1.bf16.xpose.msra.mxu0 0
      %1060 = vmatprep.subr.bf16.mxu0 0
      %1061 = vmatpush1.bf16.xpose.msra.mxu0 0
      %1062 = vmatprep.subr.bf16.mxu0 0
      %1063 = vmatpush1.bf16.xpose.msra.mxu0 0
      %1064 = vmatprep.subr.bf16.mxu0 0
      %1065 = vmatpush1.bf16.xpose.msra.mxu0 0
      %1066 = vmatprep.subr.bf16.mxu0 0
      %1067 = vmatpush1.bf16.xpose.msra.mxu0 0
      %1068 = vmatprep.subr.bf16.mxu0 0
      %1069 = vmatpush1.bf16.xpose.msra.mxu0 0
      %1070 = vmatprep.subr.bf16.mxu0 0
      %1071 = vmatpush1.bf16.xpose.msra.mxu0 0
      %1072 = vmatprep.subr.bf16.mxu0 0
      %1073 = vmatpush1.bf16.xpose.msra.mxu0 0
      %1074 = vmatprep.subr.bf16.mxu0 0
      %1075 = vmatpush1.bf16.xpose.msra.mxu0 0
      %1076 = vmatprep.subr.bf16.mxu0 0
      %1077 = vmatpush1.bf16.xpose.msra.mxu0 0
      %1078 = vmatprep.subr.bf16.mxu0 0
      %1079 = vmatpush1.bf16.xpose.msra.mxu0 0
      %1080 = vmatprep.mubr.bf16.mxu0 0
      %1081 = vmatmul.mubr.bf16.gmra.mrb[0].mxu0 %v1043
      %v1082 = vpop.f32.mrb[0].mxu0
      %v1083 = vadd.f32 0.0, %v1082
      %v1084 = vpop.f32.mrb[0].mxu0
      %v1085 = vpop.f32.mrb[0].mxu0
      %v1086 = vpop.f32.mrb[0].mxu0
      %1087 = vdwg.mxu0
      %v1089 = vsel %vm672, %v986, 0
      %v1092 = vsel %vm672, %v990, 0
      %1094 = vmatprep.subr.bf16.mxu0 0
      %1095 = vmatpush1.bf16.xpose.msra.mxu0 %v1092
      %1096 = vmatprep.subr.bf16.mxu0 0
      %1097 = vmatpush1.bf16.xpose.msra.mxu0 0
      %1098 = vmatprep.subr.bf16.mxu0 0
      %1099 = vmatpush1.bf16.xpose.msra.mxu0 0
      %1100 = vmatprep.subr.bf16.mxu0 0
      %1101 = vmatpush1.bf16.xpose.msra.mxu0 0
      %1102 = vmatprep.subr.bf16.mxu0 0
      %1103 = vmatpush1.bf16.xpose.msra.mxu0 0
      %1104 = vmatprep.subr.bf16.mxu0 0
      %1105 = vmatpush1.bf16.xpose.msra.mxu0 0
      %1106 = vmatprep.subr.bf16.mxu0 0
      %1107 = vmatpush1.bf16.xpose.msra.mxu0 0
      %1108 = vmatprep.subr.bf16.mxu0 0
      %1109 = vmatpush1.bf16.xpose.msra.mxu0 0
      %1110 = vmatprep.subr.bf16.mxu0 0
      %1111 = vmatpush1.bf16.xpose.msra.mxu0 0
      %1112 = vmatprep.subr.bf16.mxu0 0
      %1113 = vmatpush1.bf16.xpose.msra.mxu0 0
      %1114 = vmatprep.subr.bf16.mxu0 0
      %1115 = vmatpush1.bf16.xpose.msra.mxu0 0
      %1116 = vmatprep.subr.bf16.mxu0 0
      %1117 = vmatpush1.bf16.xpose.msra.mxu0 0
      %1118 = vmatprep.subr.bf16.mxu0 0
      %1119 = vmatpush1.bf16.xpose.msra.mxu0 0
      %1120 = vmatprep.subr.bf16.mxu0 0
      %1121 = vmatpush1.bf16.xpose.msra.mxu0 0
      %1122 = vmatprep.subr.bf16.mxu0 0
      %1123 = vmatpush1.bf16.xpose.msra.mxu0 0
      %1124 = vmatprep.subr.bf16.mxu0 0
      %1125 = vmatpush1.bf16.xpose.msra.mxu0 0
      %1126 = vmatprep.mubr.bf16.mxu0 0
      %1127 = vmatmul.mubr.bf16.gmra.mrb[0].mxu0 %v1089
      %v1128 = vpop.f32.mrb[0].mxu0
      %v1129 = vadd.f32 0.0, %v1128
      %v1130 = vpop.f32.mrb[0].mxu0
      %v1131 = vpop.f32.mrb[0].mxu0
      %v1132 = vpop.f32.mrb[0].mxu0
      %1133 = vdwg.mxu0
      %v1135 = vsel %vm672, %v987, 0
      %v1138 = vsel %vm672, %v991, 0
      %1140 = vmatprep.subr.bf16.mxu0 0
      %1141 = vmatpush1.bf16.xpose.msra.mxu0 %v1138
      %1142 = vmatprep.subr.bf16.mxu0 0
      %1143 = vmatpush1.bf16.xpose.msra.mxu0 0
      %1144 = vmatprep.subr.bf16.mxu0 0
      %1145 = vmatpush1.bf16.xpose.msra.mxu0 0
      %1146 = vmatprep.subr.bf16.mxu0 0
      %1147 = vmatpush1.bf16.xpose.msra.mxu0 0
      %1148 = vmatprep.subr.bf16.mxu0 0
      %1149 = vmatpush1.bf16.xpose.msra.mxu0 0
      %1150 = vmatprep.subr.bf16.mxu0 0
      %1151 = vmatpush1.bf16.xpose.msra.mxu0 0
      %1152 = vmatprep.subr.bf16.mxu0 0
      %1153 = vmatpush1.bf16.xpose.msra.mxu0 0
      %1154 = vmatprep.subr.bf16.mxu0 0
      %1155 = vmatpush1.bf16.xpose.msra.mxu0 0
      %1156 = vmatprep.subr.bf16.mxu0 0
      %1157 = vmatpush1.bf16.xpose.msra.mxu0 0
      %1158 = vmatprep.subr.bf16.mxu0 0
      %1159 = vmatpush1.bf16.xpose.msra.mxu0 0
      %1160 = vmatprep.subr.bf16.mxu0 0
      %1161 = vmatpush1.bf16.xpose.msra.mxu0 0
      %1162 = vmatprep.subr.bf16.mxu0 0
      %1163 = vmatpush1.bf16.xpose.msra.mxu0 0
      %1164 = vmatprep.subr.bf16.mxu0 0
      %1165 = vmatpush1.bf16.xpose.msra.mxu0 0
      %1166 = vmatprep.subr.bf16.mxu0 0
      %1167 = vmatpush1.bf16.xpose.msra.mxu0 0
      %1168 = vmatprep.subr.bf16.mxu0 0
      %1169 = vmatpush1.bf16.xpose.msra.mxu0 0
      %1170 = vmatprep.subr.bf16.mxu0 0
      %1171 = vmatpush1.bf16.xpose.msra.mxu0 0
      %1172 = vmatprep.mubr.bf16.mxu0 0
      %1173 = vmatmul.mubr.bf16.gmra.mrb[0].mxu0 %v1135
      %v1174 = vpop.f32.mrb[0].mxu0
      %v1175 = vadd.f32 0.0, %v1174
      %v1176 = vpop.f32.mrb[0].mxu0
      %v1177 = vpop.f32.mrb[0].mxu0
      %v1178 = vpop.f32.mrb[0].mxu0
      %1179 = vdwg.mxu0
      %v1180 = vmul.f32 %v1037, 0.35355338
      %v1181 = vmul.f32 %v1083, 0.35355338
      %v1182 = vmul.f32 %v1129, 0.35355338
      %v1183 = vmul.f32 %v1175, 0.35355338
      %v1184 = vadd.f32 %v1180, %v735
      %v1185 = vadd.f32 %v1181, %v735
      %v1186 = vadd.f32 %v1182, %v735
      %v1187 = vadd.f32 %v1183, %v735
      %v1188 = vsel %vm672, %v1184, -inf
      %1189 = vmax.xlane.f32.xlu0 %v1188
      %v1190 = vpop.xlane.xlu0 %1189
      %v1191 = vsel %vm672, %v1185, -inf
      %1192 = vmax.xlane.f32.xlu0 %v1191
      %v1193 = vpop.xlane.xlu0 %1192
      %v1194 = vsel %vm672, %v1186, -inf
      %1195 = vmax.xlane.f32.xlu0 %v1194
      %v1196 = vpop.xlane.xlu0 %1195
      %v1197 = vsel %vm672, %v1187, -inf
      %1198 = vmax.xlane.f32.xlu0 %v1197
      %v1199 = vpop.xlane.xlu0 %1198
      %v1200 = vsub.f32 %v1184, %v1190
      %v1201 = vsub.f32 %v1185, %v1193
      %v1202 = vsub.f32 %v1186, %v1196
      %v1203 = vsub.f32 %v1187, %v1199
      %v1204 = vmul.f32 %v1200, 1.442695
      %v1205 = vpow.pop %v1204
      %v1206 = vmul.f32 %v1201, 1.442695
      %v1207 = vpow.pop %v1206
      %v1208 = vmul.f32 %v1202, 1.442695
      %v1209 = vpow.pop %v1208
      %v1210 = vmul.f32 %v1203, 1.442695
      %v1211 = vpow.pop %v1210
      %v1212 = vsel %vm672, %v1205, 0.0
      %1213 = vadd.xlane.f32.xlu0 %v1212
      %v1214 = vpop.xlane.xlu0 %1213
      %v1215 = vsel %vm672, %v1207, 0.0
      %1216 = vadd.xlane.f32.xlu0 %v1215
      %v1217 = vpop.xlane.xlu0 %1216
      %v1218 = vsel %vm672, %v1209, 0.0
      %1219 = vadd.xlane.f32.xlu0 %v1218
      %v1220 = vpop.xlane.xlu0 %1219
      %v1221 = vsel %vm672, %v1211, 0.0
      %1222 = vadd.xlane.f32.xlu0 %v1221
      %v1223 = vpop.xlane.xlu0 %1222
      %v1224 = vrcp.pop %v1214
      %v1225 = vrcp.pop %v1217
      %v1226 = vrcp.pop %v1220
      %v1227 = vrcp.pop %v1223
      %v1228 = vmul.f32 %v1205, %v1224
      %v1229 = vmul.f32 %v1207, %v1225
      %v1230 = vmul.f32 %v1209, %v1226
      %v1231 = vmul.f32 %v1211, %v1227
      %v1232 = vpack.c.bf16 %v1228, %v1228
      %v1233 = vpack.c.bf16 %v1229, %v1229
      %v1234 = vpack.c.bf16 %v1230, %v1230
      %v1235 = vpack.c.bf16 %v1231, %v1231
      %v1237 = vsel %vm672, %v1232, 0
      %v1240 = vsel %vm679, %v992, 0
      %1242 = vmatprep.subr.bf16.mxu0 0
      %1243 = vmatpush1.bf16.msra.mxu0 %v1240
      %1244 = vmatprep.subr.bf16.mxu0 0
      %1245 = vmatpush1.bf16.msra.mxu0 0
      %1246 = vmatprep.subr.bf16.mxu0 0
      %1247 = vmatpush1.bf16.msra.mxu0 0
      %1248 = vmatprep.subr.bf16.mxu0 0
      %1249 = vmatpush1.bf16.msra.mxu0 0
      %1250 = vmatprep.subr.bf16.mxu0 0
      %1251 = vmatpush1.bf16.msra.mxu0 0
      %1252 = vmatprep.subr.bf16.mxu0 0
      %1253 = vmatpush1.bf16.msra.mxu0 0
      %1254 = vmatprep.subr.bf16.mxu0 0
      %1255 = vmatpush1.bf16.msra.mxu0 0
      %1256 = vmatprep.subr.bf16.mxu0 0
      %1257 = vmatpush1.bf16.msra.mxu0 0
      %1258 = vmatprep.subr.bf16.mxu0 0
      %1259 = vmatpush1.bf16.msra.mxu0 0
      %1260 = vmatprep.subr.bf16.mxu0 0
      %1261 = vmatpush1.bf16.msra.mxu0 0
      %1262 = vmatprep.subr.bf16.mxu0 0
      %1263 = vmatpush1.bf16.msra.mxu0 0
      %1264 = vmatprep.subr.bf16.mxu0 0
      %1265 = vmatpush1.bf16.msra.mxu0 0
      %1266 = vmatprep.subr.bf16.mxu0 0
      %1267 = vmatpush1.bf16.msra.mxu0 0
      %1268 = vmatprep.subr.bf16.mxu0 0
      %1269 = vmatpush1.bf16.msra.mxu0 0
      %1270 = vmatprep.subr.bf16.mxu0 0
      %1271 = vmatpush1.bf16.msra.mxu0 0
      %1272 = vmatprep.subr.bf16.mxu0 0
      %1273 = vmatpush1.bf16.msra.mxu0 0
      %1274 = vmatprep.mubr.bf16.mxu0 0
      %1275 = vmatmul.mubr.bf16.gmra.mrb[0].mxu0 %v1237
      %v1276 = vpop.f32.mrb[0].mxu0
      %v1277 = vadd.f32 0.0, %v1276
      %v1278 = vpop.f32.mrb[0].mxu0
      %v1279 = vpop.f32.mrb[0].mxu0
      %v1280 = vpop.f32.mrb[0].mxu0
      %1281 = vdwg.mxu0
      %v1283 = vsel %vm672, %v1233, 0
      %v1286 = vsel %vm679, %v993, 0
      %1288 = vmatprep.subr.bf16.mxu0 0
      %1289 = vmatpush1.bf16.msra.mxu0 %v1286
      %1290 = vmatprep.subr.bf16.mxu0 0
      %1291 = vmatpush1.bf16.msra.mxu0 0
      %1292 = vmatprep.subr.bf16.mxu0 0
      %1293 = vmatpush1.bf16.msra.mxu0 0
      %1294 = vmatprep.subr.bf16.mxu0 0
      %1295 = vmatpush1.bf16.msra.mxu0 0
      %1296 = vmatprep.subr.bf16.mxu0 0
      %1297 = vmatpush1.bf16.msra.mxu0 0
      %1298 = vmatprep.subr.bf16.mxu0 0
      %1299 = vmatpush1.bf16.msra.mxu0 0
      %1300 = vmatprep.subr.bf16.mxu0 0
      %1301 = vmatpush1.bf16.msra.mxu0 0
      %1302 = vmatprep.subr.bf16.mxu0 0
      %1303 = vmatpush1.bf16.msra.mxu0 0
      %1304 = vmatprep.subr.bf16.mxu0 0
      %1305 = vmatpush1.bf16.msra.mxu0 0
      %1306 = vmatprep.subr.bf16.mxu0 0
      %1307 = vmatpush1.bf16.msra.mxu0 0
      %1308 = vmatprep.subr.bf16.mxu0 0
      %1309 = vmatpush1.bf16.msra.mxu0 0
      %1310 = vmatprep.subr.bf16.mxu0 0
      %1311 = vmatpush1.bf16.msra.mxu0 0
      %1312 = vmatprep.subr.bf16.mxu0 0
      %1313 = vmatpush1.bf16.msra.mxu0 0
      %1314 = vmatprep.subr.bf16.mxu0 0
      %1315 = vmatpush1.bf16.msra.mxu0 0
      %1316 = vmatprep.subr.bf16.mxu0 0
      %1317 = vmatpush1.bf16.msra.mxu0 0
      %1318 = vmatprep.subr.bf16.mxu0 0
      %1319 = vmatpush1.bf16.msra.mxu0 0
      %1320 = vmatprep.mubr.bf16.mxu0 0
      %1321 = vmatmul.mubr.bf16.gmra.mrb[0].mxu0 %v1283
      %v1322 = vpop.f32.mrb[0].mxu0
      %v1323 = vadd.f32 0.0, %v1322
      %v1324 = vpop.f32.mrb[0].mxu0
      %v1325 = vpop.f32.mrb[0].mxu0
      %v1326 = vpop.f32.mrb[0].mxu0
      %1327 = vdwg.mxu0
      %v1329 = vsel %vm672, %v1234, 0
      %v1332 = vsel %vm679, %v994, 0
      %1334 = vmatprep.subr.bf16.mxu0 0
      %1335 = vmatpush1.bf16.msra.mxu0 %v1332
      %1336 = vmatprep.subr.bf16.mxu0 0
      %1337 = vmatpush1.bf16.msra.mxu0 0
      %1338 = vmatprep.subr.bf16.mxu0 0
      %1339 = vmatpush1.bf16.msra.mxu0 0
      %1340 = vmatprep.subr.bf16.mxu0 0
      %1341 = vmatpush1.bf16.msra.mxu0 0
      %1342 = vmatprep.subr.bf16.mxu0 0
      %1343 = vmatpush1.bf16.msra.mxu0 0
      %1344 = vmatprep.subr.bf16.mxu0 0
      %1345 = vmatpush1.bf16.msra.mxu0 0
      %1346 = vmatprep.subr.bf16.mxu0 0
      %1347 = vmatpush1.bf16.msra.mxu0 0
      %1348 = vmatprep.subr.bf16.mxu0 0
      %1349 = vmatpush1.bf16.msra.mxu0 0
      %1350 = vmatprep.subr.bf16.mxu0 0
      %1351 = vmatpush1.bf16.msra.mxu0 0
      %1352 = vmatprep.subr.bf16.mxu0 0
      %1353 = vmatpush1.bf16.msra.mxu0 0
      %1354 = vmatprep.subr.bf16.mxu0 0
      %1355 = vmatpush1.bf16.msra.mxu0 0
      %1356 = vmatprep.subr.bf16.mxu0 0
      %1357 = vmatpush1.bf16.msra.mxu0 0
      %1358 = vmatprep.subr.bf16.mxu0 0
      %1359 = vmatpush1.bf16.msra.mxu0 0
      %1360 = vmatprep.subr.bf16.mxu0 0
      %1361 = vmatpush1.bf16.msra.mxu0 0
      %1362 = vmatprep.subr.bf16.mxu0 0
      %1363 = vmatpush1.bf16.msra.mxu0 0
      %1364 = vmatprep.subr.bf16.mxu0 0
      %1365 = vmatpush1.bf16.msra.mxu0 0
      %1366 = vmatprep.mubr.bf16.mxu0 0
      %1367 = vmatmul.mubr.bf16.gmra.mrb[0].mxu0 %v1329
      %v1368 = vpop.f32.mrb[0].mxu0
      %v1369 = vadd.f32 0.0, %v1368
      %v1370 = vpop.f32.mrb[0].mxu0
      %v1371 = vpop.f32.mrb[0].mxu0
      %v1372 = vpop.f32.mrb[0].mxu0
      %1373 = vdwg.mxu0
      %v1375 = vsel %vm672, %v1235, 0
      %v1378 = vsel %vm679, %v995, 0
      %1380 = vmatprep.subr.bf16.mxu0 0
      %1381 = vmatpush1.bf16.msra.mxu0 %v1378
      %1382 = vmatprep.subr.bf16.mxu0 0
      %1383 = vmatpush1.bf16.msra.mxu0 0
      %1384 = vmatprep.subr.bf16.mxu0 0
      %1385 = vmatpush1.bf16.msra.mxu0 0
      %1386 = vmatprep.subr.bf16.mxu0 0
      %1387 = vmatpush1.bf16.msra.mxu0 0
      %1388 = vmatprep.subr.bf16.mxu0 0
      %1389 = vmatpush1.bf16.msra.mxu0 0
      %1390 = vmatprep.subr.bf16.mxu0 0
      %1391 = vmatpush1.bf16.msra.mxu0 0
      %1392 = vmatprep.subr.bf16.mxu0 0
      %1393 = vmatpush1.bf16.msra.mxu0 0
      %1394 = vmatprep.subr.bf16.mxu0 0
      %1395 = vmatpush1.bf16.msra.mxu0 0
      %1396 = vmatprep.subr.bf16.mxu0 0
      %1397 = vmatpush1.bf16.msra.mxu0 0
      %1398 = vmatprep.subr.bf16.mxu0 0
      %1399 = vmatpush1.bf16.msra.mxu0 0
      %1400 = vmatprep.subr.bf16.mxu0 0
      %1401 = vmatpush1.bf16.msra.mxu0 0
      %1402 = vmatprep.subr.bf16.mxu0 0
      %1403 = vmatpush1.bf16.msra.mxu0 0
      %1404 = vmatprep.subr.bf16.mxu0 0
      %1405 = vmatpush1.bf16.msra.mxu0 0
      %1406 = vmatprep.subr.bf16.mxu0 0
      %1407 = vmatpush1.bf16.msra.mxu0 0
      %1408 = vmatprep.subr.bf16.mxu0 0
      %1409 = vmatpush1.bf16.msra.mxu0 0
      %1410 = vmatprep.subr.bf16.mxu0 0
      %1411 = vmatpush1.bf16.msra.mxu0 0
      %1412 = vmatprep.mubr.bf16.mxu0 0
      %1413 = vmatmul.mubr.bf16.gmra.mrb[0].mxu0 %v1375
      %v1414 = vpop.f32.mrb[0].mxu0
      %v1415 = vadd.f32 0.0, %v1414
      %v1416 = vpop.f32.mrb[0].mxu0
      %v1417 = vpop.f32.mrb[0].mxu0
      %v1418 = vpop.f32.mrb[0].mxu0
      %1419 = vdwg.mxu0
      %v1420 = vpack.c.bf16 %v1323, %v1277
      %v1421 = vpack.c.bf16 %v1415, %v1369
      %1423 = vrot.lane.b32.xlu0 %v984, 120
      %v1424 = vpop.permute.xlu0 %1423
      %1426 = vrot.lane.b32.xlu0 %v988, 120
      %v1427 = vpop.permute.xlu0 %1426
      %v1429 = vsel %vm672, %v1424, 0
      %v1432 = vsel %vm672, %v1427, 0
      %1434 = vmatprep.subr.bf16.mxu0 0
      %1435 = vmatpush1.bf16.xpose.msra.mxu0 %v1432
      %1436 = vmatprep.subr.bf16.mxu0 0
      %1437 = vmatpush1.bf16.xpose.msra.mxu0 0
      %1438 = vmatprep.subr.bf16.mxu0 0
      %1439 = vmatpush1.bf16.xpose.msra.mxu0 0
      %1440 = vmatprep.subr.bf16.mxu0 0
      %1441 = vmatpush1.bf16.xpose.msra.mxu0 0
      %1442 = vmatprep.subr.bf16.mxu0 0
      %1443 = vmatpush1.bf16.xpose.msra.mxu0 0
      %1444 = vmatprep.subr.bf16.mxu0 0
      %1445 = vmatpush1.bf16.xpose.msra.mxu0 0
      %1446 = vmatprep.subr.bf16.mxu0 0
      %1447 = vmatpush1.bf16.xpose.msra.mxu0 0
      %1448 = vmatprep.subr.bf16.mxu0 0
      %1449 = vmatpush1.bf16.xpose.msra.mxu0 0
      %1450 = vmatprep.subr.bf16.mxu0 0
      %1451 = vmatpush1.bf16.xpose.msra.mxu0 0
      %1452 = vmatprep.subr.bf16.mxu0 0
      %1453 = vmatpush1.bf16.xpose.msra.mxu0 0
      %1454 = vmatprep.subr.bf16.mxu0 0
      %1455 = vmatpush1.bf16.xpose.msra.mxu0 0
      %1456 = vmatprep.subr.bf16.mxu0 0
      %1457 = vmatpush1.bf16.xpose.msra.mxu0 0
      %1458 = vmatprep.subr.bf16.mxu0 0
      %1459 = vmatpush1.bf16.xpose.msra.mxu0 0
      %1460 = vmatprep.subr.bf16.mxu0 0
      %1461 = vmatpush1.bf16.xpose.msra.mxu0 0
      %1462 = vmatprep.subr.bf16.mxu0 0
      %1463 = vmatpush1.bf16.xpose.msra.mxu0 0
      %1464 = vmatprep.subr.bf16.mxu0 0
      %1465 = vmatpush1.bf16.xpose.msra.mxu0 0
      %1466 = vmatprep.mubr.bf16.mxu0 0
      %1467 = vmatmul.mubr.bf16.gmra.mrb[0].mxu0 %v1429
      %v1468 = vpop.f32.mrb[0].mxu0
      %v1469 = vadd.f32 0.0, %v1468
      %v1470 = vpop.f32.mrb[0].mxu0
      %v1471 = vpop.f32.mrb[0].mxu0
      %v1472 = vpop.f32.mrb[0].mxu0
      %1473 = vdwg.mxu0
      %1475 = vrot.lane.b32.xlu0 %v985, 120
      %v1476 = vpop.permute.xlu0 %1475
      %1478 = vrot.lane.b32.xlu0 %v989, 120
      %v1479 = vpop.permute.xlu0 %1478
      %v1481 = vsel %vm672, %v1476, 0
      %v1484 = vsel %vm672, %v1479, 0
      %1486 = vmatprep.subr.bf16.mxu0 0
      %1487 = vmatpush1.bf16.xpose.msra.mxu0 %v1484
      %1488 = vmatprep.subr.bf16.mxu0 0
      %1489 = vmatpush1.bf16.xpose.msra.mxu0 0
      %1490 = vmatprep.subr.bf16.mxu0 0
      %1491 = vmatpush1.bf16.xpose.msra.mxu0 0
      %1492 = vmatprep.subr.bf16.mxu0 0
      %1493 = vmatpush1.bf16.xpose.msra.mxu0 0
      %1494 = vmatprep.subr.bf16.mxu0 0
      %1495 = vmatpush1.bf16.xpose.msra.mxu0 0
      %1496 = vmatprep.subr.bf16.mxu0 0
      %1497 = vmatpush1.bf16.xpose.msra.mxu0 0
      %1498 = vmatprep.subr.bf16.mxu0 0
      %1499 = vmatpush1.bf16.xpose.msra.mxu0 0
      %1500 = vmatprep.subr.bf16.mxu0 0
      %1501 = vmatpush1.bf16.xpose.msra.mxu0 0
      %1502 = vmatprep.subr.bf16.mxu0 0
      %1503 = vmatpush1.bf16.xpose.msra.mxu0 0
      %1504 = vmatprep.subr.bf16.mxu0 0
      %1505 = vmatpush1.bf16.xpose.msra.mxu0 0
      %1506 = vmatprep.subr.bf16.mxu0 0
      %1507 = vmatpush1.bf16.xpose.msra.mxu0 0
      %1508 = vmatprep.subr.bf16.mxu0 0
      %1509 = vmatpush1.bf16.xpose.msra.mxu0 0
      %1510 = vmatprep.subr.bf16.mxu0 0
      %1511 = vmatpush1.bf16.xpose.msra.mxu0 0
      %1512 = vmatprep.subr.bf16.mxu0 0
      %1513 = vmatpush1.bf16.xpose.msra.mxu0 0
      %1514 = vmatprep.subr.bf16.mxu0 0
      %1515 = vmatpush1.bf16.xpose.msra.mxu0 0
      %1516 = vmatprep.subr.bf16.mxu0 0
      %1517 = vmatpush1.bf16.xpose.msra.mxu0 0
      %1518 = vmatprep.mubr.bf16.mxu0 0
      %1519 = vmatmul.mubr.bf16.gmra.mrb[0].mxu0 %v1481
      %v1520 = vpop.f32.mrb[0].mxu0
      %v1521 = vadd.f32 0.0, %v1520
      %v1522 = vpop.f32.mrb[0].mxu0
      %v1523 = vpop.f32.mrb[0].mxu0
      %v1524 = vpop.f32.mrb[0].mxu0
      %1525 = vdwg.mxu0
      %1527 = vrot.lane.b32.xlu0 %v986, 120
      %v1528 = vpop.permute.xlu0 %1527
      %1530 = vrot.lane.b32.xlu0 %v990, 120
      %v1531 = vpop.permute.xlu0 %1530
      %v1533 = vsel %vm672, %v1528, 0
      %v1536 = vsel %vm672, %v1531, 0
      %1538 = vmatprep.subr.bf16.mxu0 0
      %1539 = vmatpush1.bf16.xpose.msra.mxu0 %v1536
      %1540 = vmatprep.subr.bf16.mxu0 0
      %1541 = vmatpush1.bf16.xpose.msra.mxu0 0
      %1542 = vmatprep.subr.bf16.mxu0 0
      %1543 = vmatpush1.bf16.xpose.msra.mxu0 0
      %1544 = vmatprep.subr.bf16.mxu0 0
      %1545 = vmatpush1.bf16.xpose.msra.mxu0 0
      %1546 = vmatprep.subr.bf16.mxu0 0
      %1547 = vmatpush1.bf16.xpose.msra.mxu0 0
      %1548 = vmatprep.subr.bf16.mxu0 0
      %1549 = vmatpush1.bf16.xpose.msra.mxu0 0
      %1550 = vmatprep.subr.bf16.mxu0 0
      %1551 = vmatpush1.bf16.xpose.msra.mxu0 0
      %1552 = vmatprep.subr.bf16.mxu0 0
      %1553 = vmatpush1.bf16.xpose.msra.mxu0 0
      %1554 = vmatprep.subr.bf16.mxu0 0
      %1555 = vmatpush1.bf16.xpose.msra.mxu0 0
      %1556 = vmatprep.subr.bf16.mxu0 0
      %1557 = vmatpush1.bf16.xpose.msra.mxu0 0
      %1558 = vmatprep.subr.bf16.mxu0 0
      %1559 = vmatpush1.bf16.xpose.msra.mxu0 0
      %1560 = vmatprep.subr.bf16.mxu0 0
      %1561 = vmatpush1.bf16.xpose.msra.mxu0 0
      %1562 = vmatprep.subr.bf16.mxu0 0
      %1563 = vmatpush1.bf16.xpose.msra.mxu0 0
      %1564 = vmatprep.subr.bf16.mxu0 0
      %1565 = vmatpush1.bf16.xpose.msra.mxu0 0
      %1566 = vmatprep.subr.bf16.mxu0 0
      %1567 = vmatpush1.bf16.xpose.msra.mxu0 0
      %1568 = vmatprep.subr.bf16.mxu0 0
      %1569 = vmatpush1.bf16.xpose.msra.mxu0 0
      %1570 = vmatprep.mubr.bf16.mxu0 0
      %1571 = vmatmul.mubr.bf16.gmra.mrb[0].mxu0 %v1533
      %v1572 = vpop.f32.mrb[0].mxu0
      %v1573 = vadd.f32 0.0, %v1572
      %v1574 = vpop.f32.mrb[0].mxu0
      %v1575 = vpop.f32.mrb[0].mxu0
      %v1576 = vpop.f32.mrb[0].mxu0
      %1577 = vdwg.mxu0
      %1579 = vrot.lane.b32.xlu0 %v987, 120
      %v1580 = vpop.permute.xlu0 %1579
      %1582 = vrot.lane.b32.xlu0 %v991, 120
      %v1583 = vpop.permute.xlu0 %1582
      %v1585 = vsel %vm672, %v1580, 0
      %v1588 = vsel %vm672, %v1583, 0
      %1590 = vmatprep.subr.bf16.mxu0 0
      %1591 = vmatpush1.bf16.xpose.msra.mxu0 %v1588
      %1592 = vmatprep.subr.bf16.mxu0 0
      %1593 = vmatpush1.bf16.xpose.msra.mxu0 0
      %1594 = vmatprep.subr.bf16.mxu0 0
      %1595 = vmatpush1.bf16.xpose.msra.mxu0 0
      %1596 = vmatprep.subr.bf16.mxu0 0
      %1597 = vmatpush1.bf16.xpose.msra.mxu0 0
      %1598 = vmatprep.subr.bf16.mxu0 0
      %1599 = vmatpush1.bf16.xpose.msra.mxu0 0
      %1600 = vmatprep.subr.bf16.mxu0 0
      %1601 = vmatpush1.bf16.xpose.msra.mxu0 0
      %1602 = vmatprep.subr.bf16.mxu0 0
      %1603 = vmatpush1.bf16.xpose.msra.mxu0 0
      %1604 = vmatprep.subr.bf16.mxu0 0
      %1605 = vmatpush1.bf16.xpose.msra.mxu0 0
      %1606 = vmatprep.subr.bf16.mxu0 0
      %1607 = vmatpush1.bf16.xpose.msra.mxu0 0
      %1608 = vmatprep.subr.bf16.mxu0 0
      %1609 = vmatpush1.bf16.xpose.msra.mxu0 0
      %1610 = vmatprep.subr.bf16.mxu0 0
      %1611 = vmatpush1.bf16.xpose.msra.mxu0 0
      %1612 = vmatprep.subr.bf16.mxu0 0
      %1613 = vmatpush1.bf16.xpose.msra.mxu0 0
      %1614 = vmatprep.subr.bf16.mxu0 0
      %1615 = vmatpush1.bf16.xpose.msra.mxu0 0
      %1616 = vmatprep.subr.bf16.mxu0 0
      %1617 = vmatpush1.bf16.xpose.msra.mxu0 0
      %1618 = vmatprep.subr.bf16.mxu0 0
      %1619 = vmatpush1.bf16.xpose.msra.mxu0 0
      %1620 = vmatprep.subr.bf16.mxu0 0
      %1621 = vmatpush1.bf16.xpose.msra.mxu0 0
      %1622 = vmatprep.mubr.bf16.mxu0 0
      %1623 = vmatmul.mubr.bf16.gmra.mrb[0].mxu0 %v1585
      %v1624 = vpop.f32.mrb[0].mxu0
      %v1625 = vadd.f32 0.0, %v1624
      %v1626 = vpop.f32.mrb[0].mxu0
      %v1627 = vpop.f32.mrb[0].mxu0
      %v1628 = vpop.f32.mrb[0].mxu0
      %1629 = vdwg.mxu0
      %v1630 = vmul.f32 %v1469, 0.35355338
      %v1631 = vmul.f32 %v1521, 0.35355338
      %v1632 = vmul.f32 %v1573, 0.35355338
      %v1633 = vmul.f32 %v1625, 0.35355338
      %v1634 = vadd.f32 %v1630, %v735
      %v1635 = vadd.f32 %v1631, %v735
      %v1636 = vadd.f32 %v1632, %v735
      %v1637 = vadd.f32 %v1633, %v735
      %v1638 = vsel %vm672, %v1634, -inf
      %1639 = vmax.xlane.f32.xlu0 %v1638
      %v1640 = vpop.xlane.xlu0 %1639
      %v1641 = vsel %vm672, %v1635, -inf
      %1642 = vmax.xlane.f32.xlu0 %v1641
      %v1643 = vpop.xlane.xlu0 %1642
      %v1644 = vsel %vm672, %v1636, -inf
      %1645 = vmax.xlane.f32.xlu0 %v1644
      %v1646 = vpop.xlane.xlu0 %1645
      %v1647 = vsel %vm672, %v1637, -inf
      %1648 = vmax.xlane.f32.xlu0 %v1647
      %v1649 = vpop.xlane.xlu0 %1648
      %v1650 = vsub.f32 %v1634, %v1640
      %v1651 = vsub.f32 %v1635, %v1643
      %v1652 = vsub.f32 %v1636, %v1646
      %v1653 = vsub.f32 %v1637, %v1649
      %v1654 = vmul.f32 %v1650, 1.442695
      %v1655 = vpow.pop %v1654
      %v1656 = vmul.f32 %v1651, 1.442695
      %v1657 = vpow.pop %v1656
      %v1658 = vmul.f32 %v1652, 1.442695
      %v1659 = vpow.pop %v1658
      %v1660 = vmul.f32 %v1653, 1.442695
      %v1661 = vpow.pop %v1660
      %v1662 = vsel %vm672, %v1655, 0.0
      %1663 = vadd.xlane.f32.xlu0 %v1662
      %v1664 = vpop.xlane.xlu0 %1663
      %v1665 = vsel %vm672, %v1657, 0.0
      %1666 = vadd.xlane.f32.xlu0 %v1665
      %v1667 = vpop.xlane.xlu0 %1666
      %v1668 = vsel %vm672, %v1659, 0.0
      %1669 = vadd.xlane.f32.xlu0 %v1668
      %v1670 = vpop.xlane.xlu0 %1669
      %v1671 = vsel %vm672, %v1661, 0.0
      %1672 = vadd.xlane.f32.xlu0 %v1671
      %v1673 = vpop.xlane.xlu0 %1672
      %v1674 = vrcp.pop %v1664
      %v1675 = vrcp.pop %v1667
      %v1676 = vrcp.pop %v1670
      %v1677 = vrcp.pop %v1673
      %v1678 = vmul.f32 %v1655, %v1674
      %v1679 = vmul.f32 %v1657, %v1675
      %v1680 = vmul.f32 %v1659, %v1676
      %v1681 = vmul.f32 %v1661, %v1677
      %v1682 = vpack.c.bf16 %v1678, %v1678
      %v1683 = vpack.c.bf16 %v1679, %v1679
      %v1684 = vpack.c.bf16 %v1680, %v1680
      %v1685 = vpack.c.bf16 %v1681, %v1681
      %1687 = vrot.lane.b32.xlu0 %v992, 120
      %v1688 = vpop.permute.xlu0 %1687
      %v1690 = vsel %vm672, %v1682, 0
      %v1693 = vsel %vm679, %v1688, 0
      %1695 = vmatprep.subr.bf16.mxu0 0
      %1696 = vmatpush1.bf16.msra.mxu0 %v1693
      %1697 = vmatprep.subr.bf16.mxu0 0
      %1698 = vmatpush1.bf16.msra.mxu0 0
      %1699 = vmatprep.subr.bf16.mxu0 0
      %1700 = vmatpush1.bf16.msra.mxu0 0
      %1701 = vmatprep.subr.bf16.mxu0 0
      %1702 = vmatpush1.bf16.msra.mxu0 0
      %1703 = vmatprep.subr.bf16.mxu0 0
      %1704 = vmatpush1.bf16.msra.mxu0 0
      %1705 = vmatprep.subr.bf16.mxu0 0
      %1706 = vmatpush1.bf16.msra.mxu0 0
      %1707 = vmatprep.subr.bf16.mxu0 0
      %1708 = vmatpush1.bf16.msra.mxu0 0
      %1709 = vmatprep.subr.bf16.mxu0 0
      %1710 = vmatpush1.bf16.msra.mxu0 0
      %1711 = vmatprep.subr.bf16.mxu0 0
      %1712 = vmatpush1.bf16.msra.mxu0 0
      %1713 = vmatprep.subr.bf16.mxu0 0
      %1714 = vmatpush1.bf16.msra.mxu0 0
      %1715 = vmatprep.subr.bf16.mxu0 0
      %1716 = vmatpush1.bf16.msra.mxu0 0
      %1717 = vmatprep.subr.bf16.mxu0 0
      %1718 = vmatpush1.bf16.msra.mxu0 0
      %1719 = vmatprep.subr.bf16.mxu0 0
      %1720 = vmatpush1.bf16.msra.mxu0 0
      %1721 = vmatprep.subr.bf16.mxu0 0
      %1722 = vmatpush1.bf16.msra.mxu0 0
      %1723 = vmatprep.subr.bf16.mxu0 0
      %1724 = vmatpush1.bf16.msra.mxu0 0
      %1725 = vmatprep.subr.bf16.mxu0 0
      %1726 = vmatpush1.bf16.msra.mxu0 0
      %1727 = vmatprep.mubr.bf16.mxu0 0
      %1728 = vmatmul.mubr.bf16.gmra.mrb[0].mxu0 %v1690
      %v1729 = vpop.f32.mrb[0].mxu0
      %v1730 = vadd.f32 0.0, %v1729
      %v1731 = vpop.f32.mrb[0].mxu0
      %v1732 = vpop.f32.mrb[0].mxu0
      %v1733 = vpop.f32.mrb[0].mxu0
      %1734 = vdwg.mxu0
      %1736 = vrot.lane.b32.xlu0 %v993, 120
      %v1737 = vpop.permute.xlu0 %1736
      %v1739 = vsel %vm672, %v1683, 0
      %v1742 = vsel %vm679, %v1737, 0
      %1744 = vmatprep.subr.bf16.mxu0 0
      %1745 = vmatpush1.bf16.msra.mxu0 %v1742
      %1746 = vmatprep.subr.bf16.mxu0 0
      %1747 = vmatpush1.bf16.msra.mxu0 0
      %1748 = vmatprep.subr.bf16.mxu0 0
      %1749 = vmatpush1.bf16.msra.mxu0 0
      %1750 = vmatprep.subr.bf16.mxu0 0
      %1751 = vmatpush1.bf16.msra.mxu0 0
      %1752 = vmatprep.subr.bf16.mxu0 0
      %1753 = vmatpush1.bf16.msra.mxu0 0
      %1754 = vmatprep.subr.bf16.mxu0 0
      %1755 = vmatpush1.bf16.msra.mxu0 0
      %1756 = vmatprep.subr.bf16.mxu0 0
      %1757 = vmatpush1.bf16.msra.mxu0 0
      %1758 = vmatprep.subr.bf16.mxu0 0
      %1759 = vmatpush1.bf16.msra.mxu0 0
      %1760 = vmatprep.subr.bf16.mxu0 0
      %1761 = vmatpush1.bf16.msra.mxu0 0
      %1762 = vmatprep.subr.bf16.mxu0 0
      %1763 = vmatpush1.bf16.msra.mxu0 0
      %1764 = vmatprep.subr.bf16.mxu0 0
      %1765 = vmatpush1.bf16.msra.mxu0 0
      %1766 = vmatprep.subr.bf16.mxu0 0
      %1767 = vmatpush1.bf16.msra.mxu0 0
      %1768 = vmatprep.subr.bf16.mxu0 0
      %1769 = vmatpush1.bf16.msra.mxu0 0
      %1770 = vmatprep.subr.bf16.mxu0 0
      %1771 = vmatpush1.bf16.msra.mxu0 0
      %1772 = vmatprep.subr.bf16.mxu0 0
      %1773 = vmatpush1.bf16.msra.mxu0 0
      %1774 = vmatprep.subr.bf16.mxu0 0
      %1775 = vmatpush1.bf16.msra.mxu0 0
      %1776 = vmatprep.mubr.bf16.mxu0 0
      %1777 = vmatmul.mubr.bf16.gmra.mrb[0].mxu0 %v1739
      %v1778 = vpop.f32.mrb[0].mxu0
      %v1779 = vadd.f32 0.0, %v1778
      %v1780 = vpop.f32.mrb[0].mxu0
      %v1781 = vpop.f32.mrb[0].mxu0
      %v1782 = vpop.f32.mrb[0].mxu0
      %1783 = vdwg.mxu0
      %1785 = vrot.lane.b32.xlu0 %v994, 120
      %v1786 = vpop.permute.xlu0 %1785
      %v1788 = vsel %vm672, %v1684, 0
      %v1791 = vsel %vm679, %v1786, 0
      %1793 = vmatprep.subr.bf16.mxu0 0
      %1794 = vmatpush1.bf16.msra.mxu0 %v1791
      %1795 = vmatprep.subr.bf16.mxu0 0
      %1796 = vmatpush1.bf16.msra.mxu0 0
      %1797 = vmatprep.subr.bf16.mxu0 0
      %1798 = vmatpush1.bf16.msra.mxu0 0
      %1799 = vmatprep.subr.bf16.mxu0 0
      %1800 = vmatpush1.bf16.msra.mxu0 0
      %1801 = vmatprep.subr.bf16.mxu0 0
      %1802 = vmatpush1.bf16.msra.mxu0 0
      %1803 = vmatprep.subr.bf16.mxu0 0
      %1804 = vmatpush1.bf16.msra.mxu0 0
      %1805 = vmatprep.subr.bf16.mxu0 0
      %1806 = vmatpush1.bf16.msra.mxu0 0
      %1807 = vmatprep.subr.bf16.mxu0 0
      %1808 = vmatpush1.bf16.msra.mxu0 0
      %1809 = vmatprep.subr.bf16.mxu0 0
      %1810 = vmatpush1.bf16.msra.mxu0 0
      %1811 = vmatprep.subr.bf16.mxu0 0
      %1812 = vmatpush1.bf16.msra.mxu0 0
      %1813 = vmatprep.subr.bf16.mxu0 0
      %1814 = vmatpush1.bf16.msra.mxu0 0
      %1815 = vmatprep.subr.bf16.mxu0 0
      %1816 = vmatpush1.bf16.msra.mxu0 0
      %1817 = vmatprep.subr.bf16.mxu0 0
      %1818 = vmatpush1.bf16.msra.mxu0 0
      %1819 = vmatprep.subr.bf16.mxu0 0
      %1820 = vmatpush1.bf16.msra.mxu0 0
      %1821 = vmatprep.subr.bf16.mxu0 0
      %1822 = vmatpush1.bf16.msra.mxu0 0
      %1823 = vmatprep.subr.bf16.mxu0 0
      %1824 = vmatpush1.bf16.msra.mxu0 0
      %1825 = vmatprep.mubr.bf16.mxu0 0
      %1826 = vmatmul.mubr.bf16.gmra.mrb[0].mxu0 %v1788
      %v1827 = vpop.f32.mrb[0].mxu0
      %v1828 = vadd.f32 0.0, %v1827
      %v1829 = vpop.f32.mrb[0].mxu0
      %v1830 = vpop.f32.mrb[0].mxu0
      %v1831 = vpop.f32.mrb[0].mxu0
      %1832 = vdwg.mxu0
      %1834 = vrot.lane.b32.xlu0 %v995, 120
      %v1835 = vpop.permute.xlu0 %1834
      %v1837 = vsel %vm672, %v1685, 0
      %v1840 = vsel %vm679, %v1835, 0
      %1842 = vmatprep.subr.bf16.mxu0 0
      %1843 = vmatpush1.bf16.msra.mxu0 %v1840
      %1844 = vmatprep.subr.bf16.mxu0 0
      %1845 = vmatpush1.bf16.msra.mxu0 0
      %1846 = vmatprep.subr.bf16.mxu0 0
      %1847 = vmatpush1.bf16.msra.mxu0 0
      %1848 = vmatprep.subr.bf16.mxu0 0
      %1849 = vmatpush1.bf16.msra.mxu0 0
      %1850 = vmatprep.subr.bf16.mxu0 0
      %1851 = vmatpush1.bf16.msra.mxu0 0
      %1852 = vmatprep.subr.bf16.mxu0 0
      %1853 = vmatpush1.bf16.msra.mxu0 0
      %1854 = vmatprep.subr.bf16.mxu0 0
      %1855 = vmatpush1.bf16.msra.mxu0 0
      %1856 = vmatprep.subr.bf16.mxu0 0
      %1857 = vmatpush1.bf16.msra.mxu0 0
      %1858 = vmatprep.subr.bf16.mxu0 0
      %1859 = vmatpush1.bf16.msra.mxu0 0
      %1860 = vmatprep.subr.bf16.mxu0 0
      %1861 = vmatpush1.bf16.msra.mxu0 0
      %1862 = vmatprep.subr.bf16.mxu0 0
      %1863 = vmatpush1.bf16.msra.mxu0 0
      %1864 = vmatprep.subr.bf16.mxu0 0
      %1865 = vmatpush1.bf16.msra.mxu0 0
      %1866 = vmatprep.subr.bf16.mxu0 0
      %1867 = vmatpush1.bf16.msra.mxu0 0
      %1868 = vmatprep.subr.bf16.mxu0 0
      %1869 = vmatpush1.bf16.msra.mxu0 0
      %1870 = vmatprep.subr.bf16.mxu0 0
      %1871 = vmatpush1.bf16.msra.mxu0 0
      %1872 = vmatprep.subr.bf16.mxu0 0
      %1873 = vmatpush1.bf16.msra.mxu0 0
      %1874 = vmatprep.mubr.bf16.mxu0 0
      %1875 = vmatmul.mubr.bf16.gmra.mrb[0].mxu0 %v1837
      %v1876 = vpop.f32.mrb[0].mxu0
      %v1877 = vadd.f32 0.0, %v1876
      %v1878 = vpop.f32.mrb[0].mxu0
      %v1879 = vpop.f32.mrb[0].mxu0
      %v1880 = vpop.f32.mrb[0].mxu0
      %1881 = vdwg.mxu0
      %v1882 = vpack.c.bf16 %v1779, %v1730
      %v1883 = vpack.c.bf16 %v1877, %v1828
      %v1885 = vsel %vm672, %v1882, 0
      %v1888 = vsel %vm672, %v1883, 0
      %v1891 = vsel %vm679, %v752, 0
      %1893 = vmatprep.subr.bf16.mxu0 0
      %1894 = vmatpush1.bf16.msra.mxu0 %v1891
      %1895 = vmatprep.subr.bf16.mxu0 0
      %1896 = vmatpush1.bf16.msra.mxu0 0
      %1897 = vmatprep.subr.bf16.mxu0 0
      %1898 = vmatpush1.bf16.msra.mxu0 0
      %1899 = vmatprep.subr.bf16.mxu0 0
      %1900 = vmatpush1.bf16.msra.mxu0 0
      %1901 = vmatprep.subr.bf16.mxu0 0
      %1902 = vmatpush1.bf16.msra.mxu0 0
      %1903 = vmatprep.subr.bf16.mxu0 0
      %1904 = vmatpush1.bf16.msra.mxu0 0
      %1905 = vmatprep.subr.bf16.mxu0 0
      %1906 = vmatpush1.bf16.msra.mxu0 0
      %1907 = vmatprep.subr.bf16.mxu0 0
      %1908 = vmatpush1.bf16.msra.mxu0 0
      %1909 = vmatprep.subr.bf16.mxu0 0
      %1910 = vmatpush1.bf16.msra.mxu0 0
      %1911 = vmatprep.subr.bf16.mxu0 0
      %1912 = vmatpush1.bf16.msra.mxu0 0
      %1913 = vmatprep.subr.bf16.mxu0 0
      %1914 = vmatpush1.bf16.msra.mxu0 0
      %1915 = vmatprep.subr.bf16.mxu0 0
      %1916 = vmatpush1.bf16.msra.mxu0 0
      %1917 = vmatprep.subr.bf16.mxu0 0
      %1918 = vmatpush1.bf16.msra.mxu0 0
      %1919 = vmatprep.subr.bf16.mxu0 0
      %1920 = vmatpush1.bf16.msra.mxu0 0
      %1921 = vmatprep.subr.bf16.mxu0 0
      %1922 = vmatpush1.bf16.msra.mxu0 0
      %1923 = vmatprep.subr.bf16.mxu0 0
      %1924 = vmatpush1.bf16.msra.mxu0 0
      %1925 = vmatprep.mubr.bf16.mxu0 0
      %1926 = vmatmul.mubr.bf16.gmra.mrb[0].mxu0 %v1885
      %v1927 = vpop.f32.mrb[0].mxu0
      %v1928 = vadd.f32 0.0, %v1927
      %v1929 = vpop.f32.mrb[0].mxu0
      %v1930 = vpop.f32.mrb[0].mxu0
      %v1931 = vadd.f32 0.0, %v1930
      %v1932 = vpop.f32.mrb[0].mxu0
      %1933 = vmatprep.mubr.bf16.mxu0 0
      %1934 = vmatmul.mubr.bf16.gmra.mrb[0].mxu0 %v1888
      %v1935 = vpop.f32.mrb[0].mxu0
      %v1936 = vadd.f32 0.0, %v1935
      %v1937 = vpop.f32.mrb[0].mxu0
      %v1938 = vpop.f32.mrb[0].mxu0
      %v1939 = vadd.f32 0.0, %v1938
      %v1940 = vpop.f32.mrb[0].mxu0
      %1941 = vdwg.mxu0
      %v1943 = vsel %vm672, %v1420, 0
      %v1946 = vsel %vm672, %v1421, 0
      %v1949 = vsel %vm679, %v751, 0
      %1951 = vmatprep.subr.bf16.mxu0 0
      %1952 = vmatpush1.bf16.msra.mxu0 %v1949
      %1953 = vmatprep.subr.bf16.mxu0 0
      %1954 = vmatpush1.bf16.msra.mxu0 0
      %1955 = vmatprep.subr.bf16.mxu0 0
      %1956 = vmatpush1.bf16.msra.mxu0 0
      %1957 = vmatprep.subr.bf16.mxu0 0
      %1958 = vmatpush1.bf16.msra.mxu0 0
      %1959 = vmatprep.subr.bf16.mxu0 0
      %1960 = vmatpush1.bf16.msra.mxu0 0
      %1961 = vmatprep.subr.bf16.mxu0 0
      %1962 = vmatpush1.bf16.msra.mxu0 0
      %1963 = vmatprep.subr.bf16.mxu0 0
      %1964 = vmatpush1.bf16.msra.mxu0 0
      %1965 = vmatprep.subr.bf16.mxu0 0
      %1966 = vmatpush1.bf16.msra.mxu0 0
      %1967 = vmatprep.subr.bf16.mxu0 0
      %1968 = vmatpush1.bf16.msra.mxu0 0
      %1969 = vmatprep.subr.bf16.mxu0 0
      %1970 = vmatpush1.bf16.msra.mxu0 0
      %1971 = vmatprep.subr.bf16.mxu0 0
      %1972 = vmatpush1.bf16.msra.mxu0 0
      %1973 = vmatprep.subr.bf16.mxu0 0
      %1974 = vmatpush1.bf16.msra.mxu0 0
      %1975 = vmatprep.subr.bf16.mxu0 0
      %1976 = vmatpush1.bf16.msra.mxu0 0
      %1977 = vmatprep.subr.bf16.mxu0 0
      %1978 = vmatpush1.bf16.msra.mxu0 0
      %1979 = vmatprep.subr.bf16.mxu0 0
      %1980 = vmatpush1.bf16.msra.mxu0 0
      %1981 = vmatprep.subr.bf16.mxu0 0
      %1982 = vmatpush1.bf16.msra.mxu0 0
      %1983 = vmatprep.mubr.bf16.mxu0 0
      %1984 = vmatmul.mubr.bf16.gmra.mrb[0].mxu0 %v1943
      %v1985 = vpop.f32.mrb[0].mxu0
      %v1986 = vadd.f32 %v1928, %v1985
      %v1987 = vpop.f32.mrb[0].mxu0
      %v1988 = vpop.f32.mrb[0].mxu0
      %v1989 = vadd.f32 %v1931, %v1988
      %v1990 = vpop.f32.mrb[0].mxu0
      %1991 = vmatprep.mubr.bf16.mxu0 0
      %1992 = vmatmul.mubr.bf16.gmra.mrb[0].mxu0 %v1946
      %v1993 = vpop.f32.mrb[0].mxu0
      %v1994 = vadd.f32 %v1936, %v1993
      %v1995 = vpop.f32.mrb[0].mxu0
      %v1996 = vpop.f32.mrb[0].mxu0
      %v1997 = vadd.f32 %v1939, %v1996
      %v1998 = vpop.f32.mrb[0].mxu0
      %1999 = vdwg.mxu0
      %2000 = vrot.lane.b32.xlu0 %v984, 112
      %v2001 = vpop.permute.xlu0 %2000
      %2002 = vrot.lane.b32.xlu0 %v988, 112
      %v2003 = vpop.permute.xlu0 %2002
      %v2005 = vsel %vm672, %v2001, 0
      %v2008 = vsel %vm672, %v2003, 0
      %2010 = vmatprep.subr.bf16.mxu0 0
      %2011 = vmatpush1.bf16.xpose.msra.mxu0 %v2008
      %2012 = vmatprep.subr.bf16.mxu0 0
      %2013 = vmatpush1.bf16.xpose.msra.mxu0 0
      %2014 = vmatprep.subr.bf16.mxu0 0
      %2015 = vmatpush1.bf16.xpose.msra.mxu0 0
      %2016 = vmatprep.subr.bf16.mxu0 0
      %2017 = vmatpush1.bf16.xpose.msra.mxu0 0
      %2018 = vmatprep.subr.bf16.mxu0 0
      %2019 = vmatpush1.bf16.xpose.msra.mxu0 0
      %2020 = vmatprep.subr.bf16.mxu0 0
      %2021 = vmatpush1.bf16.xpose.msra.mxu0 0
      %2022 = vmatprep.subr.bf16.mxu0 0
      %2023 = vmatpush1.bf16.xpose.msra.mxu0 0
      %2024 = vmatprep.subr.bf16.mxu0 0
      %2025 = vmatpush1.bf16.xpose.msra.mxu0 0
      %2026 = vmatprep.subr.bf16.mxu0 0
      %2027 = vmatpush1.bf16.xpose.msra.mxu0 0
      %2028 = vmatprep.subr.bf16.mxu0 0
      %2029 = vmatpush1.bf16.xpose.msra.mxu0 0
      %2030 = vmatprep.subr.bf16.mxu0 0
      %2031 = vmatpush1.bf16.xpose.msra.mxu0 0
      %2032 = vmatprep.subr.bf16.mxu0 0
      %2033 = vmatpush1.bf16.xpose.msra.mxu0 0
      %2034 = vmatprep.subr.bf16.mxu0 0
      %2035 = vmatpush1.bf16.xpose.msra.mxu0 0
      %2036 = vmatprep.subr.bf16.mxu0 0
      %2037 = vmatpush1.bf16.xpose.msra.mxu0 0
      %2038 = vmatprep.subr.bf16.mxu0 0
      %2039 = vmatpush1.bf16.xpose.msra.mxu0 0
      %2040 = vmatprep.subr.bf16.mxu0 0
      %2041 = vmatpush1.bf16.xpose.msra.mxu0 0
      %2042 = vmatprep.mubr.bf16.mxu0 0
      %2043 = vmatmul.mubr.bf16.gmra.mrb[0].mxu0 %v2005
      %v2044 = vpop.f32.mrb[0].mxu0
      %v2045 = vadd.f32 0.0, %v2044
      %v2046 = vpop.f32.mrb[0].mxu0
      %v2047 = vpop.f32.mrb[0].mxu0
      %v2048 = vpop.f32.mrb[0].mxu0
      %2049 = vdwg.mxu0
      %2050 = vrot.lane.b32.xlu0 %v985, 112
      %v2051 = vpop.permute.xlu0 %2050
      %2052 = vrot.lane.b32.xlu0 %v989, 112
      %v2053 = vpop.permute.xlu0 %2052
      %v2055 = vsel %vm672, %v2051, 0
      %v2058 = vsel %vm672, %v2053, 0
      %2060 = vmatprep.subr.bf16.mxu0 0
      %2061 = vmatpush1.bf16.xpose.msra.mxu0 %v2058
      %2062 = vmatprep.subr.bf16.mxu0 0
      %2063 = vmatpush1.bf16.xpose.msra.mxu0 0
      %2064 = vmatprep.subr.bf16.mxu0 0
      %2065 = vmatpush1.bf16.xpose.msra.mxu0 0
      %2066 = vmatprep.subr.bf16.mxu0 0
      %2067 = vmatpush1.bf16.xpose.msra.mxu0 0
      %2068 = vmatprep.subr.bf16.mxu0 0
      %2069 = vmatpush1.bf16.xpose.msra.mxu0 0
      %2070 = vmatprep.subr.bf16.mxu0 0
      %2071 = vmatpush1.bf16.xpose.msra.mxu0 0
      %2072 = vmatprep.subr.bf16.mxu0 0
      %2073 = vmatpush1.bf16.xpose.msra.mxu0 0
      %2074 = vmatprep.subr.bf16.mxu0 0
      %2075 = vmatpush1.bf16.xpose.msra.mxu0 0
      %2076 = vmatprep.subr.bf16.mxu0 0
      %2077 = vmatpush1.bf16.xpose.msra.mxu0 0
      %2078 = vmatprep.subr.bf16.mxu0 0
      %2079 = vmatpush1.bf16.xpose.msra.mxu0 0
      %2080 = vmatprep.subr.bf16.mxu0 0
      %2081 = vmatpush1.bf16.xpose.msra.mxu0 0
      %2082 = vmatprep.subr.bf16.mxu0 0
      %2083 = vmatpush1.bf16.xpose.msra.mxu0 0
      %2084 = vmatprep.subr.bf16.mxu0 0
      %2085 = vmatpush1.bf16.xpose.msra.mxu0 0
      %2086 = vmatprep.subr.bf16.mxu0 0
      %2087 = vmatpush1.bf16.xpose.msra.mxu0 0
      %2088 = vmatprep.subr.bf16.mxu0 0
      %2089 = vmatpush1.bf16.xpose.msra.mxu0 0
      %2090 = vmatprep.subr.bf16.mxu0 0
      %2091 = vmatpush1.bf16.xpose.msra.mxu0 0
      %2092 = vmatprep.mubr.bf16.mxu0 0
      %2093 = vmatmul.mubr.bf16.gmra.mrb[0].mxu0 %v2055
      %v2094 = vpop.f32.mrb[0].mxu0
      %v2095 = vadd.f32 0.0, %v2094
      %v2096 = vpop.f32.mrb[0].mxu0
      %v2097 = vpop.f32.mrb[0].mxu0
      %v2098 = vpop.f32.mrb[0].mxu0
      %2099 = vdwg.mxu0
      %2100 = vrot.lane.b32.xlu0 %v986, 112
      %v2101 = vpop.permute.xlu0 %2100
      %2102 = vrot.lane.b32.xlu0 %v990, 112
      %v2103 = vpop.permute.xlu0 %2102
      %v2105 = vsel %vm672, %v2101, 0
      %v2108 = vsel %vm672, %v2103, 0
      %2110 = vmatprep.subr.bf16.mxu0 0
      %2111 = vmatpush1.bf16.xpose.msra.mxu0 %v2108
      %2112 = vmatprep.subr.bf16.mxu0 0
      %2113 = vmatpush1.bf16.xpose.msra.mxu0 0
      %2114 = vmatprep.subr.bf16.mxu0 0
      %2115 = vmatpush1.bf16.xpose.msra.mxu0 0
      %2116 = vmatprep.subr.bf16.mxu0 0
      %2117 = vmatpush1.bf16.xpose.msra.mxu0 0
      %2118 = vmatprep.subr.bf16.mxu0 0
      %2119 = vmatpush1.bf16.xpose.msra.mxu0 0
      %2120 = vmatprep.subr.bf16.mxu0 0
      %2121 = vmatpush1.bf16.xpose.msra.mxu0 0
      %2122 = vmatprep.subr.bf16.mxu0 0
      %2123 = vmatpush1.bf16.xpose.msra.mxu0 0
      %2124 = vmatprep.subr.bf16.mxu0 0
      %2125 = vmatpush1.bf16.xpose.msra.mxu0 0
      %2126 = vmatprep.subr.bf16.mxu0 0
      %2127 = vmatpush1.bf16.xpose.msra.mxu0 0
      %2128 = vmatprep.subr.bf16.mxu0 0
      %2129 = vmatpush1.bf16.xpose.msra.mxu0 0
      %2130 = vmatprep.subr.bf16.mxu0 0
      %2131 = vmatpush1.bf16.xpose.msra.mxu0 0
      %2132 = vmatprep.subr.bf16.mxu0 0
      %2133 = vmatpush1.bf16.xpose.msra.mxu0 0
      %2134 = vmatprep.subr.bf16.mxu0 0
      %2135 = vmatpush1.bf16.xpose.msra.mxu0 0
      %2136 = vmatprep.subr.bf16.mxu0 0
      %2137 = vmatpush1.bf16.xpose.msra.mxu0 0
      %2138 = vmatprep.subr.bf16.mxu0 0
      %2139 = vmatpush1.bf16.xpose.msra.mxu0 0
      %2140 = vmatprep.subr.bf16.mxu0 0
      %2141 = vmatpush1.bf16.xpose.msra.mxu0 0
      %2142 = vmatprep.mubr.bf16.mxu0 0
      %2143 = vmatmul.mubr.bf16.gmra.mrb[0].mxu0 %v2105
      %v2144 = vpop.f32.mrb[0].mxu0
      %v2145 = vadd.f32 0.0, %v2144
      %v2146 = vpop.f32.mrb[0].mxu0
      %v2147 = vpop.f32.mrb[0].mxu0
      %v2148 = vpop.f32.mrb[0].mxu0
      %2149 = vdwg.mxu0
      %2150 = vrot.lane.b32.xlu0 %v987, 112
      %v2151 = vpop.permute.xlu0 %2150
      %2152 = vrot.lane.b32.xlu0 %v991, 112
      %v2153 = vpop.permute.xlu0 %2152
      %v2155 = vsel %vm672, %v2151, 0
      %v2158 = vsel %vm672, %v2153, 0
      %2160 = vmatprep.subr.bf16.mxu0 0
      %2161 = vmatpush1.bf16.xpose.msra.mxu0 %v2158
      %2162 = vmatprep.subr.bf16.mxu0 0
      %2163 = vmatpush1.bf16.xpose.msra.mxu0 0
      %2164 = vmatprep.subr.bf16.mxu0 0
      %2165 = vmatpush1.bf16.xpose.msra.mxu0 0
      %2166 = vmatprep.subr.bf16.mxu0 0
      %2167 = vmatpush1.bf16.xpose.msra.mxu0 0
      %2168 = vmatprep.subr.bf16.mxu0 0
      %2169 = vmatpush1.bf16.xpose.msra.mxu0 0
      %2170 = vmatprep.subr.bf16.mxu0 0
      %2171 = vmatpush1.bf16.xpose.msra.mxu0 0
      %2172 = vmatprep.subr.bf16.mxu0 0
      %2173 = vmatpush1.bf16.xpose.msra.mxu0 0
      %2174 = vmatprep.subr.bf16.mxu0 0
      %2175 = vmatpush1.bf16.xpose.msra.mxu0 0
      %2176 = vmatprep.subr.bf16.mxu0 0
      %2177 = vmatpush1.bf16.xpose.msra.mxu0 0
      %2178 = vmatprep.subr.bf16.mxu0 0
      %2179 = vmatpush1.bf16.xpose.msra.mxu0 0
      %2180 = vmatprep.subr.bf16.mxu0 0
      %2181 = vmatpush1.bf16.xpose.msra.mxu0 0
      %2182 = vmatprep.subr.bf16.mxu0 0
      %2183 = vmatpush1.bf16.xpose.msra.mxu0 0
      %2184 = vmatprep.subr.bf16.mxu0 0
      %2185 = vmatpush1.bf16.xpose.msra.mxu0 0
      %2186 = vmatprep.subr.bf16.mxu0 0
      %2187 = vmatpush1.bf16.xpose.msra.mxu0 0
      %2188 = vmatprep.subr.bf16.mxu0 0
      %2189 = vmatpush1.bf16.xpose.msra.mxu0 0
      %2190 = vmatprep.subr.bf16.mxu0 0
      %2191 = vmatpush1.bf16.xpose.msra.mxu0 0
      %2192 = vmatprep.mubr.bf16.mxu0 0
      %2193 = vmatmul.mubr.bf16.gmra.mrb[0].mxu0 %v2155
      %v2194 = vpop.f32.mrb[0].mxu0
      %v2195 = vadd.f32 0.0, %v2194
      %v2196 = vpop.f32.mrb[0].mxu0
      %v2197 = vpop.f32.mrb[0].mxu0
      %v2198 = vpop.f32.mrb[0].mxu0
      %2199 = vdwg.mxu0
      %v2200 = vmul.f32 %v2045, 0.35355338
      %v2201 = vmul.f32 %v2095, 0.35355338
      %v2202 = vmul.f32 %v2145, 0.35355338
      %v2203 = vmul.f32 %v2195, 0.35355338
      %v2204 = vadd.f32 %v2200, %v735
      %v2205 = vadd.f32 %v2201, %v735
      %v2206 = vadd.f32 %v2202, %v735
      %v2207 = vadd.f32 %v2203, %v735
      %v2208 = vsel %vm672, %v2204, -inf
      %2209 = vmax.xlane.f32.xlu0 %v2208
      %v2210 = vpop.xlane.xlu0 %2209
      %v2211 = vsel %vm672, %v2205, -inf
      %2212 = vmax.xlane.f32.xlu0 %v2211
      %v2213 = vpop.xlane.xlu0 %2212
      %v2214 = vsel %vm672, %v2206, -inf
      %2215 = vmax.xlane.f32.xlu0 %v2214
      %v2216 = vpop.xlane.xlu0 %2215
      %v2217 = vsel %vm672, %v2207, -inf
      %2218 = vmax.xlane.f32.xlu0 %v2217
      %v2219 = vpop.xlane.xlu0 %2218
      %v2220 = vsub.f32 %v2204, %v2210
      %v2221 = vsub.f32 %v2205, %v2213
      %v2222 = vsub.f32 %v2206, %v2216
      %v2223 = vsub.f32 %v2207, %v2219
      %v2224 = vmul.f32 %v2220, 1.442695
      %v2225 = vpow.pop %v2224
      %v2226 = vmul.f32 %v2221, 1.442695
      %v2227 = vpow.pop %v2226
      %v2228 = vmul.f32 %v2222, 1.442695
      %v2229 = vpow.pop %v2228
      %v2230 = vmul.f32 %v2223, 1.442695
      %v2231 = vpow.pop %v2230
      %v2232 = vsel %vm672, %v2225, 0.0
      %2233 = vadd.xlane.f32.xlu0 %v2232
      %v2234 = vpop.xlane.xlu0 %2233
      %v2235 = vsel %vm672, %v2227, 0.0
      %2236 = vadd.xlane.f32.xlu0 %v2235
      %v2237 = vpop.xlane.xlu0 %2236
      %v2238 = vsel %vm672, %v2229, 0.0
      %2239 = vadd.xlane.f32.xlu0 %v2238
      %v2240 = vpop.xlane.xlu0 %2239
      %v2241 = vsel %vm672, %v2231, 0.0
      %2242 = vadd.xlane.f32.xlu0 %v2241
      %v2243 = vpop.xlane.xlu0 %2242
      %v2244 = vrcp.pop %v2234
      %v2245 = vrcp.pop %v2237
      %v2246 = vrcp.pop %v2240
      %v2247 = vrcp.pop %v2243
      %v2248 = vmul.f32 %v2225, %v2244
      %v2249 = vmul.f32 %v2227, %v2245
      %v2250 = vmul.f32 %v2229, %v2246
      %v2251 = vmul.f32 %v2231, %v2247
      %v2252 = vpack.c.bf16 %v2248, %v2248
      %v2253 = vpack.c.bf16 %v2249, %v2249
      %v2254 = vpack.c.bf16 %v2250, %v2250
      %v2255 = vpack.c.bf16 %v2251, %v2251
      %2256 = vrot.lane.b32.xlu0 %v992, 112
      %v2257 = vpop.permute.xlu0 %2256
      %v2259 = vsel %vm672, %v2252, 0
      %v2262 = vsel %vm679, %v2257, 0
      %2264 = vmatprep.subr.bf16.mxu0 0
      %2265 = vmatpush1.bf16.msra.mxu0 %v2262
      %2266 = vmatprep.subr.bf16.mxu0 0
      %2267 = vmatpush1.bf16.msra.mxu0 0
      %2268 = vmatprep.subr.bf16.mxu0 0
      %2269 = vmatpush1.bf16.msra.mxu0 0
      %2270 = vmatprep.subr.bf16.mxu0 0
      %2271 = vmatpush1.bf16.msra.mxu0 0
      %2272 = vmatprep.subr.bf16.mxu0 0
      %2273 = vmatpush1.bf16.msra.mxu0 0
      %2274 = vmatprep.subr.bf16.mxu0 0
      %2275 = vmatpush1.bf16.msra.mxu0 0
      %2276 = vmatprep.subr.bf16.mxu0 0
      %2277 = vmatpush1.bf16.msra.mxu0 0
      %2278 = vmatprep.subr.bf16.mxu0 0
      %2279 = vmatpush1.bf16.msra.mxu0 0
      %2280 = vmatprep.subr.bf16.mxu0 0
      %2281 = vmatpush1.bf16.msra.mxu0 0
      %2282 = vmatprep.subr.bf16.mxu0 0
      %2283 = vmatpush1.bf16.msra.mxu0 0
      %2284 = vmatprep.subr.bf16.mxu0 0
      %2285 = vmatpush1.bf16.msra.mxu0 0
      %2286 = vmatprep.subr.bf16.mxu0 0
      %2287 = vmatpush1.bf16.msra.mxu0 0
      %2288 = vmatprep.subr.bf16.mxu0 0
      %2289 = vmatpush1.bf16.msra.mxu0 0
      %2290 = vmatprep.subr.bf16.mxu0 0
      %2291 = vmatpush1.bf16.msra.mxu0 0
      %2292 = vmatprep.subr.bf16.mxu0 0
      %2293 = vmatpush1.bf16.msra.mxu0 0
      %2294 = vmatprep.subr.bf16.mxu0 0
      %2295 = vmatpush1.bf16.msra.mxu0 0
      %2296 = vmatprep.mubr.bf16.mxu0 0
      %2297 = vmatmul.mubr.bf16.gmra.mrb[0].mxu0 %v2259
      %v2298 = vpop.f32.mrb[0].mxu0
      %v2299 = vadd.f32 0.0, %v2298
      %v2300 = vpop.f32.mrb[0].mxu0
      %v2301 = vpop.f32.mrb[0].mxu0
      %v2302 = vpop.f32.mrb[0].mxu0
      %2303 = vdwg.mxu0
      %2304 = vrot.lane.b32.xlu0 %v993, 112
      %v2305 = vpop.permute.xlu0 %2304
      %v2307 = vsel %vm672, %v2253, 0
      %v2310 = vsel %vm679, %v2305, 0
      %2312 = vmatprep.subr.bf16.mxu0 0
      %2313 = vmatpush1.bf16.msra.mxu0 %v2310
      %2314 = vmatprep.subr.bf16.mxu0 0
      %2315 = vmatpush1.bf16.msra.mxu0 0
      %2316 = vmatprep.subr.bf16.mxu0 0
      %2317 = vmatpush1.bf16.msra.mxu0 0
      %2318 = vmatprep.subr.bf16.mxu0 0
      %2319 = vmatpush1.bf16.msra.mxu0 0
      %2320 = vmatprep.subr.bf16.mxu0 0
      %2321 = vmatpush1.bf16.msra.mxu0 0
      %2322 = vmatprep.subr.bf16.mxu0 0
      %2323 = vmatpush1.bf16.msra.mxu0 0
      %2324 = vmatprep.subr.bf16.mxu0 0
      %2325 = vmatpush1.bf16.msra.mxu0 0
      %2326 = vmatprep.subr.bf16.mxu0 0
      %2327 = vmatpush1.bf16.msra.mxu0 0
      %2328 = vmatprep.subr.bf16.mxu0 0
      %2329 = vmatpush1.bf16.msra.mxu0 0
      %2330 = vmatprep.subr.bf16.mxu0 0
      %2331 = vmatpush1.bf16.msra.mxu0 0
      %2332 = vmatprep.subr.bf16.mxu0 0
      %2333 = vmatpush1.bf16.msra.mxu0 0
      %2334 = vmatprep.subr.bf16.mxu0 0
      %2335 = vmatpush1.bf16.msra.mxu0 0
      %2336 = vmatprep.subr.bf16.mxu0 0
      %2337 = vmatpush1.bf16.msra.mxu0 0
      %2338 = vmatprep.subr.bf16.mxu0 0
      %2339 = vmatpush1.bf16.msra.mxu0 0
      %2340 = vmatprep.subr.bf16.mxu0 0
      %2341 = vmatpush1.bf16.msra.mxu0 0
      %2342 = vmatprep.subr.bf16.mxu0 0
      %2343 = vmatpush1.bf16.msra.mxu0 0
      %2344 = vmatprep.mubr.bf16.mxu0 0
      %2345 = vmatmul.mubr.bf16.gmra.mrb[0].mxu0 %v2307
      %v2346 = vpop.f32.mrb[0].mxu0
      %v2347 = vadd.f32 0.0, %v2346
      %v2348 = vpop.f32.mrb[0].mxu0
      %v2349 = vpop.f32.mrb[0].mxu0
      %v2350 = vpop.f32.mrb[0].mxu0
      %2351 = vdwg.mxu0
      %2352 = vrot.lane.b32.xlu0 %v994, 112
      %v2353 = vpop.permute.xlu0 %2352
      %v2355 = vsel %vm672, %v2254, 0
      %v2358 = vsel %vm679, %v2353, 0
      %2360 = vmatprep.subr.bf16.mxu0 0
      %2361 = vmatpush1.bf16.msra.mxu0 %v2358
      %2362 = vmatprep.subr.bf16.mxu0 0
      %2363 = vmatpush1.bf16.msra.mxu0 0
      %2364 = vmatprep.subr.bf16.mxu0 0
      %2365 = vmatpush1.bf16.msra.mxu0 0
      %2366 = vmatprep.subr.bf16.mxu0 0
      %2367 = vmatpush1.bf16.msra.mxu0 0
      %2368 = vmatprep.subr.bf16.mxu0 0
      %2369 = vmatpush1.bf16.msra.mxu0 0
      %2370 = vmatprep.subr.bf16.mxu0 0
      %2371 = vmatpush1.bf16.msra.mxu0 0
      %2372 = vmatprep.subr.bf16.mxu0 0
      %2373 = vmatpush1.bf16.msra.mxu0 0
      %2374 = vmatprep.subr.bf16.mxu0 0
      %2375 = vmatpush1.bf16.msra.mxu0 0
      %2376 = vmatprep.subr.bf16.mxu0 0
      %2377 = vmatpush1.bf16.msra.mxu0 0
      %2378 = vmatprep.subr.bf16.mxu0 0
      %2379 = vmatpush1.bf16.msra.mxu0 0
      %2380 = vmatprep.subr.bf16.mxu0 0
      %2381 = vmatpush1.bf16.msra.mxu0 0
      %2382 = vmatprep.subr.bf16.mxu0 0
      %2383 = vmatpush1.bf16.msra.mxu0 0
      %2384 = vmatprep.subr.bf16.mxu0 0
      %2385 = vmatpush1.bf16.msra.mxu0 0
      %2386 = vmatprep.subr.bf16.mxu0 0
      %2387 = vmatpush1.bf16.msra.mxu0 0
      %2388 = vmatprep.subr.bf16.mxu0 0
      %2389 = vmatpush1.bf16.msra.mxu0 0
      %2390 = vmatprep.subr.bf16.mxu0 0
      %2391 = vmatpush1.bf16.msra.mxu0 0
      %2392 = vmatprep.mubr.bf16.mxu0 0
      %2393 = vmatmul.mubr.bf16.gmra.mrb[0].mxu0 %v2355
      %v2394 = vpop.f32.mrb[0].mxu0
      %v2395 = vadd.f32 0.0, %v2394
      %v2396 = vpop.f32.mrb[0].mxu0
      %v2397 = vpop.f32.mrb[0].mxu0
      %v2398 = vpop.f32.mrb[0].mxu0
      %2399 = vdwg.mxu0
      %2400 = vrot.lane.b32.xlu0 %v995, 112
      %v2401 = vpop.permute.xlu0 %2400
      %v2403 = vsel %vm672, %v2255, 0
      %v2406 = vsel %vm679, %v2401, 0
      %2408 = vmatprep.subr.bf16.mxu0 0
      %2409 = vmatpush1.bf16.msra.mxu0 %v2406
      %2410 = vmatprep.subr.bf16.mxu0 0
      %2411 = vmatpush1.bf16.msra.mxu0 0
      %2412 = vmatprep.subr.bf16.mxu0 0
      %2413 = vmatpush1.bf16.msra.mxu0 0
      %2414 = vmatprep.subr.bf16.mxu0 0
      %2415 = vmatpush1.bf16.msra.mxu0 0
      %2416 = vmatprep.subr.bf16.mxu0 0
      %2417 = vmatpush1.bf16.msra.mxu0 0
      %2418 = vmatprep.subr.bf16.mxu0 0
      %2419 = vmatpush1.bf16.msra.mxu0 0
      %2420 = vmatprep.subr.bf16.mxu0 0
      %2421 = vmatpush1.bf16.msra.mxu0 0
      %2422 = vmatprep.subr.bf16.mxu0 0
      %2423 = vmatpush1.bf16.msra.mxu0 0
      %2424 = vmatprep.subr.bf16.mxu0 0
      %2425 = vmatpush1.bf16.msra.mxu0 0
      %2426 = vmatprep.subr.bf16.mxu0 0
      %2427 = vmatpush1.bf16.msra.mxu0 0
      %2428 = vmatprep.subr.bf16.mxu0 0
      %2429 = vmatpush1.bf16.msra.mxu0 0
      %2430 = vmatprep.subr.bf16.mxu0 0
      %2431 = vmatpush1.bf16.msra.mxu0 0
      %2432 = vmatprep.subr.bf16.mxu0 0
      %2433 = vmatpush1.bf16.msra.mxu0 0
      %2434 = vmatprep.subr.bf16.mxu0 0
      %2435 = vmatpush1.bf16.msra.mxu0 0
      %2436 = vmatprep.subr.bf16.mxu0 0
      %2437 = vmatpush1.bf16.msra.mxu0 0
      %2438 = vmatprep.subr.bf16.mxu0 0
      %2439 = vmatpush1.bf16.msra.mxu0 0
      %2440 = vmatprep.mubr.bf16.mxu0 0
      %2441 = vmatmul.mubr.bf16.gmra.mrb[0].mxu0 %v2403
      %v2442 = vpop.f32.mrb[0].mxu0
      %v2443 = vadd.f32 0.0, %v2442
      %v2444 = vpop.f32.mrb[0].mxu0
      %v2445 = vpop.f32.mrb[0].mxu0
      %v2446 = vpop.f32.mrb[0].mxu0
      %2447 = vdwg.mxu0
      %v2448 = vpack.c.bf16 %v2347, %v2299
      %v2449 = vpack.c.bf16 %v2443, %v2395
      %v2451 = vsel %vm672, %v2448, 0
      %v2454 = vsel %vm672, %v2449, 0
      %v2457 = vsel %vm679, %v753, 0
      %2459 = vmatprep.subr.bf16.mxu0 0
      %2460 = vmatpush1.bf16.msra.mxu0 %v2457
      %2461 = vmatprep.subr.bf16.mxu0 0
      %2462 = vmatpush1.bf16.msra.mxu0 0
      %2463 = vmatprep.subr.bf16.mxu0 0
      %2464 = vmatpush1.bf16.msra.mxu0 0
      %2465 = vmatprep.subr.bf16.mxu0 0
      %2466 = vmatpush1.bf16.msra.mxu0 0
      %2467 = vmatprep.subr.bf16.mxu0 0
      %2468 = vmatpush1.bf16.msra.mxu0 0
      %2469 = vmatprep.subr.bf16.mxu0 0
      %2470 = vmatpush1.bf16.msra.mxu0 0
      %2471 = vmatprep.subr.bf16.mxu0 0
      %2472 = vmatpush1.bf16.msra.mxu0 0
      %2473 = vmatprep.subr.bf16.mxu0 0
      %2474 = vmatpush1.bf16.msra.mxu0 0
      %2475 = vmatprep.subr.bf16.mxu0 0
      %2476 = vmatpush1.bf16.msra.mxu0 0
      %2477 = vmatprep.subr.bf16.mxu0 0
      %2478 = vmatpush1.bf16.msra.mxu0 0
      %2479 = vmatprep.subr.bf16.mxu0 0
      %2480 = vmatpush1.bf16.msra.mxu0 0
      %2481 = vmatprep.subr.bf16.mxu0 0
      %2482 = vmatpush1.bf16.msra.mxu0 0
      %2483 = vmatprep.subr.bf16.mxu0 0
      %2484 = vmatpush1.bf16.msra.mxu0 0
      %2485 = vmatprep.subr.bf16.mxu0 0
      %2486 = vmatpush1.bf16.msra.mxu0 0
      %2487 = vmatprep.subr.bf16.mxu0 0
      %2488 = vmatpush1.bf16.msra.mxu0 0
      %2489 = vmatprep.subr.bf16.mxu0 0
      %2490 = vmatpush1.bf16.msra.mxu0 0
      %2491 = vmatprep.mubr.bf16.mxu0 0
      %2492 = vmatmul.mubr.bf16.gmra.mrb[0].mxu0 %v2451
      %v2493 = vpop.f32.mrb[0].mxu0
      %v2494 = vadd.f32 0.0, %v2493
      %v2495 = vpop.f32.mrb[0].mxu0
      %v2496 = vpop.f32.mrb[0].mxu0
      %v2497 = vadd.f32 0.0, %v2496
      %v2498 = vpop.f32.mrb[0].mxu0
      %2499 = vmatprep.mubr.bf16.mxu0 0
      %2500 = vmatmul.mubr.bf16.gmra.mrb[0].mxu0 %v2454
      %v2501 = vpop.f32.mrb[0].mxu0
      %v2502 = vadd.f32 0.0, %v2501
      %v2503 = vpop.f32.mrb[0].mxu0
      %v2504 = vpop.f32.mrb[0].mxu0
      %v2505 = vadd.f32 0.0, %v2504
      %v2506 = vpop.f32.mrb[0].mxu0
      %2507 = vdwg.mxu0
      %v2508 = vadd.f32 %v1986, %v2494
      %v2509 = vadd.f32 %v1989, %v2497
      %v2510 = vadd.f32 %v1994, %v2502
      %v2511 = vadd.f32 %v1997, %v2505
      %2512 = vrot.lane.b32.xlu0 %v984, 104
      %v2513 = vpop.permute.xlu0 %2512
      %2514 = vrot.lane.b32.xlu0 %v988, 104
      %v2515 = vpop.permute.xlu0 %2514
      %v2517 = vsel %vm672, %v2513, 0
      %v2520 = vsel %vm672, %v2515, 0
      %2522 = vmatprep.subr.bf16.mxu0 0
      %2523 = vmatpush1.bf16.xpose.msra.mxu0 %v2520
      %2524 = vmatprep.subr.bf16.mxu0 0
      %2525 = vmatpush1.bf16.xpose.msra.mxu0 0
      %2526 = vmatprep.subr.bf16.mxu0 0
      %2527 = vmatpush1.bf16.xpose.msra.mxu0 0
      %2528 = vmatprep.subr.bf16.mxu0 0
      %2529 = vmatpush1.bf16.xpose.msra.mxu0 0
      %2530 = vmatprep.subr.bf16.mxu0 0
      %2531 = vmatpush1.bf16.xpose.msra.mxu0 0
      %2532 = vmatprep.subr.bf16.mxu0 0
      %2533 = vmatpush1.bf16.xpose.msra.mxu0 0
      %2534 = vmatprep.subr.bf16.mxu0 0
      %2535 = vmatpush1.bf16.xpose.msra.mxu0 0
      %2536 = vmatprep.subr.bf16.mxu0 0
      %2537 = vmatpush1.bf16.xpose.msra.mxu0 0
      %2538 = vmatprep.subr.bf16.mxu0 0
      %2539 = vmatpush1.bf16.xpose.msra.mxu0 0
      %2540 = vmatprep.subr.bf16.mxu0 0
      %2541 = vmatpush1.bf16.xpose.msra.mxu0 0
      %2542 = vmatprep.subr.bf16.mxu0 0
      %2543 = vmatpush1.bf16.xpose.msra.mxu0 0
      %2544 = vmatprep.subr.bf16.mxu0 0
      %2545 = vmatpush1.bf16.xpose.msra.mxu0 0
      %2546 = vmatprep.subr.bf16.mxu0 0
      %2547 = vmatpush1.bf16.xpose.msra.mxu0 0
      %2548 = vmatprep.subr.bf16.mxu0 0
      %2549 = vmatpush1.bf16.xpose.msra.mxu0 0
      %2550 = vmatprep.subr.bf16.mxu0 0
      %2551 = vmatpush1.bf16.xpose.msra.mxu0 0
      %2552 = vmatprep.subr.bf16.mxu0 0
      %2553 = vmatpush1.bf16.xpose.msra.mxu0 0
      %2554 = vmatprep.mubr.bf16.mxu0 0
      %2555 = vmatmul.mubr.bf16.gmra.mrb[0].mxu0 %v2517
      %v2556 = vpop.f32.mrb[0].mxu0
      %v2557 = vadd.f32 0.0, %v2556
      %v2558 = vpop.f32.mrb[0].mxu0
      %v2559 = vpop.f32.mrb[0].mxu0
      %v2560 = vpop.f32.mrb[0].mxu0
      %2561 = vdwg.mxu0
      %2562 = vrot.lane.b32.xlu0 %v985, 104
      %v2563 = vpop.permute.xlu0 %2562
      %2564 = vrot.lane.b32.xlu0 %v989, 104
      %v2565 = vpop.permute.xlu0 %2564
      %v2567 = vsel %vm672, %v2563, 0
      %v2570 = vsel %vm672, %v2565, 0
      %2572 = vmatprep.subr.bf16.mxu0 0
      %2573 = vmatpush1.bf16.xpose.msra.mxu0 %v2570
      %2574 = vmatprep.subr.bf16.mxu0 0
      %2575 = vmatpush1.bf16.xpose.msra.mxu0 0
      %2576 = vmatprep.subr.bf16.mxu0 0
      %2577 = vmatpush1.bf16.xpose.msra.mxu0 0
      %2578 = vmatprep.subr.bf16.mxu0 0
      %2579 = vmatpush1.bf16.xpose.msra.mxu0 0
      %2580 = vmatprep.subr.bf16.mxu0 0
      %2581 = vmatpush1.bf16.xpose.msra.mxu0 0
      %2582 = vmatprep.subr.bf16.mxu0 0
      %2583 = vmatpush1.bf16.xpose.msra.mxu0 0
      %2584 = vmatprep.subr.bf16.mxu0 0
      %2585 = vmatpush1.bf16.xpose.msra.mxu0 0
      %2586 = vmatprep.subr.bf16.mxu0 0
      %2587 = vmatpush1.bf16.xpose.msra.mxu0 0
      %2588 = vmatprep.subr.bf16.mxu0 0
      %2589 = vmatpush1.bf16.xpose.msra.mxu0 0
      %2590 = vmatprep.subr.bf16.mxu0 0
      %2591 = vmatpush1.bf16.xpose.msra.mxu0 0
      %2592 = vmatprep.subr.bf16.mxu0 0
      %2593 = vmatpush1.bf16.xpose.msra.mxu0 0
      %2594 = vmatprep.subr.bf16.mxu0 0
      %2595 = vmatpush1.bf16.xpose.msra.mxu0 0
      %2596 = vmatprep.subr.bf16.mxu0 0
      %2597 = vmatpush1.bf16.xpose.msra.mxu0 0
      %2598 = vmatprep.subr.bf16.mxu0 0
      %2599 = vmatpush1.bf16.xpose.msra.mxu0 0
      %2600 = vmatprep.subr.bf16.mxu0 0
      %2601 = vmatpush1.bf16.xpose.msra.mxu0 0
      %2602 = vmatprep.subr.bf16.mxu0 0
      %2603 = vmatpush1.bf16.xpose.msra.mxu0 0
      %2604 = vmatprep.mubr.bf16.mxu0 0
      %2605 = vmatmul.mubr.bf16.gmra.mrb[0].mxu0 %v2567
      %v2606 = vpop.f32.mrb[0].mxu0
      %v2607 = vadd.f32 0.0, %v2606
      %v2608 = vpop.f32.mrb[0].mxu0
      %v2609 = vpop.f32.mrb[0].mxu0
      %v2610 = vpop.f32.mrb[0].mxu0
      %2611 = vdwg.mxu0
      %2612 = vrot.lane.b32.xlu0 %v986, 104
      %v2613 = vpop.permute.xlu0 %2612
      %2614 = vrot.lane.b32.xlu0 %v990, 104
      %v2615 = vpop.permute.xlu0 %2614
      %v2617 = vsel %vm672, %v2613, 0
      %v2620 = vsel %vm672, %v2615, 0
      %2622 = vmatprep.subr.bf16.mxu0 0
      %2623 = vmatpush1.bf16.xpose.msra.mxu0 %v2620
      %2624 = vmatprep.subr.bf16.mxu0 0
      %2625 = vmatpush1.bf16.xpose.msra.mxu0 0
      %2626 = vmatprep.subr.bf16.mxu0 0
      %2627 = vmatpush1.bf16.xpose.msra.mxu0 0
      %2628 = vmatprep.subr.bf16.mxu0 0
      %2629 = vmatpush1.bf16.xpose.msra.mxu0 0
      %2630 = vmatprep.subr.bf16.mxu0 0
      %2631 = vmatpush1.bf16.xpose.msra.mxu0 0
      %2632 = vmatprep.subr.bf16.mxu0 0
      %2633 = vmatpush1.bf16.xpose.msra.mxu0 0
      %2634 = vmatprep.subr.bf16.mxu0 0
      %2635 = vmatpush1.bf16.xpose.msra.mxu0 0
      %2636 = vmatprep.subr.bf16.mxu0 0
      %2637 = vmatpush1.bf16.xpose.msra.mxu0 0
      %2638 = vmatprep.subr.bf16.mxu0 0
      %2639 = vmatpush1.bf16.xpose.msra.mxu0 0
      %2640 = vmatprep.subr.bf16.mxu0 0
      %2641 = vmatpush1.bf16.xpose.msra.mxu0 0
      %2642 = vmatprep.subr.bf16.mxu0 0
      %2643 = vmatpush1.bf16.xpose.msra.mxu0 0
      %2644 = vmatprep.subr.bf16.mxu0 0
      %2645 = vmatpush1.bf16.xpose.msra.mxu0 0
      %2646 = vmatprep.subr.bf16.mxu0 0
      %2647 = vmatpush1.bf16.xpose.msra.mxu0 0
      %2648 = vmatprep.subr.bf16.mxu0 0
      %2649 = vmatpush1.bf16.xpose.msra.mxu0 0
      %2650 = vmatprep.subr.bf16.mxu0 0
      %2651 = vmatpush1.bf16.xpose.msra.mxu0 0
      %2652 = vmatprep.subr.bf16.mxu0 0
      %2653 = vmatpush1.bf16.xpose.msra.mxu0 0
      %2654 = vmatprep.mubr.bf16.mxu0 0
      %2655 = vmatmul.mubr.bf16.gmra.mrb[0].mxu0 %v2617
      %v2656 = vpop.f32.mrb[0].mxu0
      %v2657 = vadd.f32 0.0, %v2656
      %v2658 = vpop.f32.mrb[0].mxu0
      %v2659 = vpop.f32.mrb[0].mxu0
      %v2660 = vpop.f32.mrb[0].mxu0
      %2661 = vdwg.mxu0
      %2662 = vrot.lane.b32.xlu0 %v987, 104
      %v2663 = vpop.permute.xlu0 %2662
      %2664 = vrot.lane.b32.xlu0 %v991, 104
      %v2665 = vpop.permute.xlu0 %2664
      %v2667 = vsel %vm672, %v2663, 0
      %v2670 = vsel %vm672, %v2665, 0
      %2672 = vmatprep.subr.bf16.mxu0 0
      %2673 = vmatpush1.bf16.xpose.msra.mxu0 %v2670
      %2674 = vmatprep.subr.bf16.mxu0 0
      %2675 = vmatpush1.bf16.xpose.msra.mxu0 0
      %2676 = vmatprep.subr.bf16.mxu0 0
      %2677 = vmatpush1.bf16.xpose.msra.mxu0 0
      %2678 = vmatprep.subr.bf16.mxu0 0
      %2679 = vmatpush1.bf16.xpose.msra.mxu0 0
      %2680 = vmatprep.subr.bf16.mxu0 0
      %2681 = vmatpush1.bf16.xpose.msra.mxu0 0
      %2682 = vmatprep.subr.bf16.mxu0 0
      %2683 = vmatpush1.bf16.xpose.msra.mxu0 0
      %2684 = vmatprep.subr.bf16.mxu0 0
      %2685 = vmatpush1.bf16.xpose.msra.mxu0 0
      %2686 = vmatprep.subr.bf16.mxu0 0
      %2687 = vmatpush1.bf16.xpose.msra.mxu0 0
      %2688 = vmatprep.subr.bf16.mxu0 0
      %2689 = vmatpush1.bf16.xpose.msra.mxu0 0
      %2690 = vmatprep.subr.bf16.mxu0 0
      %2691 = vmatpush1.bf16.xpose.msra.mxu0 0
      %2692 = vmatprep.subr.bf16.mxu0 0
      %2693 = vmatpush1.bf16.xpose.msra.mxu0 0
      %2694 = vmatprep.subr.bf16.mxu0 0
      %2695 = vmatpush1.bf16.xpose.msra.mxu0 0
      %2696 = vmatprep.subr.bf16.mxu0 0
      %2697 = vmatpush1.bf16.xpose.msra.mxu0 0
      %2698 = vmatprep.subr.bf16.mxu0 0
      %2699 = vmatpush1.bf16.xpose.msra.mxu0 0
      %2700 = vmatprep.subr.bf16.mxu0 0
      %2701 = vmatpush1.bf16.xpose.msra.mxu0 0
      %2702 = vmatprep.subr.bf16.mxu0 0
      %2703 = vmatpush1.bf16.xpose.msra.mxu0 0
      %2704 = vmatprep.mubr.bf16.mxu0 0
      %2705 = vmatmul.mubr.bf16.gmra.mrb[0].mxu0 %v2667
      %v2706 = vpop.f32.mrb[0].mxu0
      %v2707 = vadd.f32 0.0, %v2706
      %v2708 = vpop.f32.mrb[0].mxu0
      %v2709 = vpop.f32.mrb[0].mxu0
      %v2710 = vpop.f32.mrb[0].mxu0
      %2711 = vdwg.mxu0
      %v2712 = vmul.f32 %v2557, 0.35355338
      %v2713 = vmul.f32 %v2607, 0.35355338
      %v2714 = vmul.f32 %v2657, 0.35355338
      %v2715 = vmul.f32 %v2707, 0.35355338
      %v2716 = vadd.f32 %v2712, %v735
      %v2717 = vadd.f32 %v2713, %v735
      %v2718 = vadd.f32 %v2714, %v735
      %v2719 = vadd.f32 %v2715, %v735
      %v2720 = vsel %vm672, %v2716, -inf
      %2721 = vmax.xlane.f32.xlu0 %v2720
      %v2722 = vpop.xlane.xlu0 %2721
      %v2723 = vsel %vm672, %v2717, -inf
      %2724 = vmax.xlane.f32.xlu0 %v2723
      %v2725 = vpop.xlane.xlu0 %2724
      %v2726 = vsel %vm672, %v2718, -inf
      %2727 = vmax.xlane.f32.xlu0 %v2726
      %v2728 = vpop.xlane.xlu0 %2727
      %v2729 = vsel %vm672, %v2719, -inf
      %2730 = vmax.xlane.f32.xlu0 %v2729
      %v2731 = vpop.xlane.xlu0 %2730
      %v2732 = vsub.f32 %v2716, %v2722
      %v2733 = vsub.f32 %v2717, %v2725
      %v2734 = vsub.f32 %v2718, %v2728
      %v2735 = vsub.f32 %v2719, %v2731
      %v2736 = vmul.f32 %v2732, 1.442695
      %v2737 = vpow.pop %v2736
      %v2738 = vmul.f32 %v2733, 1.442695
      %v2739 = vpow.pop %v2738
      %v2740 = vmul.f32 %v2734, 1.442695
      %v2741 = vpow.pop %v2740
      %v2742 = vmul.f32 %v2735, 1.442695
      %v2743 = vpow.pop %v2742
      %v2744 = vsel %vm672, %v2737, 0.0
      %2745 = vadd.xlane.f32.xlu0 %v2744
      %v2746 = vpop.xlane.xlu0 %2745
      %v2747 = vsel %vm672, %v2739, 0.0
      %2748 = vadd.xlane.f32.xlu0 %v2747
      %v2749 = vpop.xlane.xlu0 %2748
      %v2750 = vsel %vm672, %v2741, 0.0
      %2751 = vadd.xlane.f32.xlu0 %v2750
      %v2752 = vpop.xlane.xlu0 %2751
      %v2753 = vsel %vm672, %v2743, 0.0
      %2754 = vadd.xlane.f32.xlu0 %v2753
      %v2755 = vpop.xlane.xlu0 %2754
      %v2756 = vrcp.pop %v2746
      %v2757 = vrcp.pop %v2749
      %v2758 = vrcp.pop %v2752
      %v2759 = vrcp.pop %v2755
      %v2760 = vmul.f32 %v2737, %v2756
      %v2761 = vmul.f32 %v2739, %v2757
      %v2762 = vmul.f32 %v2741, %v2758
      %v2763 = vmul.f32 %v2743, %v2759
      %v2764 = vpack.c.bf16 %v2760, %v2760
      %v2765 = vpack.c.bf16 %v2761, %v2761
      %v2766 = vpack.c.bf16 %v2762, %v2762
      %v2767 = vpack.c.bf16 %v2763, %v2763
      %2768 = vrot.lane.b32.xlu0 %v992, 104
      %v2769 = vpop.permute.xlu0 %2768
      %v2771 = vsel %vm672, %v2764, 0
      %v2774 = vsel %vm679, %v2769, 0
      %2776 = vmatprep.subr.bf16.mxu0 0
      %2777 = vmatpush1.bf16.msra.mxu0 %v2774
      %2778 = vmatprep.subr.bf16.mxu0 0
      %2779 = vmatpush1.bf16.msra.mxu0 0
      %2780 = vmatprep.subr.bf16.mxu0 0
      %2781 = vmatpush1.bf16.msra.mxu0 0
      %2782 = vmatprep.subr.bf16.mxu0 0
      %2783 = vmatpush1.bf16.msra.mxu0 0
      %2784 = vmatprep.subr.bf16.mxu0 0
      %2785 = vmatpush1.bf16.msra.mxu0 0
      %2786 = vmatprep.subr.bf16.mxu0 0
      %2787 = vmatpush1.bf16.msra.mxu0 0
      %2788 = vmatprep.subr.bf16.mxu0 0
      %2789 = vmatpush1.bf16.msra.mxu0 0
      %2790 = vmatprep.subr.bf16.mxu0 0
      %2791 = vmatpush1.bf16.msra.mxu0 0
      %2792 = vmatprep.subr.bf16.mxu0 0
      %2793 = vmatpush1.bf16.msra.mxu0 0
      %2794 = vmatprep.subr.bf16.mxu0 0
      %2795 = vmatpush1.bf16.msra.mxu0 0
      %2796 = vmatprep.subr.bf16.mxu0 0
      %2797 = vmatpush1.bf16.msra.mxu0 0
      %2798 = vmatprep.subr.bf16.mxu0 0
      %2799 = vmatpush1.bf16.msra.mxu0 0
      %2800 = vmatprep.subr.bf16.mxu0 0
      %2801 = vmatpush1.bf16.msra.mxu0 0
      %2802 = vmatprep.subr.bf16.mxu0 0
      %2803 = vmatpush1.bf16.msra.mxu0 0
      %2804 = vmatprep.subr.bf16.mxu0 0
      %2805 = vmatpush1.bf16.msra.mxu0 0
      %2806 = vmatprep.subr.bf16.mxu0 0
      %2807 = vmatpush1.bf16.msra.mxu0 0
      %2808 = vmatprep.mubr.bf16.mxu0 0
      %2809 = vmatmul.mubr.bf16.gmra.mrb[0].mxu0 %v2771
      %v2810 = vpop.f32.mrb[0].mxu0
      %v2811 = vadd.f32 0.0, %v2810
      %v2812 = vpop.f32.mrb[0].mxu0
      %v2813 = vpop.f32.mrb[0].mxu0
      %v2814 = vpop.f32.mrb[0].mxu0
      %2815 = vdwg.mxu0
      %2816 = vrot.lane.b32.xlu0 %v993, 104
      %v2817 = vpop.permute.xlu0 %2816
      %v2819 = vsel %vm672, %v2765, 0
      %v2822 = vsel %vm679, %v2817, 0
      %2824 = vmatprep.subr.bf16.mxu0 0
      %2825 = vmatpush1.bf16.msra.mxu0 %v2822
      %2826 = vmatprep.subr.bf16.mxu0 0
      %2827 = vmatpush1.bf16.msra.mxu0 0
      %2828 = vmatprep.subr.bf16.mxu0 0
      %2829 = vmatpush1.bf16.msra.mxu0 0
      %2830 = vmatprep.subr.bf16.mxu0 0
      %2831 = vmatpush1.bf16.msra.mxu0 0
      %2832 = vmatprep.subr.bf16.mxu0 0
      %2833 = vmatpush1.bf16.msra.mxu0 0
      %2834 = vmatprep.subr.bf16.mxu0 0
      %2835 = vmatpush1.bf16.msra.mxu0 0
      %2836 = vmatprep.subr.bf16.mxu0 0
      %2837 = vmatpush1.bf16.msra.mxu0 0
      %2838 = vmatprep.subr.bf16.mxu0 0
      %2839 = vmatpush1.bf16.msra.mxu0 0
      %2840 = vmatprep.subr.bf16.mxu0 0
      %2841 = vmatpush1.bf16.msra.mxu0 0
      %2842 = vmatprep.subr.bf16.mxu0 0
      %2843 = vmatpush1.bf16.msra.mxu0 0
      %2844 = vmatprep.subr.bf16.mxu0 0
      %2845 = vmatpush1.bf16.msra.mxu0 0
      %2846 = vmatprep.subr.bf16.mxu0 0
      %2847 = vmatpush1.bf16.msra.mxu0 0
      %2848 = vmatprep.subr.bf16.mxu0 0
      %2849 = vmatpush1.bf16.msra.mxu0 0
      %2850 = vmatprep.subr.bf16.mxu0 0
      %2851 = vmatpush1.bf16.msra.mxu0 0
      %2852 = vmatprep.subr.bf16.mxu0 0
      %2853 = vmatpush1.bf16.msra.mxu0 0
      %2854 = vmatprep.subr.bf16.mxu0 0
      %2855 = vmatpush1.bf16.msra.mxu0 0
      %2856 = vmatprep.mubr.bf16.mxu0 0
      %2857 = vmatmul.mubr.bf16.gmra.mrb[0].mxu0 %v2819
      %v2858 = vpop.f32.mrb[0].mxu0
      %v2859 = vadd.f32 0.0, %v2858
      %v2860 = vpop.f32.mrb[0].mxu0
      %v2861 = vpop.f32.mrb[0].mxu0
      %v2862 = vpop.f32.mrb[0].mxu0
      %2863 = vdwg.mxu0
      %2864 = vrot.lane.b32.xlu0 %v994, 104
      %v2865 = vpop.permute.xlu0 %2864
      %v2867 = vsel %vm672, %v2766, 0
      %v2870 = vsel %vm679, %v2865, 0
      %2872 = vmatprep.subr.bf16.mxu0 0
      %2873 = vmatpush1.bf16.msra.mxu0 %v2870
      %2874 = vmatprep.subr.bf16.mxu0 0
      %2875 = vmatpush1.bf16.msra.mxu0 0
      %2876 = vmatprep.subr.bf16.mxu0 0
      %2877 = vmatpush1.bf16.msra.mxu0 0
      %2878 = vmatprep.subr.bf16.mxu0 0
      %2879 = vmatpush1.bf16.msra.mxu0 0
      %2880 = vmatprep.subr.bf16.mxu0 0
      %2881 = vmatpush1.bf16.msra.mxu0 0
      %2882 = vmatprep.subr.bf16.mxu0 0
      %2883 = vmatpush1.bf16.msra.mxu0 0
      %2884 = vmatprep.subr.bf16.mxu0 0
      %2885 = vmatpush1.bf16.msra.mxu0 0
      %2886 = vmatprep.subr.bf16.mxu0 0
      %2887 = vmatpush1.bf16.msra.mxu0 0
      %2888 = vmatprep.subr.bf16.mxu0 0
      %2889 = vmatpush1.bf16.msra.mxu0 0
      %2890 = vmatprep.subr.bf16.mxu0 0
      %2891 = vmatpush1.bf16.msra.mxu0 0
      %2892 = vmatprep.subr.bf16.mxu0 0
      %2893 = vmatpush1.bf16.msra.mxu0 0
      %2894 = vmatprep.subr.bf16.mxu0 0
      %2895 = vmatpush1.bf16.msra.mxu0 0
      %2896 = vmatprep.subr.bf16.mxu0 0
      %2897 = vmatpush1.bf16.msra.mxu0 0
      %2898 = vmatprep.subr.bf16.mxu0 0
      %2899 = vmatpush1.bf16.msra.mxu0 0
      %2900 = vmatprep.subr.bf16.mxu0 0
      %2901 = vmatpush1.bf16.msra.mxu0 0
      %2902 = vmatprep.subr.bf16.mxu0 0
      %2903 = vmatpush1.bf16.msra.mxu0 0
      %2904 = vmatprep.mubr.bf16.mxu0 0
      %2905 = vmatmul.mubr.bf16.gmra.mrb[0].mxu0 %v2867
      %v2906 = vpop.f32.mrb[0].mxu0
      %v2907 = vadd.f32 0.0, %v2906
      %v2908 = vpop.f32.mrb[0].mxu0
      %v2909 = vpop.f32.mrb[0].mxu0
      %v2910 = vpop.f32.mrb[0].mxu0
      %2911 = vdwg.mxu0
      %2912 = vrot.lane.b32.xlu0 %v995, 104
      %v2913 = vpop.permute.xlu0 %2912
      %v2915 = vsel %vm672, %v2767, 0
      %v2918 = vsel %vm679, %v2913, 0
      %2920 = vmatprep.subr.bf16.mxu0 0
      %2921 = vmatpush1.bf16.msra.mxu0 %v2918
      %2922 = vmatprep.subr.bf16.mxu0 0
      %2923 = vmatpush1.bf16.msra.mxu0 0
      %2924 = vmatprep.subr.bf16.mxu0 0
      %2925 = vmatpush1.bf16.msra.mxu0 0
      %2926 = vmatprep.subr.bf16.mxu0 0
      %2927 = vmatpush1.bf16.msra.mxu0 0
      %2928 = vmatprep.subr.bf16.mxu0 0
      %2929 = vmatpush1.bf16.msra.mxu0 0
      %2930 = vmatprep.subr.bf16.mxu0 0
      %2931 = vmatpush1.bf16.msra.mxu0 0
      %2932 = vmatprep.subr.bf16.mxu0 0
      %2933 = vmatpush1.bf16.msra.mxu0 0
      %2934 = vmatprep.subr.bf16.mxu0 0
      %2935 = vmatpush1.bf16.msra.mxu0 0
      %2936 = vmatprep.subr.bf16.mxu0 0
      %2937 = vmatpush1.bf16.msra.mxu0 0
      %2938 = vmatprep.subr.bf16.mxu0 0
      %2939 = vmatpush1.bf16.msra.mxu0 0
      %2940 = vmatprep.subr.bf16.mxu0 0
      %2941 = vmatpush1.bf16.msra.mxu0 0
      %2942 = vmatprep.subr.bf16.mxu0 0
      %2943 = vmatpush1.bf16.msra.mxu0 0
      %2944 = vmatprep.subr.bf16.mxu0 0
      %2945 = vmatpush1.bf16.msra.mxu0 0
      %2946 = vmatprep.subr.bf16.mxu0 0
      %2947 = vmatpush1.bf16.msra.mxu0 0
      %2948 = vmatprep.subr.bf16.mxu0 0
      %2949 = vmatpush1.bf16.msra.mxu0 0
      %2950 = vmatprep.subr.bf16.mxu0 0
      %2951 = vmatpush1.bf16.msra.mxu0 0
      %2952 = vmatprep.mubr.bf16.mxu0 0
      %2953 = vmatmul.mubr.bf16.gmra.mrb[0].mxu0 %v2915
      %v2954 = vpop.f32.mrb[0].mxu0
      %v2955 = vadd.f32 0.0, %v2954
      %v2956 = vpop.f32.mrb[0].mxu0
      %v2957 = vpop.f32.mrb[0].mxu0
      %v2958 = vpop.f32.mrb[0].mxu0
      %2959 = vdwg.mxu0
      %v2960 = vpack.c.bf16 %v2859, %v2811
      %v2961 = vpack.c.bf16 %v2955, %v2907
      %v2963 = vsel %vm672, %v2960, 0
      %v2966 = vsel %vm672, %v2961, 0
      %v2969 = vsel %vm679, %v754, 0
      %2971 = vmatprep.subr.bf16.mxu0 0
      %2972 = vmatpush1.bf16.msra.mxu0 %v2969
      %2973 = vmatprep.subr.bf16.mxu0 0
      %2974 = vmatpush1.bf16.msra.mxu0 0
      %2975 = vmatprep.subr.bf16.mxu0 0
      %2976 = vmatpush1.bf16.msra.mxu0 0
      %2977 = vmatprep.subr.bf16.mxu0 0
      %2978 = vmatpush1.bf16.msra.mxu0 0
      %2979 = vmatprep.subr.bf16.mxu0 0
      %2980 = vmatpush1.bf16.msra.mxu0 0
      %2981 = vmatprep.subr.bf16.mxu0 0
      %2982 = vmatpush1.bf16.msra.mxu0 0
      %2983 = vmatprep.subr.bf16.mxu0 0
      %2984 = vmatpush1.bf16.msra.mxu0 0
      %2985 = vmatprep.subr.bf16.mxu0 0
      %2986 = vmatpush1.bf16.msra.mxu0 0
      %2987 = vmatprep.subr.bf16.mxu0 0
      %2988 = vmatpush1.bf16.msra.mxu0 0
      %2989 = vmatprep.subr.bf16.mxu0 0
      %2990 = vmatpush1.bf16.msra.mxu0 0
      %2991 = vmatprep.subr.bf16.mxu0 0
      %2992 = vmatpush1.bf16.msra.mxu0 0
      %2993 = vmatprep.subr.bf16.mxu0 0
      %2994 = vmatpush1.bf16.msra.mxu0 0
      %2995 = vmatprep.subr.bf16.mxu0 0
      %2996 = vmatpush1.bf16.msra.mxu0 0
      %2997 = vmatprep.subr.bf16.mxu0 0
      %2998 = vmatpush1.bf16.msra.mxu0 0
      %2999 = vmatprep.subr.bf16.mxu0 0
      %3000 = vmatpush1.bf16.msra.mxu0 0
      %3001 = vmatprep.subr.bf16.mxu0 0
      %3002 = vmatpush1.bf16.msra.mxu0 0
      %3003 = vmatprep.mubr.bf16.mxu0 0
      %3004 = vmatmul.mubr.bf16.gmra.mrb[0].mxu0 %v2963
      %v3005 = vpop.f32.mrb[0].mxu0
      %v3006 = vadd.f32 0.0, %v3005
      %v3007 = vpop.f32.mrb[0].mxu0
      %v3008 = vpop.f32.mrb[0].mxu0
      %v3009 = vadd.f32 0.0, %v3008
      %v3010 = vpop.f32.mrb[0].mxu0
      %3011 = vmatprep.mubr.bf16.mxu0 0
      %3012 = vmatmul.mubr.bf16.gmra.mrb[0].mxu0 %v2966
      %v3013 = vpop.f32.mrb[0].mxu0
      %v3014 = vadd.f32 0.0, %v3013
      %v3015 = vpop.f32.mrb[0].mxu0
      %v3016 = vpop.f32.mrb[0].mxu0
      %v3017 = vadd.f32 0.0, %v3016
      %v3018 = vpop.f32.mrb[0].mxu0
      %3019 = vdwg.mxu0
      %v3020 = vadd.f32 %v2508, %v3006
      %v3021 = vadd.f32 %v2509, %v3009
      %v3022 = vadd.f32 %v2510, %v3014
      %v3023 = vadd.f32 %v2511, %v3017
      %v3025 = vlaneseq
      %v3026 = vshrl.u32 %v3025, 7
      %v3027 = vsub.s32 0, %v3026
      %v3028 = vrot.slane %v755, %v3027
      %v3030 = vadd.f32 %v3020, %v3028
      %v3031 = vadd.f32 %v3021, %v3028
      %v3032 = vadd.f32 %v3022, %v3028
      %v3033 = vadd.f32 %v3023, %v3028
      %v3034 = vadd.f32 %v718, %v3030
      %v3035 = vadd.f32 %v721, %v3031
      %v3036 = vadd.f32 %v726, %v3032
      %v3037 = vadd.f32 %v729, %v3033
      %v3038 = vsel %vm794, %v3034, 0.0
      %3039 = vadd.xlane.f32.xlu0 %v3038
      %v3040 = vpop.xlane.xlu0 %3039
      %v3041 = vsel %vm794, %v3035, 0.0
      %3042 = vadd.xlane.f32.xlu0 %v3041
      %v3043 = vpop.xlane.xlu0 %3042
      %v3044 = vsel %vm794, %v3036, 0.0
      %3045 = vadd.xlane.f32.xlu0 %v3044
      %v3046 = vpop.xlane.xlu0 %3045
      %v3047 = vsel %vm794, %v3037, 0.0
      %3048 = vadd.xlane.f32.xlu0 %v3047
      %v3049 = vpop.xlane.xlu0 %3048
      %v3050 = vrcp.pop 32.0
      %v3051 = vmul.f32 %v3040, %v3050
      %v3052 = vmul.f32 %v3043, %v3050
      %v3053 = vmul.f32 %v3046, %v3050
      %v3054 = vmul.f32 %v3049, %v3050
      %v3055 = vsub.f32 %v3034, %v3051
      %v3056 = vsub.f32 %v3035, %v3052
      %v3057 = vsub.f32 %v3036, %v3053
      %v3058 = vsub.f32 %v3037, %v3054
      %v3059 = vmul.f32 %v3055, %v3055
      %v3060 = vmul.f32 %v3056, %v3056
      %v3061 = vmul.f32 %v3057, %v3057
      %v3062 = vmul.f32 %v3058, %v3058
      %v3063 = vsel %vm794, %v3059, 0.0
      %3064 = vadd.xlane.f32.xlu0 %v3063
      %v3065 = vpop.xlane.xlu0 %3064
      %v3066 = vsel %vm794, %v3060, 0.0
      %3067 = vadd.xlane.f32.xlu0 %v3066
      %v3068 = vpop.xlane.xlu0 %3067
      %v3069 = vsel %vm794, %v3061, 0.0
      %3070 = vadd.xlane.f32.xlu0 %v3069
      %v3071 = vpop.xlane.xlu0 %3070
      %v3072 = vsel %vm794, %v3062, 0.0
      %3073 = vadd.xlane.f32.xlu0 %v3072
      %v3074 = vpop.xlane.xlu0 %3073
      %v3075 = vmul.f32 %v3065, %v3050
      %v3076 = vmul.f32 %v3068, %v3050
      %v3077 = vmul.f32 %v3071, %v3050
      %v3078 = vmul.f32 %v3074, %v3050
      %v3079 = vadd.f32 %v3075, 1e-05
      %v3080 = vadd.f32 %v3076, 1e-05
      %v3081 = vadd.f32 %v3077, 1e-05
      %v3082 = vadd.f32 %v3078, 1e-05
      %v3083 = vrsqrt.pop %v3079
      %v3084 = vrsqrt.pop %v3080
      %v3085 = vrsqrt.pop %v3081
      %v3086 = vrsqrt.pop %v3082
      %v3087 = vmul.f32 %v3055, %v3083
      %v3088 = vmul.f32 %v3056, %v3084
      %v3089 = vmul.f32 %v3057, %v3085
      %v3090 = vmul.f32 %v3058, %v3086
      %v3092 = vlaneseq
      %v3093 = vshrl.u32 %v3092, 7
      %v3094 = vsub.s32 0, %v3093
      %v3095 = vrot.slane %v756, %v3094
      %v3097 = vmul.f32 %v3087, %v3095
      %v3098 = vmul.f32 %v3088, %v3095
      %v3099 = vmul.f32 %v3089, %v3095
      %v3100 = vmul.f32 %v3090, %v3095
      %v3102 = vlaneseq
      %v3103 = vshrl.u32 %v3102, 7
      %v3104 = vsub.s32 0, %v3103
      %v3105 = vrot.slane %v757, %v3104
      %v3107 = vadd.f32 %v3097, %v3105
      %v3108 = vadd.f32 %v3098, %v3105
      %v3109 = vadd.f32 %v3099, %v3105
      %v3110 = vadd.f32 %v3100, %v3105
      %v3111 = vpack.c.bf16 %v3108, %v3107
      %v3112 = vpack.c.bf16 %v3110, %v3109
      %v3114 = vlaneseq
      %v3115 = vshrl.u32 %v3114, 7
      %v3116 = vsub.s32 0, %v3115
      %v3117 = vrot.slane %v762, %v3116
      %v3123 = vunpack.c.l.b16 %v758
      %v3124 = vunpack.c.l.b16 %v759
      %v3125 = vunpack.c.l.b16 %v760
      %v3126 = vunpack.c.l.b16 %v761
      %v3127 = vpack.c.b16 %v3124, %v3123
      %v3128 = vpack.c.b16 %v3126, %v3125
      %v3132 = vsel %vm794, %v3111, 0
      %v3135 = vsel %vm794, %v3112, 0
      %3137 = vmatprep.subr.bf16.mxu0 0
      %3138 = vmatpush1.bf16.msra.mxu0 %v3127
      %3139 = vmatprep.subr.bf16.mxu0 0
      %3140 = vmatpush1.bf16.msra.mxu0 %v3128
      %3141 = vmatprep.subr.bf16.mxu0 0
      %3142 = vmatpush1.bf16.msra.mxu0 0
      %3143 = vmatprep.subr.bf16.mxu0 0
      %3144 = vmatpush1.bf16.msra.mxu0 0
      %3145 = vmatprep.subr.bf16.mxu0 0
      %3146 = vmatpush1.bf16.msra.mxu0 0
      %3147 = vmatprep.subr.bf16.mxu0 0
      %3148 = vmatpush1.bf16.msra.mxu0 0
      %3149 = vmatprep.subr.bf16.mxu0 0
      %3150 = vmatpush1.bf16.msra.mxu0 0
      %3151 = vmatprep.subr.bf16.mxu0 0
      %3152 = vmatpush1.bf16.msra.mxu0 0
      %3153 = vmatprep.subr.bf16.mxu0 0
      %3154 = vmatpush1.bf16.msra.mxu0 0
      %3155 = vmatprep.subr.bf16.mxu0 0
      %3156 = vmatpush1.bf16.msra.mxu0 0
      %3157 = vmatprep.subr.bf16.mxu0 0
      %3158 = vmatpush1.bf16.msra.mxu0 0
      %3159 = vmatprep.subr.bf16.mxu0 0
      %3160 = vmatpush1.bf16.msra.mxu0 0
      %3161 = vmatprep.subr.bf16.mxu0 0
      %3162 = vmatpush1.bf16.msra.mxu0 0
      %3163 = vmatprep.subr.bf16.mxu0 0
      %3164 = vmatpush1.bf16.msra.mxu0 0
      %3165 = vmatprep.subr.bf16.mxu0 0
      %3166 = vmatpush1.bf16.msra.mxu0 0
      %3167 = vmatprep.subr.bf16.mxu0 0
      %3168 = vmatpush1.bf16.msra.mxu0 0
      %3169 = vmatprep.mubr.bf16.mxu0 0
      %3170 = vmatmul.mubr.bf16.gmra.mrb[0].mxu0 %v3132
      %v3171 = vpop.f32.mrb[0].mxu0
      %v3172 = vadd.f32 %v3117, %v3171
      %v3173 = vpop.f32.mrb[0].mxu0
      %v3174 = vpop.f32.mrb[0].mxu0
      %v3175 = vadd.f32 %v3117, %v3174
      %v3176 = vpop.f32.mrb[0].mxu0
      %3177 = vmatprep.mubr.bf16.mxu0 0
      %3178 = vmatmul.mubr.bf16.gmra.mrb[0].mxu0 %v3135
      %v3179 = vpop.f32.mrb[0].mxu0
      %v3180 = vadd.f32 %v3117, %v3179
      %v3181 = vpop.f32.mrb[0].mxu0
      %v3182 = vpop.f32.mrb[0].mxu0
      %v3183 = vadd.f32 %v3117, %v3182
      %v3184 = vpop.f32.mrb[0].mxu0
      %3185 = vdwg.mxu0
      %v3186 = vmax.f32 %v3172, 0.0
      %v3187 = vmax.f32 %v3175, 0.0
      %v3188 = vmax.f32 %v3180, 0.0
      %v3189 = vmax.f32 %v3183, 0.0
      %v3190 = vpack.c.bf16 %v3187, %v3186
      %v3191 = vpack.c.bf16 %v3189, %v3188
      %v3193 = vlaneseq
      %v3194 = vshrl.u32 %v3193, 7
      %v3195 = vsub.s32 0, %v3194
      %v3196 = vrot.slane %v771, %v3195
      %v3206 = vunpack.c.l.b16 %v763
      %v3207 = vunpack.c.l.b16 %v764
      %v3208 = vunpack.c.l.b16 %v765
      %v3209 = vunpack.c.l.b16 %v766
      %v3210 = vunpack.c.l.b16 %v767
      %v3211 = vunpack.c.l.b16 %v768
      %v3212 = vunpack.c.l.b16 %v769
      %v3213 = vunpack.c.l.b16 %v770
      %v3214 = vpack.c.b16 %v3207, %v3206
      %v3215 = vpack.c.b16 %v3209, %v3208
      %v3216 = vpack.c.b16 %v3211, %v3210
      %v3217 = vpack.c.b16 %v3213, %v3212
      %vm3222 = vcmask 523264
      %v3224 = vsel %vm3222, %v3190, 0
      %v3227 = vsel %vm3222, %v3191, 0
      %3229 = vmatprep.subr.bf16.mxu0 0
      %3230 = vmatpush1.bf16.msra.mxu0 %v3214
      %3231 = vmatprep.subr.bf16.mxu0 0
      %3232 = vmatpush1.bf16.msra.mxu0 %v3215
      %3233 = vmatprep.subr.bf16.mxu0 0
      %3234 = vmatpush1.bf16.msra.mxu0 %v3216
      %3235 = vmatprep.subr.bf16.mxu0 0
      %3236 = vmatpush1.bf16.msra.mxu0 %v3217
      %3237 = vmatprep.subr.bf16.mxu0 0
      %3238 = vmatpush1.bf16.msra.mxu0 0
      %3239 = vmatprep.subr.bf16.mxu0 0
      %3240 = vmatpush1.bf16.msra.mxu0 0
      %3241 = vmatprep.subr.bf16.mxu0 0
      %3242 = vmatpush1.bf16.msra.mxu0 0
      %3243 = vmatprep.subr.bf16.mxu0 0
      %3244 = vmatpush1.bf16.msra.mxu0 0
      %3245 = vmatprep.subr.bf16.mxu0 0
      %3246 = vmatpush1.bf16.msra.mxu0 0
      %3247 = vmatprep.subr.bf16.mxu0 0
      %3248 = vmatpush1.bf16.msra.mxu0 0
      %3249 = vmatprep.subr.bf16.mxu0 0
      %3250 = vmatpush1.bf16.msra.mxu0 0
      %3251 = vmatprep.subr.bf16.mxu0 0
      %3252 = vmatpush1.bf16.msra.mxu0 0
      %3253 = vmatprep.subr.bf16.mxu0 0
      %3254 = vmatpush1.bf16.msra.mxu0 0
      %3255 = vmatprep.subr.bf16.mxu0 0
      %3256 = vmatpush1.bf16.msra.mxu0 0
      %3257 = vmatprep.subr.bf16.mxu0 0
      %3258 = vmatpush1.bf16.msra.mxu0 0
      %3259 = vmatprep.subr.bf16.mxu0 0
      %3260 = vmatpush1.bf16.msra.mxu0 0
      %3261 = vmatprep.mubr.bf16.mxu0 0
      %3262 = vmatmul.mubr.bf16.gmra.mrb[0].mxu0 %v3224
      %v3263 = vpop.f32.mrb[0].mxu0
      %v3264 = vadd.f32 %v3196, %v3263
      %v3265 = vpop.f32.mrb[0].mxu0
      %v3266 = vpop.f32.mrb[0].mxu0
      %v3267 = vadd.f32 %v3196, %v3266
      %v3268 = vpop.f32.mrb[0].mxu0
      %3269 = vmatprep.mubr.bf16.mxu0 0
      %3270 = vmatmul.mubr.bf16.gmra.mrb[0].mxu0 %v3227
      %v3271 = vpop.f32.mrb[0].mxu0
      %v3272 = vadd.f32 %v3196, %v3271
      %v3273 = vpop.f32.mrb[0].mxu0
      %v3274 = vpop.f32.mrb[0].mxu0
      %v3275 = vadd.f32 %v3196, %v3274
      %v3276 = vpop.f32.mrb[0].mxu0
      %3277 = vdwg.mxu0
      %v3278 = vadd.f32 %v3107, %v3264
      %v3279 = vadd.f32 %v3108, %v3267
      %v3280 = vadd.f32 %v3109, %v3272
      %v3281 = vadd.f32 %v3110, %v3275
      %v3282 = vsel %vm794, %v3278, 0.0
      %3283 = vadd.xlane.f32.xlu0 %v3282
      %v3284 = vpop.xlane.xlu0 %3283
      %v3285 = vsel %vm794, %v3279, 0.0
      %3286 = vadd.xlane.f32.xlu0 %v3285
      %v3287 = vpop.xlane.xlu0 %3286
      %v3288 = vsel %vm794, %v3280, 0.0
      %3289 = vadd.xlane.f32.xlu0 %v3288
      %v3290 = vpop.xlane.xlu0 %3289
      %v3291 = vsel %vm794, %v3281, 0.0
      %3292 = vadd.xlane.f32.xlu0 %v3291
      %v3293 = vpop.xlane.xlu0 %3292
      %v3294 = vmul.f32 %v3284, %v3050
      %v3295 = vmul.f32 %v3287, %v3050
      %v3296 = vmul.f32 %v3290, %v3050
      %v3297 = vmul.f32 %v3293, %v3050
      %v3298 = vsub.f32 %v3278, %v3294
      %v3299 = vsub.f32 %v3279, %v3295
      %v3300 = vsub.f32 %v3280, %v3296
      %v3301 = vsub.f32 %v3281, %v3297
      %v3302 = vmul.f32 %v3298, %v3298
      %v3303 = vmul.f32 %v3299, %v3299
      %v3304 = vmul.f32 %v3300, %v3300
      %v3305 = vmul.f32 %v3301, %v3301
      %v3306 = vsel %vm794, %v3302, 0.0
      %3307 = vadd.xlane.f32.xlu0 %v3306
      %v3308 = vpop.xlane.xlu0 %3307
      %v3309 = vsel %vm794, %v3303, 0.0
      %3310 = vadd.xlane.f32.xlu0 %v3309
      %v3311 = vpop.xlane.xlu0 %3310
      %v3312 = vsel %vm794, %v3304, 0.0
      %3313 = vadd.xlane.f32.xlu0 %v3312
      %v3314 = vpop.xlane.xlu0 %3313
      %v3315 = vsel %vm794, %v3305, 0.0
      %3316 = vadd.xlane.f32.xlu0 %v3315
      %v3317 = vpop.xlane.xlu0 %3316
      %v3318 = vmul.f32 %v3308, %v3050
      %v3319 = vmul.f32 %v3311, %v3050
      %v3320 = vmul.f32 %v3314, %v3050
      %v3321 = vmul.f32 %v3317, %v3050
      %v3322 = vadd.f32 %v3318, 1e-05
      %v3323 = vadd.f32 %v3319, 1e-05
      %v3324 = vadd.f32 %v3320, 1e-05
      %v3325 = vadd.f32 %v3321, 1e-05
      %v3326 = vrsqrt.pop %v3322
      %v3327 = vrsqrt.pop %v3323
      %v3328 = vrsqrt.pop %v3324
      %v3329 = vrsqrt.pop %v3325
      %v3330 = vmul.f32 %v3298, %v3326
      %v3331 = vmul.f32 %v3299, %v3327
      %v3332 = vmul.f32 %v3300, %v3328
      %v3333 = vmul.f32 %v3301, %v3329
      %v3335 = vlaneseq
      %v3336 = vshrl.u32 %v3335, 7
      %v3337 = vsub.s32 0, %v3336
      %v3338 = vrot.slane %v772, %v3337
      %v3340 = vmul.f32 %v3330, %v3338
      %v3341 = vmul.f32 %v3331, %v3338
      %v3342 = vmul.f32 %v3332, %v3338
      %v3343 = vmul.f32 %v3333, %v3338
      %v3345 = vlaneseq
      %v3346 = vshrl.u32 %v3345, 7
      %v3347 = vsub.s32 0, %v3346
      %v3348 = vrot.slane %v773, %v3347
      %v3350 = vadd.f32 %v3340, %v3348
      %v3351 = vadd.f32 %v3341, %v3348
      %v3352 = vadd.f32 %v3342, %v3348
      %v3353 = vadd.f32 %v3343, %v3348
      %s3354 = scalar_lea.vmem %s3, 16
      %v3355 = vld [vmem:[%s3354] sm:$0xf]
      %v3356 = vld [vmem:[%s3354 + $0x4] sm:$0xf]
      %v3357 = vld [vmem:[%s3354 + $0x8] sm:$0xf]
      %v3358 = vld [vmem:[%s3354 + $0xc] sm:$0xf]
      %s3359 = scalar_lea.vmem %s4, 1
      %v3360 = vld [vmem:[%s3359] sm:$0x1]
      %s3361 = scalar_lea.vmem %s5, 16
      %v3362 = vld [vmem:[%s3361] sm:$0xf]
      %v3363 = vld [vmem:[%s3361 + $0x4] sm:$0xf]
      %v3364 = vld [vmem:[%s3361 + $0x8] sm:$0xf]
      %v3365 = vld [vmem:[%s3361 + $0xc] sm:$0xf]
      %s3366 = scalar_lea.vmem %s6, 1
      %v3367 = vld [vmem:[%s3366] sm:$0x1]
      %s3368 = scalar_lea.vmem %s7, 16
      %v3369 = vld [vmem:[%s3368] sm:$0xf]
      %v3370 = vld [vmem:[%s3368 + $0x4] sm:$0xf]
      %v3371 = vld [vmem:[%s3368 + $0x8] sm:$0xf]
      %v3372 = vld [vmem:[%s3368 + $0xc] sm:$0xf]
      %s3373 = scalar_lea.vmem %s8, 1
      %v3374 = vld [vmem:[%s3373] sm:$0x1]
      %s3375 = scalar_lea.vmem %s9, 16
      %v3376 = vld [vmem:[%s3375] sm:$0xf]
      %v3377 = vld [vmem:[%s3375 + $0x4] sm:$0xf]
      %v3378 = vld [vmem:[%s3375 + $0x8] sm:$0xf]
      %v3379 = vld [vmem:[%s3375 + $0xc] sm:$0xf]
      %s3380 = scalar_lea.vmem %s10, 1
      %v3381 = vld [vmem:[%s3380] sm:$0x1]
      %s3382 = scalar_lea.vmem %s11, 1
      %v3383 = vld [vmem:[%s3382] sm:$0x1]
      %s3384 = scalar_lea.vmem %s12, 1
      %v3385 = vld [vmem:[%s3384] sm:$0x1]
      %s3386 = scalar_lea.vmem %s13, 16
      %v3387 = vld [vmem:[%s3386] sm:$0xf]
      %v3388 = vld [vmem:[%s3386 + $0x4] sm:$0xf]
      %v3389 = vld [vmem:[%s3386 + $0x8] sm:$0xf]
      %v3390 = vld [vmem:[%s3386 + $0xc] sm:$0xf]
      %s3391 = scalar_lea.vmem %s14, 1
      %v3392 = vld [vmem:[%s3391] sm:$0x1]
      %s3393 = scalar_lea.vmem %s15, 32
      %v3394 = vld [vmem:[%s3393] sm:$0xf]
      %v3395 = vld [vmem:[%s3393 + $0x4] sm:$0xf]
      %v3396 = vld [vmem:[%s3393 + $0x8] sm:$0xf]
      %v3397 = vld [vmem:[%s3393 + $0xc] sm:$0xf]
      %v3398 = vld [vmem:[%s3393 + $0x10] sm:$0xf]
      %v3399 = vld [vmem:[%s3393 + $0x14] sm:$0xf]
      %v3400 = vld [vmem:[%s3393 + $0x18] sm:$0xf]
      %v3401 = vld [vmem:[%s3393 + $0x1c] sm:$0xf]
      %s3402 = scalar_lea.vmem %s16, 1
      %v3403 = vld [vmem:[%s3402] sm:$0x1]
      %s3404 = scalar_lea.vmem %s17, 1
      %v3405 = vld [vmem:[%s3404] sm:$0x1]
      %s3406 = scalar_lea.vmem %s18, 1
      %v3407 = vld [vmem:[%s3406] sm:$0x1]
      %v3408 = vpack.c.bf16 %v3351, %v3350
      %v3409 = vpack.c.bf16 %v3353, %v3352
      %v3411 = vlaneseq
      %v3412 = vshrl.u32 %v3411, 7
      %v3413 = vsub.s32 0, %v3412
      %v3414 = vrot.slane %v3360, %v3413
      %v3420 = vunpack.c.l.b16 %v3355
      %v3421 = vunpack.c.l.b16 %v3356
      %v3422 = vunpack.c.l.b16 %v3357
      %v3423 = vunpack.c.l.b16 %v3358
      %v3424 = vpack.c.b16 %v3421, %v3420
      %v3425 = vpack.c.b16 %v3423, %v3422
      %v3429 = vsel %vm794, %v3408, 0
      %v3432 = vsel %vm794, %v3409, 0
      %3434 = vmatprep.subr.bf16.mxu0 0
      %3435 = vmatpush1.bf16.msra.mxu0 %v3424
      %3436 = vmatprep.subr.bf16.mxu0 0
      %3437 = vmatpush1.bf16.msra.mxu0 %v3425
      %3438 = vmatprep.subr.bf16.mxu0 0
      %3439 = vmatpush1.bf16.msra.mxu0 0
      %3440 = vmatprep.subr.bf16.mxu0 0
      %3441 = vmatpush1.bf16.msra.mxu0 0
      %3442 = vmatprep.subr.bf16.mxu0 0
      %3443 = vmatpush1.bf16.msra.mxu0 0
      %3444 = vmatprep.subr.bf16.mxu0 0
      %3445 = vmatpush1.bf16.msra.mxu0 0
      %3446 = vmatprep.subr.bf16.mxu0 0
      %3447 = vmatpush1.bf16.msra.mxu0 0
      %3448 = vmatprep.subr.bf16.mxu0 0
      %3449 = vmatpush1.bf16.msra.mxu0 0
      %3450 = vmatprep.subr.bf16.mxu0 0
      %3451 = vmatpush1.bf16.msra.mxu0 0
      %3452 = vmatprep.subr.bf16.mxu0 0
      %3453 = vmatpush1.bf16.msra.mxu0 0
      %3454 = vmatprep.subr.bf16.mxu0 0
      %3455 = vmatpush1.bf16.msra.mxu0 0
      %3456 = vmatprep.subr.bf16.mxu0 0
      %3457 = vmatpush1.bf16.msra.mxu0 0
      %3458 = vmatprep.subr.bf16.mxu0 0
      %3459 = vmatpush1.bf16.msra.mxu0 0
      %3460 = vmatprep.subr.bf16.mxu0 0
      %3461 = vmatpush1.bf16.msra.mxu0 0
      %3462 = vmatprep.subr.bf16.mxu0 0
      %3463 = vmatpush1.bf16.msra.mxu0 0
      %3464 = vmatprep.subr.bf16.mxu0 0
      %3465 = vmatpush1.bf16.msra.mxu0 0
      %3466 = vmatprep.mubr.bf16.mxu0 0
      %3467 = vmatmul.mubr.bf16.gmra.mrb[0].mxu0 %v3429
      %v3468 = vpop.f32.mrb[0].mxu0
      %v3469 = vadd.f32 %v3414, %v3468
      %v3470 = vpop.f32.mrb[0].mxu0
      %v3471 = vpop.f32.mrb[0].mxu0
      %v3472 = vadd.f32 %v3414, %v3471
      %v3473 = vpop.f32.mrb[0].mxu0
      %3474 = vmatprep.mubr.bf16.mxu0 0
      %3475 = vmatmul.mubr.bf16.gmra.mrb[0].mxu0 %v3432
      %v3476 = vpop.f32.mrb[0].mxu0
      %v3477 = vadd.f32 %v3414, %v3476
      %v3478 = vpop.f32.mrb[0].mxu0
      %v3479 = vpop.f32.mrb[0].mxu0
      %v3480 = vadd.f32 %v3414, %v3479
      %v3481 = vpop.f32.mrb[0].mxu0
      %3482 = vdwg.mxu0
      %v3484 = vlaneseq
      %v3485 = vshrl.u32 %v3484, 7
      %v3486 = vsub.s32 0, %v3485
      %v3487 = vrot.slane %v3367, %v3486
      %v3493 = vunpack.c.l.b16 %v3362
      %v3494 = vunpack.c.l.b16 %v3363
      %v3495 = vunpack.c.l.b16 %v3364
      %v3496 = vunpack.c.l.b16 %v3365
      %v3497 = vpack.c.b16 %v3494, %v3493
      %v3498 = vpack.c.b16 %v3496, %v3495
      %3501 = vmatprep.subr.bf16.mxu0 0
      %3502 = vmatpush1.bf16.msra.mxu0 %v3497
      %3503 = vmatprep.subr.bf16.mxu0 0
      %3504 = vmatpush1.bf16.msra.mxu0 %v3498
      %3505 = vmatprep.subr.bf16.mxu0 0
      %3506 = vmatpush1.bf16.msra.mxu0 0
      %3507 = vmatprep.subr.bf16.mxu0 0
      %3508 = vmatpush1.bf16.msra.mxu0 0
      %3509 = vmatprep.subr.bf16.mxu0 0
      %3510 = vmatpush1.bf16.msra.mxu0 0
      %3511 = vmatprep.subr.bf16.mxu0 0
      %3512 = vmatpush1.bf16.msra.mxu0 0
      %3513 = vmatprep.subr.bf16.mxu0 0
      %3514 = vmatpush1.bf16.msra.mxu0 0
      %3515 = vmatprep.subr.bf16.mxu0 0
      %3516 = vmatpush1.bf16.msra.mxu0 0
      %3517 = vmatprep.subr.bf16.mxu0 0
      %3518 = vmatpush1.bf16.msra.mxu0 0
      %3519 = vmatprep.subr.bf16.mxu0 0
      %3520 = vmatpush1.bf16.msra.mxu0 0
      %3521 = vmatprep.subr.bf16.mxu0 0
      %3522 = vmatpush1.bf16.msra.mxu0 0
      %3523 = vmatprep.subr.bf16.mxu0 0
      %3524 = vmatpush1.bf16.msra.mxu0 0
      %3525 = vmatprep.subr.bf16.mxu0 0
      %3526 = vmatpush1.bf16.msra.mxu0 0
      %3527 = vmatprep.subr.bf16.mxu0 0
      %3528 = vmatpush1.bf16.msra.mxu0 0
      %3529 = vmatprep.subr.bf16.mxu0 0
      %3530 = vmatpush1.bf16.msra.mxu0 0
      %3531 = vmatprep.subr.bf16.mxu0 0
      %3532 = vmatpush1.bf16.msra.mxu0 0
      %3533 = vmatprep.mubr.bf16.mxu0 0
      %3534 = vmatmul.mubr.bf16.gmra.mrb[0].mxu0 %v3429
      %v3535 = vpop.f32.mrb[0].mxu0
      %v3536 = vadd.f32 %v3487, %v3535
      %v3537 = vpop.f32.mrb[0].mxu0
      %v3538 = vpop.f32.mrb[0].mxu0
      %v3539 = vadd.f32 %v3487, %v3538
      %v3540 = vpop.f32.mrb[0].mxu0
      %3541 = vmatprep.mubr.bf16.mxu0 0
      %3542 = vmatmul.mubr.bf16.gmra.mrb[0].mxu0 %v3432
      %v3543 = vpop.f32.mrb[0].mxu0
      %v3544 = vadd.f32 %v3487, %v3543
      %v3545 = vpop.f32.mrb[0].mxu0
      %v3546 = vpop.f32.mrb[0].mxu0
      %v3547 = vadd.f32 %v3487, %v3546
      %v3548 = vpop.f32.mrb[0].mxu0
      %3549 = vdwg.mxu0
      %v3551 = vlaneseq
      %v3552 = vshrl.u32 %v3551, 7
      %v3553 = vsub.s32 0, %v3552
      %v3554 = vrot.slane %v3374, %v3553
      %v3560 = vunpack.c.l.b16 %v3369
      %v3561 = vunpack.c.l.b16 %v3370
      %v3562 = vunpack.c.l.b16 %v3371
      %v3563 = vunpack.c.l.b16 %v3372
      %v3564 = vpack.c.b16 %v3561, %v3560
      %v3565 = vpack.c.b16 %v3563, %v3562
      %3568 = vmatprep.subr.bf16.mxu0 0
      %3569 = vmatpush1.bf16.msra.mxu0 %v3564
      %3570 = vmatprep.subr.bf16.mxu0 0
      %3571 = vmatpush1.bf16.msra.mxu0 %v3565
      %3572 = vmatprep.subr.bf16.mxu0 0
      %3573 = vmatpush1.bf16.msra.mxu0 0
      %3574 = vmatprep.subr.bf16.mxu0 0
      %3575 = vmatpush1.bf16.msra.mxu0 0
      %3576 = vmatprep.subr.bf16.mxu0 0
      %3577 = vmatpush1.bf16.msra.mxu0 0
      %3578 = vmatprep.subr.bf16.mxu0 0
      %3579 = vmatpush1.bf16.msra.mxu0 0
      %3580 = vmatprep.subr.bf16.mxu0 0
      %3581 = vmatpush1.bf16.msra.mxu0 0
      %3582 = vmatprep.subr.bf16.mxu0 0
      %3583 = vmatpush1.bf16.msra.mxu0 0
      %3584 = vmatprep.subr.bf16.mxu0 0
      %3585 = vmatpush1.bf16.msra.mxu0 0
      %3586 = vmatprep.subr.bf16.mxu0 0
      %3587 = vmatpush1.bf16.msra.mxu0 0
      %3588 = vmatprep.subr.bf16.mxu0 0
      %3589 = vmatpush1.bf16.msra.mxu0 0
      %3590 = vmatprep.subr.bf16.mxu0 0
      %3591 = vmatpush1.bf16.msra.mxu0 0
      %3592 = vmatprep.subr.bf16.mxu0 0
      %3593 = vmatpush1.bf16.msra.mxu0 0
      %3594 = vmatprep.subr.bf16.mxu0 0
      %3595 = vmatpush1.bf16.msra.mxu0 0
      %3596 = vmatprep.subr.bf16.mxu0 0
      %3597 = vmatpush1.bf16.msra.mxu0 0
      %3598 = vmatprep.subr.bf16.mxu0 0
      %3599 = vmatpush1.bf16.msra.mxu0 0
      %3600 = vmatprep.mubr.bf16.mxu0 0
      %3601 = vmatmul.mubr.bf16.gmra.mrb[0].mxu0 %v3429
      %v3602 = vpop.f32.mrb[0].mxu0
      %v3603 = vadd.f32 %v3554, %v3602
      %v3604 = vpop.f32.mrb[0].mxu0
      %v3605 = vpop.f32.mrb[0].mxu0
      %v3606 = vadd.f32 %v3554, %v3605
      %v3607 = vpop.f32.mrb[0].mxu0
      %3608 = vmatprep.mubr.bf16.mxu0 0
      %3609 = vmatmul.mubr.bf16.gmra.mrb[0].mxu0 %v3432
      %v3610 = vpop.f32.mrb[0].mxu0
      %v3611 = vadd.f32 %v3554, %v3610
      %v3612 = vpop.f32.mrb[0].mxu0
      %v3613 = vpop.f32.mrb[0].mxu0
      %v3614 = vadd.f32 %v3554, %v3613
      %v3615 = vpop.f32.mrb[0].mxu0
      %3616 = vdwg.mxu0
      %v3617 = vpack.c.bf16 %v3469, %v3469
      %v3618 = vpack.c.bf16 %v3472, %v3472
      %v3619 = vpack.c.bf16 %v3477, %v3477
      %v3620 = vpack.c.bf16 %v3480, %v3480
      %v3621 = vpack.c.bf16 %v3536, %v3536
      %v3622 = vpack.c.bf16 %v3539, %v3539
      %v3623 = vpack.c.bf16 %v3544, %v3544
      %v3624 = vpack.c.bf16 %v3547, %v3547
      %v3625 = vpack.c.bf16 %v3603, %v3603
      %v3626 = vpack.c.bf16 %v3606, %v3606
      %v3627 = vpack.c.bf16 %v3611, %v3611
      %v3628 = vpack.c.bf16 %v3614, %v3614
      %v3630 = vsel %vm672, %v3617, 0
      %v3633 = vsel %vm672, %v3621, 0
      %3635 = vmatprep.subr.bf16.mxu0 0
      %3636 = vmatpush1.bf16.xpose.msra.mxu0 %v3633
      %3637 = vmatprep.subr.bf16.mxu0 0
      %3638 = vmatpush1.bf16.xpose.msra.mxu0 0
      %3639 = vmatprep.subr.bf16.mxu0 0
      %3640 = vmatpush1.bf16.xpose.msra.mxu0 0
      %3641 = vmatprep.subr.bf16.mxu0 0
      %3642 = vmatpush1.bf16.xpose.msra.mxu0 0
      %3643 = vmatprep.subr.bf16.mxu0 0
      %3644 = vmatpush1.bf16.xpose.msra.mxu0 0
      %3645 = vmatprep.subr.bf16.mxu0 0
      %3646 = vmatpush1.bf16.xpose.msra.mxu0 0
      %3647 = vmatprep.subr.bf16.mxu0 0
      %3648 = vmatpush1.bf16.xpose.msra.mxu0 0
      %3649 = vmatprep.subr.bf16.mxu0 0
      %3650 = vmatpush1.bf16.xpose.msra.mxu0 0
      %3651 = vmatprep.subr.bf16.mxu0 0
      %3652 = vmatpush1.bf16.xpose.msra.mxu0 0
      %3653 = vmatprep.subr.bf16.mxu0 0
      %3654 = vmatpush1.bf16.xpose.msra.mxu0 0
      %3655 = vmatprep.subr.bf16.mxu0 0
      %3656 = vmatpush1.bf16.xpose.msra.mxu0 0
      %3657 = vmatprep.subr.bf16.mxu0 0
      %3658 = vmatpush1.bf16.xpose.msra.mxu0 0
      %3659 = vmatprep.subr.bf16.mxu0 0
      %3660 = vmatpush1.bf16.xpose.msra.mxu0 0
      %3661 = vmatprep.subr.bf16.mxu0 0
      %3662 = vmatpush1.bf16.xpose.msra.mxu0 0
      %3663 = vmatprep.subr.bf16.mxu0 0
      %3664 = vmatpush1.bf16.xpose.msra.mxu0 0
      %3665 = vmatprep.subr.bf16.mxu0 0
      %3666 = vmatpush1.bf16.xpose.msra.mxu0 0
      %3667 = vmatprep.mubr.bf16.mxu0 0
      %3668 = vmatmul.mubr.bf16.gmra.mrb[0].mxu0 %v3630
      %v3669 = vpop.f32.mrb[0].mxu0
      %v3670 = vadd.f32 0.0, %v3669
      %v3671 = vpop.f32.mrb[0].mxu0
      %v3672 = vpop.f32.mrb[0].mxu0
      %v3673 = vpop.f32.mrb[0].mxu0
      %3674 = vdwg.mxu0
      %v3676 = vsel %vm672, %v3618, 0
      %v3679 = vsel %vm672, %v3622, 0
      %3681 = vmatprep.subr.bf16.mxu0 0
      %3682 = vmatpush1.bf16.xpose.msra.mxu0 %v3679
      %3683 = vmatprep.subr.bf16.mxu0 0
      %3684 = vmatpush1.bf16.xpose.msra.mxu0 0
      %3685 = vmatprep.subr.bf16.mxu0 0
      %3686 = vmatpush1.bf16.xpose.msra.mxu0 0
      %3687 = vmatprep.subr.bf16.mxu0 0
      %3688 = vmatpush1.bf16.xpose.msra.mxu0 0
      %3689 = vmatprep.subr.bf16.mxu0 0
      %3690 = vmatpush1.bf16.xpose.msra.mxu0 0
      %3691 = vmatprep.subr.bf16.mxu0 0
      %3692 = vmatpush1.bf16.xpose.msra.mxu0 0
      %3693 = vmatprep.subr.bf16.mxu0 0
      %3694 = vmatpush1.bf16.xpose.msra.mxu0 0
      %3695 = vmatprep.subr.bf16.mxu0 0
      %3696 = vmatpush1.bf16.xpose.msra.mxu0 0
      %3697 = vmatprep.subr.bf16.mxu0 0
      %3698 = vmatpush1.bf16.xpose.msra.mxu0 0
      %3699 = vmatprep.subr.bf16.mxu0 0
      %3700 = vmatpush1.bf16.xpose.msra.mxu0 0
      %3701 = vmatprep.subr.bf16.mxu0 0
      %3702 = vmatpush1.bf16.xpose.msra.mxu0 0
      %3703 = vmatprep.subr.bf16.mxu0 0
      %3704 = vmatpush1.bf16.xpose.msra.mxu0 0
      %3705 = vmatprep.subr.bf16.mxu0 0
      %3706 = vmatpush1.bf16.xpose.msra.mxu0 0
      %3707 = vmatprep.subr.bf16.mxu0 0
      %3708 = vmatpush1.bf16.xpose.msra.mxu0 0
      %3709 = vmatprep.subr.bf16.mxu0 0
      %3710 = vmatpush1.bf16.xpose.msra.mxu0 0
      %3711 = vmatprep.subr.bf16.mxu0 0
      %3712 = vmatpush1.bf16.xpose.msra.mxu0 0
      %3713 = vmatprep.mubr.bf16.mxu0 0
      %3714 = vmatmul.mubr.bf16.gmra.mrb[0].mxu0 %v3676
      %v3715 = vpop.f32.mrb[0].mxu0
      %v3716 = vadd.f32 0.0, %v3715
      %v3717 = vpop.f32.mrb[0].mxu0
      %v3718 = vpop.f32.mrb[0].mxu0
      %v3719 = vpop.f32.mrb[0].mxu0
      %3720 = vdwg.mxu0
      %v3722 = vsel %vm672, %v3619, 0
      %v3725 = vsel %vm672, %v3623, 0
      %3727 = vmatprep.subr.bf16.mxu0 0
      %3728 = vmatpush1.bf16.xpose.msra.mxu0 %v3725
      %3729 = vmatprep.subr.bf16.mxu0 0
      %3730 = vmatpush1.bf16.xpose.msra.mxu0 0
      %3731 = vmatprep.subr.bf16.mxu0 0
      %3732 = vmatpush1.bf16.xpose.msra.mxu0 0
      %3733 = vmatprep.subr.bf16.mxu0 0
      %3734 = vmatpush1.bf16.xpose.msra.mxu0 0
      %3735 = vmatprep.subr.bf16.mxu0 0
      %3736 = vmatpush1.bf16.xpose.msra.mxu0 0
      %3737 = vmatprep.subr.bf16.mxu0 0
      %3738 = vmatpush1.bf16.xpose.msra.mxu0 0
      %3739 = vmatprep.subr.bf16.mxu0 0
      %3740 = vmatpush1.bf16.xpose.msra.mxu0 0
      %3741 = vmatprep.subr.bf16.mxu0 0
      %3742 = vmatpush1.bf16.xpose.msra.mxu0 0
      %3743 = vmatprep.subr.bf16.mxu0 0
      %3744 = vmatpush1.bf16.xpose.msra.mxu0 0
      %3745 = vmatprep.subr.bf16.mxu0 0
      %3746 = vmatpush1.bf16.xpose.msra.mxu0 0
      %3747 = vmatprep.subr.bf16.mxu0 0
      %3748 = vmatpush1.bf16.xpose.msra.mxu0 0
      %3749 = vmatprep.subr.bf16.mxu0 0
      %3750 = vmatpush1.bf16.xpose.msra.mxu0 0
      %3751 = vmatprep.subr.bf16.mxu0 0
      %3752 = vmatpush1.bf16.xpose.msra.mxu0 0
      %3753 = vmatprep.subr.bf16.mxu0 0
      %3754 = vmatpush1.bf16.xpose.msra.mxu0 0
      %3755 = vmatprep.subr.bf16.mxu0 0
      %3756 = vmatpush1.bf16.xpose.msra.mxu0 0
      %3757 = vmatprep.subr.bf16.mxu0 0
      %3758 = vmatpush1.bf16.xpose.msra.mxu0 0
      %3759 = vmatprep.mubr.bf16.mxu0 0
      %3760 = vmatmul.mubr.bf16.gmra.mrb[0].mxu0 %v3722
      %v3761 = vpop.f32.mrb[0].mxu0
      %v3762 = vadd.f32 0.0, %v3761
      %v3763 = vpop.f32.mrb[0].mxu0
      %v3764 = vpop.f32.mrb[0].mxu0
      %v3765 = vpop.f32.mrb[0].mxu0
      %3766 = vdwg.mxu0
      %v3768 = vsel %vm672, %v3620, 0
      %v3771 = vsel %vm672, %v3624, 0
      %3773 = vmatprep.subr.bf16.mxu0 0
      %3774 = vmatpush1.bf16.xpose.msra.mxu0 %v3771
      %3775 = vmatprep.subr.bf16.mxu0 0
      %3776 = vmatpush1.bf16.xpose.msra.mxu0 0
      %3777 = vmatprep.subr.bf16.mxu0 0
      %3778 = vmatpush1.bf16.xpose.msra.mxu0 0
      %3779 = vmatprep.subr.bf16.mxu0 0
      %3780 = vmatpush1.bf16.xpose.msra.mxu0 0
      %3781 = vmatprep.subr.bf16.mxu0 0
      %3782 = vmatpush1.bf16.xpose.msra.mxu0 0
      %3783 = vmatprep.subr.bf16.mxu0 0
      %3784 = vmatpush1.bf16.xpose.msra.mxu0 0
      %3785 = vmatprep.subr.bf16.mxu0 0
      %3786 = vmatpush1.bf16.xpose.msra.mxu0 0
      %3787 = vmatprep.subr.bf16.mxu0 0
      %3788 = vmatpush1.bf16.xpose.msra.mxu0 0
      %3789 = vmatprep.subr.bf16.mxu0 0
      %3790 = vmatpush1.bf16.xpose.msra.mxu0 0
      %3791 = vmatprep.subr.bf16.mxu0 0
      %3792 = vmatpush1.bf16.xpose.msra.mxu0 0
      %3793 = vmatprep.subr.bf16.mxu0 0
      %3794 = vmatpush1.bf16.xpose.msra.mxu0 0
      %3795 = vmatprep.subr.bf16.mxu0 0
      %3796 = vmatpush1.bf16.xpose.msra.mxu0 0
      %3797 = vmatprep.subr.bf16.mxu0 0
      %3798 = vmatpush1.bf16.xpose.msra.mxu0 0
      %3799 = vmatprep.subr.bf16.mxu0 0
      %3800 = vmatpush1.bf16.xpose.msra.mxu0 0
      %3801 = vmatprep.subr.bf16.mxu0 0
      %3802 = vmatpush1.bf16.xpose.msra.mxu0 0
      %3803 = vmatprep.subr.bf16.mxu0 0
      %3804 = vmatpush1.bf16.xpose.msra.mxu0 0
      %3805 = vmatprep.mubr.bf16.mxu0 0
      %3806 = vmatmul.mubr.bf16.gmra.mrb[0].mxu0 %v3768
      %v3807 = vpop.f32.mrb[0].mxu0
      %v3808 = vadd.f32 0.0, %v3807
      %v3809 = vpop.f32.mrb[0].mxu0
      %v3810 = vpop.f32.mrb[0].mxu0
      %v3811 = vpop.f32.mrb[0].mxu0
      %3812 = vdwg.mxu0
      %v3813 = vmul.f32 %v3670, 0.35355338
      %v3814 = vmul.f32 %v3716, 0.35355338
      %v3815 = vmul.f32 %v3762, 0.35355338
      %v3816 = vmul.f32 %v3808, 0.35355338
      %v3817 = vadd.f32 %v3813, %v735
      %v3818 = vadd.f32 %v3814, %v735
      %v3819 = vadd.f32 %v3815, %v735
      %v3820 = vadd.f32 %v3816, %v735
      %v3821 = vsel %vm672, %v3817, -inf
      %3822 = vmax.xlane.f32.xlu0 %v3821
      %v3823 = vpop.xlane.xlu0 %3822
      %v3824 = vsel %vm672, %v3818, -inf
      %3825 = vmax.xlane.f32.xlu0 %v3824
      %v3826 = vpop.xlane.xlu0 %3825
      %v3827 = vsel %vm672, %v3819, -inf
      %3828 = vmax.xlane.f32.xlu0 %v3827
      %v3829 = vpop.xlane.xlu0 %3828
      %v3830 = vsel %vm672, %v3820, -inf
      %3831 = vmax.xlane.f32.xlu0 %v3830
      %v3832 = vpop.xlane.xlu0 %3831
      %v3833 = vsub.f32 %v3817, %v3823
      %v3834 = vsub.f32 %v3818, %v3826
      %v3835 = vsub.f32 %v3819, %v3829
      %v3836 = vsub.f32 %v3820, %v3832
      %v3837 = vmul.f32 %v3833, 1.442695
      %v3838 = vpow.pop %v3837
      %v3839 = vmul.f32 %v3834, 1.442695
      %v3840 = vpow.pop %v3839
      %v3841 = vmul.f32 %v3835, 1.442695
      %v3842 = vpow.pop %v3841
      %v3843 = vmul.f32 %v3836, 1.442695
      %v3844 = vpow.pop %v3843
      %v3845 = vsel %vm672, %v3838, 0.0
      %3846 = vadd.xlane.f32.xlu0 %v3845
      %v3847 = vpop.xlane.xlu0 %3846
      %v3848 = vsel %vm672, %v3840, 0.0
      %3849 = vadd.xlane.f32.xlu0 %v3848
      %v3850 = vpop.xlane.xlu0 %3849
      %v3851 = vsel %vm672, %v3842, 0.0
      %3852 = vadd.xlane.f32.xlu0 %v3851
      %v3853 = vpop.xlane.xlu0 %3852
      %v3854 = vsel %vm672, %v3844, 0.0
      %3855 = vadd.xlane.f32.xlu0 %v3854
      %v3856 = vpop.xlane.xlu0 %3855
      %v3857 = vrcp.pop %v3847
      %v3858 = vrcp.pop %v3850
      %v3859 = vrcp.pop %v3853
      %v3860 = vrcp.pop %v3856
      %v3861 = vmul.f32 %v3838, %v3857
      %v3862 = vmul.f32 %v3840, %v3858
      %v3863 = vmul.f32 %v3842, %v3859
      %v3864 = vmul.f32 %v3844, %v3860
      %v3865 = vpack.c.bf16 %v3861, %v3861
      %v3866 = vpack.c.bf16 %v3862, %v3862
      %v3867 = vpack.c.bf16 %v3863, %v3863
      %v3868 = vpack.c.bf16 %v3864, %v3864
      %v3870 = vsel %vm672, %v3865, 0
      %v3873 = vsel %vm679, %v3625, 0
      %3875 = vmatprep.subr.bf16.mxu0 0
      %3876 = vmatpush1.bf16.msra.mxu0 %v3873
      %3877 = vmatprep.subr.bf16.mxu0 0
      %3878 = vmatpush1.bf16.msra.mxu0 0
      %3879 = vmatprep.subr.bf16.mxu0 0
      %3880 = vmatpush1.bf16.msra.mxu0 0
      %3881 = vmatprep.subr.bf16.mxu0 0
      %3882 = vmatpush1.bf16.msra.mxu0 0
      %3883 = vmatprep.subr.bf16.mxu0 0
      %3884 = vmatpush1.bf16.msra.mxu0 0
      %3885 = vmatprep.subr.bf16.mxu0 0
      %3886 = vmatpush1.bf16.msra.mxu0 0
      %3887 = vmatprep.subr.bf16.mxu0 0
      %3888 = vmatpush1.bf16.msra.mxu0 0
      %3889 = vmatprep.subr.bf16.mxu0 0
      %3890 = vmatpush1.bf16.msra.mxu0 0
      %3891 = vmatprep.subr.bf16.mxu0 0
      %3892 = vmatpush1.bf16.msra.mxu0 0
      %3893 = vmatprep.subr.bf16.mxu0 0
      %3894 = vmatpush1.bf16.msra.mxu0 0
      %3895 = vmatprep.subr.bf16.mxu0 0
      %3896 = vmatpush1.bf16.msra.mxu0 0
      %3897 = vmatprep.subr.bf16.mxu0 0
      %3898 = vmatpush1.bf16.msra.mxu0 0
      %3899 = vmatprep.subr.bf16.mxu0 0
      %3900 = vmatpush1.bf16.msra.mxu0 0
      %3901 = vmatprep.subr.bf16.mxu0 0
      %3902 = vmatpush1.bf16.msra.mxu0 0
      %3903 = vmatprep.subr.bf16.mxu0 0
      %3904 = vmatpush1.bf16.msra.mxu0 0
      %3905 = vmatprep.subr.bf16.mxu0 0
      %3906 = vmatpush1.bf16.msra.mxu0 0
      %3907 = vmatprep.mubr.bf16.mxu0 0
      %3908 = vmatmul.mubr.bf16.gmra.mrb[0].mxu0 %v3870
      %v3909 = vpop.f32.mrb[0].mxu0
      %v3910 = vadd.f32 0.0, %v3909
      %v3911 = vpop.f32.mrb[0].mxu0
      %v3912 = vpop.f32.mrb[0].mxu0
      %v3913 = vpop.f32.mrb[0].mxu0
      %3914 = vdwg.mxu0
      %v3916 = vsel %vm672, %v3866, 0
      %v3919 = vsel %vm679, %v3626, 0
      %3921 = vmatprep.subr.bf16.mxu0 0
      %3922 = vmatpush1.bf16.msra.mxu0 %v3919
      %3923 = vmatprep.subr.bf16.mxu0 0
      %3924 = vmatpush1.bf16.msra.mxu0 0
      %3925 = vmatprep.subr.bf16.mxu0 0
      %3926 = vmatpush1.bf16.msra.mxu0 0
      %3927 = vmatprep.subr.bf16.mxu0 0
      %3928 = vmatpush1.bf16.msra.mxu0 0
      %3929 = vmatprep.subr.bf16.mxu0 0
      %3930 = vmatpush1.bf16.msra.mxu0 0
      %3931 = vmatprep.subr.bf16.mxu0 0
      %3932 = vmatpush1.bf16.msra.mxu0 0
      %3933 = vmatprep.subr.bf16.mxu0 0
      %3934 = vmatpush1.bf16.msra.mxu0 0
      %3935 = vmatprep.subr.bf16.mxu0 0
      %3936 = vmatpush1.bf16.msra.mxu0 0
      %3937 = vmatprep.subr.bf16.mxu0 0
      %3938 = vmatpush1.bf16.msra.mxu0 0
      %3939 = vmatprep.subr.bf16.mxu0 0
      %3940 = vmatpush1.bf16.msra.mxu0 0
      %3941 = vmatprep.subr.bf16.mxu0 0
      %3942 = vmatpush1.bf16.msra.mxu0 0
      %3943 = vmatprep.subr.bf16.mxu0 0
      %3944 = vmatpush1.bf16.msra.mxu0 0
      %3945 = vmatprep.subr.bf16.mxu0 0
      %3946 = vmatpush1.bf16.msra.mxu0 0
      %3947 = vmatprep.subr.bf16.mxu0 0
      %3948 = vmatpush1.bf16.msra.mxu0 0
      %3949 = vmatprep.subr.bf16.mxu0 0
      %3950 = vmatpush1.bf16.msra.mxu0 0
      %3951 = vmatprep.subr.bf16.mxu0 0
      %3952 = vmatpush1.bf16.msra.mxu0 0
      %3953 = vmatprep.mubr.bf16.mxu0 0
      %3954 = vmatmul.mubr.bf16.gmra.mrb[0].mxu0 %v3916
      %v3955 = vpop.f32.mrb[0].mxu0
      %v3956 = vadd.f32 0.0, %v3955
      %v3957 = vpop.f32.mrb[0].mxu0
      %v3958 = vpop.f32.mrb[0].mxu0
      %v3959 = vpop.f32.mrb[0].mxu0
      %3960 = vdwg.mxu0
      %v3962 = vsel %vm672, %v3867, 0
      %v3965 = vsel %vm679, %v3627, 0
      %3967 = vmatprep.subr.bf16.mxu0 0
      %3968 = vmatpush1.bf16.msra.mxu0 %v3965
      %3969 = vmatprep.subr.bf16.mxu0 0
      %3970 = vmatpush1.bf16.msra.mxu0 0
      %3971 = vmatprep.subr.bf16.mxu0 0
      %3972 = vmatpush1.bf16.msra.mxu0 0
      %3973 = vmatprep.subr.bf16.mxu0 0
      %3974 = vmatpush1.bf16.msra.mxu0 0
      %3975 = vmatprep.subr.bf16.mxu0 0
      %3976 = vmatpush1.bf16.msra.mxu0 0
      %3977 = vmatprep.subr.bf16.mxu0 0
      %3978 = vmatpush1.bf16.msra.mxu0 0
      %3979 = vmatprep.subr.bf16.mxu0 0
      %3980 = vmatpush1.bf16.msra.mxu0 0
      %3981 = vmatprep.subr.bf16.mxu0 0
      %3982 = vmatpush1.bf16.msra.mxu0 0
      %3983 = vmatprep.subr.bf16.mxu0 0
      %3984 = vmatpush1.bf16.msra.mxu0 0
      %3985 = vmatprep.subr.bf16.mxu0 0
      %3986 = vmatpush1.bf16.msra.mxu0 0
      %3987 = vmatprep.subr.bf16.mxu0 0
      %3988 = vmatpush1.bf16.msra.mxu0 0
      %3989 = vmatprep.subr.bf16.mxu0 0
      %3990 = vmatpush1.bf16.msra.mxu0 0
      %3991 = vmatprep.subr.bf16.mxu0 0
      %3992 = vmatpush1.bf16.msra.mxu0 0
      %3993 = vmatprep.subr.bf16.mxu0 0
      %3994 = vmatpush1.bf16.msra.mxu0 0
      %3995 = vmatprep.subr.bf16.mxu0 0
      %3996 = vmatpush1.bf16.msra.mxu0 0
      %3997 = vmatprep.subr.bf16.mxu0 0
      %3998 = vmatpush1.bf16.msra.mxu0 0
      %3999 = vmatprep.mubr.bf16.mxu0 0
      %4000 = vmatmul.mubr.bf16.gmra.mrb[0].mxu0 %v3962
      %v4001 = vpop.f32.mrb[0].mxu0
      %v4002 = vadd.f32 0.0, %v4001
      %v4003 = vpop.f32.mrb[0].mxu0
      %v4004 = vpop.f32.mrb[0].mxu0
      %v4005 = vpop.f32.mrb[0].mxu0
      %4006 = vdwg.mxu0
      %v4008 = vsel %vm672, %v3868, 0
      %v4011 = vsel %vm679, %v3628, 0
      %4013 = vmatprep.subr.bf16.mxu0 0
      %4014 = vmatpush1.bf16.msra.mxu0 %v4011
      %4015 = vmatprep.subr.bf16.mxu0 0
      %4016 = vmatpush1.bf16.msra.mxu0 0
      %4017 = vmatprep.subr.bf16.mxu0 0
      %4018 = vmatpush1.bf16.msra.mxu0 0
      %4019 = vmatprep.subr.bf16.mxu0 0
      %4020 = vmatpush1.bf16.msra.mxu0 0
      %4021 = vmatprep.subr.bf16.mxu0 0
      %4022 = vmatpush1.bf16.msra.mxu0 0
      %4023 = vmatprep.subr.bf16.mxu0 0
      %4024 = vmatpush1.bf16.msra.mxu0 0
      %4025 = vmatprep.subr.bf16.mxu0 0
      %4026 = vmatpush1.bf16.msra.mxu0 0
      %4027 = vmatprep.subr.bf16.mxu0 0
      %4028 = vmatpush1.bf16.msra.mxu0 0
      %4029 = vmatprep.subr.bf16.mxu0 0
      %4030 = vmatpush1.bf16.msra.mxu0 0
      %4031 = vmatprep.subr.bf16.mxu0 0
      %4032 = vmatpush1.bf16.msra.mxu0 0
      %4033 = vmatprep.subr.bf16.mxu0 0
      %4034 = vmatpush1.bf16.msra.mxu0 0
      %4035 = vmatprep.subr.bf16.mxu0 0
      %4036 = vmatpush1.bf16.msra.mxu0 0
      %4037 = vmatprep.subr.bf16.mxu0 0
      %4038 = vmatpush1.bf16.msra.mxu0 0
      %4039 = vmatprep.subr.bf16.mxu0 0
      %4040 = vmatpush1.bf16.msra.mxu0 0
      %4041 = vmatprep.subr.bf16.mxu0 0
      %4042 = vmatpush1.bf16.msra.mxu0 0
      %4043 = vmatprep.subr.bf16.mxu0 0
      %4044 = vmatpush1.bf16.msra.mxu0 0
      %4045 = vmatprep.mubr.bf16.mxu0 0
      %4046 = vmatmul.mubr.bf16.gmra.mrb[0].mxu0 %v4008
      %v4047 = vpop.f32.mrb[0].mxu0
      %v4048 = vadd.f32 0.0, %v4047
      %v4049 = vpop.f32.mrb[0].mxu0
      %v4050 = vpop.f32.mrb[0].mxu0
      %v4051 = vpop.f32.mrb[0].mxu0
      %4052 = vdwg.mxu0
      %v4053 = vpack.c.bf16 %v3956, %v3910
      %v4054 = vpack.c.bf16 %v4048, %v4002
      %4056 = vrot.lane.b32.xlu0 %v3617, 120
      %v4057 = vpop.permute.xlu0 %4056
      %4059 = vrot.lane.b32.xlu0 %v3621, 120
      %v4060 = vpop.permute.xlu0 %4059
      %v4062 = vsel %vm672, %v4057, 0
      %v4065 = vsel %vm672, %v4060, 0
      %4067 = vmatprep.subr.bf16.mxu0 0
      %4068 = vmatpush1.bf16.xpose.msra.mxu0 %v4065
      %4069 = vmatprep.subr.bf16.mxu0 0
      %4070 = vmatpush1.bf16.xpose.msra.mxu0 0
      %4071 = vmatprep.subr.bf16.mxu0 0
      %4072 = vmatpush1.bf16.xpose.msra.mxu0 0
      %4073 = vmatprep.subr.bf16.mxu0 0
      %4074 = vmatpush1.bf16.xpose.msra.mxu0 0
      %4075 = vmatprep.subr.bf16.mxu0 0
      %4076 = vmatpush1.bf16.xpose.msra.mxu0 0
      %4077 = vmatprep.subr.bf16.mxu0 0
      %4078 = vmatpush1.bf16.xpose.msra.mxu0 0
      %4079 = vmatprep.subr.bf16.mxu0 0
      %4080 = vmatpush1.bf16.xpose.msra.mxu0 0
      %4081 = vmatprep.subr.bf16.mxu0 0
      %4082 = vmatpush1.bf16.xpose.msra.mxu0 0
      %4083 = vmatprep.subr.bf16.mxu0 0
      %4084 = vmatpush1.bf16.xpose.msra.mxu0 0
      %4085 = vmatprep.subr.bf16.mxu0 0
      %4086 = vmatpush1.bf16.xpose.msra.mxu0 0
      %4087 = vmatprep.subr.bf16.mxu0 0
      %4088 = vmatpush1.bf16.xpose.msra.mxu0 0
      %4089 = vmatprep.subr.bf16.mxu0 0
      %4090 = vmatpush1.bf16.xpose.msra.mxu0 0
      %4091 = vmatprep.subr.bf16.mxu0 0
      %4092 = vmatpush1.bf16.xpose.msra.mxu0 0
      %4093 = vmatprep.subr.bf16.mxu0 0
      %4094 = vmatpush1.bf16.xpose.msra.mxu0 0
      %4095 = vmatprep.subr.bf16.mxu0 0
      %4096 = vmatpush1.bf16.xpose.msra.mxu0 0
      %4097 = vmatprep.subr.bf16.mxu0 0
      %4098 = vmatpush1.bf16.xpose.msra.mxu0 0
      %4099 = vmatprep.mubr.bf16.mxu0 0
      %4100 = vmatmul.mubr.bf16.gmra.mrb[0].mxu0 %v4062
      %v4101 = vpop.f32.mrb[0].mxu0
      %v4102 = vadd.f32 0.0, %v4101
      %v4103 = vpop.f32.mrb[0].mxu0
      %v4104 = vpop.f32.mrb[0].mxu0
      %v4105 = vpop.f32.mrb[0].mxu0
      %4106 = vdwg.mxu0
      %4108 = vrot.lane.b32.xlu0 %v3618, 120
      %v4109 = vpop.permute.xlu0 %4108
      %4111 = vrot.lane.b32.xlu0 %v3622, 120
      %v4112 = vpop.permute.xlu0 %4111
      %v4114 = vsel %vm672, %v4109, 0
      %v4117 = vsel %vm672, %v4112, 0
      %4119 = vmatprep.subr.bf16.mxu0 0
      %4120 = vmatpush1.bf16.xpose.msra.mxu0 %v4117
      %4121 = vmatprep.subr.bf16.mxu0 0
      %4122 = vmatpush1.bf16.xpose.msra.mxu0 0
      %4123 = vmatprep.subr.bf16.mxu0 0
      %4124 = vmatpush1.bf16.xpose.msra.mxu0 0
      %4125 = vmatprep.subr.bf16.mxu0 0
      %4126 = vmatpush1.bf16.xpose.msra.mxu0 0
      %4127 = vmatprep.subr.bf16.mxu0 0
      %4128 = vmatpush1.bf16.xpose.msra.mxu0 0
      %4129 = vmatprep.subr.bf16.mxu0 0
      %4130 = vmatpush1.bf16.xpose.msra.mxu0 0
      %4131 = vmatprep.subr.bf16.mxu0 0
      %4132 = vmatpush1.bf16.xpose.msra.mxu0 0
      %4133 = vmatprep.subr.bf16.mxu0 0
      %4134 = vmatpush1.bf16.xpose.msra.mxu0 0
      %4135 = vmatprep.subr.bf16.mxu0 0
      %4136 = vmatpush1.bf16.xpose.msra.mxu0 0
      %4137 = vmatprep.subr.bf16.mxu0 0
      %4138 = vmatpush1.bf16.xpose.msra.mxu0 0
      %4139 = vmatprep.subr.bf16.mxu0 0
      %4140 = vmatpush1.bf16.xpose.msra.mxu0 0
      %4141 = vmatprep.subr.bf16.mxu0 0
      %4142 = vmatpush1.bf16.xpose.msra.mxu0 0
      %4143 = vmatprep.subr.bf16.mxu0 0
      %4144 = vmatpush1.bf16.xpose.msra.mxu0 0
      %4145 = vmatprep.subr.bf16.mxu0 0
      %4146 = vmatpush1.bf16.xpose.msra.mxu0 0
      %4147 = vmatprep.subr.bf16.mxu0 0
      %4148 = vmatpush1.bf16.xpose.msra.mxu0 0
      %4149 = vmatprep.subr.bf16.mxu0 0
      %4150 = vmatpush1.bf16.xpose.msra.mxu0 0
      %4151 = vmatprep.mubr.bf16.mxu0 0
      %4152 = vmatmul.mubr.bf16.gmra.mrb[0].mxu0 %v4114
      %v4153 = vpop.f32.mrb[0].mxu0
      %v4154 = vadd.f32 0.0, %v4153
      %v4155 = vpop.f32.mrb[0].mxu0
      %v4156 = vpop.f32.mrb[0].mxu0
      %v4157 = vpop.f32.mrb[0].mxu0
      %4158 = vdwg.mxu0
      %4160 = vrot.lane.b32.xlu0 %v3619, 120
      %v4161 = vpop.permute.xlu0 %4160
      %4163 = vrot.lane.b32.xlu0 %v3623, 120
      %v4164 = vpop.permute.xlu0 %4163
      %v4166 = vsel %vm672, %v4161, 0
      %v4169 = vsel %vm672, %v4164, 0
      %4171 = vmatprep.subr.bf16.mxu0 0
      %4172 = vmatpush1.bf16.xpose.msra.mxu0 %v4169
      %4173 = vmatprep.subr.bf16.mxu0 0
      %4174 = vmatpush1.bf16.xpose.msra.mxu0 0
      %4175 = vmatprep.subr.bf16.mxu0 0
      %4176 = vmatpush1.bf16.xpose.msra.mxu0 0
      %4177 = vmatprep.subr.bf16.mxu0 0
      %4178 = vmatpush1.bf16.xpose.msra.mxu0 0
      %4179 = vmatprep.subr.bf16.mxu0 0
      %4180 = vmatpush1.bf16.xpose.msra.mxu0 0
      %4181 = vmatprep.subr.bf16.mxu0 0
      %4182 = vmatpush1.bf16.xpose.msra.mxu0 0
      %4183 = vmatprep.subr.bf16.mxu0 0
      %4184 = vmatpush1.bf16.xpose.msra.mxu0 0
      %4185 = vmatprep.subr.bf16.mxu0 0
      %4186 = vmatpush1.bf16.xpose.msra.mxu0 0
      %4187 = vmatprep.subr.bf16.mxu0 0
      %4188 = vmatpush1.bf16.xpose.msra.mxu0 0
      %4189 = vmatprep.subr.bf16.mxu0 0
      %4190 = vmatpush1.bf16.xpose.msra.mxu0 0
      %4191 = vmatprep.subr.bf16.mxu0 0
      %4192 = vmatpush1.bf16.xpose.msra.mxu0 0
      %4193 = vmatprep.subr.bf16.mxu0 0
      %4194 = vmatpush1.bf16.xpose.msra.mxu0 0
      %4195 = vmatprep.subr.bf16.mxu0 0
      %4196 = vmatpush1.bf16.xpose.msra.mxu0 0
      %4197 = vmatprep.subr.bf16.mxu0 0
      %4198 = vmatpush1.bf16.xpose.msra.mxu0 0
      %4199 = vmatprep.subr.bf16.mxu0 0
      %4200 = vmatpush1.bf16.xpose.msra.mxu0 0
      %4201 = vmatprep.subr.bf16.mxu0 0
      %4202 = vmatpush1.bf16.xpose.msra.mxu0 0
      %4203 = vmatprep.mubr.bf16.mxu0 0
      %4204 = vmatmul.mubr.bf16.gmra.mrb[0].mxu0 %v4166
      %v4205 = vpop.f32.mrb[0].mxu0
      %v4206 = vadd.f32 0.0, %v4205
      %v4207 = vpop.f32.mrb[0].mxu0
      %v4208 = vpop.f32.mrb[0].mxu0
      %v4209 = vpop.f32.mrb[0].mxu0
      %4210 = vdwg.mxu0
      %4212 = vrot.lane.b32.xlu0 %v3620, 120
      %v4213 = vpop.permute.xlu0 %4212
      %4215 = vrot.lane.b32.xlu0 %v3624, 120
      %v4216 = vpop.permute.xlu0 %4215
      %v4218 = vsel %vm672, %v4213, 0
      %v4221 = vsel %vm672, %v4216, 0
      %4223 = vmatprep.subr.bf16.mxu0 0
      %4224 = vmatpush1.bf16.xpose.msra.mxu0 %v4221
      %4225 = vmatprep.subr.bf16.mxu0 0
      %4226 = vmatpush1.bf16.xpose.msra.mxu0 0
      %4227 = vmatprep.subr.bf16.mxu0 0
      %4228 = vmatpush1.bf16.xpose.msra.mxu0 0
      %4229 = vmatprep.subr.bf16.mxu0 0
      %4230 = vmatpush1.bf16.xpose.msra.mxu0 0
      %4231 = vmatprep.subr.bf16.mxu0 0
      %4232 = vmatpush1.bf16.xpose.msra.mxu0 0
      %4233 = vmatprep.subr.bf16.mxu0 0
      %4234 = vmatpush1.bf16.xpose.msra.mxu0 0
      %4235 = vmatprep.subr.bf16.mxu0 0
      %4236 = vmatpush1.bf16.xpose.msra.mxu0 0
      %4237 = vmatprep.subr.bf16.mxu0 0
      %4238 = vmatpush1.bf16.xpose.msra.mxu0 0
      %4239 = vmatprep.subr.bf16.mxu0 0
      %4240 = vmatpush1.bf16.xpose.msra.mxu0 0
      %4241 = vmatprep.subr.bf16.mxu0 0
      %4242 = vmatpush1.bf16.xpose.msra.mxu0 0
      %4243 = vmatprep.subr.bf16.mxu0 0
      %4244 = vmatpush1.bf16.xpose.msra.mxu0 0
      %4245 = vmatprep.subr.bf16.mxu0 0
      %4246 = vmatpush1.bf16.xpose.msra.mxu0 0
      %4247 = vmatprep.subr.bf16.mxu0 0
      %4248 = vmatpush1.bf16.xpose.msra.mxu0 0
      %4249 = vmatprep.subr.bf16.mxu0 0
      %4250 = vmatpush1.bf16.xpose.msra.mxu0 0
      %4251 = vmatprep.subr.bf16.mxu0 0
      %4252 = vmatpush1.bf16.xpose.msra.mxu0 0
      %4253 = vmatprep.subr.bf16.mxu0 0
      %4254 = vmatpush1.bf16.xpose.msra.mxu0 0
      %4255 = vmatprep.mubr.bf16.mxu0 0
      %4256 = vmatmul.mubr.bf16.gmra.mrb[0].mxu0 %v4218
      %v4257 = vpop.f32.mrb[0].mxu0
      %v4258 = vadd.f32 0.0, %v4257
      %v4259 = vpop.f32.mrb[0].mxu0
      %v4260 = vpop.f32.mrb[0].mxu0
      %v4261 = vpop.f32.mrb[0].mxu0
      %4262 = vdwg.mxu0
      %v4263 = vmul.f32 %v4102, 0.35355338
      %v4264 = vmul.f32 %v4154, 0.35355338
      %v4265 = vmul.f32 %v4206, 0.35355338
      %v4266 = vmul.f32 %v4258, 0.35355338
      %v4267 = vadd.f32 %v4263, %v735
      %v4268 = vadd.f32 %v4264, %v735
      %v4269 = vadd.f32 %v4265, %v735
      %v4270 = vadd.f32 %v4266, %v735
      %v4271 = vsel %vm672, %v4267, -inf
      %4272 = vmax.xlane.f32.xlu0 %v4271
      %v4273 = vpop.xlane.xlu0 %4272
      %v4274 = vsel %vm672, %v4268, -inf
      %4275 = vmax.xlane.f32.xlu0 %v4274
      %v4276 = vpop.xlane.xlu0 %4275
      %v4277 = vsel %vm672, %v4269, -inf
      %4278 = vmax.xlane.f32.xlu0 %v4277
      %v4279 = vpop.xlane.xlu0 %4278
      %v4280 = vsel %vm672, %v4270, -inf
      %4281 = vmax.xlane.f32.xlu0 %v4280
      %v4282 = vpop.xlane.xlu0 %4281
      %v4283 = vsub.f32 %v4267, %v4273
      %v4284 = vsub.f32 %v4268, %v4276
      %v4285 = vsub.f32 %v4269, %v4279
      %v4286 = vsub.f32 %v4270, %v4282
      %v4287 = vmul.f32 %v4283, 1.442695
      %v4288 = vpow.pop %v4287
      %v4289 = vmul.f32 %v4284, 1.442695
      %v4290 = vpow.pop %v4289
      %v4291 = vmul.f32 %v4285, 1.442695
      %v4292 = vpow.pop %v4291
      %v4293 = vmul.f32 %v4286, 1.442695
      %v4294 = vpow.pop %v4293
      %v4295 = vsel %vm672, %v4288, 0.0
      %4296 = vadd.xlane.f32.xlu0 %v4295
      %v4297 = vpop.xlane.xlu0 %4296
      %v4298 = vsel %vm672, %v4290, 0.0
      %4299 = vadd.xlane.f32.xlu0 %v4298
      %v4300 = vpop.xlane.xlu0 %4299
      %v4301 = vsel %vm672, %v4292, 0.0
      %4302 = vadd.xlane.f32.xlu0 %v4301
      %v4303 = vpop.xlane.xlu0 %4302
      %v4304 = vsel %vm672, %v4294, 0.0
      %4305 = vadd.xlane.f32.xlu0 %v4304
      %v4306 = vpop.xlane.xlu0 %4305
      %v4307 = vrcp.pop %v4297
      %v4308 = vrcp.pop %v4300
      %v4309 = vrcp.pop %v4303
      %v4310 = vrcp.pop %v4306
      %v4311 = vmul.f32 %v4288, %v4307
      %v4312 = vmul.f32 %v4290, %v4308
      %v4313 = vmul.f32 %v4292, %v4309
      %v4314 = vmul.f32 %v4294, %v4310
      %v4315 = vpack.c.bf16 %v4311, %v4311
      %v4316 = vpack.c.bf16 %v4312, %v4312
      %v4317 = vpack.c.bf16 %v4313, %v4313
      %v4318 = vpack.c.bf16 %v4314, %v4314
      %4320 = vrot.lane.b32.xlu0 %v3625, 120
      %v4321 = vpop.permute.xlu0 %4320
      %v4323 = vsel %vm672, %v4315, 0
      %v4326 = vsel %vm679, %v4321, 0
      %4328 = vmatprep.subr.bf16.mxu0 0
      %4329 = vmatpush1.bf16.msra.mxu0 %v4326
      %4330 = vmatprep.subr.bf16.mxu0 0
      %4331 = vmatpush1.bf16.msra.mxu0 0
      %4332 = vmatprep.subr.bf16.mxu0 0
      %4333 = vmatpush1.bf16.msra.mxu0 0
      %4334 = vmatprep.subr.bf16.mxu0 0
      %4335 = vmatpush1.bf16.msra.mxu0 0
      %4336 = vmatprep.subr.bf16.mxu0 0
      %4337 = vmatpush1.bf16.msra.mxu0 0
      %4338 = vmatprep.subr.bf16.mxu0 0
      %4339 = vmatpush1.bf16.msra.mxu0 0
      %4340 = vmatprep.subr.bf16.mxu0 0
      %4341 = vmatpush1.bf16.msra.mxu0 0
      %4342 = vmatprep.subr.bf16.mxu0 0
      %4343 = vmatpush1.bf16.msra.mxu0 0
      %4344 = vmatprep.subr.bf16.mxu0 0
      %4345 = vmatpush1.bf16.msra.mxu0 0
      %4346 = vmatprep.subr.bf16.mxu0 0
      %4347 = vmatpush1.bf16.msra.mxu0 0
      %4348 = vmatprep.subr.bf16.mxu0 0
      %4349 = vmatpush1.bf16.msra.mxu0 0
      %4350 = vmatprep.subr.bf16.mxu0 0
      %4351 = vmatpush1.bf16.msra.mxu0 0
      %4352 = vmatprep.subr.bf16.mxu0 0
      %4353 = vmatpush1.bf16.msra.mxu0 0
      %4354 = vmatprep.subr.bf16.mxu0 0
      %4355 = vmatpush1.bf16.msra.mxu0 0
      %4356 = vmatprep.subr.bf16.mxu0 0
      %4357 = vmatpush1.bf16.msra.mxu0 0
      %4358 = vmatprep.subr.bf16.mxu0 0
      %4359 = vmatpush1.bf16.msra.mxu0 0
      %4360 = vmatprep.mubr.bf16.mxu0 0
      %4361 = vmatmul.mubr.bf16.gmra.mrb[0].mxu0 %v4323
      %v4362 = vpop.f32.mrb[0].mxu0
      %v4363 = vadd.f32 0.0, %v4362
      %v4364 = vpop.f32.mrb[0].mxu0
      %v4365 = vpop.f32.mrb[0].mxu0
      %v4366 = vpop.f32.mrb[0].mxu0
      %4367 = vdwg.mxu0
      %4369 = vrot.lane.b32.xlu0 %v3626, 120
      %v4370 = vpop.permute.xlu0 %4369
      %v4372 = vsel %vm672, %v4316, 0
      %v4375 = vsel %vm679, %v4370, 0
      %4377 = vmatprep.subr.bf16.mxu0 0
      %4378 = vmatpush1.bf16.msra.mxu0 %v4375
      %4379 = vmatprep.subr.bf16.mxu0 0
      %4380 = vmatpush1.bf16.msra.mxu0 0
      %4381 = vmatprep.subr.bf16.mxu0 0
      %4382 = vmatpush1.bf16.msra.mxu0 0
      %4383 = vmatprep.subr.bf16.mxu0 0
      %4384 = vmatpush1.bf16.msra.mxu0 0
      %4385 = vmatprep.subr.bf16.mxu0 0
      %4386 = vmatpush1.bf16.msra.mxu0 0
      %4387 = vmatprep.subr.bf16.mxu0 0
      %4388 = vmatpush1.bf16.msra.mxu0 0
      %4389 = vmatprep.subr.bf16.mxu0 0
      %4390 = vmatpush1.bf16.msra.mxu0 0
      %4391 = vmatprep.subr.bf16.mxu0 0
      %4392 = vmatpush1.bf16.msra.mxu0 0
      %4393 = vmatprep.subr.bf16.mxu0 0
      %4394 = vmatpush1.bf16.msra.mxu0 0
      %4395 = vmatprep.subr.bf16.mxu0 0
      %4396 = vmatpush1.bf16.msra.mxu0 0
      %4397 = vmatprep.subr.bf16.mxu0 0
      %4398 = vmatpush1.bf16.msra.mxu0 0
      %4399 = vmatprep.subr.bf16.mxu0 0
      %4400 = vmatpush1.bf16.msra.mxu0 0
      %4401 = vmatprep.subr.bf16.mxu0 0
      %4402 = vmatpush1.bf16.msra.mxu0 0
      %4403 = vmatprep.subr.bf16.mxu0 0
      %4404 = vmatpush1.bf16.msra.mxu0 0
      %4405 = vmatprep.subr.bf16.mxu0 0
      %4406 = vmatpush1.bf16.msra.mxu0 0
      %4407 = vmatprep.subr.bf16.mxu0 0
      %4408 = vmatpush1.bf16.msra.mxu0 0
      %4409 = vmatprep.mubr.bf16.mxu0 0
      %4410 = vmatmul.mubr.bf16.gmra.mrb[0].mxu0 %v4372
      %v4411 = vpop.f32.mrb[0].mxu0
      %v4412 = vadd.f32 0.0, %v4411
      %v4413 = vpop.f32.mrb[0].mxu0
      %v4414 = vpop.f32.mrb[0].mxu0
      %v4415 = vpop.f32.mrb[0].mxu0
      %4416 = vdwg.mxu0
      %4418 = vrot.lane.b32.xlu0 %v3627, 120
      %v4419 = vpop.permute.xlu0 %4418
      %v4421 = vsel %vm672, %v4317, 0
      %v4424 = vsel %vm679, %v4419, 0
      %4426 = vmatprep.subr.bf16.mxu0 0
      %4427 = vmatpush1.bf16.msra.mxu0 %v4424
      %4428 = vmatprep.subr.bf16.mxu0 0
      %4429 = vmatpush1.bf16.msra.mxu0 0
      %4430 = vmatprep.subr.bf16.mxu0 0
      %4431 = vmatpush1.bf16.msra.mxu0 0
      %4432 = vmatprep.subr.bf16.mxu0 0
      %4433 = vmatpush1.bf16.msra.mxu0 0
      %4434 = vmatprep.subr.bf16.mxu0 0
      %4435 = vmatpush1.bf16.msra.mxu0 0
      %4436 = vmatprep.subr.bf16.mxu0 0
      %4437 = vmatpush1.bf16.msra.mxu0 0
      %4438 = vmatprep.subr.bf16.mxu0 0
      %4439 = vmatpush1.bf16.msra.mxu0 0
      %4440 = vmatprep.subr.bf16.mxu0 0
      %4441 = vmatpush1.bf16.msra.mxu0 0
      %4442 = vmatprep.subr.bf16.mxu0 0
      %4443 = vmatpush1.bf16.msra.mxu0 0
      %4444 = vmatprep.subr.bf16.mxu0 0
      %4445 = vmatpush1.bf16.msra.mxu0 0
      %4446 = vmatprep.subr.bf16.mxu0 0
      %4447 = vmatpush1.bf16.msra.mxu0 0
      %4448 = vmatprep.subr.bf16.mxu0 0
      %4449 = vmatpush1.bf16.msra.mxu0 0
      %4450 = vmatprep.subr.bf16.mxu0 0
      %4451 = vmatpush1.bf16.msra.mxu0 0
      %4452 = vmatprep.subr.bf16.mxu0 0
      %4453 = vmatpush1.bf16.msra.mxu0 0
      %4454 = vmatprep.subr.bf16.mxu0 0
      %4455 = vmatpush1.bf16.msra.mxu0 0
      %4456 = vmatprep.subr.bf16.mxu0 0
      %4457 = vmatpush1.bf16.msra.mxu0 0
      %4458 = vmatprep.mubr.bf16.mxu0 0
      %4459 = vmatmul.mubr.bf16.gmra.mrb[0].mxu0 %v4421
      %v4460 = vpop.f32.mrb[0].mxu0
      %v4461 = vadd.f32 0.0, %v4460
      %v4462 = vpop.f32.mrb[0].mxu0
      %v4463 = vpop.f32.mrb[0].mxu0
      %v4464 = vpop.f32.mrb[0].mxu0
      %4465 = vdwg.mxu0
      %4467 = vrot.lane.b32.xlu0 %v3628, 120
      %v4468 = vpop.permute.xlu0 %4467
      %v4470 = vsel %vm672, %v4318, 0
      %v4473 = vsel %vm679, %v4468, 0
      %4475 = vmatprep.subr.bf16.mxu0 0
      %4476 = vmatpush1.bf16.msra.mxu0 %v4473
      %4477 = vmatprep.subr.bf16.mxu0 0
      %4478 = vmatpush1.bf16.msra.mxu0 0
      %4479 = vmatprep.subr.bf16.mxu0 0
      %4480 = vmatpush1.bf16.msra.mxu0 0
      %4481 = vmatprep.subr.bf16.mxu0 0
      %4482 = vmatpush1.bf16.msra.mxu0 0
      %4483 = vmatprep.subr.bf16.mxu0 0
      %4484 = vmatpush1.bf16.msra.mxu0 0
      %4485 = vmatprep.subr.bf16.mxu0 0
      %4486 = vmatpush1.bf16.msra.mxu0 0
      %4487 = vmatprep.subr.bf16.mxu0 0
      %4488 = vmatpush1.bf16.msra.mxu0 0
      %4489 = vmatprep.subr.bf16.mxu0 0
      %4490 = vmatpush1.bf16.msra.mxu0 0
      %4491 = vmatprep.subr.bf16.mxu0 0
      %4492 = vmatpush1.bf16.msra.mxu0 0
      %4493 = vmatprep.subr.bf16.mxu0 0
      %4494 = vmatpush1.bf16.msra.mxu0 0
      %4495 = vmatprep.subr.bf16.mxu0 0
      %4496 = vmatpush1.bf16.msra.mxu0 0
      %4497 = vmatprep.subr.bf16.mxu0 0
      %4498 = vmatpush1.bf16.msra.mxu0 0
      %4499 = vmatprep.subr.bf16.mxu0 0
      %4500 = vmatpush1.bf16.msra.mxu0 0
      %4501 = vmatprep.subr.bf16.mxu0 0
      %4502 = vmatpush1.bf16.msra.mxu0 0
      %4503 = vmatprep.subr.bf16.mxu0 0
      %4504 = vmatpush1.bf16.msra.mxu0 0
      %4505 = vmatprep.subr.bf16.mxu0 0
      %4506 = vmatpush1.bf16.msra.mxu0 0
      %4507 = vmatprep.mubr.bf16.mxu0 0
      %4508 = vmatmul.mubr.bf16.gmra.mrb[0].mxu0 %v4470
      %v4509 = vpop.f32.mrb[0].mxu0
      %v4510 = vadd.f32 0.0, %v4509
      %v4511 = vpop.f32.mrb[0].mxu0
      %v4512 = vpop.f32.mrb[0].mxu0
      %v4513 = vpop.f32.mrb[0].mxu0
      %4514 = vdwg.mxu0
      %v4515 = vpack.c.bf16 %v4412, %v4363
      %v4516 = vpack.c.bf16 %v4510, %v4461
      %v4518 = vsel %vm672, %v4515, 0
      %v4521 = vsel %vm672, %v4516, 0
      %v4524 = vsel %vm679, %v3377, 0
      %4526 = vmatprep.subr.bf16.mxu0 0
      %4527 = vmatpush1.bf16.msra.mxu0 %v4524
      %4528 = vmatprep.subr.bf16.mxu0 0
      %4529 = vmatpush1.bf16.msra.mxu0 0
      %4530 = vmatprep.subr.bf16.mxu0 0
      %4531 = vmatpush1.bf16.msra.mxu0 0
      %4532 = vmatprep.subr.bf16.mxu0 0
      %4533 = vmatpush1.bf16.msra.mxu0 0
      %4534 = vmatprep.subr.bf16.mxu0 0
      %4535 = vmatpush1.bf16.msra.mxu0 0
      %4536 = vmatprep.subr.bf16.mxu0 0
      %4537 = vmatpush1.bf16.msra.mxu0 0
      %4538 = vmatprep.subr.bf16.mxu0 0
      %4539 = vmatpush1.bf16.msra.mxu0 0
      %4540 = vmatprep.subr.bf16.mxu0 0
      %4541 = vmatpush1.bf16.msra.mxu0 0
      %4542 = vmatprep.subr.bf16.mxu0 0
      %4543 = vmatpush1.bf16.msra.mxu0 0
      %4544 = vmatprep.subr.bf16.mxu0 0
      %4545 = vmatpush1.bf16.msra.mxu0 0
      %4546 = vmatprep.subr.bf16.mxu0 0
      %4547 = vmatpush1.bf16.msra.mxu0 0
      %4548 = vmatprep.subr.bf16.mxu0 0
      %4549 = vmatpush1.bf16.msra.mxu0 0
      %4550 = vmatprep.subr.bf16.mxu0 0
      %4551 = vmatpush1.bf16.msra.mxu0 0
      %4552 = vmatprep.subr.bf16.mxu0 0
      %4553 = vmatpush1.bf16.msra.mxu0 0
      %4554 = vmatprep.subr.bf16.mxu0 0
      %4555 = vmatpush1.bf16.msra.mxu0 0
      %4556 = vmatprep.subr.bf16.mxu0 0
      %4557 = vmatpush1.bf16.msra.mxu0 0
      %4558 = vmatprep.mubr.bf16.mxu0 0
      %4559 = vmatmul.mubr.bf16.gmra.mrb[0].mxu0 %v4518
      %v4560 = vpop.f32.mrb[0].mxu0
      %v4561 = vadd.f32 0.0, %v4560
      %v4562 = vpop.f32.mrb[0].mxu0
      %v4563 = vpop.f32.mrb[0].mxu0
      %v4564 = vadd.f32 0.0, %v4563
      %v4565 = vpop.f32.mrb[0].mxu0
      %4566 = vmatprep.mubr.bf16.mxu0 0
      %4567 = vmatmul.mubr.bf16.gmra.mrb[0].mxu0 %v4521
      %v4568 = vpop.f32.mrb[0].mxu0
      %v4569 = vadd.f32 0.0, %v4568
      %v4570 = vpop.f32.mrb[0].mxu0
      %v4571 = vpop.f32.mrb[0].mxu0
      %v4572 = vadd.f32 0.0, %v4571
      %v4573 = vpop.f32.mrb[0].mxu0
      %4574 = vdwg.mxu0
      %v4576 = vsel %vm672, %v4053, 0
      %v4579 = vsel %vm672, %v4054, 0
      %v4582 = vsel %vm679, %v3376, 0
      %4584 = vmatprep.subr.bf16.mxu0 0
      %4585 = vmatpush1.bf16.msra.mxu0 %v4582
      %4586 = vmatprep.subr.bf16.mxu0 0
      %4587 = vmatpush1.bf16.msra.mxu0 0
      %4588 = vmatprep.subr.bf16.mxu0 0
      %4589 = vmatpush1.bf16.msra.mxu0 0
      %4590 = vmatprep.subr.bf16.mxu0 0
      %4591 = vmatpush1.bf16.msra.mxu0 0
      %4592 = vmatprep.subr.bf16.mxu0 0
      %4593 = vmatpush1.bf16.msra.mxu0 0
      %4594 = vmatprep.subr.bf16.mxu0 0
      %4595 = vmatpush1.bf16.msra.mxu0 0
      %4596 = vmatprep.subr.bf16.mxu0 0
      %4597 = vmatpush1.bf16.msra.mxu0 0
      %4598 = vmatprep.subr.bf16.mxu0 0
      %4599 = vmatpush1.bf16.msra.mxu0 0
      %4600 = vmatprep.subr.bf16.mxu0 0
      %4601 = vmatpush1.bf16.msra.mxu0 0
      %4602 = vmatprep.subr.bf16.mxu0 0
      %4603 = vmatpush1.bf16.msra.mxu0 0
      %4604 = vmatprep.subr.bf16.mxu0 0
      %4605 = vmatpush1.bf16.msra.mxu0 0
      %4606 = vmatprep.subr.bf16.mxu0 0
      %4607 = vmatpush1.bf16.msra.mxu0 0
      %4608 = vmatprep.subr.bf16.mxu0 0
      %4609 = vmatpush1.bf16.msra.mxu0 0
      %4610 = vmatprep.subr.bf16.mxu0 0
      %4611 = vmatpush1.bf16.msra.mxu0 0
      %4612 = vmatprep.subr.bf16.mxu0 0
      %4613 = vmatpush1.bf16.msra.mxu0 0
      %4614 = vmatprep.subr.bf16.mxu0 0
      %4615 = vmatpush1.bf16.msra.mxu0 0
      %4616 = vmatprep.mubr.bf16.mxu0 0
      %4617 = vmatmul.mubr.bf16.gmra.mrb[0].mxu0 %v4576
      %v4618 = vpop.f32.mrb[0].mxu0
      %v4619 = vadd.f32 %v4561, %v4618
      %v4620 = vpop.f32.mrb[0].mxu0
      %v4621 = vpop.f32.mrb[0].mxu0
      %v4622 = vadd.f32 %v4564, %v4621
      %v4623 = vpop.f32.mrb[0].mxu0
      %4624 = vmatprep.mubr.bf16.mxu0 0
      %4625 = vmatmul.mubr.bf16.gmra.mrb[0].mxu0 %v4579
      %v4626 = vpop.f32.mrb[0].mxu0
      %v4627 = vadd.f32 %v4569, %v4626
      %v4628 = vpop.f32.mrb[0].mxu0
      %v4629 = vpop.f32.mrb[0].mxu0
      %v4630 = vadd.f32 %v4572, %v4629
      %v4631 = vpop.f32.mrb[0].mxu0
      %4632 = vdwg.mxu0
      %4633 = vrot.lane.b32.xlu0 %v3617, 112
      %v4634 = vpop.permute.xlu0 %4633
      %4635 = vrot.lane.b32.xlu0 %v3621, 112
      %v4636 = vpop.permute.xlu0 %4635
      %v4638 = vsel %vm672, %v4634, 0
      %v4641 = vsel %vm672, %v4636, 0
      %4643 = vmatprep.subr.bf16.mxu0 0
      %4644 = vmatpush1.bf16.xpose.msra.mxu0 %v4641
      %4645 = vmatprep.subr.bf16.mxu0 0
      %4646 = vmatpush1.bf16.xpose.msra.mxu0 0
      %4647 = vmatprep.subr.bf16.mxu0 0
      %4648 = vmatpush1.bf16.xpose.msra.mxu0 0
      %4649 = vmatprep.subr.bf16.mxu0 0
      %4650 = vmatpush1.bf16.xpose.msra.mxu0 0
      %4651 = vmatprep.subr.bf16.mxu0 0
      %4652 = vmatpush1.bf16.xpose.msra.mxu0 0
      %4653 = vmatprep.subr.bf16.mxu0 0
      %4654 = vmatpush1.bf16.xpose.msra.mxu0 0
      %4655 = vmatprep.subr.bf16.mxu0 0
      %4656 = vmatpush1.bf16.xpose.msra.mxu0 0
      %4657 = vmatprep.subr.bf16.mxu0 0
      %4658 = vmatpush1.bf16.xpose.msra.mxu0 0
      %4659 = vmatprep.subr.bf16.mxu0 0
      %4660 = vmatpush1.bf16.xpose.msra.mxu0 0
      %4661 = vmatprep.subr.bf16.mxu0 0
      %4662 = vmatpush1.bf16.xpose.msra.mxu0 0
      %4663 = vmatprep.subr.bf16.mxu0 0
      %4664 = vmatpush1.bf16.xpose.msra.mxu0 0
      %4665 = vmatprep.subr.bf16.mxu0 0
      %4666 = vmatpush1.bf16.xpose.msra.mxu0 0
      %4667 = vmatprep.subr.bf16.mxu0 0
      %4668 = vmatpush1.bf16.xpose.msra.mxu0 0
      %4669 = vmatprep.subr.bf16.mxu0 0
      %4670 = vmatpush1.bf16.xpose.msra.mxu0 0
      %4671 = vmatprep.subr.bf16.mxu0 0
      %4672 = vmatpush1.bf16.xpose.msra.mxu0 0
      %4673 = vmatprep.subr.bf16.mxu0 0
      %4674 = vmatpush1.bf16.xpose.msra.mxu0 0
      %4675 = vmatprep.mubr.bf16.mxu0 0
      %4676 = vmatmul.mubr.bf16.gmra.mrb[0].mxu0 %v4638
      %v4677 = vpop.f32.mrb[0].mxu0
      %v4678 = vadd.f32 0.0, %v4677
      %v4679 = vpop.f32.mrb[0].mxu0
      %v4680 = vpop.f32.mrb[0].mxu0
      %v4681 = vpop.f32.mrb[0].mxu0
      %4682 = vdwg.mxu0
      %4683 = vrot.lane.b32.xlu0 %v3618, 112
      %v4684 = vpop.permute.xlu0 %4683
      %4685 = vrot.lane.b32.xlu0 %v3622, 112
      %v4686 = vpop.permute.xlu0 %4685
      %v4688 = vsel %vm672, %v4684, 0
      %v4691 = vsel %vm672, %v4686, 0
      %4693 = vmatprep.subr.bf16.mxu0 0
      %4694 = vmatpush1.bf16.xpose.msra.mxu0 %v4691
      %4695 = vmatprep.subr.bf16.mxu0 0
      %4696 = vmatpush1.bf16.xpose.msra.mxu0 0
      %4697 = vmatprep.subr.bf16.mxu0 0
      %4698 = vmatpush1.bf16.xpose.msra.mxu0 0
      %4699 = vmatprep.subr.bf16.mxu0 0
      %4700 = vmatpush1.bf16.xpose.msra.mxu0 0
      %4701 = vmatprep.subr.bf16.mxu0 0
      %4702 = vmatpush1.bf16.xpose.msra.mxu0 0
      %4703 = vmatprep.subr.bf16.mxu0 0
      %4704 = vmatpush1.bf16.xpose.msra.mxu0 0
      %4705 = vmatprep.subr.bf16.mxu0 0
      %4706 = vmatpush1.bf16.xpose.msra.mxu0 0
      %4707 = vmatprep.subr.bf16.mxu0 0
      %4708 = vmatpush1.bf16.xpose.msra.mxu0 0
      %4709 = vmatprep.subr.bf16.mxu0 0
      %4710 = vmatpush1.bf16.xpose.msra.mxu0 0
      %4711 = vmatprep.subr.bf16.mxu0 0
      %4712 = vmatpush1.bf16.xpose.msra.mxu0 0
      %4713 = vmatprep.subr.bf16.mxu0 0
      %4714 = vmatpush1.bf16.xpose.msra.mxu0 0
      %4715 = vmatprep.subr.bf16.mxu0 0
      %4716 = vmatpush1.bf16.xpose.msra.mxu0 0
      %4717 = vmatprep.subr.bf16.mxu0 0
      %4718 = vmatpush1.bf16.xpose.msra.mxu0 0
      %4719 = vmatprep.subr.bf16.mxu0 0
      %4720 = vmatpush1.bf16.xpose.msra.mxu0 0
      %4721 = vmatprep.subr.bf16.mxu0 0
      %4722 = vmatpush1.bf16.xpose.msra.mxu0 0
      %4723 = vmatprep.subr.bf16.mxu0 0
      %4724 = vmatpush1.bf16.xpose.msra.mxu0 0
      %4725 = vmatprep.mubr.bf16.mxu0 0
      %4726 = vmatmul.mubr.bf16.gmra.mrb[0].mxu0 %v4688
      %v4727 = vpop.f32.mrb[0].mxu0
      %v4728 = vadd.f32 0.0, %v4727
      %v4729 = vpop.f32.mrb[0].mxu0
      %v4730 = vpop.f32.mrb[0].mxu0
      %v4731 = vpop.f32.mrb[0].mxu0
      %4732 = vdwg.mxu0
      %4733 = vrot.lane.b32.xlu0 %v3619, 112
      %v4734 = vpop.permute.xlu0 %4733
      %4735 = vrot.lane.b32.xlu0 %v3623, 112
      %v4736 = vpop.permute.xlu0 %4735
      %v4738 = vsel %vm672, %v4734, 0
      %v4741 = vsel %vm672, %v4736, 0
      %4743 = vmatprep.subr.bf16.mxu0 0
      %4744 = vmatpush1.bf16.xpose.msra.mxu0 %v4741
      %4745 = vmatprep.subr.bf16.mxu0 0
      %4746 = vmatpush1.bf16.xpose.msra.mxu0 0
      %4747 = vmatprep.subr.bf16.mxu0 0
      %4748 = vmatpush1.bf16.xpose.msra.mxu0 0
      %4749 = vmatprep.subr.bf16.mxu0 0
      %4750 = vmatpush1.bf16.xpose.msra.mxu0 0
      %4751 = vmatprep.subr.bf16.mxu0 0
      %4752 = vmatpush1.bf16.xpose.msra.mxu0 0
      %4753 = vmatprep.subr.bf16.mxu0 0
      %4754 = vmatpush1.bf16.xpose.msra.mxu0 0
      %4755 = vmatprep.subr.bf16.mxu0 0
      %4756 = vmatpush1.bf16.xpose.msra.mxu0 0
      %4757 = vmatprep.subr.bf16.mxu0 0
      %4758 = vmatpush1.bf16.xpose.msra.mxu0 0
      %4759 = vmatprep.subr.bf16.mxu0 0
      %4760 = vmatpush1.bf16.xpose.msra.mxu0 0
      %4761 = vmatprep.subr.bf16.mxu0 0
      %4762 = vmatpush1.bf16.xpose.msra.mxu0 0
      %4763 = vmatprep.subr.bf16.mxu0 0
      %4764 = vmatpush1.bf16.xpose.msra.mxu0 0
      %4765 = vmatprep.subr.bf16.mxu0 0
      %4766 = vmatpush1.bf16.xpose.msra.mxu0 0
      %4767 = vmatprep.subr.bf16.mxu0 0
      %4768 = vmatpush1.bf16.xpose.msra.mxu0 0
      %4769 = vmatprep.subr.bf16.mxu0 0
      %4770 = vmatpush1.bf16.xpose.msra.mxu0 0
      %4771 = vmatprep.subr.bf16.mxu0 0
      %4772 = vmatpush1.bf16.xpose.msra.mxu0 0
      %4773 = vmatprep.subr.bf16.mxu0 0
      %4774 = vmatpush1.bf16.xpose.msra.mxu0 0
      %4775 = vmatprep.mubr.bf16.mxu0 0
      %4776 = vmatmul.mubr.bf16.gmra.mrb[0].mxu0 %v4738
      %v4777 = vpop.f32.mrb[0].mxu0
      %v4778 = vadd.f32 0.0, %v4777
      %v4779 = vpop.f32.mrb[0].mxu0
      %v4780 = vpop.f32.mrb[0].mxu0
      %v4781 = vpop.f32.mrb[0].mxu0
      %4782 = vdwg.mxu0
      %4783 = vrot.lane.b32.xlu0 %v3620, 112
      %v4784 = vpop.permute.xlu0 %4783
      %4785 = vrot.lane.b32.xlu0 %v3624, 112
      %v4786 = vpop.permute.xlu0 %4785
      %v4788 = vsel %vm672, %v4784, 0
      %v4791 = vsel %vm672, %v4786, 0
      %4793 = vmatprep.subr.bf16.mxu0 0
      %4794 = vmatpush1.bf16.xpose.msra.mxu0 %v4791
      %4795 = vmatprep.subr.bf16.mxu0 0
      %4796 = vmatpush1.bf16.xpose.msra.mxu0 0
      %4797 = vmatprep.subr.bf16.mxu0 0
      %4798 = vmatpush1.bf16.xpose.msra.mxu0 0
      %4799 = vmatprep.subr.bf16.mxu0 0
      %4800 = vmatpush1.bf16.xpose.msra.mxu0 0
      %4801 = vmatprep.subr.bf16.mxu0 0
      %4802 = vmatpush1.bf16.xpose.msra.mxu0 0
      %4803 = vmatprep.subr.bf16.mxu0 0
      %4804 = vmatpush1.bf16.xpose.msra.mxu0 0
      %4805 = vmatprep.subr.bf16.mxu0 0
      %4806 = vmatpush1.bf16.xpose.msra.mxu0 0
      %4807 = vmatprep.subr.bf16.mxu0 0
      %4808 = vmatpush1.bf16.xpose.msra.mxu0 0
      %4809 = vmatprep.subr.bf16.mxu0 0
      %4810 = vmatpush1.bf16.xpose.msra.mxu0 0
      %4811 = vmatprep.subr.bf16.mxu0 0
      %4812 = vmatpush1.bf16.xpose.msra.mxu0 0
      %4813 = vmatprep.subr.bf16.mxu0 0
      %4814 = vmatpush1.bf16.xpose.msra.mxu0 0
      %4815 = vmatprep.subr.bf16.mxu0 0
      %4816 = vmatpush1.bf16.xpose.msra.mxu0 0
      %4817 = vmatprep.subr.bf16.mxu0 0
      %4818 = vmatpush1.bf16.xpose.msra.mxu0 0
      %4819 = vmatprep.subr.bf16.mxu0 0
      %4820 = vmatpush1.bf16.xpose.msra.mxu0 0
      %4821 = vmatprep.subr.bf16.mxu0 0
      %4822 = vmatpush1.bf16.xpose.msra.mxu0 0
      %4823 = vmatprep.subr.bf16.mxu0 0
      %4824 = vmatpush1.bf16.xpose.msra.mxu0 0
      %4825 = vmatprep.mubr.bf16.mxu0 0
      %4826 = vmatmul.mubr.bf16.gmra.mrb[0].mxu0 %v4788
      %v4827 = vpop.f32.mrb[0].mxu0
      %v4828 = vadd.f32 0.0, %v4827
      %v4829 = vpop.f32.mrb[0].mxu0
      %v4830 = vpop.f32.mrb[0].mxu0
      %v4831 = vpop.f32.mrb[0].mxu0
      %4832 = vdwg.mxu0
      %v4833 = vmul.f32 %v4678, 0.35355338
      %v4834 = vmul.f32 %v4728, 0.35355338
      %v4835 = vmul.f32 %v4778, 0.35355338
      %v4836 = vmul.f32 %v4828, 0.35355338
      %v4837 = vadd.f32 %v4833, %v735
      %v4838 = vadd.f32 %v4834, %v735
      %v4839 = vadd.f32 %v4835, %v735
      %v4840 = vadd.f32 %v4836, %v735
      %v4841 = vsel %vm672, %v4837, -inf
      %4842 = vmax.xlane.f32.xlu0 %v4841
      %v4843 = vpop.xlane.xlu0 %4842
      %v4844 = vsel %vm672, %v4838, -inf
      %4845 = vmax.xlane.f32.xlu0 %v4844
      %v4846 = vpop.xlane.xlu0 %4845
      %v4847 = vsel %vm672, %v4839, -inf
      %4848 = vmax.xlane.f32.xlu0 %v4847
      %v4849 = vpop.xlane.xlu0 %4848
      %v4850 = vsel %vm672, %v4840, -inf
      %4851 = vmax.xlane.f32.xlu0 %v4850
      %v4852 = vpop.xlane.xlu0 %4851
      %v4853 = vsub.f32 %v4837, %v4843
      %v4854 = vsub.f32 %v4838, %v4846
      %v4855 = vsub.f32 %v4839, %v4849
      %v4856 = vsub.f32 %v4840, %v4852
      %v4857 = vmul.f32 %v4853, 1.442695
      %v4858 = vpow.pop %v4857
      %v4859 = vmul.f32 %v4854, 1.442695
      %v4860 = vpow.pop %v4859
      %v4861 = vmul.f32 %v4855, 1.442695
      %v4862 = vpow.pop %v4861
      %v4863 = vmul.f32 %v4856, 1.442695
      %v4864 = vpow.pop %v4863
      %v4865 = vsel %vm672, %v4858, 0.0
      %4866 = vadd.xlane.f32.xlu0 %v4865
      %v4867 = vpop.xlane.xlu0 %4866
      %v4868 = vsel %vm672, %v4860, 0.0
      %4869 = vadd.xlane.f32.xlu0 %v4868
      %v4870 = vpop.xlane.xlu0 %4869
      %v4871 = vsel %vm672, %v4862, 0.0
      %4872 = vadd.xlane.f32.xlu0 %v4871
      %v4873 = vpop.xlane.xlu0 %4872
      %v4874 = vsel %vm672, %v4864, 0.0
      %4875 = vadd.xlane.f32.xlu0 %v4874
      %v4876 = vpop.xlane.xlu0 %4875
      %v4877 = vrcp.pop %v4867
      %v4878 = vrcp.pop %v4870
      %v4879 = vrcp.pop %v4873
      %v4880 = vrcp.pop %v4876
      %v4881 = vmul.f32 %v4858, %v4877
      %v4882 = vmul.f32 %v4860, %v4878
      %v4883 = vmul.f32 %v4862, %v4879
      %v4884 = vmul.f32 %v4864, %v4880
      %v4885 = vpack.c.bf16 %v4881, %v4881
      %v4886 = vpack.c.bf16 %v4882, %v4882
      %v4887 = vpack.c.bf16 %v4883, %v4883
      %v4888 = vpack.c.bf16 %v4884, %v4884
      %4889 = vrot.lane.b32.xlu0 %v3625, 112
      %v4890 = vpop.permute.xlu0 %4889
      %v4892 = vsel %vm672, %v4885, 0
      %v4895 = vsel %vm679, %v4890, 0
      %4897 = vmatprep.subr.bf16.mxu0 0
      %4898 = vmatpush1.bf16.msra.mxu0 %v4895
      %4899 = vmatprep.subr.bf16.mxu0 0
      %4900 = vmatpush1.bf16.msra.mxu0 0
      %4901 = vmatprep.subr.bf16.mxu0 0
      %4902 = vmatpush1.bf16.msra.mxu0 0
      %4903 = vmatprep.subr.bf16.mxu0 0
      %4904 = vmatpush1.bf16.msra.mxu0 0
      %4905 = vmatprep.subr.bf16.mxu0 0
      %4906 = vmatpush1.bf16.msra.mxu0 0
      %4907 = vmatprep.subr.bf16.mxu0 0
      %4908 = vmatpush1.bf16.msra.mxu0 0
      %4909 = vmatprep.subr.bf16.mxu0 0
      %4910 = vmatpush1.bf16.msra.mxu0 0
      %4911 = vmatprep.subr.bf16.mxu0 0
      %4912 = vmatpush1.bf16.msra.mxu0 0
      %4913 = vmatprep.subr.bf16.mxu0 0
      %4914 = vmatpush1.bf16.msra.mxu0 0
      %4915 = vmatprep.subr.bf16.mxu0 0
      %4916 = vmatpush1.bf16.msra.mxu0 0
      %4917 = vmatprep.subr.bf16.mxu0 0
      %4918 = vmatpush1.bf16.msra.mxu0 0
      %4919 = vmatprep.subr.bf16.mxu0 0
      %4920 = vmatpush1.bf16.msra.mxu0 0
      %4921 = vmatprep.subr.bf16.mxu0 0
      %4922 = vmatpush1.bf16.msra.mxu0 0
      %4923 = vmatprep.subr.bf16.mxu0 0
      %4924 = vmatpush1.bf16.msra.mxu0 0
      %4925 = vmatprep.subr.bf16.mxu0 0
      %4926 = vmatpush1.bf16.msra.mxu0 0
      %4927 = vmatprep.subr.bf16.mxu0 0
      %4928 = vmatpush1.bf16.msra.mxu0 0
      %4929 = vmatprep.mubr.bf16.mxu0 0
      %4930 = vmatmul.mubr.bf16.gmra.mrb[0].mxu0 %v4892
      %v4931 = vpop.f32.mrb[0].mxu0
      %v4932 = vadd.f32 0.0, %v4931
      %v4933 = vpop.f32.mrb[0].mxu0
      %v4934 = vpop.f32.mrb[0].mxu0
      %v4935 = vpop.f32.mrb[0].mxu0
      %4936 = vdwg.mxu0
      %4937 = vrot.lane.b32.xlu0 %v3626, 112
      %v4938 = vpop.permute.xlu0 %4937
      %v4940 = vsel %vm672, %v4886, 0
      %v4943 = vsel %vm679, %v4938, 0
      %4945 = vmatprep.subr.bf16.mxu0 0
      %4946 = vmatpush1.bf16.msra.mxu0 %v4943
      %4947 = vmatprep.subr.bf16.mxu0 0
      %4948 = vmatpush1.bf16.msra.mxu0 0
      %4949 = vmatprep.subr.bf16.mxu0 0
      %4950 = vmatpush1.bf16.msra.mxu0 0
      %4951 = vmatprep.subr.bf16.mxu0 0
      %4952 = vmatpush1.bf16.msra.mxu0 0
      %4953 = vmatprep.subr.bf16.mxu0 0
      %4954 = vmatpush1.bf16.msra.mxu0 0
      %4955 = vmatprep.subr.bf16.mxu0 0
      %4956 = vmatpush1.bf16.msra.mxu0 0
      %4957 = vmatprep.subr.bf16.mxu0 0
      %4958 = vmatpush1.bf16.msra.mxu0 0
      %4959 = vmatprep.subr.bf16.mxu0 0
      %4960 = vmatpush1.bf16.msra.mxu0 0
      %4961 = vmatprep.subr.bf16.mxu0 0
      %4962 = vmatpush1.bf16.msra.mxu0 0
      %4963 = vmatprep.subr.bf16.mxu0 0
      %4964 = vmatpush1.bf16.msra.mxu0 0
      %4965 = vmatprep.subr.bf16.mxu0 0
      %4966 = vmatpush1.bf16.msra.mxu0 0
      %4967 = vmatprep.subr.bf16.mxu0 0
      %4968 = vmatpush1.bf16.msra.mxu0 0
      %4969 = vmatprep.subr.bf16.mxu0 0
      %4970 = vmatpush1.bf16.msra.mxu0 0
      %4971 = vmatprep.subr.bf16.mxu0 0
      %4972 = vmatpush1.bf16.msra.mxu0 0
      %4973 = vmatprep.subr.bf16.mxu0 0
      %4974 = vmatpush1.bf16.msra.mxu0 0
      %4975 = vmatprep.subr.bf16.mxu0 0
      %4976 = vmatpush1.bf16.msra.mxu0 0
      %4977 = vmatprep.mubr.bf16.mxu0 0
      %4978 = vmatmul.mubr.bf16.gmra.mrb[0].mxu0 %v4940
      %v4979 = vpop.f32.mrb[0].mxu0
      %v4980 = vadd.f32 0.0, %v4979
      %v4981 = vpop.f32.mrb[0].mxu0
      %v4982 = vpop.f32.mrb[0].mxu0
      %v4983 = vpop.f32.mrb[0].mxu0
      %4984 = vdwg.mxu0
      %4985 = vrot.lane.b32.xlu0 %v3627, 112
      %v4986 = vpop.permute.xlu0 %4985
      %v4988 = vsel %vm672, %v4887, 0
      %v4991 = vsel %vm679, %v4986, 0
      %4993 = vmatprep.subr.bf16.mxu0 0
      %4994 = vmatpush1.bf16.msra.mxu0 %v4991
      %4995 = vmatprep.subr.bf16.mxu0 0
      %4996 = vmatpush1.bf16.msra.mxu0 0
      %4997 = vmatprep.subr.bf16.mxu0 0
      %4998 = vmatpush1.bf16.msra.mxu0 0
      %4999 = vmatprep.subr.bf16.mxu0 0
      %5000 = vmatpush1.bf16.msra.mxu0 0
      %5001 = vmatprep.subr.bf16.mxu0 0
      %5002 = vmatpush1.bf16.msra.mxu0 0
      %5003 = vmatprep.subr.bf16.mxu0 0
      %5004 = vmatpush1.bf16.msra.mxu0 0
      %5005 = vmatprep.subr.bf16.mxu0 0
      %5006 = vmatpush1.bf16.msra.mxu0 0
      %5007 = vmatprep.subr.bf16.mxu0 0
      %5008 = vmatpush1.bf16.msra.mxu0 0
      %5009 = vmatprep.subr.bf16.mxu0 0
      %5010 = vmatpush1.bf16.msra.mxu0 0
      %5011 = vmatprep.subr.bf16.mxu0 0
      %5012 = vmatpush1.bf16.msra.mxu0 0
      %5013 = vmatprep.subr.bf16.mxu0 0
      %5014 = vmatpush1.bf16.msra.mxu0 0
      %5015 = vmatprep.subr.bf16.mxu0 0
      %5016 = vmatpush1.bf16.msra.mxu0 0
      %5017 = vmatprep.subr.bf16.mxu0 0
      %5018 = vmatpush1.bf16.msra.mxu0 0
      %5019 = vmatprep.subr.bf16.mxu0 0
      %5020 = vmatpush1.bf16.msra.mxu0 0
      %5021 = vmatprep.subr.bf16.mxu0 0
      %5022 = vmatpush1.bf16.msra.mxu0 0
      %5023 = vmatprep.subr.bf16.mxu0 0
      %5024 = vmatpush1.bf16.msra.mxu0 0
      %5025 = vmatprep.mubr.bf16.mxu0 0
      %5026 = vmatmul.mubr.bf16.gmra.mrb[0].mxu0 %v4988
      %v5027 = vpop.f32.mrb[0].mxu0
      %v5028 = vadd.f32 0.0, %v5027
      %v5029 = vpop.f32.mrb[0].mxu0
      %v5030 = vpop.f32.mrb[0].mxu0
      %v5031 = vpop.f32.mrb[0].mxu0
      %5032 = vdwg.mxu0
      %5033 = vrot.lane.b32.xlu0 %v3628, 112
      %v5034 = vpop.permute.xlu0 %5033
      %v5036 = vsel %vm672, %v4888, 0
      %v5039 = vsel %vm679, %v5034, 0
      %5041 = vmatprep.subr.bf16.mxu0 0
      %5042 = vmatpush1.bf16.msra.mxu0 %v5039
      %5043 = vmatprep.subr.bf16.mxu0 0
      %5044 = vmatpush1.bf16.msra.mxu0 0
      %5045 = vmatprep.subr.bf16.mxu0 0
      %5046 = vmatpush1.bf16.msra.mxu0 0
      %5047 = vmatprep.subr.bf16.mxu0 0
      %5048 = vmatpush1.bf16.msra.mxu0 0
      %5049 = vmatprep.subr.bf16.mxu0 0
      %5050 = vmatpush1.bf16.msra.mxu0 0
      %5051 = vmatprep.subr.bf16.mxu0 0
      %5052 = vmatpush1.bf16.msra.mxu0 0
      %5053 = vmatprep.subr.bf16.mxu0 0
      %5054 = vmatpush1.bf16.msra.mxu0 0
      %5055 = vmatprep.subr.bf16.mxu0 0
      %5056 = vmatpush1.bf16.msra.mxu0 0
      %5057 = vmatprep.subr.bf16.mxu0 0
      %5058 = vmatpush1.bf16.msra.mxu0 0
      %5059 = vmatprep.subr.bf16.mxu0 0
      %5060 = vmatpush1.bf16.msra.mxu0 0
      %5061 = vmatprep.subr.bf16.mxu0 0
      %5062 = vmatpush1.bf16.msra.mxu0 0
      %5063 = vmatprep.subr.bf16.mxu0 0
      %5064 = vmatpush1.bf16.msra.mxu0 0
      %5065 = vmatprep.subr.bf16.mxu0 0
      %5066 = vmatpush1.bf16.msra.mxu0 0
      %5067 = vmatprep.subr.bf16.mxu0 0
      %5068 = vmatpush1.bf16.msra.mxu0 0
      %5069 = vmatprep.subr.bf16.mxu0 0
      %5070 = vmatpush1.bf16.msra.mxu0 0
      %5071 = vmatprep.subr.bf16.mxu0 0
      %5072 = vmatpush1.bf16.msra.mxu0 0
      %5073 = vmatprep.mubr.bf16.mxu0 0
      %5074 = vmatmul.mubr.bf16.gmra.mrb[0].mxu0 %v5036
      %v5075 = vpop.f32.mrb[0].mxu0
      %v5076 = vadd.f32 0.0, %v5075
      %v5077 = vpop.f32.mrb[0].mxu0
      %v5078 = vpop.f32.mrb[0].mxu0
      %v5079 = vpop.f32.mrb[0].mxu0
      %5080 = vdwg.mxu0
      %v5081 = vpack.c.bf16 %v4980, %v4932
      %v5082 = vpack.c.bf16 %v5076, %v5028
      %v5084 = vsel %vm672, %v5081, 0
      %v5087 = vsel %vm672, %v5082, 0
      %v5090 = vsel %vm679, %v3378, 0
      %5092 = vmatprep.subr.bf16.mxu0 0
      %5093 = vmatpush1.bf16.msra.mxu0 %v5090
      %5094 = vmatprep.subr.bf16.mxu0 0
      %5095 = vmatpush1.bf16.msra.mxu0 0
      %5096 = vmatprep.subr.bf16.mxu0 0
      %5097 = vmatpush1.bf16.msra.mxu0 0
      %5098 = vmatprep.subr.bf16.mxu0 0
      %5099 = vmatpush1.bf16.msra.mxu0 0
      %5100 = vmatprep.subr.bf16.mxu0 0
      %5101 = vmatpush1.bf16.msra.mxu0 0
      %5102 = vmatprep.subr.bf16.mxu0 0
      %5103 = vmatpush1.bf16.msra.mxu0 0
      %5104 = vmatprep.subr.bf16.mxu0 0
      %5105 = vmatpush1.bf16.msra.mxu0 0
      %5106 = vmatprep.subr.bf16.mxu0 0
      %5107 = vmatpush1.bf16.msra.mxu0 0
      %5108 = vmatprep.subr.bf16.mxu0 0
      %5109 = vmatpush1.bf16.msra.mxu0 0
      %5110 = vmatprep.subr.bf16.mxu0 0
      %5111 = vmatpush1.bf16.msra.mxu0 0
      %5112 = vmatprep.subr.bf16.mxu0 0
      %5113 = vmatpush1.bf16.msra.mxu0 0
      %5114 = vmatprep.subr.bf16.mxu0 0
      %5115 = vmatpush1.bf16.msra.mxu0 0
      %5116 = vmatprep.subr.bf16.mxu0 0
      %5117 = vmatpush1.bf16.msra.mxu0 0
      %5118 = vmatprep.subr.bf16.mxu0 0
      %5119 = vmatpush1.bf16.msra.mxu0 0
      %5120 = vmatprep.subr.bf16.mxu0 0
      %5121 = vmatpush1.bf16.msra.mxu0 0
      %5122 = vmatprep.subr.bf16.mxu0 0
      %5123 = vmatpush1.bf16.msra.mxu0 0
      %5124 = vmatprep.mubr.bf16.mxu0 0
      %5125 = vmatmul.mubr.bf16.gmra.mrb[0].mxu0 %v5084
      %v5126 = vpop.f32.mrb[0].mxu0
      %v5127 = vadd.f32 0.0, %v5126
      %v5128 = vpop.f32.mrb[0].mxu0
      %v5129 = vpop.f32.mrb[0].mxu0
      %v5130 = vadd.f32 0.0, %v5129
      %v5131 = vpop.f32.mrb[0].mxu0
      %5132 = vmatprep.mubr.bf16.mxu0 0
      %5133 = vmatmul.mubr.bf16.gmra.mrb[0].mxu0 %v5087
      %v5134 = vpop.f32.mrb[0].mxu0
      %v5135 = vadd.f32 0.0, %v5134
      %v5136 = vpop.f32.mrb[0].mxu0
      %v5137 = vpop.f32.mrb[0].mxu0
      %v5138 = vadd.f32 0.0, %v5137
      %v5139 = vpop.f32.mrb[0].mxu0
      %5140 = vdwg.mxu0
      %v5141 = vadd.f32 %v4619, %v5127
      %v5142 = vadd.f32 %v4622, %v5130
      %v5143 = vadd.f32 %v4627, %v5135
      %v5144 = vadd.f32 %v4630, %v5138
      %5145 = vrot.lane.b32.xlu0 %v3617, 104
      %v5146 = vpop.permute.xlu0 %5145
      %5147 = vrot.lane.b32.xlu0 %v3621, 104
      %v5148 = vpop.permute.xlu0 %5147
      %v5150 = vsel %vm672, %v5146, 0
      %v5153 = vsel %vm672, %v5148, 0
      %5155 = vmatprep.subr.bf16.mxu0 0
      %5156 = vmatpush1.bf16.xpose.msra.mxu0 %v5153
      %5157 = vmatprep.subr.bf16.mxu0 0
      %5158 = vmatpush1.bf16.xpose.msra.mxu0 0
      %5159 = vmatprep.subr.bf16.mxu0 0
      %5160 = vmatpush1.bf16.xpose.msra.mxu0 0
      %5161 = vmatprep.subr.bf16.mxu0 0
      %5162 = vmatpush1.bf16.xpose.msra.mxu0 0
      %5163 = vmatprep.subr.bf16.mxu0 0
      %5164 = vmatpush1.bf16.xpose.msra.mxu0 0
      %5165 = vmatprep.subr.bf16.mxu0 0
      %5166 = vmatpush1.bf16.xpose.msra.mxu0 0
      %5167 = vmatprep.subr.bf16.mxu0 0
      %5168 = vmatpush1.bf16.xpose.msra.mxu0 0
      %5169 = vmatprep.subr.bf16.mxu0 0
      %5170 = vmatpush1.bf16.xpose.msra.mxu0 0
      %5171 = vmatprep.subr.bf16.mxu0 0
      %5172 = vmatpush1.bf16.xpose.msra.mxu0 0
      %5173 = vmatprep.subr.bf16.mxu0 0
      %5174 = vmatpush1.bf16.xpose.msra.mxu0 0
      %5175 = vmatprep.subr.bf16.mxu0 0
      %5176 = vmatpush1.bf16.xpose.msra.mxu0 0
      %5177 = vmatprep.subr.bf16.mxu0 0
      %5178 = vmatpush1.bf16.xpose.msra.mxu0 0
      %5179 = vmatprep.subr.bf16.mxu0 0
      %5180 = vmatpush1.bf16.xpose.msra.mxu0 0
      %5181 = vmatprep.subr.bf16.mxu0 0
      %5182 = vmatpush1.bf16.xpose.msra.mxu0 0
      %5183 = vmatprep.subr.bf16.mxu0 0
      %5184 = vmatpush1.bf16.xpose.msra.mxu0 0
      %5185 = vmatprep.subr.bf16.mxu0 0
      %5186 = vmatpush1.bf16.xpose.msra.mxu0 0
      %5187 = vmatprep.mubr.bf16.mxu0 0
      %5188 = vmatmul.mubr.bf16.gmra.mrb[0].mxu0 %v5150
      %v5189 = vpop.f32.mrb[0].mxu0
      %v5190 = vadd.f32 0.0, %v5189
      %v5191 = vpop.f32.mrb[0].mxu0
      %v5192 = vpop.f32.mrb[0].mxu0
      %v5193 = vpop.f32.mrb[0].mxu0
      %5194 = vdwg.mxu0
      %5195 = vrot.lane.b32.xlu0 %v3618, 104
      %v5196 = vpop.permute.xlu0 %5195
      %5197 = vrot.lane.b32.xlu0 %v3622, 104
      %v5198 = vpop.permute.xlu0 %5197
      %v5200 = vsel %vm672, %v5196, 0
      %v5203 = vsel %vm672, %v5198, 0
      %5205 = vmatprep.subr.bf16.mxu0 0
      %5206 = vmatpush1.bf16.xpose.msra.mxu0 %v5203
      %5207 = vmatprep.subr.bf16.mxu0 0
      %5208 = vmatpush1.bf16.xpose.msra.mxu0 0
      %5209 = vmatprep.subr.bf16.mxu0 0
      %5210 = vmatpush1.bf16.xpose.msra.mxu0 0
      %5211 = vmatprep.subr.bf16.mxu0 0
      %5212 = vmatpush1.bf16.xpose.msra.mxu0 0
      %5213 = vmatprep.subr.bf16.mxu0 0
      %5214 = vmatpush1.bf16.xpose.msra.mxu0 0
      %5215 = vmatprep.subr.bf16.mxu0 0
      %5216 = vmatpush1.bf16.xpose.msra.mxu0 0
      %5217 = vmatprep.subr.bf16.mxu0 0
      %5218 = vmatpush1.bf16.xpose.msra.mxu0 0
      %5219 = vmatprep.subr.bf16.mxu0 0
      %5220 = vmatpush1.bf16.xpose.msra.mxu0 0
      %5221 = vmatprep.subr.bf16.mxu0 0
      %5222 = vmatpush1.bf16.xpose.msra.mxu0 0
      %5223 = vmatprep.subr.bf16.mxu0 0
      %5224 = vmatpush1.bf16.xpose.msra.mxu0 0
      %5225 = vmatprep.subr.bf16.mxu0 0
      %5226 = vmatpush1.bf16.xpose.msra.mxu0 0
      %5227 = vmatprep.subr.bf16.mxu0 0
      %5228 = vmatpush1.bf16.xpose.msra.mxu0 0
      %5229 = vmatprep.subr.bf16.mxu0 0
      %5230 = vmatpush1.bf16.xpose.msra.mxu0 0
      %5231 = vmatprep.subr.bf16.mxu0 0
      %5232 = vmatpush1.bf16.xpose.msra.mxu0 0
      %5233 = vmatprep.subr.bf16.mxu0 0
      %5234 = vmatpush1.bf16.xpose.msra.mxu0 0
      %5235 = vmatprep.subr.bf16.mxu0 0
      %5236 = vmatpush1.bf16.xpose.msra.mxu0 0
      %5237 = vmatprep.mubr.bf16.mxu0 0
      %5238 = vmatmul.mubr.bf16.gmra.mrb[0].mxu0 %v5200
      %v5239 = vpop.f32.mrb[0].mxu0
      %v5240 = vadd.f32 0.0, %v5239
      %v5241 = vpop.f32.mrb[0].mxu0
      %v5242 = vpop.f32.mrb[0].mxu0
      %v5243 = vpop.f32.mrb[0].mxu0
      %5244 = vdwg.mxu0
      %5245 = vrot.lane.b32.xlu0 %v3619, 104
      %v5246 = vpop.permute.xlu0 %5245
      %5247 = vrot.lane.b32.xlu0 %v3623, 104
      %v5248 = vpop.permute.xlu0 %5247
      %v5250 = vsel %vm672, %v5246, 0
      %v5253 = vsel %vm672, %v5248, 0
      %5255 = vmatprep.subr.bf16.mxu0 0
      %5256 = vmatpush1.bf16.xpose.msra.mxu0 %v5253
      %5257 = vmatprep.subr.bf16.mxu0 0
      %5258 = vmatpush1.bf16.xpose.msra.mxu0 0
      %5259 = vmatprep.subr.bf16.mxu0 0
      %5260 = vmatpush1.bf16.xpose.msra.mxu0 0
      %5261 = vmatprep.subr.bf16.mxu0 0
      %5262 = vmatpush1.bf16.xpose.msra.mxu0 0
      %5263 = vmatprep.subr.bf16.mxu0 0
      %5264 = vmatpush1.bf16.xpose.msra.mxu0 0
      %5265 = vmatprep.subr.bf16.mxu0 0
      %5266 = vmatpush1.bf16.xpose.msra.mxu0 0
      %5267 = vmatprep.subr.bf16.mxu0 0
      %5268 = vmatpush1.bf16.xpose.msra.mxu0 0
      %5269 = vmatprep.subr.bf16.mxu0 0
      %5270 = vmatpush1.bf16.xpose.msra.mxu0 0
      %5271 = vmatprep.subr.bf16.mxu0 0
      %5272 = vmatpush1.bf16.xpose.msra.mxu0 0
      %5273 = vmatprep.subr.bf16.mxu0 0
      %5274 = vmatpush1.bf16.xpose.msra.mxu0 0
      %5275 = vmatprep.subr.bf16.mxu0 0
      %5276 = vmatpush1.bf16.xpose.msra.mxu0 0
      %5277 = vmatprep.subr.bf16.mxu0 0
      %5278 = vmatpush1.bf16.xpose.msra.mxu0 0
      %5279 = vmatprep.subr.bf16.mxu0 0
      %5280 = vmatpush1.bf16.xpose.msra.mxu0 0
      %5281 = vmatprep.subr.bf16.mxu0 0
      %5282 = vmatpush1.bf16.xpose.msra.mxu0 0
      %5283 = vmatprep.subr.bf16.mxu0 0
      %5284 = vmatpush1.bf16.xpose.msra.mxu0 0
      %5285 = vmatprep.subr.bf16.mxu0 0
      %5286 = vmatpush1.bf16.xpose.msra.mxu0 0
      %5287 = vmatprep.mubr.bf16.mxu0 0
      %5288 = vmatmul.mubr.bf16.gmra.mrb[0].mxu0 %v5250
      %v5289 = vpop.f32.mrb[0].mxu0
      %v5290 = vadd.f32 0.0, %v5289
      %v5291 = vpop.f32.mrb[0].mxu0
      %v5292 = vpop.f32.mrb[0].mxu0
      %v5293 = vpop.f32.mrb[0].mxu0
      %5294 = vdwg.mxu0
      %5295 = vrot.lane.b32.xlu0 %v3620, 104
      %v5296 = vpop.permute.xlu0 %5295
      %5297 = vrot.lane.b32.xlu0 %v3624, 104
      %v5298 = vpop.permute.xlu0 %5297
      %v5300 = vsel %vm672, %v5296, 0
      %v5303 = vsel %vm672, %v5298, 0
      %5305 = vmatprep.subr.bf16.mxu0 0
      %5306 = vmatpush1.bf16.xpose.msra.mxu0 %v5303
      %5307 = vmatprep.subr.bf16.mxu0 0
      %5308 = vmatpush1.bf16.xpose.msra.mxu0 0
      %5309 = vmatprep.subr.bf16.mxu0 0
      %5310 = vmatpush1.bf16.xpose.msra.mxu0 0
      %5311 = vmatprep.subr.bf16.mxu0 0
      %5312 = vmatpush1.bf16.xpose.msra.mxu0 0
      %5313 = vmatprep.subr.bf16.mxu0 0
      %5314 = vmatpush1.bf16.xpose.msra.mxu0 0
      %5315 = vmatprep.subr.bf16.mxu0 0
      %5316 = vmatpush1.bf16.xpose.msra.mxu0 0
      %5317 = vmatprep.subr.bf16.mxu0 0
      %5318 = vmatpush1.bf16.xpose.msra.mxu0 0
      %5319 = vmatprep.subr.bf16.mxu0 0
      %5320 = vmatpush1.bf16.xpose.msra.mxu0 0
      %5321 = vmatprep.subr.bf16.mxu0 0
      %5322 = vmatpush1.bf16.xpose.msra.mxu0 0
      %5323 = vmatprep.subr.bf16.mxu0 0
      %5324 = vmatpush1.bf16.xpose.msra.mxu0 0
      %5325 = vmatprep.subr.bf16.mxu0 0
      %5326 = vmatpush1.bf16.xpose.msra.mxu0 0
      %5327 = vmatprep.subr.bf16.mxu0 0
      %5328 = vmatpush1.bf16.xpose.msra.mxu0 0
      %5329 = vmatprep.subr.bf16.mxu0 0
      %5330 = vmatpush1.bf16.xpose.msra.mxu0 0
      %5331 = vmatprep.subr.bf16.mxu0 0
      %5332 = vmatpush1.bf16.xpose.msra.mxu0 0
      %5333 = vmatprep.subr.bf16.mxu0 0
      %5334 = vmatpush1.bf16.xpose.msra.mxu0 0
      %5335 = vmatprep.subr.bf16.mxu0 0
      %5336 = vmatpush1.bf16.xpose.msra.mxu0 0
      %5337 = vmatprep.mubr.bf16.mxu0 0
      %5338 = vmatmul.mubr.bf16.gmra.mrb[0].mxu0 %v5300
      %v5339 = vpop.f32.mrb[0].mxu0
      %v5340 = vadd.f32 0.0, %v5339
      %v5341 = vpop.f32.mrb[0].mxu0
      %v5342 = vpop.f32.mrb[0].mxu0
      %v5343 = vpop.f32.mrb[0].mxu0
      %5344 = vdwg.mxu0
      %v5345 = vmul.f32 %v5190, 0.35355338
      %v5346 = vmul.f32 %v5240, 0.35355338
      %v5347 = vmul.f32 %v5290, 0.35355338
      %v5348 = vmul.f32 %v5340, 0.35355338
      %v5349 = vadd.f32 %v5345, %v735
      %v5350 = vadd.f32 %v5346, %v735
      %v5351 = vadd.f32 %v5347, %v735
      %v5352 = vadd.f32 %v5348, %v735
      %v5353 = vsel %vm672, %v5349, -inf
      %5354 = vmax.xlane.f32.xlu0 %v5353
      %v5355 = vpop.xlane.xlu0 %5354
      %v5356 = vsel %vm672, %v5350, -inf
      %5357 = vmax.xlane.f32.xlu0 %v5356
      %v5358 = vpop.xlane.xlu0 %5357
      %v5359 = vsel %vm672, %v5351, -inf
      %5360 = vmax.xlane.f32.xlu0 %v5359
      %v5361 = vpop.xlane.xlu0 %5360
      %v5362 = vsel %vm672, %v5352, -inf
      %5363 = vmax.xlane.f32.xlu0 %v5362
      %v5364 = vpop.xlane.xlu0 %5363
      %v5365 = vsub.f32 %v5349, %v5355
      %v5366 = vsub.f32 %v5350, %v5358
      %v5367 = vsub.f32 %v5351, %v5361
      %v5368 = vsub.f32 %v5352, %v5364
      %v5369 = vmul.f32 %v5365, 1.442695
      %v5370 = vpow.pop %v5369
      %v5371 = vmul.f32 %v5366, 1.442695
      %v5372 = vpow.pop %v5371
      %v5373 = vmul.f32 %v5367, 1.442695
      %v5374 = vpow.pop %v5373
      %v5375 = vmul.f32 %v5368, 1.442695
      %v5376 = vpow.pop %v5375
      %v5377 = vsel %vm672, %v5370, 0.0
      %5378 = vadd.xlane.f32.xlu0 %v5377
      %v5379 = vpop.xlane.xlu0 %5378
      %v5380 = vsel %vm672, %v5372, 0.0
      %5381 = vadd.xlane.f32.xlu0 %v5380
      %v5382 = vpop.xlane.xlu0 %5381
      %v5383 = vsel %vm672, %v5374, 0.0
      %5384 = vadd.xlane.f32.xlu0 %v5383
      %v5385 = vpop.xlane.xlu0 %5384
      %v5386 = vsel %vm672, %v5376, 0.0
      %5387 = vadd.xlane.f32.xlu0 %v5386
      %v5388 = vpop.xlane.xlu0 %5387
      %v5389 = vrcp.pop %v5379
      %v5390 = vrcp.pop %v5382
      %v5391 = vrcp.pop %v5385
      %v5392 = vrcp.pop %v5388
      %v5393 = vmul.f32 %v5370, %v5389
      %v5394 = vmul.f32 %v5372, %v5390
      %v5395 = vmul.f32 %v5374, %v5391
      %v5396 = vmul.f32 %v5376, %v5392
      %v5397 = vpack.c.bf16 %v5393, %v5393
      %v5398 = vpack.c.bf16 %v5394, %v5394
      %v5399 = vpack.c.bf16 %v5395, %v5395
      %v5400 = vpack.c.bf16 %v5396, %v5396
      %5401 = vrot.lane.b32.xlu0 %v3625, 104
      %v5402 = vpop.permute.xlu0 %5401
      %v5404 = vsel %vm672, %v5397, 0
      %v5407 = vsel %vm679, %v5402, 0
      %5409 = vmatprep.subr.bf16.mxu0 0
      %5410 = vmatpush1.bf16.msra.mxu0 %v5407
      %5411 = vmatprep.subr.bf16.mxu0 0
      %5412 = vmatpush1.bf16.msra.mxu0 0
      %5413 = vmatprep.subr.bf16.mxu0 0
      %5414 = vmatpush1.bf16.msra.mxu0 0
      %5415 = vmatprep.subr.bf16.mxu0 0
      %5416 = vmatpush1.bf16.msra.mxu0 0
      %5417 = vmatprep.subr.bf16.mxu0 0
      %5418 = vmatpush1.bf16.msra.mxu0 0
      %5419 = vmatprep.subr.bf16.mxu0 0
      %5420 = vmatpush1.bf16.msra.mxu0 0
      %5421 = vmatprep.subr.bf16.mxu0 0
      %5422 = vmatpush1.bf16.msra.mxu0 0
      %5423 = vmatprep.subr.bf16.mxu0 0
      %5424 = vmatpush1.bf16.msra.mxu0 0
      %5425 = vmatprep.subr.bf16.mxu0 0
      %5426 = vmatpush1.bf16.msra.mxu0 0
      %5427 = vmatprep.subr.bf16.mxu0 0
      %5428 = vmatpush1.bf16.msra.mxu0 0
      %5429 = vmatprep.subr.bf16.mxu0 0
      %5430 = vmatpush1.bf16.msra.mxu0 0
      %5431 = vmatprep.subr.bf16.mxu0 0
      %5432 = vmatpush1.bf16.msra.mxu0 0
      %5433 = vmatprep.subr.bf16.mxu0 0
      %5434 = vmatpush1.bf16.msra.mxu0 0
      %5435 = vmatprep.subr.bf16.mxu0 0
      %5436 = vmatpush1.bf16.msra.mxu0 0
      %5437 = vmatprep.subr.bf16.mxu0 0
      %5438 = vmatpush1.bf16.msra.mxu0 0
      %5439 = vmatprep.subr.bf16.mxu0 0
      %5440 = vmatpush1.bf16.msra.mxu0 0
      %5441 = vmatprep.mubr.bf16.mxu0 0
      %5442 = vmatmul.mubr.bf16.gmra.mrb[0].mxu0 %v5404
      %v5443 = vpop.f32.mrb[0].mxu0
      %v5444 = vadd.f32 0.0, %v5443
      %v5445 = vpop.f32.mrb[0].mxu0
      %v5446 = vpop.f32.mrb[0].mxu0
      %v5447 = vpop.f32.mrb[0].mxu0
      %5448 = vdwg.mxu0
      %5449 = vrot.lane.b32.xlu0 %v3626, 104
      %v5450 = vpop.permute.xlu0 %5449
      %v5452 = vsel %vm672, %v5398, 0
      %v5455 = vsel %vm679, %v5450, 0
      %5457 = vmatprep.subr.bf16.mxu0 0
      %5458 = vmatpush1.bf16.msra.mxu0 %v5455
      %5459 = vmatprep.subr.bf16.mxu0 0
      %5460 = vmatpush1.bf16.msra.mxu0 0
      %5461 = vmatprep.subr.bf16.mxu0 0
      %5462 = vmatpush1.bf16.msra.mxu0 0
      %5463 = vmatprep.subr.bf16.mxu0 0
      %5464 = vmatpush1.bf16.msra.mxu0 0
      %5465 = vmatprep.subr.bf16.mxu0 0
      %5466 = vmatpush1.bf16.msra.mxu0 0
      %5467 = vmatprep.subr.bf16.mxu0 0
      %5468 = vmatpush1.bf16.msra.mxu0 0
      %5469 = vmatprep.subr.bf16.mxu0 0
      %5470 = vmatpush1.bf16.msra.mxu0 0
      %5471 = vmatprep.subr.bf16.mxu0 0
      %5472 = vmatpush1.bf16.msra.mxu0 0
      %5473 = vmatprep.subr.bf16.mxu0 0
      %5474 = vmatpush1.bf16.msra.mxu0 0
      %5475 = vmatprep.subr.bf16.mxu0 0
      %5476 = vmatpush1.bf16.msra.mxu0 0
      %5477 = vmatprep.subr.bf16.mxu0 0
      %5478 = vmatpush1.bf16.msra.mxu0 0
      %5479 = vmatprep.subr.bf16.mxu0 0
      %5480 = vmatpush1.bf16.msra.mxu0 0
      %5481 = vmatprep.subr.bf16.mxu0 0
      %5482 = vmatpush1.bf16.msra.mxu0 0
      %5483 = vmatprep.subr.bf16.mxu0 0
      %5484 = vmatpush1.bf16.msra.mxu0 0
      %5485 = vmatprep.subr.bf16.mxu0 0
      %5486 = vmatpush1.bf16.msra.mxu0 0
      %5487 = vmatprep.subr.bf16.mxu0 0
      %5488 = vmatpush1.bf16.msra.mxu0 0
      %5489 = vmatprep.mubr.bf16.mxu0 0
      %5490 = vmatmul.mubr.bf16.gmra.mrb[0].mxu0 %v5452
      %v5491 = vpop.f32.mrb[0].mxu0
      %v5492 = vadd.f32 0.0, %v5491
      %v5493 = vpop.f32.mrb[0].mxu0
      %v5494 = vpop.f32.mrb[0].mxu0
      %v5495 = vpop.f32.mrb[0].mxu0
      %5496 = vdwg.mxu0
      %5497 = vrot.lane.b32.xlu0 %v3627, 104
      %v5498 = vpop.permute.xlu0 %5497
      %v5500 = vsel %vm672, %v5399, 0
      %v5503 = vsel %vm679, %v5498, 0
      %5505 = vmatprep.subr.bf16.mxu0 0
      %5506 = vmatpush1.bf16.msra.mxu0 %v5503
      %5507 = vmatprep.subr.bf16.mxu0 0
      %5508 = vmatpush1.bf16.msra.mxu0 0
      %5509 = vmatprep.subr.bf16.mxu0 0
      %5510 = vmatpush1.bf16.msra.mxu0 0
      %5511 = vmatprep.subr.bf16.mxu0 0
      %5512 = vmatpush1.bf16.msra.mxu0 0
      %5513 = vmatprep.subr.bf16.mxu0 0
      %5514 = vmatpush1.bf16.msra.mxu0 0
      %5515 = vmatprep.subr.bf16.mxu0 0
      %5516 = vmatpush1.bf16.msra.mxu0 0
      %5517 = vmatprep.subr.bf16.mxu0 0
      %5518 = vmatpush1.bf16.msra.mxu0 0
      %5519 = vmatprep.subr.bf16.mxu0 0
      %5520 = vmatpush1.bf16.msra.mxu0 0
      %5521 = vmatprep.subr.bf16.mxu0 0
      %5522 = vmatpush1.bf16.msra.mxu0 0
      %5523 = vmatprep.subr.bf16.mxu0 0
      %5524 = vmatpush1.bf16.msra.mxu0 0
      %5525 = vmatprep.subr.bf16.mxu0 0
      %5526 = vmatpush1.bf16.msra.mxu0 0
      %5527 = vmatprep.subr.bf16.mxu0 0
      %5528 = vmatpush1.bf16.msra.mxu0 0
      %5529 = vmatprep.subr.bf16.mxu0 0
      %5530 = vmatpush1.bf16.msra.mxu0 0
      %5531 = vmatprep.subr.bf16.mxu0 0
      %5532 = vmatpush1.bf16.msra.mxu0 0
      %5533 = vmatprep.subr.bf16.mxu0 0
      %5534 = vmatpush1.bf16.msra.mxu0 0
      %5535 = vmatprep.subr.bf16.mxu0 0
      %5536 = vmatpush1.bf16.msra.mxu0 0
      %5537 = vmatprep.mubr.bf16.mxu0 0
      %5538 = vmatmul.mubr.bf16.gmra.mrb[0].mxu0 %v5500
      %v5539 = vpop.f32.mrb[0].mxu0
      %v5540 = vadd.f32 0.0, %v5539
      %v5541 = vpop.f32.mrb[0].mxu0
      %v5542 = vpop.f32.mrb[0].mxu0
      %v5543 = vpop.f32.mrb[0].mxu0
      %5544 = vdwg.mxu0
      %5545 = vrot.lane.b32.xlu0 %v3628, 104
      %v5546 = vpop.permute.xlu0 %5545
      %v5548 = vsel %vm672, %v5400, 0
      %v5551 = vsel %vm679, %v5546, 0
      %5553 = vmatprep.subr.bf16.mxu0 0
      %5554 = vmatpush1.bf16.msra.mxu0 %v5551
      %5555 = vmatprep.subr.bf16.mxu0 0
      %5556 = vmatpush1.bf16.msra.mxu0 0
      %5557 = vmatprep.subr.bf16.mxu0 0
      %5558 = vmatpush1.bf16.msra.mxu0 0
      %5559 = vmatprep.subr.bf16.mxu0 0
      %5560 = vmatpush1.bf16.msra.mxu0 0
      %5561 = vmatprep.subr.bf16.mxu0 0
      %5562 = vmatpush1.bf16.msra.mxu0 0
      %5563 = vmatprep.subr.bf16.mxu0 0
      %5564 = vmatpush1.bf16.msra.mxu0 0
      %5565 = vmatprep.subr.bf16.mxu0 0
      %5566 = vmatpush1.bf16.msra.mxu0 0
      %5567 = vmatprep.subr.bf16.mxu0 0
      %5568 = vmatpush1.bf16.msra.mxu0 0
      %5569 = vmatprep.subr.bf16.mxu0 0
      %5570 = vmatpush1.bf16.msra.mxu0 0
      %5571 = vmatprep.subr.bf16.mxu0 0
      %5572 = vmatpush1.bf16.msra.mxu0 0
      %5573 = vmatprep.subr.bf16.mxu0 0
      %5574 = vmatpush1.bf16.msra.mxu0 0
      %5575 = vmatprep.subr.bf16.mxu0 0
      %5576 = vmatpush1.bf16.msra.mxu0 0
      %5577 = vmatprep.subr.bf16.mxu0 0
      %5578 = vmatpush1.bf16.msra.mxu0 0
      %5579 = vmatprep.subr.bf16.mxu0 0
      %5580 = vmatpush1.bf16.msra.mxu0 0
      %5581 = vmatprep.subr.bf16.mxu0 0
      %5582 = vmatpush1.bf16.msra.mxu0 0
      %5583 = vmatprep.subr.bf16.mxu0 0
      %5584 = vmatpush1.bf16.msra.mxu0 0
      %5585 = vmatprep.mubr.bf16.mxu0 0
      %5586 = vmatmul.mubr.bf16.gmra.mrb[0].mxu0 %v5548
      %v5587 = vpop.f32.mrb[0].mxu0
      %v5588 = vadd.f32 0.0, %v5587
      %v5589 = vpop.f32.mrb[0].mxu0
      %v5590 = vpop.f32.mrb[0].mxu0
      %v5591 = vpop.f32.mrb[0].mxu0
      %5592 = vdwg.mxu0
      %v5593 = vpack.c.bf16 %v5492, %v5444
      %v5594 = vpack.c.bf16 %v5588, %v5540
      %v5596 = vsel %vm672, %v5593, 0
      %v5599 = vsel %vm672, %v5594, 0
      %v5602 = vsel %vm679, %v3379, 0
      %5604 = vmatprep.subr.bf16.mxu0 0
      %5605 = vmatpush1.bf16.msra.mxu0 %v5602
      %5606 = vmatprep.subr.bf16.mxu0 0
      %5607 = vmatpush1.bf16.msra.mxu0 0
      %5608 = vmatprep.subr.bf16.mxu0 0
      %5609 = vmatpush1.bf16.msra.mxu0 0
      %5610 = vmatprep.subr.bf16.mxu0 0
      %5611 = vmatpush1.bf16.msra.mxu0 0
      %5612 = vmatprep.subr.bf16.mxu0 0
      %5613 = vmatpush1.bf16.msra.mxu0 0
      %5614 = vmatprep.subr.bf16.mxu0 0
      %5615 = vmatpush1.bf16.msra.mxu0 0
      %5616 = vmatprep.subr.bf16.mxu0 0
      %5617 = vmatpush1.bf16.msra.mxu0 0
      %5618 = vmatprep.subr.bf16.mxu0 0
      %5619 = vmatpush1.bf16.msra.mxu0 0
      %5620 = vmatprep.subr.bf16.mxu0 0
      %5621 = vmatpush1.bf16.msra.mxu0 0
      %5622 = vmatprep.subr.bf16.mxu0 0
      %5623 = vmatpush1.bf16.msra.mxu0 0
      %5624 = vmatprep.subr.bf16.mxu0 0
      %5625 = vmatpush1.bf16.msra.mxu0 0
      %5626 = vmatprep.subr.bf16.mxu0 0
      %5627 = vmatpush1.bf16.msra.mxu0 0
      %5628 = vmatprep.subr.bf16.mxu0 0
      %5629 = vmatpush1.bf16.msra.mxu0 0
      %5630 = vmatprep.subr.bf16.mxu0 0
      %5631 = vmatpush1.bf16.msra.mxu0 0
      %5632 = vmatprep.subr.bf16.mxu0 0
      %5633 = vmatpush1.bf16.msra.mxu0 0
      %5634 = vmatprep.subr.bf16.mxu0 0
      %5635 = vmatpush1.bf16.msra.mxu0 0
      %5636 = vmatprep.mubr.bf16.mxu0 0
      %5637 = vmatmul.mubr.bf16.gmra.mrb[0].mxu0 %v5596
      %v5638 = vpop.f32.mrb[0].mxu0
      %v5639 = vadd.f32 0.0, %v5638
      %v5640 = vpop.f32.mrb[0].mxu0
      %v5641 = vpop.f32.mrb[0].mxu0
      %v5642 = vadd.f32 0.0, %v5641
      %v5643 = vpop.f32.mrb[0].mxu0
      %5644 = vmatprep.mubr.bf16.mxu0 0
      %5645 = vmatmul.mubr.bf16.gmra.mrb[0].mxu0 %v5599
      %v5646 = vpop.f32.mrb[0].mxu0
      %v5647 = vadd.f32 0.0, %v5646
      %v5648 = vpop.f32.mrb[0].mxu0
      %v5649 = vpop.f32.mrb[0].mxu0
      %v5650 = vadd.f32 0.0, %v5649
      %v5651 = vpop.f32.mrb[0].mxu0
      %5652 = vdwg.mxu0
      %v5653 = vadd.f32 %v5141, %v5639
      %v5654 = vadd.f32 %v5142, %v5642
      %v5655 = vadd.f32 %v5143, %v5647
      %v5656 = vadd.f32 %v5144, %v5650
      %v5658 = vlaneseq
      %v5659 = vshrl.u32 %v5658, 7
      %v5660 = vsub.s32 0, %v5659
      %v5661 = vrot.slane %v3381, %v5660
      %v5663 = vadd.f32 %v5653, %v5661
      %v5664 = vadd.f32 %v5654, %v5661
      %v5665 = vadd.f32 %v5655, %v5661
      %v5666 = vadd.f32 %v5656, %v5661
      %v5667 = vadd.f32 %v3350, %v5663
      %v5668 = vadd.f32 %v3351, %v5664
      %v5669 = vadd.f32 %v3352, %v5665
      %v5670 = vadd.f32 %v3353, %v5666
      %v5671 = vsel %vm794, %v5667, 0.0
      %5672 = vadd.xlane.f32.xlu0 %v5671
      %v5673 = vpop.xlane.xlu0 %5672
      %v5674 = vsel %vm794, %v5668, 0.0
      %5675 = vadd.xlane.f32.xlu0 %v5674
      %v5676 = vpop.xlane.xlu0 %5675
      %v5677 = vsel %vm794, %v5669, 0.0
      %5678 = vadd.xlane.f32.xlu0 %v5677
      %v5679 = vpop.xlane.xlu0 %5678
      %v5680 = vsel %vm794, %v5670, 0.0
      %5681 = vadd.xlane.f32.xlu0 %v5680
      %v5682 = vpop.xlane.xlu0 %5681
      %v5683 = vmul.f32 %v5673, %v3050
      %v5684 = vmul.f32 %v5676, %v3050
      %v5685 = vmul.f32 %v5679, %v3050
      %v5686 = vmul.f32 %v5682, %v3050
      %v5687 = vsub.f32 %v5667, %v5683
      %v5688 = vsub.f32 %v5668, %v5684
      %v5689 = vsub.f32 %v5669, %v5685
      %v5690 = vsub.f32 %v5670, %v5686
      %v5691 = vmul.f32 %v5687, %v5687
      %v5692 = vmul.f32 %v5688, %v5688
      %v5693 = vmul.f32 %v5689, %v5689
      %v5694 = vmul.f32 %v5690, %v5690
      %v5695 = vsel %vm794, %v5691, 0.0
      %5696 = vadd.xlane.f32.xlu0 %v5695
      %v5697 = vpop.xlane.xlu0 %5696
      %v5698 = vsel %vm794, %v5692, 0.0
      %5699 = vadd.xlane.f32.xlu0 %v5698
      %v5700 = vpop.xlane.xlu0 %5699
      %v5701 = vsel %vm794, %v5693, 0.0
      %5702 = vadd.xlane.f32.xlu0 %v5701
      %v5703 = vpop.xlane.xlu0 %5702
      %v5704 = vsel %vm794, %v5694, 0.0
      %5705 = vadd.xlane.f32.xlu0 %v5704
      %v5706 = vpop.xlane.xlu0 %5705
      %v5707 = vmul.f32 %v5697, %v3050
      %v5708 = vmul.f32 %v5700, %v3050
      %v5709 = vmul.f32 %v5703, %v3050
      %v5710 = vmul.f32 %v5706, %v3050
      %v5711 = vadd.f32 %v5707, 1e-05
      %v5712 = vadd.f32 %v5708, 1e-05
      %v5713 = vadd.f32 %v5709, 1e-05
      %v5714 = vadd.f32 %v5710, 1e-05
      %v5715 = vrsqrt.pop %v5711
      %v5716 = vrsqrt.pop %v5712
      %v5717 = vrsqrt.pop %v5713
      %v5718 = vrsqrt.pop %v5714
      %v5719 = vmul.f32 %v5687, %v5715
      %v5720 = vmul.f32 %v5688, %v5716
      %v5721 = vmul.f32 %v5689, %v5717
      %v5722 = vmul.f32 %v5690, %v5718
      %v5724 = vlaneseq
      %v5725 = vshrl.u32 %v5724, 7
      %v5726 = vsub.s32 0, %v5725
      %v5727 = vrot.slane %v3383, %v5726
      %v5729 = vmul.f32 %v5719, %v5727
      %v5730 = vmul.f32 %v5720, %v5727
      %v5731 = vmul.f32 %v5721, %v5727
      %v5732 = vmul.f32 %v5722, %v5727
      %v5734 = vlaneseq
      %v5735 = vshrl.u32 %v5734, 7
      %v5736 = vsub.s32 0, %v5735
      %v5737 = vrot.slane %v3385, %v5736
      %v5739 = vadd.f32 %v5729, %v5737
      %v5740 = vadd.f32 %v5730, %v5737
      %v5741 = vadd.f32 %v5731, %v5737
      %v5742 = vadd.f32 %v5732, %v5737
      %v5743 = vpack.c.bf16 %v5740, %v5739
      %v5744 = vpack.c.bf16 %v5742, %v5741
      %v5746 = vlaneseq
      %v5747 = vshrl.u32 %v5746, 7
      %v5748 = vsub.s32 0, %v5747
      %v5749 = vrot.slane %v3392, %v5748
      %v5755 = vunpack.c.l.b16 %v3387
      %v5756 = vunpack.c.l.b16 %v3388
      %v5757 = vunpack.c.l.b16 %v3389
      %v5758 = vunpack.c.l.b16 %v3390
      %v5759 = vpack.c.b16 %v5756, %v5755
      %v5760 = vpack.c.b16 %v5758, %v5757
      %v5764 = vsel %vm794, %v5743, 0
      %v5767 = vsel %vm794, %v5744, 0
      %5769 = vmatprep.subr.bf16.mxu0 0
      %5770 = vmatpush1.bf16.msra.mxu0 %v5759
      %5771 = vmatprep.subr.bf16.mxu0 0
      %5772 = vmatpush1.bf16.msra.mxu0 %v5760
      %5773 = vmatprep.subr.bf16.mxu0 0
      %5774 = vmatpush1.bf16.msra.mxu0 0
      %5775 = vmatprep.subr.bf16.mxu0 0
      %5776 = vmatpush1.bf16.msra.mxu0 0
      %5777 = vmatprep.subr.bf16.mxu0 0
      %5778 = vmatpush1.bf16.msra.mxu0 0
      %5779 = vmatprep.subr.bf16.mxu0 0
      %5780 = vmatpush1.bf16.msra.mxu0 0
      %5781 = vmatprep.subr.bf16.mxu0 0
      %5782 = vmatpush1.bf16.msra.mxu0 0
      %5783 = vmatprep.subr.bf16.mxu0 0
      %5784 = vmatpush1.bf16.msra.mxu0 0
      %5785 = vmatprep.subr.bf16.mxu0 0
      %5786 = vmatpush1.bf16.msra.mxu0 0
      %5787 = vmatprep.subr.bf16.mxu0 0
      %5788 = vmatpush1.bf16.msra.mxu0 0
      %5789 = vmatprep.subr.bf16.mxu0 0
      %5790 = vmatpush1.bf16.msra.mxu0 0
      %5791 = vmatprep.subr.bf16.mxu0 0
      %5792 = vmatpush1.bf16.msra.mxu0 0
      %5793 = vmatprep.subr.bf16.mxu0 0
      %5794 = vmatpush1.bf16.msra.mxu0 0
      %5795 = vmatprep.subr.bf16.mxu0 0
      %5796 = vmatpush1.bf16.msra.mxu0 0
      %5797 = vmatprep.subr.bf16.mxu0 0
      %5798 = vmatpush1.bf16.msra.mxu0 0
      %5799 = vmatprep.subr.bf16.mxu0 0
      %5800 = vmatpush1.bf16.msra.mxu0 0
      %5801 = vmatprep.mubr.bf16.mxu0 0
      %5802 = vmatmul.mubr.bf16.gmra.mrb[0].mxu0 %v5764
      %v5803 = vpop.f32.mrb[0].mxu0
      %v5804 = vadd.f32 %v5749, %v5803
      %v5805 = vpop.f32.mrb[0].mxu0
      %v5806 = vpop.f32.mrb[0].mxu0
      %v5807 = vadd.f32 %v5749, %v5806
      %v5808 = vpop.f32.mrb[0].mxu0
      %5809 = vmatprep.mubr.bf16.mxu0 0
      %5810 = vmatmul.mubr.bf16.gmra.mrb[0].mxu0 %v5767
      %v5811 = vpop.f32.mrb[0].mxu0
      %v5812 = vadd.f32 %v5749, %v5811
      %v5813 = vpop.f32.mrb[0].mxu0
      %v5814 = vpop.f32.mrb[0].mxu0
      %v5815 = vadd.f32 %v5749, %v5814
      %v5816 = vpop.f32.mrb[0].mxu0
      %5817 = vdwg.mxu0
      %v5818 = vmax.f32 %v5804, 0.0
      %v5819 = vmax.f32 %v5807, 0.0
      %v5820 = vmax.f32 %v5812, 0.0
      %v5821 = vmax.f32 %v5815, 0.0
      %v5822 = vpack.c.bf16 %v5819, %v5818
      %v5823 = vpack.c.bf16 %v5821, %v5820
      %v5825 = vlaneseq
      %v5826 = vshrl.u32 %v5825, 7
      %v5827 = vsub.s32 0, %v5826
      %v5828 = vrot.slane %v3403, %v5827
      %v5838 = vunpack.c.l.b16 %v3394
      %v5839 = vunpack.c.l.b16 %v3395
      %v5840 = vunpack.c.l.b16 %v3396
      %v5841 = vunpack.c.l.b16 %v3397
      %v5842 = vunpack.c.l.b16 %v3398
      %v5843 = vunpack.c.l.b16 %v3399
      %v5844 = vunpack.c.l.b16 %v3400
      %v5845 = vunpack.c.l.b16 %v3401
      %v5846 = vpack.c.b16 %v5839, %v5838
      %v5847 = vpack.c.b16 %v5841, %v5840
      %v5848 = vpack.c.b16 %v5843, %v5842
      %v5849 = vpack.c.b16 %v5845, %v5844
      %v5855 = vsel %vm3222, %v5822, 0
      %v5858 = vsel %vm3222, %v5823, 0
      %5860 = vmatprep.subr.bf16.mxu0 0
      %5861 = vmatpush1.bf16.msra.mxu0 %v5846
      %5862 = vmatprep.subr.bf16.mxu0 0
      %5863 = vmatpush1.bf16.msra.mxu0 %v5847
      %5864 = vmatprep.subr.bf16.mxu0 0
      %5865 = vmatpush1.bf16.msra.mxu0 %v5848
      %5866 = vmatprep.subr.bf16.mxu0 0
      %5867 = vmatpush1.bf16.msra.mxu0 %v5849
      %5868 = vmatprep.subr.bf16.mxu0 0
      %5869 = vmatpush1.bf16.msra.mxu0 0
      %5870 = vmatprep.subr.bf16.mxu0 0
      %5871 = vmatpush1.bf16.msra.mxu0 0
      %5872 = vmatprep.subr.bf16.mxu0 0
      %5873 = vmatpush1.bf16.msra.mxu0 0
      %5874 = vmatprep.subr.bf16.mxu0 0
      %5875 = vmatpush1.bf16.msra.mxu0 0
      %5876 = vmatprep.subr.bf16.mxu0 0
      %5877 = vmatpush1.bf16.msra.mxu0 0
      %5878 = vmatprep.subr.bf16.mxu0 0
      %5879 = vmatpush1.bf16.msra.mxu0 0
      %5880 = vmatprep.subr.bf16.mxu0 0
      %5881 = vmatpush1.bf16.msra.mxu0 0
      %5882 = vmatprep.subr.bf16.mxu0 0
      %5883 = vmatpush1.bf16.msra.mxu0 0
      %5884 = vmatprep.subr.bf16.mxu0 0
      %5885 = vmatpush1.bf16.msra.mxu0 0
      %5886 = vmatprep.subr.bf16.mxu0 0
      %5887 = vmatpush1.bf16.msra.mxu0 0
      %5888 = vmatprep.subr.bf16.mxu0 0
      %5889 = vmatpush1.bf16.msra.mxu0 0
      %5890 = vmatprep.subr.bf16.mxu0 0
      %5891 = vmatpush1.bf16.msra.mxu0 0
      %5892 = vmatprep.mubr.bf16.mxu0 0
      %5893 = vmatmul.mubr.bf16.gmra.mrb[0].mxu0 %v5855
      %v5894 = vpop.f32.mrb[0].mxu0
      %v5895 = vadd.f32 %v5828, %v5894
      %v5896 = vpop.f32.mrb[0].mxu0
      %v5897 = vpop.f32.mrb[0].mxu0
      %v5898 = vadd.f32 %v5828, %v5897
      %v5899 = vpop.f32.mrb[0].mxu0
      %5900 = vmatprep.mubr.bf16.mxu0 0
      %5901 = vmatmul.mubr.bf16.gmra.mrb[0].mxu0 %v5858
      %v5902 = vpop.f32.mrb[0].mxu0
      %v5903 = vadd.f32 %v5828, %v5902
      %v5904 = vpop.f32.mrb[0].mxu0
      %v5905 = vpop.f32.mrb[0].mxu0
      %v5906 = vadd.f32 %v5828, %v5905
      %v5907 = vpop.f32.mrb[0].mxu0
      %5908 = vdwg.mxu0
      %v5909 = vadd.f32 %v5739, %v5895
      %v5910 = vadd.f32 %v5740, %v5898
      %v5911 = vadd.f32 %v5741, %v5903
      %v5912 = vadd.f32 %v5742, %v5906
      %v5913 = vsel %vm794, %v5909, 0.0
      %5914 = vadd.xlane.f32.xlu0 %v5913
      %v5915 = vpop.xlane.xlu0 %5914
      %v5916 = vsel %vm794, %v5910, 0.0
      %5917 = vadd.xlane.f32.xlu0 %v5916
      %v5918 = vpop.xlane.xlu0 %5917
      %v5919 = vsel %vm794, %v5911, 0.0
      %5920 = vadd.xlane.f32.xlu0 %v5919
      %v5921 = vpop.xlane.xlu0 %5920
      %v5922 = vsel %vm794, %v5912, 0.0
      %5923 = vadd.xlane.f32.xlu0 %v5922
      %v5924 = vpop.xlane.xlu0 %5923
      %v5925 = vmul.f32 %v5915, %v3050
      %v5926 = vmul.f32 %v5918, %v3050
      %v5927 = vmul.f32 %v5921, %v3050
      %v5928 = vmul.f32 %v5924, %v3050
      %v5929 = vsub.f32 %v5909, %v5925
      %v5930 = vsub.f32 %v5910, %v5926
      %v5931 = vsub.f32 %v5911, %v5927
      %v5932 = vsub.f32 %v5912, %v5928
      %v5933 = vmul.f32 %v5929, %v5929
      %v5934 = vmul.f32 %v5930, %v5930
      %v5935 = vmul.f32 %v5931, %v5931
      %v5936 = vmul.f32 %v5932, %v5932
      %v5937 = vsel %vm794, %v5933, 0.0
      %5938 = vadd.xlane.f32.xlu0 %v5937
      %v5939 = vpop.xlane.xlu0 %5938
      %v5940 = vsel %vm794, %v5934, 0.0
      %5941 = vadd.xlane.f32.xlu0 %v5940
      %v5942 = vpop.xlane.xlu0 %5941
      %v5943 = vsel %vm794, %v5935, 0.0
      %5944 = vadd.xlane.f32.xlu0 %v5943
      %v5945 = vpop.xlane.xlu0 %5944
      %v5946 = vsel %vm794, %v5936, 0.0
      %5947 = vadd.xlane.f32.xlu0 %v5946
      %v5948 = vpop.xlane.xlu0 %5947
      %v5949 = vmul.f32 %v5939, %v3050
      %v5950 = vmul.f32 %v5942, %v3050
      %v5951 = vmul.f32 %v5945, %v3050
      %v5952 = vmul.f32 %v5948, %v3050
      %v5953 = vadd.f32 %v5949, 1e-05
      %v5954 = vadd.f32 %v5950, 1e-05
      %v5955 = vadd.f32 %v5951, 1e-05
      %v5956 = vadd.f32 %v5952, 1e-05
      %v5957 = vrsqrt.pop %v5953
      %v5958 = vrsqrt.pop %v5954
      %v5959 = vrsqrt.pop %v5955
      %v5960 = vrsqrt.pop %v5956
      %v5961 = vmul.f32 %v5929, %v5957
      %v5962 = vmul.f32 %v5930, %v5958
      %v5963 = vmul.f32 %v5931, %v5959
      %v5964 = vmul.f32 %v5932, %v5960
      %v5966 = vlaneseq
      %v5967 = vshrl.u32 %v5966, 7
      %v5968 = vsub.s32 0, %v5967
      %v5969 = vrot.slane %v3405, %v5968
      %v5971 = vmul.f32 %v5961, %v5969
      %v5972 = vmul.f32 %v5962, %v5969
      %v5973 = vmul.f32 %v5963, %v5969
      %v5974 = vmul.f32 %v5964, %v5969
      %v5976 = vlaneseq
      %v5977 = vshrl.u32 %v5976, 7
      %v5978 = vsub.s32 0, %v5977
      %v5979 = vrot.slane %v3407, %v5978
      %v5981 = vadd.f32 %v5971, %v5979
      %v5982 = vadd.f32 %v5972, %v5979
      %v5983 = vadd.f32 %v5973, %v5979
      %v5984 = vadd.f32 %v5974, %v5979
      %v5985 = vld [vmem:[%s19] sm:$0x1]
      %v5986 = vld [vmem:[%s20] sm:$0x1]
      %v5987 = vsel %vm794, %v5981, 0.0
      %5988 = vadd.xlane.f32.xlu0 %v5987
      %v5989 = vpop.xlane.xlu0 %5988
      %v5990 = vsel %vm794, %v5982, 0.0
      %5991 = vadd.xlane.f32.xlu0 %v5990
      %v5992 = vpop.xlane.xlu0 %5991
      %v5993 = vsel %vm794, %v5983, 0.0
      %5994 = vadd.xlane.f32.xlu0 %v5993
      %v5995 = vpop.xlane.xlu0 %5994
      %v5996 = vsel %vm794, %v5984, 0.0
      %5997 = vadd.xlane.f32.xlu0 %v5996
      %v5998 = vpop.xlane.xlu0 %5997
      %v5999 = vmul.f32 %v5989, %v3050
      %v6000 = vmul.f32 %v5992, %v3050
      %v6001 = vmul.f32 %v5995, %v3050
      %v6002 = vmul.f32 %v5998, %v3050
      %v6003 = vsub.f32 %v5981, %v5999
      %v6004 = vsub.f32 %v5982, %v6000
      %v6005 = vsub.f32 %v5983, %v6001
      %v6006 = vsub.f32 %v5984, %v6002
      %v6007 = vmul.f32 %v6003, %v6003
      %v6008 = vmul.f32 %v6004, %v6004
      %v6009 = vmul.f32 %v6005, %v6005
      %v6010 = vmul.f32 %v6006, %v6006
      %v6011 = vsel %vm794, %v6007, 0.0
      %6012 = vadd.xlane.f32.xlu0 %v6011
      %v6013 = vpop.xlane.xlu0 %6012
      %v6014 = vsel %vm794, %v6008, 0.0
      %6015 = vadd.xlane.f32.xlu0 %v6014
      %v6016 = vpop.xlane.xlu0 %6015
      %v6017 = vsel %vm794, %v6009, 0.0
      %6018 = vadd.xlane.f32.xlu0 %v6017
      %v6019 = vpop.xlane.xlu0 %6018
      %v6020 = vsel %vm794, %v6010, 0.0
      %6021 = vadd.xlane.f32.xlu0 %v6020
      %v6022 = vpop.xlane.xlu0 %6021
      %v6023 = vmul.f32 %v6013, %v3050
      %v6024 = vmul.f32 %v6016, %v3050
      %v6025 = vmul.f32 %v6019, %v3050
      %v6026 = vmul.f32 %v6022, %v3050
      %v6027 = vadd.f32 %v6023, 1e-05
      %v6028 = vadd.f32 %v6024, 1e-05
      %v6029 = vadd.f32 %v6025, 1e-05
      %v6030 = vadd.f32 %v6026, 1e-05
      %v6031 = vrsqrt.pop %v6027
      %v6032 = vrsqrt.pop %v6028
      %v6033 = vrsqrt.pop %v6029
      %v6034 = vrsqrt.pop %v6030
      %v6035 = vmul.f32 %v6003, %v6031
      %v6036 = vmul.f32 %v6004, %v6032
      %v6037 = vmul.f32 %v6005, %v6033
      %v6038 = vmul.f32 %v6006, %v6034
      %v6040 = vlaneseq
      %v6041 = vshrl.u32 %v6040, 7
      %v6042 = vsub.s32 0, %v6041
      %v6043 = vrot.slane %v5985, %v6042
      %v6045 = vmul.f32 %v6035, %v6043
      %v6046 = vmul.f32 %v6036, %v6043
      %v6047 = vmul.f32 %v6037, %v6043
      %v6048 = vmul.f32 %v6038, %v6043
      %v6050 = vlaneseq
      %v6051 = vshrl.u32 %v6050, 7
      %v6052 = vsub.s32 0, %v6051
      %v6053 = vrot.slane %v5986, %v6052
      %v6055 = vadd.f32 %v6045, %v6053
      %v6056 = vadd.f32 %v6046, %v6053
      %v6057 = vadd.f32 %v6047, %v6053
      %v6058 = vadd.f32 %v6048, %v6053
      %6059 = vst.msk [vmem:[%s658] sm:$0xff] %vm794, %v6055
      %6060 = vst.msk [vmem:[%s658 + $0x8] sm:$0xff] %vm794, %v6056
      %6061 = vst.msk [vmem:[%s658 + $0x10] sm:$0xff] %vm794, %v6057
      %6062 = vst.msk [vmem:[%s658 + $0x18] sm:$0xff] %vm794, %v6058
      %s6063 = smul.u32 4, %s32
      %p6064 = scmp.lt.s32.totalorder %s6063, 7
      %s6065 = scalar_select %p6064, %s6063, 7
      %s6066 = smul.addr %s6065, 8
      %s6067 = scalar_lea.vmem %s21, %s6066
      // Predicated region
      $region105: #{_lambda_.2} parent=103 // pred_check
        %p6068 = pneg %p496
      $region106: #{_lambda_.2} parent=103 // pred_check_branch
        %6070 = sbr.rel (%p6068) target = $region108
      $region107: #{_lambda_.2} parent=103 // pred_region
        %s6071 = smul.u32 4, %s32
      $region108: #{_lambda_.2} parent=103 // pred_fallthru
        _
    $region104: #{_lambda_.2} parent=5 // pred_fallthru
      _
    %p6072 = scmp.le.s32.totalorder 2, %s27
    // Predicated region
    $region109: #{_lambda_.2} parent=5 // pred_check
      %p6073 = pneg %p6072
    $region110: #{_lambda_.2} parent=5 // pred_check_branch
      %6075 = sbr.rel (%p6073) target = $region112
    $region111: #{_lambda_.2} parent=5 // pred_region
      %s6076 = ssub.s32 %s27, 2
      // Predicated region
      $region113: #{_lambda_.2} parent=111 // pred_check
        %p6077 = pneg %p502
      $region114: #{_lambda_.2} parent=111 // pred_check_branch
        %6079 = sbr.rel (%p6077) target = $region116
      $region115: #{_lambda_.2} parent=111 // pred_region
        %s6080 = smul.u32 4, %s33
        %p6081 = scmp.lt.s32.totalorder %s6080, 7
        %s6082 = scalar_select %p6081, %s6080, 7
        %s6083 = smul.addr %s6082, 8
        %s6084 = scalar_lea.vmem %s21, %s6083
      $region116: #{_lambda_.2} parent=111 // pred_fallthru
        _
    $region112: #{_lambda_.2} parent=5 // pred_fallthru
      _
  $region6: #{_lambda_.2} parent=0 // loop_footer
    %s31 = sadd.s32 1, %s27
  $region7: #{_lambda_.2} parent=0 // loop_footer_branch
    %26 = sbr.rel target = $region3
  $region8: #{_lambda_.2} parent=0 // loop_exit
    _

</llo_original>
